<compile_context>
chip_gen: v6e
topology: v6e:2x2x1
jax: 0.10.0
libtpu: 0.0.40
codegen_flags: <defaults>
</compile_context>

<pallas_src>
import functools

import jax
import jax.numpy as jnp
from jax.experimental import pallas as pl
from jax.experimental.pallas import tpu as pltpu


def _round_up(x, m):
    return (x + m - 1) // m * m


def _cdiv(a, b):
    return -(-a // b)


@functools.lru_cache(maxsize=1)
def _tpu_hw_info():
    """(vmem_capacity_bytes, num_tensorcores); conservative defaults on failure."""
    vmem_bytes = 128 * 2 ** 20
    num_cores = 1
    try:
        info = pltpu.get_tpu_info()
        vmem_bytes = int(getattr(info, "vmem_capacity_bytes", vmem_bytes))
        for name in ("num_tensorcores", "tensorcore_count", "num_cores",
                     "core_count"):
            v = getattr(info, name, None)
            if v:
                num_cores = int(v)
                break
    except Exception:
        pass
    return vmem_bytes, num_cores


# -----------------------------------------------------------------------------
# Kernels (whole MLP hot path, everything resident in VMEM)
# -----------------------------------------------------------------------------
def _mlp_kernel_unrolled(precision, x_ref, *refs):
    """refs = (w0, b0, w1, b1, ..., wN, bN, out_ref)."""
    out_ref = refs[-1]
    param_refs = refs[:-1]
    n_linear = len(param_refs) // 2

    h = x_ref[...]
    for i in range(n_linear):
        w = param_refs[2 * i][...]
        b = param_refs[2 * i + 1][...].astype(jnp.float32)
        h = jnp.dot(h.astype(w.dtype), w, preferred_element_type=jnp.float32,
                    precision=precision) + b
        if i < n_linear - 1:                  # ReLU after all but the last layer
            h = jnp.maximum(h, 0.0)
    out_ref[...] = h.astype(out_ref.dtype)


def _mlp_kernel_stacked(precision, x_ref, w0_ref, b0_ref, ws_ref, bs_ref,
                        wl_ref, bl_ref, out_ref):
    """Hidden layers stacked as (L, H, H)/(L, 1, H) and looped with fori_loop
    (bounds live ranges / code size for deep MLPs)."""
    cdt = w0_ref.dtype
    h = x_ref[...]
    h = jnp.dot(h.astype(cdt), w0_ref[...], preferred_element_type=jnp.float32,
                precision=precision) + b0_ref[...].astype(jnp.float32)
    h = jnp.maximum(h, 0.0)

    def body(l, carry):
        w = ws_ref[l]                                   # (H, H)
        b = bs_ref[l].astype(jnp.float32)               # (1, H)
        hh = jnp.dot(carry.astype(cdt), w, preferred_element_type=jnp.float32,
                     precision=precision) + b
        return jnp.maximum(hh, 0.0)

    h = jax.lax.fori_loop(0, ws_ref.shape[0], body, h)

    h = jnp.dot(h.astype(cdt), wl_ref[...], preferred_element_type=jnp.float32,
                precision=precision) + bl_ref[...].astype(jnp.float32)
    out_ref[...] = h.astype(out_ref.dtype)


# -----------------------------------------------------------------------------
# Wrapper
# -----------------------------------------------------------------------------
@functools.partial(
    jax.jit,
    static_argnames=("batch_tile", "compute_dtype", "out_dtype",
                     "single_buffer_weights", "stack_hidden_threshold",
                     "feature_pad", "x_pipeline_buffers", "force_parallel"))
def mlp_forward(x, params, *, batch_tile=None, compute_dtype=jnp.bfloat16,
                out_dtype=None, single_buffer_weights=True,
                stack_hidden_threshold=4, feature_pad=128,
                x_pipeline_buffers=2, force_parallel=False):
    """MLP forward pass as a single Pallas kernel, tiled over batch."""
    batch, in_dim = x.shape
    n_linear = len(params) // 2
    hidden = params[0].shape[-1]
    out_dim = params[-1].shape[-1]
    out_dtype = compute_dtype if out_dtype is None else out_dtype

    vmem_cap, num_cores = _tpu_hw_info()
    c_bytes = jnp.dtype(compute_dtype).itemsize
    o_bytes = jnp.dtype(out_dtype).itemsize
    precision = (jax.lax.Precision.HIGHEST
                 if jnp.dtype(compute_dtype) == jnp.dtype(jnp.float32) else None)

    # ---- feature padding: lane-dense (multiple-of-128) activations ----------
    in_pad = _round_up(in_dim, feature_pad)
    hid_pad = _round_up(hidden, feature_pad)
    out_pad = _round_up(out_dim, feature_pad)

    # ---- batch tiling --------------------------------------------------------
    default_bt = 1024 if vmem_cap >= 96 * 2 ** 20 else 512   # 128-MiB parts vs v7x
    tb = min(batch_tile or default_bt, batch)
    align = 16 if c_bytes == 2 else 8        # bf16 packs 16 rows per vreg sublane
    if _cdiv(batch, tb) < 2 and batch >= 2 * align:
        tb = _round_up(batch // 2, align)    # >= 2 grid steps (2 TCs on v7x)
    grid = (_cdiv(batch, tb),)

    # ---- parameters: pad to lane-dense dims, cast to compute dtype ----------
    padded = []
    for i in range(n_linear):
        w = params[2 * i]
        b = params[2 * i + 1]
        fi, fo = w.shape
        fi_p = in_pad if i == 0 else hid_pad
        fo_p = out_pad if i == n_linear - 1 else hid_pad
        w = jnp.pad(w, ((0, fi_p - fi), (0, fo_p - fo))).astype(compute_dtype)
        b = jnp.pad(b, ((0, 0), (0, fo_p - fo))).astype(jnp.float32)
        padded.append((w, b))
    x_in = jnp.pad(x, ((0, 0), (0, in_pad - in_dim))).astype(compute_dtype)

    n_hidden_layers = n_linear - 2
    if n_hidden_layers >= stack_hidden_threshold:
        call_params = [
            padded[0][0], padded[0][1],
            jnp.stack([padded[i][0] for i in range(1, n_linear - 1)]),
            jnp.stack([padded[i][1] for i in range(1, n_linear - 1)]),
            padded[-1][0], padded[-1][1],
        ]
        kernel = functools.partial(_mlp_kernel_stacked, precision)
    else:
        call_params = [p for pair in padded for p in pair]
        kernel = functools.partial(_mlp_kernel_unrolled, precision)

    # ---- BlockSpecs ----------------------------------------------------------
    # Weights/biases have a constant index_map (same block every grid step), so
    # double-buffering them only doubles resident VMEM -> Buffered(1).
    def _param_spec(shape):
        nd = len(shape)
        idx = lambda i: (0,) * nd
        if single_buffer_weights:
            return pl.BlockSpec(shape, idx, pipeline_mode=pl.Buffered(1))
        return pl.BlockSpec(shape, idx)

    if x_pipeline_buffers != 2:
        x_spec = pl.BlockSpec((tb, in_pad), lambda i: (i, 0),
                              pipeline_mode=pl.Buffered(x_pipeline_buffers))
    else:
        x_spec = pl.BlockSpec((tb, in_pad), lambda i: (i, 0))
    in_specs = [x_spec] + [_param_spec(p.shape) for p in call_params]
    out_specs = pl.BlockSpec((tb, out_pad), lambda i: (i, 0))

    # ---- explicit VMEM budget (generation-aware cap) -------------------------
    weights_bytes = sum(int(p.size) * p.dtype.itemsize for p in call_params)
    param_bufs = 1 if single_buffer_weights else 2
    act_width = max(in_pad, hid_pad, out_pad)
    est = (2 * tb * in_pad * c_bytes                 # x tile (double-buffered)
           + 2 * tb * out_pad * o_bytes              # out tile (double-buffered)
           + param_bufs * weights_bytes              # resident weights/biases
           + 8 * tb * act_width * 4)                 # live f32 activations (fudge)
    cap_hi = (48 << 20) if vmem_cap <= (72 << 20) else (56 << 20)
    vmem_limit_bytes = int(max(16 << 20, min(cap_hi, 2 * est)))
    # TODO(synk): for hidden >~ 2-4K (weights > ~24-32 MiB bf16) the
    # all-weights-resident strategy exceeds v7x's 64 MiB VMEM; stream each
    # layer's W over K/N tiles with pltpu.emit_pipeline instead of shrinking
    # the batch tile.

    # ---- megacore: shard the batch axis across TensorCores on v7x -----------
    core_parallel = getattr(pltpu, "CORE_PARALLEL", None)
    if (not force_parallel and num_cores >= 2 and grid[0] >= 2
            and core_parallel is not None):
        dim_sem = (core_parallel,)
    else:
        dim_sem = ("parallel",)

    y = pl.pallas_call(
        kernel,
        out_shape=jax.ShapeDtypeStruct((batch, out_pad), out_dtype),
        grid_spec=pltpu.PrefetchScalarGridSpec(
            num_scalar_prefetch=0,
            grid=grid,
            in_specs=in_specs,
            out_specs=out_specs),
        compiler_params=pltpu.CompilerParams(
            dimension_semantics=dim_sem,
            vmem_limit_bytes=vmem_limit_bytes),
    )(x_in, *call_params)

    return y[:, :out_dim] if out_pad != out_dim else y


# -----------------------------------------------------------------------------
# Params init + pure-JAX reference
# -----------------------------------------------------------------------------
def init_mlp_params(key, inputs, outputs, hidden, layers):
    """PyTorch-style init U(-1/sqrt(fan_in), +1/sqrt(fan_in)); W pre-transposed
    to (in, out), b shaped (1, out)."""
    dims = [(inputs, hidden)] + [(hidden, hidden)] * layers + [(hidden, outputs)]
    params = []
    for (fan_in, fan_out) in dims:
        key, kw, kb = jax.random.split(key, 3)
        bound = 1.0 / jnp.sqrt(jnp.float32(fan_in))
        w = jax.random.uniform(kw, (fan_in, fan_out), jnp.float32, -bound, bound)
        b = jax.random.uniform(kb, (1, fan_out), jnp.float32, -bound, bound)
        params += [w, b]
    return params


def mlp_reference(x, params):
    n_linear = len(params) // 2
    h = x
    for i in range(n_linear):
        h = h @ params[2 * i] + params[2 * i + 1]
        if i < n_linear - 1:
            h = jnp.maximum(h, 0.0)
    return h


# TODO(synk): dropout (train-mode) and the optional AffineModule input
# normalization are omitted; defaults (dropout=0.0, norm_inputs=False) make
# them identity in this forward pass.


def _run(x, params, **kw):
    """Run with graceful fallback if a build rejects Buffered(1)/CORE_PARALLEL."""
    attempts = (dict(),
                dict(single_buffer_weights=False),
                dict(single_buffer_weights=False, force_parallel=True))
    err = None
    for extra in attempts:
        try:
            return jax.block_until_ready(mlp_forward(x, params, **kw, **extra))
        except Exception as e:
            err = e
    raise err


if __name__ == "__main__":
    key = jax.random.PRNGKey(0)

    # --- Config 1: MultilayerPerceptron(inputs=4, outputs=3, hidden=32, layers=2)
    inputs, outputs, hidden, layers = 4, 3, 32, 2
    batch = 8
    key, kx, kp = jax.random.split(key, 3)
    x = jax.random.normal(kx, (batch, inputs), jnp.float32)
    params = init_mlp_params(kp, inputs, outputs, hidden, layers)
    y_ref = mlp_reference(x, params)

    # f32 operand path (Precision.HIGHEST): tight check.
    y32 = _run(x, params, compute_dtype=jnp.float32)
    assert y32.shape == (batch, outputs), y32.shape
    assert jnp.allclose(y32, y_ref, atol=1e-5, rtol=1e-5), (
        float(jnp.max(jnp.abs(y32 - y_ref))))

    # Default bf16 operand/output path: loose check.
    ybf = _run(x, params)
    assert ybf.shape == (batch, outputs), ybf.shape
    assert jnp.allclose(ybf.astype(jnp.float32), y_ref, atol=1e-1, rtol=1e-1), (
        float(jnp.max(jnp.abs(ybf.astype(jnp.float32) - y_ref))))

    # --- Config 2: deeper MLP -> exercises the stacked fori_loop kernel path.
    inputs2, outputs2, hidden2, layers2 = 4, 3, 32, 6
    batch2 = 16
    key, kx2, kp2 = jax.random.split(key, 3)
    x2 = jax.random.normal(kx2, (batch2, inputs2), jnp.float32)
    params2 = init_mlp_params(kp2, inputs2, outputs2, hidden2, layers2)
    y2_ref = mlp_reference(x2, params2)

    y2_32 = _run(x2, params2, compute_dtype=jnp.float32)
    assert y2_32.shape == (batch2, outputs2), y2_32.shape
    assert jnp.allclose(y2_32, y2_ref, atol=1e-4, rtol=1e-4), (
        float(jnp.max(jnp.abs(y2_32 - y2_ref))))

    y2_bf = _run(x2, params2)
    assert y2_bf.shape == (batch2, outputs2), y2_bf.shape
    assert jnp.allclose(y2_bf.astype(jnp.float32), y2_ref, atol=2e-1, rtol=2e-1), (
        float(jnp.max(jnp.abs(y2_bf.astype(jnp.float32) - y2_ref))))

    print("KERNEL_OK")
</pallas_src>

<mosaic_0001>
module attributes {stable_mosaic.version = 11 : i64} {
  func.func @_mlp_kernel_unrolled(%arg0: i32, %arg1: memref<8x128xf32, #tpu.memory_space<vmem>>, %arg2: memref<128x128xf32, #tpu.memory_space<vmem>>, %arg3: memref<1x128xf32, #tpu.memory_space<vmem>>, %arg4: memref<128x128xf32, #tpu.memory_space<vmem>>, %arg5: memref<1x128xf32, #tpu.memory_space<vmem>>, %arg6: memref<128x128xf32, #tpu.memory_space<vmem>>, %arg7: memref<1x128xf32, #tpu.memory_space<vmem>>, %arg8: memref<128x128xf32, #tpu.memory_space<vmem>>, %arg9: memref<1x128xf32, #tpu.memory_space<vmem>>, %arg10: memref<8x128xf32, #tpu.memory_space<vmem>>) attributes {dimension_semantics = [#tpu.dimension_semantics<parallel>], iteration_bounds = array<i64: 1>, scalar_prefetch = 0 : i64, scratch_operands = 0 : i64, tpu.core_type = #tpu.core_type<tc>, window_params = [{transform_indices = @transform_0, window_bounds = array<i64: 8, 128>}, {pipeline_mode = #tpu.pipeline_mode<synchronous>, transform_indices = @transform_1, window_bounds = array<i64: 128, 128>}, {pipeline_mode = #tpu.pipeline_mode<synchronous>, transform_indices = @transform_2, window_bounds = array<i64: 1, 128>}, {pipeline_mode = #tpu.pipeline_mode<synchronous>, transform_indices = @transform_3, window_bounds = array<i64: 128, 128>}, {pipeline_mode = #tpu.pipeline_mode<synchronous>, transform_indices = @transform_4, window_bounds = array<i64: 1, 128>}, {pipeline_mode = #tpu.pipeline_mode<synchronous>, transform_indices = @transform_5, window_bounds = array<i64: 128, 128>}, {pipeline_mode = #tpu.pipeline_mode<synchronous>, transform_indices = @transform_6, window_bounds = array<i64: 1, 128>}, {pipeline_mode = #tpu.pipeline_mode<synchronous>, transform_indices = @transform_7, window_bounds = array<i64: 128, 128>}, {pipeline_mode = #tpu.pipeline_mode<synchronous>, transform_indices = @transform_8, window_bounds = array<i64: 1, 128>}, {transform_indices = @transform_9, window_bounds = array<i64: 8, 128>}]} {
    %c0 = arith.constant 0 : index
    %c0_0 = arith.constant 0 : index
    %0 = vector.load %arg1[%c0, %c0_0] : memref<8x128xf32, #tpu.memory_space<vmem>>, vector<8x128xf32>
    %c0_1 = arith.constant 0 : index
    %c0_2 = arith.constant 0 : index
    %1 = vector.load %arg2[%c0_1, %c0_2] : memref<128x128xf32, #tpu.memory_space<vmem>>, vector<128x128xf32>
    %c0_3 = arith.constant 0 : index
    %c0_4 = arith.constant 0 : index
    %2 = vector.load %arg3[%c0_3, %c0_4] : memref<1x128xf32, #tpu.memory_space<vmem>>, vector<1x128xf32>
    %cst = arith.constant dense<0.000000e+00> : vector<8x128xf32>
    %3 = tpu.matmul %0, %1, %cst {dimension_numbers = #tpu.dot_dimension_numbers<[1], [0], [0], [1], [0, 0, 1, 1], [], []>, precision = #tpu.contract_precision<fp32>} : vector<8x128xf32>, vector<128x128xf32>, vector<8x128xf32> -> vector<8x128xf32>
    %4 = vector.broadcast %2 : vector<1x128xf32> to vector<8x128xf32>
    %5 = arith.addf %3, %4 : vector<8x128xf32>
    %cst_5 = arith.constant 0.000000e+00 : f32
    %6 = vector.broadcast %cst_5 : f32 to vector<8x128xf32>
    %7 = arith.maximumf %5, %6 : vector<8x128xf32>
    %c0_6 = arith.constant 0 : index
    %c0_7 = arith.constant 0 : index
    %8 = vector.load %arg4[%c0_6, %c0_7] : memref<128x128xf32, #tpu.memory_space<vmem>>, vector<128x128xf32>
    %c0_8 = arith.constant 0 : index
    %c0_9 = arith.constant 0 : index
    %9 = vector.load %arg5[%c0_8, %c0_9] : memref<1x128xf32, #tpu.memory_space<vmem>>, vector<1x128xf32>
    %cst_10 = arith.constant dense<0.000000e+00> : vector<8x128xf32>
    %10 = tpu.matmul %7, %8, %cst_10 {dimension_numbers = #tpu.dot_dimension_numbers<[1], [0], [0], [1], [0, 0, 1, 1], [], []>, precision = #tpu.contract_precision<fp32>} : vector<8x128xf32>, vector<128x128xf32>, vector<8x128xf32> -> vector<8x128xf32>
    %11 = vector.broadcast %9 : vector<1x128xf32> to vector<8x128xf32>
    %12 = arith.addf %10, %11 : vector<8x128xf32>
    %cst_11 = arith.constant 0.000000e+00 : f32
    %13 = vector.broadcast %cst_11 : f32 to vector<8x128xf32>
    %14 = arith.maximumf %12, %13 : vector<8x128xf32>
    %c0_12 = arith.constant 0 : index
    %c0_13 = arith.constant 0 : index
    %15 = vector.load %arg6[%c0_12, %c0_13] : memref<128x128xf32, #tpu.memory_space<vmem>>, vector<128x128xf32>
    %c0_14 = arith.constant 0 : index
    %c0_15 = arith.constant 0 : index
    %16 = vector.load %arg7[%c0_14, %c0_15] : memref<1x128xf32, #tpu.memory_space<vmem>>, vector<1x128xf32>
    %cst_16 = arith.constant dense<0.000000e+00> : vector<8x128xf32>
    %17 = tpu.matmul %14, %15, %cst_16 {dimension_numbers = #tpu.dot_dimension_numbers<[1], [0], [0], [1], [0, 0, 1, 1], [], []>, precision = #tpu.contract_precision<fp32>} : vector<8x128xf32>, vector<128x128xf32>, vector<8x128xf32> -> vector<8x128xf32>
    %18 = vector.broadcast %16 : vector<1x128xf32> to vector<8x128xf32>
    %19 = arith.addf %17, %18 : vector<8x128xf32>
    %cst_17 = arith.constant 0.000000e+00 : f32
    %20 = vector.broadcast %cst_17 : f32 to vector<8x128xf32>
    %21 = arith.maximumf %19, %20 : vector<8x128xf32>
    %c0_18 = arith.constant 0 : index
    %c0_19 = arith.constant 0 : index
    %22 = vector.load %arg8[%c0_18, %c0_19] : memref<128x128xf32, #tpu.memory_space<vmem>>, vector<128x128xf32>
    %c0_20 = arith.constant 0 : index
    %c0_21 = arith.constant 0 : index
    %23 = vector.load %arg9[%c0_20, %c0_21] : memref<1x128xf32, #tpu.memory_space<vmem>>, vector<1x128xf32>
    %cst_22 = arith.constant dense<0.000000e+00> : vector<8x128xf32>
    %24 = tpu.matmul %21, %22, %cst_22 {dimension_numbers = #tpu.dot_dimension_numbers<[1], [0], [0], [1], [0, 0, 1, 1], [], []>, precision = #tpu.contract_precision<fp32>} : vector<8x128xf32>, vector<128x128xf32>, vector<8x128xf32> -> vector<8x128xf32>
    %25 = vector.broadcast %23 : vector<1x128xf32> to vector<8x128xf32>
    %26 = arith.addf %24, %25 : vector<8x128xf32>
    %c0_23 = arith.constant 0 : index
    %c0_24 = arith.constant 0 : index
    %27 = vector.load %arg10[%c0_23, %c0_24] : memref<8x128xf32, #tpu.memory_space<vmem>>, vector<8x128xf32>
    tpu.vector_store %arg10[%c0_23, %c0_24], %26 {strides = array<i32>} : memref<8x128xf32, #tpu.memory_space<vmem>>, vector<8x128xf32>,
    return
  }
  func.func @transform_0(%arg0: i32) -> (i32, i32) {
    %c0_i32 = arith.constant 0 : i32
    %c0_i32_0 = arith.constant 0 : i32
    return %arg0, %c0_i32 : i32, i32
  }
  func.func @transform_1(%arg0: i32) -> (i32, i32) {
    %c0_i32 = arith.constant 0 : i32
    %c0_i32_0 = arith.constant 0 : i32
    %c0_i32_1 = arith.constant 0 : i32
    return %c0_i32, %c0_i32_0 : i32, i32
  }
  func.func @transform_2(%arg0: i32) -> (i32, i32) {
    %c0_i32 = arith.constant 0 : i32
    %c0_i32_0 = arith.constant 0 : i32
    %c0_i32_1 = arith.constant 0 : i32
    return %c0_i32, %c0_i32_0 : i32, i32
  }
  func.func @transform_3(%arg0: i32) -> (i32, i32) {
    %c0_i32 = arith.constant 0 : i32
    %c0_i32_0 = arith.constant 0 : i32
    %c0_i32_1 = arith.constant 0 : i32
    return %c0_i32, %c0_i32_0 : i32, i32
  }
  func.func @transform_4(%arg0: i32) -> (i32, i32) {
    %c0_i32 = arith.constant 0 : i32
    %c0_i32_0 = arith.constant 0 : i32
    %c0_i32_1 = arith.constant 0 : i32
    return %c0_i32, %c0_i32_0 : i32, i32
  }
  func.func @transform_5(%arg0: i32) -> (i32, i32) {
    %c0_i32 = arith.constant 0 : i32
    %c0_i32_0 = arith.constant 0 : i32
    %c0_i32_1 = arith.constant 0 : i32
    return %c0_i32, %c0_i32_0 : i32, i32
  }
  func.func @transform_6(%arg0: i32) -> (i32, i32) {
    %c0_i32 = arith.constant 0 : i32
    %c0_i32_0 = arith.constant 0 : i32
    %c0_i32_1 = arith.constant 0 : i32
    return %c0_i32, %c0_i32_0 : i32, i32
  }
  func.func @transform_7(%arg0: i32) -> (i32, i32) {
    %c0_i32 = arith.constant 0 : i32
    %c0_i32_0 = arith.constant 0 : i32
    %c0_i32_1 = arith.constant 0 : i32
    return %c0_i32, %c0_i32_0 : i32, i32
  }
  func.func @transform_8(%arg0: i32) -> (i32, i32) {
    %c0_i32 = arith.constant 0 : i32
    %c0_i32_0 = arith.constant 0 : i32
    %c0_i32_1 = arith.constant 0 : i32
    return %c0_i32, %c0_i32_0 : i32, i32
  }
  func.func @transform_9(%arg0: i32) -> (i32, i32) {
    %c0_i32 = arith.constant 0 : i32
    %c0_i32_0 = arith.constant 0 : i32
    return %arg0, %c0_i32 : i32, i32
  }
}

module attributes {stable_mosaic.version = 11 : i64} {
  func.func @_mlp_kernel_unrolled(%arg0: i32, %arg1: memref<8x128xf32, #tpu.memory_space<vmem>>, %arg2: memref<128x128xf32, #tpu.memory_space<vmem>>, %arg3: memref<1x128xf32, #tpu.memory_space<vmem>>, %arg4: memref<128x128xf32, #tpu.memory_space<vmem>>, %arg5: memref<1x128xf32, #tpu.memory_space<vmem>>, %arg6: memref<128x128xf32, #tpu.memory_space<vmem>>, %arg7: memref<1x128xf32, #tpu.memory_space<vmem>>, %arg8: memref<128x128xf32, #tpu.memory_space<vmem>>, %arg9: memref<1x128xf32, #tpu.memory_space<vmem>>, %arg10: memref<8x128xf32, #tpu.memory_space<vmem>>) attributes {dimension_semantics = [#tpu.dimension_semantics<parallel>], iteration_bounds = array<i64: 1>, scalar_prefetch = 0 : i64, scratch_operands = 0 : i64, tpu.core_type = #tpu.core_type<tc>, window_params = [{transform_indices = @transform_0, window_bounds = array<i64: 8, 128>}, {pipeline_mode = #tpu.pipeline_mode<synchronous>, transform_indices = @transform_1, window_bounds = array<i64: 128, 128>}, {pipeline_mode = #tpu.pipeline_mode<synchronous>, transform_indices = @transform_2, window_bounds = array<i64: 1, 128>}, {pipeline_mode = #tpu.pipeline_mode<synchronous>, transform_indices = @transform_3, window_bounds = array<i64: 128, 128>}, {pipeline_mode = #tpu.pipeline_mode<synchronous>, transform_indices = @transform_4, window_bounds = array<i64: 1, 128>}, {pipeline_mode = #tpu.pipeline_mode<synchronous>, transform_indices = @transform_5, window_bounds = array<i64: 128, 128>}, {pipeline_mode = #tpu.pipeline_mode<synchronous>, transform_indices = @transform_6, window_bounds = array<i64: 1, 128>}, {pipeline_mode = #tpu.pipeline_mode<synchronous>, transform_indices = @transform_7, window_bounds = array<i64: 128, 128>}, {pipeline_mode = #tpu.pipeline_mode<synchronous>, transform_indices = @transform_8, window_bounds = array<i64: 1, 128>}, {transform_indices = @transform_9, window_bounds = array<i64: 8, 128>}]} {
    %c0 = arith.constant 0 : index
    %c0_0 = arith.constant 0 : index
    %0 = vector.load %arg1[%c0, %c0_0] : memref<8x128xf32, #tpu.memory_space<vmem>>, vector<8x128xf32>
    %c0_1 = arith.constant 0 : index
    %c0_2 = arith.constant 0 : index
    %1 = vector.load %arg2[%c0_1, %c0_2] : memref<128x128xf32, #tpu.memory_space<vmem>>, vector<128x128xf32>
    %c0_3 = arith.constant 0 : index
    %c0_4 = arith.constant 0 : index
    %2 = vector.load %arg3[%c0_3, %c0_4] : memref<1x128xf32, #tpu.memory_space<vmem>>, vector<1x128xf32>
    %cst = arith.constant dense<0.000000e+00> : vector<8x128xf32>
    %3 = tpu.matmul %0, %1, %cst {dimension_numbers = #tpu.dot_dimension_numbers<[1], [0], [0], [1], [0, 0, 1, 1], [], []>, precision = #tpu.contract_precision<fp32>} : vector<8x128xf32>, vector<128x128xf32>, vector<8x128xf32> -> vector<8x128xf32>
    %4 = vector.broadcast %2 : vector<1x128xf32> to vector<8x128xf32>
    %5 = arith.addf %3, %4 : vector<8x128xf32>
    %cst_5 = arith.constant 0.000000e+00 : f32
    %6 = vector.broadcast %cst_5 : f32 to vector<8x128xf32>
    %7 = arith.maximumf %5, %6 : vector<8x128xf32>
    %c0_6 = arith.constant 0 : index
    %c0_7 = arith.constant 0 : index
    %8 = vector.load %arg4[%c0_6, %c0_7] : memref<128x128xf32, #tpu.memory_space<vmem>>, vector<128x128xf32>
    %c0_8 = arith.constant 0 : index
    %c0_9 = arith.constant 0 : index
    %9 = vector.load %arg5[%c0_8, %c0_9] : memref<1x128xf32, #tpu.memory_space<vmem>>, vector<1x128xf32>
    %cst_10 = arith.constant dense<0.000000e+00> : vector<8x128xf32>
    %10 = tpu.matmul %7, %8, %cst_10 {dimension_numbers = #tpu.dot_dimension_numbers<[1], [0], [0], [1], [0, 0, 1, 1], [], []>, precision = #tpu.contract_precision<fp32>} : vector<8x128xf32>, vector<128x128xf32>, vector<8x128xf32> -> vector<8x128xf32>
    %11 = vector.broadcast %9 : vector<1x128xf32> to vector<8x128xf32>
    %12 = arith.addf %10, %11 : vector<8x128xf32>
    %cst_11 = arith.constant 0.000000e+00 : f32
    %13 = vector.broadcast %cst_11 : f32 to vector<8x128xf32>
    %14 = arith.maximumf %12, %13 : vector<8x128xf32>
    %c0_12 = arith.constant 0 : index
    %c0_13 = arith.constant 0 : index
    %15 = vector.load %arg6[%c0_12, %c0_13] : memref<128x128xf32, #tpu.memory_space<vmem>>, vector<128x128xf32>
    %c0_14 = arith.constant 0 : index
    %c0_15 = arith.constant 0 : index
    %16 = vector.load %arg7[%c0_14, %c0_15] : memref<1x128xf32, #tpu.memory_space<vmem>>, vector<1x128xf32>
    %cst_16 = arith.constant dense<0.000000e+00> : vector<8x128xf32>
    %17 = tpu.matmul %14, %15, %cst_16 {dimension_numbers = #tpu.dot_dimension_numbers<[1], [0], [0], [1], [0, 0, 1, 1], [], []>, precision = #tpu.contract_precision<fp32>} : vector<8x128xf32>, vector<128x128xf32>, vector<8x128xf32> -> vector<8x128xf32>
    %18 = vector.broadcast %16 : vector<1x128xf32> to vector<8x128xf32>
    %19 = arith.addf %17, %18 : vector<8x128xf32>
    %cst_17 = arith.constant 0.000000e+00 : f32
    %20 = vector.broadcast %cst_17 : f32 to vector<8x128xf32>
    %21 = arith.maximumf %19, %20 : vector<8x128xf32>
    %c0_18 = arith.constant 0 : index
    %c0_19 = arith.constant 0 : index
    %22 = vector.load %arg8[%c0_18, %c0_19] : memref<128x128xf32, #tpu.memory_space<vmem>>, vector<128x128xf32>
    %c0_20 = arith.constant 0 : index
    %c0_21 = arith.constant 0 : index
    %23 = vector.load %arg9[%c0_20, %c0_21] : memref<1x128xf32, #tpu.memory_space<vmem>>, vector<1x128xf32>
    %cst_22 = arith.constant dense<0.000000e+00> : vector<8x128xf32>
    %24 = tpu.matmul %21, %22, %cst_22 {dimension_numbers = #tpu.dot_dimension_numbers<[1], [0], [0], [1], [0, 0, 1, 1], [], []>, precision = #tpu.contract_precision<fp32>} : vector<8x128xf32>, vector<128x128xf32>, vector<8x128xf32> -> vector<8x128xf32>
    %25 = vector.broadcast %23 : vector<1x128xf32> to vector<8x128xf32>
    %26 = arith.addf %24, %25 : vector<8x128xf32>
    %c0_23 = arith.constant 0 : index
    %c0_24 = arith.constant 0 : index
    %27 = vector.load %arg10[%c0_23, %c0_24] : memref<8x128xf32, #tpu.memory_space<vmem>>, vector<8x128xf32>
    tpu.vector_store %arg10[%c0_23, %c0_24], %26 {strides = array<i32>} : memref<8x128xf32, #tpu.memory_space<vmem>>, vector<8x128xf32>,
    return
  }
  func.func @transform_0(%arg0: i32) -> (i32, i32) {
    %c0_i32 = arith.constant 0 : i32
    %c0_i32_0 = arith.constant 0 : i32
    return %arg0, %c0_i32 : i32, i32
  }
  func.func @transform_1(%arg0: i32) -> (i32, i32) {
    %c0_i32 = arith.constant 0 : i32
    %c0_i32_0 = arith.constant 0 : i32
    %c0_i32_1 = arith.constant 0 : i32
    return %c0_i32, %c0_i32_0 : i32, i32
  }
  func.func @transform_2(%arg0: i32) -> (i32, i32) {
    %c0_i32 = arith.constant 0 : i32
    %c0_i32_0 = arith.constant 0 : i32
    %c0_i32_1 = arith.constant 0 : i32
    return %c0_i32, %c0_i32_0 : i32, i32
  }
  func.func @transform_3(%arg0: i32) -> (i32, i32) {
    %c0_i32 = arith.constant 0 : i32
    %c0_i32_0 = arith.constant 0 : i32
    %c0_i32_1 = arith.constant 0 : i32
    return %c0_i32, %c0_i32_0 : i32, i32
  }
  func.func @transform_4(%arg0: i32) -> (i32, i32) {
    %c0_i32 = arith.constant 0 : i32
    %c0_i32_0 = arith.constant 0 : i32
    %c0_i32_1 = arith.constant 0 : i32
    return %c0_i32, %c0_i32_0 : i32, i32
  }
  func.func @transform_5(%arg0: i32) -> (i32, i32) {
    %c0_i32 = arith.constant 0 : i32
    %c0_i32_0 = arith.constant 0 : i32
    %c0_i32_1 = arith.constant 0 : i32
    return %c0_i32, %c0_i32_0 : i32, i32
  }
  func.func @transform_6(%arg0: i32) -> (i32, i32) {
    %c0_i32 = arith.constant 0 : i32
    %c0_i32_0 = arith.constant 0 : i32
    %c0_i32_1 = arith.constant 0 : i32
    return %c0_i32, %c0_i32_0 : i32, i32
  }
  func.func @transform_7(%arg0: i32) -> (i32, i32) {
    %c0_i32 = arith.constant 0 : i32
    %c0_i32_0 = arith.constant 0 : i32
    %c0_i32_1 = arith.constant 0 : i32
    return %c0_i32, %c0_i32_0 : i32, i32
  }
  func.func @transform_8(%arg0: i32) -> (i32, i32) {
    %c0_i32 = arith.constant 0 : i32
    %c0_i32_0 = arith.constant 0 : i32
    %c0_i32_1 = arith.constant 0 : i32
    return %c0_i32, %c0_i32_0 : i32, i32
  }
  func.func @transform_9(%arg0: i32) -> (i32, i32) {
    %c0_i32 = arith.constant 0 : i32
    %c0_i32_0 = arith.constant 0 : i32
    return %arg0, %c0_i32 : i32, i32
  }
}

module attributes {stable_mosaic.version = 11 : i64} {
  func.func @_mlp_kernel_unrolled(%arg0: i32, %arg1: memref<8x128xf32, #tpu.memory_space<vmem>>, %arg2: memref<128x128xf32, #tpu.memory_space<vmem>>, %arg3: memref<1x128xf32, #tpu.memory_space<vmem>>, %arg4: memref<128x128xf32, #tpu.memory_space<vmem>>, %arg5: memref<1x128xf32, #tpu.memory_space<vmem>>, %arg6: memref<128x128xf32, #tpu.memory_space<vmem>>, %arg7: memref<1x128xf32, #tpu.memory_space<vmem>>, %arg8: memref<128x128xf32, #tpu.memory_space<vmem>>, %arg9: memref<1x128xf32, #tpu.memory_space<vmem>>, %arg10: memref<8x128xf32, #tpu.memory_space<vmem>>) attributes {dimension_semantics = [#tpu.dimension_semantics<parallel>], iteration_bounds = array<i64: 1>, scalar_prefetch = 0 : i64, scratch_operands = 0 : i64, tpu.core_type = #tpu.core_type<tc>, window_params = [{transform_indices = @transform_0, window_bounds = array<i64: 8, 128>}, {pipeline_mode = #tpu.pipeline_mode<synchronous>, transform_indices = @transform_1, window_bounds = array<i64: 128, 128>}, {pipeline_mode = #tpu.pipeline_mode<synchronous>, transform_indices = @transform_2, window_bounds = array<i64: 1, 128>}, {pipeline_mode = #tpu.pipeline_mode<synchronous>, transform_indices = @transform_3, window_bounds = array<i64: 128, 128>}, {pipeline_mode = #tpu.pipeline_mode<synchronous>, transform_indices = @transform_4, window_bounds = array<i64: 1, 128>}, {pipeline_mode = #tpu.pipeline_mode<synchronous>, transform_indices = @transform_5, window_bounds = array<i64: 128, 128>}, {pipeline_mode = #tpu.pipeline_mode<synchronous>, transform_indices = @transform_6, window_bounds = array<i64: 1, 128>}, {pipeline_mode = #tpu.pipeline_mode<synchronous>, transform_indices = @transform_7, window_bounds = array<i64: 128, 128>}, {pipeline_mode = #tpu.pipeline_mode<synchronous>, transform_indices = @transform_8, window_bounds = array<i64: 1, 128>}, {transform_indices = @transform_9, window_bounds = array<i64: 8, 128>}]} {
    %c0 = arith.constant 0 : index
    %c0_0 = arith.constant 0 : index
    %0 = vector.load %arg1[%c0, %c0_0] : memref<8x128xf32, #tpu.memory_space<vmem>>, vector<8x128xf32>
    %c0_1 = arith.constant 0 : index
    %c0_2 = arith.constant 0 : index
    %1 = vector.load %arg2[%c0_1, %c0_2] : memref<128x128xf32, #tpu.memory_space<vmem>>, vector<128x128xf32>
    %c0_3 = arith.constant 0 : index
    %c0_4 = arith.constant 0 : index
    %2 = vector.load %arg3[%c0_3, %c0_4] : memref<1x128xf32, #tpu.memory_space<vmem>>, vector<1x128xf32>
    %cst = arith.constant dense<0.000000e+00> : vector<8x128xf32>
    %3 = tpu.matmul %0, %1, %cst {dimension_numbers = #tpu.dot_dimension_numbers<[1], [0], [0], [1], [0, 0, 1, 1], [], []>, precision = #tpu.contract_precision<fp32>} : vector<8x128xf32>, vector<128x128xf32>, vector<8x128xf32> -> vector<8x128xf32>
    %4 = vector.broadcast %2 : vector<1x128xf32> to vector<8x128xf32>
    %5 = arith.addf %3, %4 : vector<8x128xf32>
    %cst_5 = arith.constant 0.000000e+00 : f32
    %6 = vector.broadcast %cst_5 : f32 to vector<8x128xf32>
    %7 = arith.maximumf %5, %6 : vector<8x128xf32>
    %c0_6 = arith.constant 0 : index
    %c0_7 = arith.constant 0 : index
    %8 = vector.load %arg4[%c0_6, %c0_7] : memref<128x128xf32, #tpu.memory_space<vmem>>, vector<128x128xf32>
    %c0_8 = arith.constant 0 : index
    %c0_9 = arith.constant 0 : index
    %9 = vector.load %arg5[%c0_8, %c0_9] : memref<1x128xf32, #tpu.memory_space<vmem>>, vector<1x128xf32>
    %cst_10 = arith.constant dense<0.000000e+00> : vector<8x128xf32>
    %10 = tpu.matmul %7, %8, %cst_10 {dimension_numbers = #tpu.dot_dimension_numbers<[1], [0], [0], [1], [0, 0, 1, 1], [], []>, precision = #tpu.contract_precision<fp32>} : vector<8x128xf32>, vector<128x128xf32>, vector<8x128xf32> -> vector<8x128xf32>
    %11 = vector.broadcast %9 : vector<1x128xf32> to vector<8x128xf32>
    %12 = arith.addf %10, %11 : vector<8x128xf32>
    %cst_11 = arith.constant 0.000000e+00 : f32
    %13 = vector.broadcast %cst_11 : f32 to vector<8x128xf32>
    %14 = arith.maximumf %12, %13 : vector<8x128xf32>
    %c0_12 = arith.constant 0 : index
    %c0_13 = arith.constant 0 : index
    %15 = vector.load %arg6[%c0_12, %c0_13] : memref<128x128xf32, #tpu.memory_space<vmem>>, vector<128x128xf32>
    %c0_14 = arith.constant 0 : index
    %c0_15 = arith.constant 0 : index
    %16 = vector.load %arg7[%c0_14, %c0_15] : memref<1x128xf32, #tpu.memory_space<vmem>>, vector<1x128xf32>
    %cst_16 = arith.constant dense<0.000000e+00> : vector<8x128xf32>
    %17 = tpu.matmul %14, %15, %cst_16 {dimension_numbers = #tpu.dot_dimension_numbers<[1], [0], [0], [1], [0, 0, 1, 1], [], []>, precision = #tpu.contract_precision<fp32>} : vector<8x128xf32>, vector<128x128xf32>, vector<8x128xf32> -> vector<8x128xf32>
    %18 = vector.broadcast %16 : vector<1x128xf32> to vector<8x128xf32>
    %19 = arith.addf %17, %18 : vector<8x128xf32>
    %cst_17 = arith.constant 0.000000e+00 : f32
    %20 = vector.broadcast %cst_17 : f32 to vector<8x128xf32>
    %21 = arith.maximumf %19, %20 : vector<8x128xf32>
    %c0_18 = arith.constant 0 : index
    %c0_19 = arith.constant 0 : index
    %22 = vector.load %arg8[%c0_18, %c0_19] : memref<128x128xf32, #tpu.memory_space<vmem>>, vector<128x128xf32>
    %c0_20 = arith.constant 0 : index
    %c0_21 = arith.constant 0 : index
    %23 = vector.load %arg9[%c0_20, %c0_21] : memref<1x128xf32, #tpu.memory_space<vmem>>, vector<1x128xf32>
    %cst_22 = arith.constant dense<0.000000e+00> : vector<8x128xf32>
    %24 = tpu.matmul %21, %22, %cst_22 {dimension_numbers = #tpu.dot_dimension_numbers<[1], [0], [0], [1], [0, 0, 1, 1], [], []>, precision = #tpu.contract_precision<fp32>} : vector<8x128xf32>, vector<128x128xf32>, vector<8x128xf32> -> vector<8x128xf32>
    %25 = vector.broadcast %23 : vector<1x128xf32> to vector<8x128xf32>
    %26 = arith.addf %24, %25 : vector<8x128xf32>
    %c0_23 = arith.constant 0 : index
    %c0_24 = arith.constant 0 : index
    %27 = vector.load %arg10[%c0_23, %c0_24] : memref<8x128xf32, #tpu.memory_space<vmem>>, vector<8x128xf32>
    tpu.vector_store %arg10[%c0_23, %c0_24], %26 {strides = array<i32>} : memref<8x128xf32, #tpu.memory_space<vmem>>, vector<8x128xf32>,
    return
  }
  func.func @transform_0(%arg0: i32) -> (i32, i32) {
    %c0_i32 = arith.constant 0 : i32
    %c0_i32_0 = arith.constant 0 : i32
    return %arg0, %c0_i32 : i32, i32
  }
  func.func @transform_1(%arg0: i32) -> (i32, i32) {
    %c0_i32 = arith.constant 0 : i32
    %c0_i32_0 = arith.constant 0 : i32
    %c0_i32_1 = arith.constant 0 : i32
    return %c0_i32, %c0_i32_0 : i32, i32
  }
  func.func @transform_2(%arg0: i32) -> (i32, i32) {
    %c0_i32 = arith.constant 0 : i32
    %c0_i32_0 = arith.constant 0 : i32
    %c0_i32_1 = arith.constant 0 : i32
    return %c0_i32, %c0_i32_0 : i32, i32
  }
  func.func @transform_3(%arg0: i32) -> (i32, i32) {
    %c0_i32 = arith.constant 0 : i32
    %c0_i32_0 = arith.constant 0 : i32
    %c0_i32_1 = arith.constant 0 : i32
    return %c0_i32, %c0_i32_0 : i32, i32
  }
  func.func @transform_4(%arg0: i32) -> (i32, i32) {
    %c0_i32 = arith.constant 0 : i32
    %c0_i32_0 = arith.constant 0 : i32
    %c0_i32_1 = arith.constant 0 : i32
    return %c0_i32, %c0_i32_0 : i32, i32
  }
  func.func @transform_5(%arg0: i32) -> (i32, i32) {
    %c0_i32 = arith.constant 0 : i32
    %c0_i32_0 = arith.constant 0 : i32
    %c0_i32_1 = arith.constant 0 : i32
    return %c0_i32, %c0_i32_0 : i32, i32
  }
  func.func @transform_6(%arg0: i32) -> (i32, i32) {
    %c0_i32 = arith.constant 0 : i32
    %c0_i32_0 = arith.constant 0 : i32
    %c0_i32_1 = arith.constant 0 : i32
    return %c0_i32, %c0_i32_0 : i32, i32
  }
  func.func @transform_7(%arg0: i32) -> (i32, i32) {
    %c0_i32 = arith.constant 0 : i32
    %c0_i32_0 = arith.constant 0 : i32
    %c0_i32_1 = arith.constant 0 : i32
    return %c0_i32, %c0_i32_0 : i32, i32
  }
  func.func @transform_8(%arg0: i32) -> (i32, i32) {
    %c0_i32 = arith.constant 0 : i32
    %c0_i32_0 = arith.constant 0 : i32
    %c0_i32_1 = arith.constant 0 : i32
    return %c0_i32, %c0_i32_0 : i32, i32
  }
  func.func @transform_9(%arg0: i32) -> (i32, i32) {
    %c0_i32 = arith.constant 0 : i32
    %c0_i32_0 = arith.constant 0 : i32
    return %arg0, %c0_i32 : i32, i32
  }
}

</mosaic_0001>

<llo_original>
// kernel: mlp_forward.1
$region0: #{mlp_forward.1}
  #allocation0 [shape = 'u32[]', space=smem, size = 0x4, offset = 0x4, fixed_abs, tag = 'smem constant byte address 0x4 - core index']
  #allocation1 [shape = 'u32[144,128]{1,0:T(1,128)}', space=vmem, size = 0x12000, scoped, tag = 'internal scratch']
  %s0 = inlined_call_operand.vmem [shape: f32[8,128], index: 0, kind: input, shape index: {}]
  %s1 = inlined_call_operand.vmem [shape: f32[128,128], index: 1, kind: input, shape index: {}]
  %s2 = inlined_call_operand.vmem [shape: f32[1,128], index: 2, kind: input, shape index: {}]
  %s3 = inlined_call_operand.vmem [shape: f32[128,128], index: 3, kind: input, shape index: {}]
  %s4 = inlined_call_operand.vmem [shape: f32[1,128], index: 4, kind: input, shape index: {}]
  %s5 = inlined_call_operand.vmem [shape: f32[128,128], index: 5, kind: input, shape index: {}]
  %s6 = inlined_call_operand.vmem [shape: f32[1,128], index: 6, kind: input, shape index: {}]
  %s7 = inlined_call_operand.vmem [shape: f32[128,128], index: 7, kind: input, shape index: {}]
  %s8 = inlined_call_operand.vmem [shape: f32[1,128], index: 8, kind: input, shape index: {}]
  %s9 = inlined_call_operand.vmem [shape: f32[8,128], index: 9, kind: output, shape index: {}]
  %s10 = sld [smem:[#allocation0]]
  $region46: #{mlp_forward.1} parent=0
    _
  %s12 = ssub.s32 1, %s10
  %s13 = scalar_select 0, %s12, %s10
  // Predicated region
  $region2: #{mlp_forward.1} parent=0 // pred_check
    _
  $region3: #{mlp_forward.1} parent=0 // pred_check_branch
    %15 = sbr.rel (0) target = $region5
  $region4: #{mlp_forward.1} parent=0 // pred_region
    _
  $region5: #{mlp_forward.1} parent=0 // pred_fallthru
    _
  // Predicated region
  $region6: #{mlp_forward.1} parent=0 // pred_check
    _
  $region7: #{mlp_forward.1} parent=0 // pred_check_branch
    %17 = sbr.rel (0) target = $region9
  $region8: #{mlp_forward.1} parent=0 // pred_region
    _
  $region9: #{mlp_forward.1} parent=0 // pred_fallthru
    _
  // Predicated region
  $region10: #{mlp_forward.1} parent=0 // pred_check
    _
  $region11: #{mlp_forward.1} parent=0 // pred_check_branch
    %19 = sbr.rel (0) target = $region13
  $region12: #{mlp_forward.1} parent=0 // pred_region
    _
  $region13: #{mlp_forward.1} parent=0 // pred_fallthru
    _
  // Predicated region
  $region14: #{mlp_forward.1} parent=0 // pred_check
    _
  $region15: #{mlp_forward.1} parent=0 // pred_check_branch
    %21 = sbr.rel (0) target = $region17
  $region16: #{mlp_forward.1} parent=0 // pred_region
    _
  $region17: #{mlp_forward.1} parent=0 // pred_fallthru
    _
  // Predicated region
  $region18: #{mlp_forward.1} parent=0 // pred_check
    _
  $region19: #{mlp_forward.1} parent=0 // pred_check_branch
    %23 = sbr.rel (0) target = $region21
  $region20: #{mlp_forward.1} parent=0 // pred_region
    _
  $region21: #{mlp_forward.1} parent=0 // pred_fallthru
    _
  // Predicated region
  $region22: #{mlp_forward.1} parent=0 // pred_check
    _
  $region23: #{mlp_forward.1} parent=0 // pred_check_branch
    %25 = sbr.rel (0) target = $region25
  $region24: #{mlp_forward.1} parent=0 // pred_region
    _
  $region25: #{mlp_forward.1} parent=0 // pred_fallthru
    _
  // Predicated region
  $region26: #{mlp_forward.1} parent=0 // pred_check
    _
  $region27: #{mlp_forward.1} parent=0 // pred_check_branch
    %27 = sbr.rel (0) target = $region29
  $region28: #{mlp_forward.1} parent=0 // pred_region
    _
  $region29: #{mlp_forward.1} parent=0 // pred_fallthru
    _
  // Predicated region
  $region30: #{mlp_forward.1} parent=0 // pred_check
    _
  $region31: #{mlp_forward.1} parent=0 // pred_check_branch
    %29 = sbr.rel (0) target = $region33
  $region32: #{mlp_forward.1} parent=0 // pred_region
    _
  $region33: #{mlp_forward.1} parent=0 // pred_fallthru
    _
  // Predicated region
  $region34: #{mlp_forward.1} parent=0 // pred_check
    _
  $region35: #{mlp_forward.1} parent=0 // pred_check_branch
    %31 = sbr.rel (0) target = $region37
  $region36: #{mlp_forward.1} parent=0 // pred_region
    _
  $region37: #{mlp_forward.1} parent=0 // pred_fallthru
    _
  %v32 = vld [vmem:[%s0] sm:$0xff]
  %v33 = vld [vmem:[%s1] sm:$0xff]
  %v34 = vld [vmem:[%s1 + $0x8] sm:$0xff]
  %v35 = vld [vmem:[%s1 + $0x10] sm:$0xff]
  %v36 = vld [vmem:[%s1 + $0x18] sm:$0xff]
  %v37 = vld [vmem:[%s1 + $0x20] sm:$0xff]
  %v38 = vld [vmem:[%s1 + $0x28] sm:$0xff]
  %v39 = vld [vmem:[%s1 + $0x30] sm:$0xff]
  %v40 = vld [vmem:[%s1 + $0x38] sm:$0xff]
  %v41 = vld [vmem:[%s1 + $0x40] sm:$0xff]
  %v42 = vld [vmem:[%s1 + $0x48] sm:$0xff]
  %v43 = vld [vmem:[%s1 + $0x50] sm:$0xff]
  %v44 = vld [vmem:[%s1 + $0x58] sm:$0xff]
  %v45 = vld [vmem:[%s1 + $0x60] sm:$0xff]
  %v46 = vld [vmem:[%s1 + $0x68] sm:$0xff]
  %v47 = vld [vmem:[%s1 + $0x70] sm:$0xff]
  %v48 = vld [vmem:[%s1 + $0x78] sm:$0xff]
  %v49 = vld [vmem:[%s2] sm:$0x1]
  %v51 = vlaneseq
  %v52 = vshrl.u32 %v51, 7
  %v53 = vsub.s32 0, %v52
  %v54 = vrot.slane %v49, %v53
  %56 = vmatprep.subr.mxu0 0.0
  %v57 = vand.u32 %v48, 4294901760
  %58 = vmatpush1.msra.mxu0 %v57
  %59 = vmatprep.subr.mxu0 0.0
  %v60 = vand.u32 %v47, 4294901760
  %61 = vmatpush1.msra.mxu0 %v60
  %62 = vmatprep.subr.mxu0 0.0
  %v63 = vand.u32 %v46, 4294901760
  %64 = vmatpush1.msra.mxu0 %v63
  %65 = vmatprep.subr.mxu0 0.0
  %v66 = vand.u32 %v45, 4294901760
  %67 = vmatpush1.msra.mxu0 %v66
  %68 = vmatprep.subr.mxu0 0.0
  %v69 = vand.u32 %v44, 4294901760
  %70 = vmatpush1.msra.mxu0 %v69
  %71 = vmatprep.subr.mxu0 0.0
  %v72 = vand.u32 %v43, 4294901760
  %73 = vmatpush1.msra.mxu0 %v72
  %74 = vmatprep.subr.mxu0 0.0
  %v75 = vand.u32 %v42, 4294901760
  %76 = vmatpush1.msra.mxu0 %v75
  %77 = vmatprep.subr.mxu0 0.0
  %v78 = vand.u32 %v41, 4294901760
  %79 = vmatpush1.msra.mxu0 %v78
  %80 = vmatprep.subr.mxu0 0.0
  %v81 = vand.u32 %v40, 4294901760
  %82 = vmatpush1.msra.mxu0 %v81
  %83 = vmatprep.subr.mxu0 0.0
  %v84 = vand.u32 %v39, 4294901760
  %85 = vmatpush1.msra.mxu0 %v84
  %86 = vmatprep.subr.mxu0 0.0
  %v87 = vand.u32 %v38, 4294901760
  %88 = vmatpush1.msra.mxu0 %v87
  %89 = vmatprep.subr.mxu0 0.0
  %v90 = vand.u32 %v37, 4294901760
  %91 = vmatpush1.msra.mxu0 %v90
  %92 = vmatprep.subr.mxu0 0.0
  %v93 = vand.u32 %v36, 4294901760
  %94 = vmatpush1.msra.mxu0 %v93
  %95 = vmatprep.subr.mxu0 0.0
  %v96 = vand.u32 %v35, 4294901760
  %97 = vmatpush1.msra.mxu0 %v96
  %98 = vmatprep.subr.mxu0 0.0
  %v99 = vand.u32 %v34, 4294901760
  %100 = vmatpush1.msra.mxu0 %v99
  %101 = vmatprep.subr.mxu0 0.0
  %v102 = vand.u32 %v33, 4294901760
  %103 = vmatpush1.msra.mxu0 %v102
  %104 = vmatprep.subr.mxu0 0.0
  %105 = vmatpush2.msra.mxu0 0.0
  %106 = vmatprep.subr.mxu0 0.0
  %107 = vmatpush2.msra.mxu0 0.0
  %108 = vmatprep.subr.mxu0 0.0
  %109 = vmatpush2.msra.mxu0 0.0
  %110 = vmatprep.subr.mxu0 0.0
  %111 = vmatpush2.msra.mxu0 0.0
  %112 = vmatprep.subr.mxu0 0.0
  %113 = vmatpush2.msra.mxu0 0.0
  %114 = vmatprep.subr.mxu0 0.0
  %115 = vmatpush2.msra.mxu0 0.0
  %116 = vmatprep.subr.mxu0 0.0
  %117 = vmatpush2.msra.mxu0 0.0
  %118 = vmatprep.subr.mxu0 0.0
  %119 = vmatpush2.msra.mxu0 0.0
  %120 = vmatprep.subr.mxu0 0.0
  %121 = vmatpush2.msra.mxu0 0.0
  %122 = vmatprep.subr.mxu0 0.0
  %123 = vmatpush2.msra.mxu0 0.0
  %124 = vmatprep.subr.mxu0 0.0
  %125 = vmatpush2.msra.mxu0 0.0
  %126 = vmatprep.subr.mxu0 0.0
  %127 = vmatpush2.msra.mxu0 0.0
  %128 = vmatprep.subr.mxu0 0.0
  %129 = vmatpush2.msra.mxu0 0.0
  %130 = vmatprep.subr.mxu0 0.0
  %131 = vmatpush2.msra.mxu0 0.0
  %132 = vmatprep.subr.mxu0 0.0
  %133 = vmatpush2.msra.mxu0 0.0
  %134 = vmatprep.subr.mxu0 0.0
  %135 = vmatpush2.msra.mxu0 0.0
  %136 = vmatprep.mubr.f32.mxu0 0.0
  %v137 = vand.u32 %v32, 4294901760
  %v138 = vsub.f32 %v32, %v137
  %v139 = vand.u32 %v138, 4294901760
  %v140 = vsub.f32 %v138, %v139
  %v141 = vand.u32 %v140, 4294901760
  %142 = vmatmul.mubr.f32.gmra.mxu0 %v141
  %v143 = vpop.f32.mrf.mxu0
  %v144 = vadd.f32 %v54, %v143
  %v145 = vpop.f32.mrf.mxu0
  %146 = vdwg.mxu0
  %147 = vmatprep.subr.mxu0 0.0
  %v148 = vand.u32 %v48, 4294901760
  %v149 = vsub.f32 %v48, %v148
  %v150 = vand.u32 %v149, 4294901760
  %v151 = vsub.f32 %v149, %v150
  %v152 = vand.u32 %v151, 4294901760
  %153 = vmatpush1.msra.mxu0 %v152
  %154 = vmatprep.subr.mxu0 0.0
  %v155 = vand.u32 %v47, 4294901760
  %v156 = vsub.f32 %v47, %v155
  %v157 = vand.u32 %v156, 4294901760
  %v158 = vsub.f32 %v156, %v157
  %v159 = vand.u32 %v158, 4294901760
  %160 = vmatpush1.msra.mxu0 %v159
  %161 = vmatprep.subr.mxu0 0.0
  %v162 = vand.u32 %v46, 4294901760
  %v163 = vsub.f32 %v46, %v162
  %v164 = vand.u32 %v163, 4294901760
  %v165 = vsub.f32 %v163, %v164
  %v166 = vand.u32 %v165, 4294901760
  %167 = vmatpush1.msra.mxu0 %v166
  %168 = vmatprep.subr.mxu0 0.0
  %v169 = vand.u32 %v45, 4294901760
  %v170 = vsub.f32 %v45, %v169
  %v171 = vand.u32 %v170, 4294901760
  %v172 = vsub.f32 %v170, %v171
  %v173 = vand.u32 %v172, 4294901760
  %174 = vmatpush1.msra.mxu0 %v173
  %175 = vmatprep.subr.mxu0 0.0
  %v176 = vand.u32 %v44, 4294901760
  %v177 = vsub.f32 %v44, %v176
  %v178 = vand.u32 %v177, 4294901760
  %v179 = vsub.f32 %v177, %v178
  %v180 = vand.u32 %v179, 4294901760
  %181 = vmatpush1.msra.mxu0 %v180
  %182 = vmatprep.subr.mxu0 0.0
  %v183 = vand.u32 %v43, 4294901760
  %v184 = vsub.f32 %v43, %v183
  %v185 = vand.u32 %v184, 4294901760
  %v186 = vsub.f32 %v184, %v185
  %v187 = vand.u32 %v186, 4294901760
  %188 = vmatpush1.msra.mxu0 %v187
  %189 = vmatprep.subr.mxu0 0.0
  %v190 = vand.u32 %v42, 4294901760
  %v191 = vsub.f32 %v42, %v190
  %v192 = vand.u32 %v191, 4294901760
  %v193 = vsub.f32 %v191, %v192
  %v194 = vand.u32 %v193, 4294901760
  %195 = vmatpush1.msra.mxu0 %v194
  %196 = vmatprep.subr.mxu0 0.0
  %v197 = vand.u32 %v41, 4294901760
  %v198 = vsub.f32 %v41, %v197
  %v199 = vand.u32 %v198, 4294901760
  %v200 = vsub.f32 %v198, %v199
  %v201 = vand.u32 %v200, 4294901760
  %202 = vmatpush1.msra.mxu0 %v201
  %203 = vmatprep.subr.mxu0 0.0
  %v204 = vand.u32 %v40, 4294901760
  %v205 = vsub.f32 %v40, %v204
  %v206 = vand.u32 %v205, 4294901760
  %v207 = vsub.f32 %v205, %v206
  %v208 = vand.u32 %v207, 4294901760
  %209 = vmatpush1.msra.mxu0 %v208
  %210 = vmatprep.subr.mxu0 0.0
  %v211 = vand.u32 %v39, 4294901760
  %v212 = vsub.f32 %v39, %v211
  %v213 = vand.u32 %v212, 4294901760
  %v214 = vsub.f32 %v212, %v213
  %v215 = vand.u32 %v214, 4294901760
  %216 = vmatpush1.msra.mxu0 %v215
  %217 = vmatprep.subr.mxu0 0.0
  %v218 = vand.u32 %v38, 4294901760
  %v219 = vsub.f32 %v38, %v218
  %v220 = vand.u32 %v219, 4294901760
  %v221 = vsub.f32 %v219, %v220
  %v222 = vand.u32 %v221, 4294901760
  %223 = vmatpush1.msra.mxu0 %v222
  %224 = vmatprep.subr.mxu0 0.0
  %v225 = vand.u32 %v37, 4294901760
  %v226 = vsub.f32 %v37, %v225
  %v227 = vand.u32 %v226, 4294901760
  %v228 = vsub.f32 %v226, %v227
  %v229 = vand.u32 %v228, 4294901760
  %230 = vmatpush1.msra.mxu0 %v229
  %231 = vmatprep.subr.mxu0 0.0
  %v232 = vand.u32 %v36, 4294901760
  %v233 = vsub.f32 %v36, %v232
  %v234 = vand.u32 %v233, 4294901760
  %v235 = vsub.f32 %v233, %v234
  %v236 = vand.u32 %v235, 4294901760
  %237 = vmatpush1.msra.mxu0 %v236
  %238 = vmatprep.subr.mxu0 0.0
  %v239 = vand.u32 %v35, 4294901760
  %v240 = vsub.f32 %v35, %v239
  %v241 = vand.u32 %v240, 4294901760
  %v242 = vsub.f32 %v240, %v241
  %v243 = vand.u32 %v242, 4294901760
  %244 = vmatpush1.msra.mxu0 %v243
  %245 = vmatprep.subr.mxu0 0.0
  %v246 = vand.u32 %v34, 4294901760
  %v247 = vsub.f32 %v34, %v246
  %v248 = vand.u32 %v247, 4294901760
  %v249 = vsub.f32 %v247, %v248
  %v250 = vand.u32 %v249, 4294901760
  %251 = vmatpush1.msra.mxu0 %v250
  %252 = vmatprep.subr.mxu0 0.0
  %v253 = vand.u32 %v33, 4294901760
  %v254 = vsub.f32 %v33, %v253
  %v255 = vand.u32 %v254, 4294901760
  %v256 = vsub.f32 %v254, %v255
  %v257 = vand.u32 %v256, 4294901760
  %258 = vmatpush1.msra.mxu0 %v257
  %259 = vmatprep.subr.mxu0 0.0
  %260 = vmatpush2.msra.mxu0 0.0
  %261 = vmatprep.subr.mxu0 0.0
  %262 = vmatpush2.msra.mxu0 0.0
  %263 = vmatprep.subr.mxu0 0.0
  %264 = vmatpush2.msra.mxu0 0.0
  %265 = vmatprep.subr.mxu0 0.0
  %266 = vmatpush2.msra.mxu0 0.0
  %267 = vmatprep.subr.mxu0 0.0
  %268 = vmatpush2.msra.mxu0 0.0
  %269 = vmatprep.subr.mxu0 0.0
  %270 = vmatpush2.msra.mxu0 0.0
  %271 = vmatprep.subr.mxu0 0.0
  %272 = vmatpush2.msra.mxu0 0.0
  %273 = vmatprep.subr.mxu0 0.0
  %274 = vmatpush2.msra.mxu0 0.0
  %275 = vmatprep.subr.mxu0 0.0
  %276 = vmatpush2.msra.mxu0 0.0
  %277 = vmatprep.subr.mxu0 0.0
  %278 = vmatpush2.msra.mxu0 0.0
  %279 = vmatprep.subr.mxu0 0.0
  %280 = vmatpush2.msra.mxu0 0.0
  %281 = vmatprep.subr.mxu0 0.0
  %282 = vmatpush2.msra.mxu0 0.0
  %283 = vmatprep.subr.mxu0 0.0
  %284 = vmatpush2.msra.mxu0 0.0
  %285 = vmatprep.subr.mxu0 0.0
  %286 = vmatpush2.msra.mxu0 0.0
  %287 = vmatprep.subr.mxu0 0.0
  %288 = vmatpush2.msra.mxu0 0.0
  %289 = vmatprep.subr.mxu0 0.0
  %290 = vmatpush2.msra.mxu0 0.0
  %291 = vmatprep.mubr.f32.mxu0 0.0
  %v292 = vand.u32 %v32, 4294901760
  %293 = vmatmul.mubr.f32.gmra.mxu0 %v292
  %v294 = vpop.f32.mrf.mxu0
  %v295 = vadd.f32 %v144, %v294
  %v296 = vpop.f32.mrf.mxu0
  %297 = vdwg.mxu0
  %298 = vmatprep.subr.mxu0 0.0
  %v299 = vand.u32 %v48, 4294901760
  %v300 = vsub.f32 %v48, %v299
  %301 = vmatpush1.msra.mxu0 %v300
  %302 = vmatprep.subr.mxu0 0.0
  %v303 = vand.u32 %v47, 4294901760
  %v304 = vsub.f32 %v47, %v303
  %305 = vmatpush1.msra.mxu0 %v304
  %306 = vmatprep.subr.mxu0 0.0
  %v307 = vand.u32 %v46, 4294901760
  %v308 = vsub.f32 %v46, %v307
  %309 = vmatpush1.msra.mxu0 %v308
  %310 = vmatprep.subr.mxu0 0.0
  %v311 = vand.u32 %v45, 4294901760
  %v312 = vsub.f32 %v45, %v311
  %313 = vmatpush1.msra.mxu0 %v312
  %314 = vmatprep.subr.mxu0 0.0
  %v315 = vand.u32 %v44, 4294901760
  %v316 = vsub.f32 %v44, %v315
  %317 = vmatpush1.msra.mxu0 %v316
  %318 = vmatprep.subr.mxu0 0.0
  %v319 = vand.u32 %v43, 4294901760
  %v320 = vsub.f32 %v43, %v319
  %321 = vmatpush1.msra.mxu0 %v320
  %322 = vmatprep.subr.mxu0 0.0
  %v323 = vand.u32 %v42, 4294901760
  %v324 = vsub.f32 %v42, %v323
  %325 = vmatpush1.msra.mxu0 %v324
  %326 = vmatprep.subr.mxu0 0.0
  %v327 = vand.u32 %v41, 4294901760
  %v328 = vsub.f32 %v41, %v327
  %329 = vmatpush1.msra.mxu0 %v328
  %330 = vmatprep.subr.mxu0 0.0
  %v331 = vand.u32 %v40, 4294901760
  %v332 = vsub.f32 %v40, %v331
  %333 = vmatpush1.msra.mxu0 %v332
  %334 = vmatprep.subr.mxu0 0.0
  %v335 = vand.u32 %v39, 4294901760
  %v336 = vsub.f32 %v39, %v335
  %337 = vmatpush1.msra.mxu0 %v336
  %338 = vmatprep.subr.mxu0 0.0
  %v339 = vand.u32 %v38, 4294901760
  %v340 = vsub.f32 %v38, %v339
  %341 = vmatpush1.msra.mxu0 %v340
  %342 = vmatprep.subr.mxu0 0.0
  %v343 = vand.u32 %v37, 4294901760
  %v344 = vsub.f32 %v37, %v343
  %345 = vmatpush1.msra.mxu0 %v344
  %346 = vmatprep.subr.mxu0 0.0
  %v347 = vand.u32 %v36, 4294901760
  %v348 = vsub.f32 %v36, %v347
  %349 = vmatpush1.msra.mxu0 %v348
  %350 = vmatprep.subr.mxu0 0.0
  %v351 = vand.u32 %v35, 4294901760
  %v352 = vsub.f32 %v35, %v351
  %353 = vmatpush1.msra.mxu0 %v352
  %354 = vmatprep.subr.mxu0 0.0
  %v355 = vand.u32 %v34, 4294901760
  %v356 = vsub.f32 %v34, %v355
  %357 = vmatpush1.msra.mxu0 %v356
  %358 = vmatprep.subr.mxu0 0.0
  %v359 = vand.u32 %v33, 4294901760
  %v360 = vsub.f32 %v33, %v359
  %361 = vmatpush1.msra.mxu0 %v360
  %362 = vmatprep.subr.mxu0 0.0
  %363 = vmatpush2.msra.mxu0 0.0
  %364 = vmatprep.subr.mxu0 0.0
  %365 = vmatpush2.msra.mxu0 0.0
  %366 = vmatprep.subr.mxu0 0.0
  %367 = vmatpush2.msra.mxu0 0.0
  %368 = vmatprep.subr.mxu0 0.0
  %369 = vmatpush2.msra.mxu0 0.0
  %370 = vmatprep.subr.mxu0 0.0
  %371 = vmatpush2.msra.mxu0 0.0
  %372 = vmatprep.subr.mxu0 0.0
  %373 = vmatpush2.msra.mxu0 0.0
  %374 = vmatprep.subr.mxu0 0.0
  %375 = vmatpush2.msra.mxu0 0.0
  %376 = vmatprep.subr.mxu0 0.0
  %377 = vmatpush2.msra.mxu0 0.0
  %378 = vmatprep.subr.mxu0 0.0
  %379 = vmatpush2.msra.mxu0 0.0
  %380 = vmatprep.subr.mxu0 0.0
  %381 = vmatpush2.msra.mxu0 0.0
  %382 = vmatprep.subr.mxu0 0.0
  %383 = vmatpush2.msra.mxu0 0.0
  %384 = vmatprep.subr.mxu0 0.0
  %385 = vmatpush2.msra.mxu0 0.0
  %386 = vmatprep.subr.mxu0 0.0
  %387 = vmatpush2.msra.mxu0 0.0
  %388 = vmatprep.subr.mxu0 0.0
  %389 = vmatpush2.msra.mxu0 0.0
  %390 = vmatprep.subr.mxu0 0.0
  %391 = vmatpush2.msra.mxu0 0.0
  %392 = vmatprep.subr.mxu0 0.0
  %393 = vmatpush2.msra.mxu0 0.0
  %394 = vmatprep.mubr.f32.mxu0 0.0
  %v395 = vand.u32 %v32, 4294901760
  %v396 = vsub.f32 %v32, %v395
  %397 = vmatmul.mubr.f32.gmra.mxu0 %v396
  %v398 = vpop.f32.mrf.mxu0
  %v399 = vadd.f32 %v295, %v398
  %v400 = vpop.f32.mrf.mxu0
  %401 = vdwg.mxu0
  %402 = vmatprep.subr.mxu0 0.0
  %v403 = vand.u32 %v48, 4294901760
  %404 = vmatpush1.msra.mxu0 %v403
  %405 = vmatprep.subr.mxu0 0.0
  %v406 = vand.u32 %v47, 4294901760
  %407 = vmatpush1.msra.mxu0 %v406
  %408 = vmatprep.subr.mxu0 0.0
  %v409 = vand.u32 %v46, 4294901760
  %410 = vmatpush1.msra.mxu0 %v409
  %411 = vmatprep.subr.mxu0 0.0
  %v412 = vand.u32 %v45, 4294901760
  %413 = vmatpush1.msra.mxu0 %v412
  %414 = vmatprep.subr.mxu0 0.0
  %v415 = vand.u32 %v44, 4294901760
  %416 = vmatpush1.msra.mxu0 %v415
  %417 = vmatprep.subr.mxu0 0.0
  %v418 = vand.u32 %v43, 4294901760
  %419 = vmatpush1.msra.mxu0 %v418
  %420 = vmatprep.subr.mxu0 0.0
  %v421 = vand.u32 %v42, 4294901760
  %422 = vmatpush1.msra.mxu0 %v421
  %423 = vmatprep.subr.mxu0 0.0
  %v424 = vand.u32 %v41, 4294901760
  %425 = vmatpush1.msra.mxu0 %v424
  %426 = vmatprep.subr.mxu0 0.0
  %v427 = vand.u32 %v40, 4294901760
  %428 = vmatpush1.msra.mxu0 %v427
  %429 = vmatprep.subr.mxu0 0.0
  %v430 = vand.u32 %v39, 4294901760
  %431 = vmatpush1.msra.mxu0 %v430
  %432 = vmatprep.subr.mxu0 0.0
  %v433 = vand.u32 %v38, 4294901760
  %434 = vmatpush1.msra.mxu0 %v433
  %435 = vmatprep.subr.mxu0 0.0
  %v436 = vand.u32 %v37, 4294901760
  %437 = vmatpush1.msra.mxu0 %v436
  %438 = vmatprep.subr.mxu0 0.0
  %v439 = vand.u32 %v36, 4294901760
  %440 = vmatpush1.msra.mxu0 %v439
  %441 = vmatprep.subr.mxu0 0.0
  %v442 = vand.u32 %v35, 4294901760
  %443 = vmatpush1.msra.mxu0 %v442
  %444 = vmatprep.subr.mxu0 0.0
  %v445 = vand.u32 %v34, 4294901760
  %446 = vmatpush1.msra.mxu0 %v445
  %447 = vmatprep.subr.mxu0 0.0
  %v448 = vand.u32 %v33, 4294901760
  %449 = vmatpush1.msra.mxu0 %v448
  %450 = vmatprep.subr.mxu0 0.0
  %451 = vmatpush2.msra.mxu0 0.0
  %452 = vmatprep.subr.mxu0 0.0
  %453 = vmatpush2.msra.mxu0 0.0
  %454 = vmatprep.subr.mxu0 0.0
  %455 = vmatpush2.msra.mxu0 0.0
  %456 = vmatprep.subr.mxu0 0.0
  %457 = vmatpush2.msra.mxu0 0.0
  %458 = vmatprep.subr.mxu0 0.0
  %459 = vmatpush2.msra.mxu0 0.0
  %460 = vmatprep.subr.mxu0 0.0
  %461 = vmatpush2.msra.mxu0 0.0
  %462 = vmatprep.subr.mxu0 0.0
  %463 = vmatpush2.msra.mxu0 0.0
  %464 = vmatprep.subr.mxu0 0.0
  %465 = vmatpush2.msra.mxu0 0.0
  %466 = vmatprep.subr.mxu0 0.0
  %467 = vmatpush2.msra.mxu0 0.0
  %468 = vmatprep.subr.mxu0 0.0
  %469 = vmatpush2.msra.mxu0 0.0
  %470 = vmatprep.subr.mxu0 0.0
  %471 = vmatpush2.msra.mxu0 0.0
  %472 = vmatprep.subr.mxu0 0.0
  %473 = vmatpush2.msra.mxu0 0.0
  %474 = vmatprep.subr.mxu0 0.0
  %475 = vmatpush2.msra.mxu0 0.0
  %476 = vmatprep.subr.mxu0 0.0
  %477 = vmatpush2.msra.mxu0 0.0
  %478 = vmatprep.subr.mxu0 0.0
  %479 = vmatpush2.msra.mxu0 0.0
  %480 = vmatprep.subr.mxu0 0.0
  %481 = vmatpush2.msra.mxu0 0.0
  %482 = vmatprep.mubr.f32.mxu0 0.0
  %v483 = vand.u32 %v32, 4294901760
  %v484 = vsub.f32 %v32, %v483
  %v485 = vand.u32 %v484, 4294901760
  %486 = vmatmul.mubr.f32.gmra.mxu0 %v485
  %v487 = vpop.f32.mrf.mxu0
  %v488 = vadd.f32 %v399, %v487
  %v489 = vpop.f32.mrf.mxu0
  %490 = vdwg.mxu0
  %491 = vmatprep.subr.mxu0 0.0
  %v492 = vand.u32 %v48, 4294901760
  %v493 = vsub.f32 %v48, %v492
  %v494 = vand.u32 %v493, 4294901760
  %495 = vmatpush1.msra.mxu0 %v494
  %496 = vmatprep.subr.mxu0 0.0
  %v497 = vand.u32 %v47, 4294901760
  %v498 = vsub.f32 %v47, %v497
  %v499 = vand.u32 %v498, 4294901760
  %500 = vmatpush1.msra.mxu0 %v499
  %501 = vmatprep.subr.mxu0 0.0
  %v502 = vand.u32 %v46, 4294901760
  %v503 = vsub.f32 %v46, %v502
  %v504 = vand.u32 %v503, 4294901760
  %505 = vmatpush1.msra.mxu0 %v504
  %506 = vmatprep.subr.mxu0 0.0
  %v507 = vand.u32 %v45, 4294901760
  %v508 = vsub.f32 %v45, %v507
  %v509 = vand.u32 %v508, 4294901760
  %510 = vmatpush1.msra.mxu0 %v509
  %511 = vmatprep.subr.mxu0 0.0
  %v512 = vand.u32 %v44, 4294901760
  %v513 = vsub.f32 %v44, %v512
  %v514 = vand.u32 %v513, 4294901760
  %515 = vmatpush1.msra.mxu0 %v514
  %516 = vmatprep.subr.mxu0 0.0
  %v517 = vand.u32 %v43, 4294901760
  %v518 = vsub.f32 %v43, %v517
  %v519 = vand.u32 %v518, 4294901760
  %520 = vmatpush1.msra.mxu0 %v519
  %521 = vmatprep.subr.mxu0 0.0
  %v522 = vand.u32 %v42, 4294901760
  %v523 = vsub.f32 %v42, %v522
  %v524 = vand.u32 %v523, 4294901760
  %525 = vmatpush1.msra.mxu0 %v524
  %526 = vmatprep.subr.mxu0 0.0
  %v527 = vand.u32 %v41, 4294901760
  %v528 = vsub.f32 %v41, %v527
  %v529 = vand.u32 %v528, 4294901760
  %530 = vmatpush1.msra.mxu0 %v529
  %531 = vmatprep.subr.mxu0 0.0
  %v532 = vand.u32 %v40, 4294901760
  %v533 = vsub.f32 %v40, %v532
  %v534 = vand.u32 %v533, 4294901760
  %535 = vmatpush1.msra.mxu0 %v534
  %536 = vmatprep.subr.mxu0 0.0
  %v537 = vand.u32 %v39, 4294901760
  %v538 = vsub.f32 %v39, %v537
  %v539 = vand.u32 %v538, 4294901760
  %540 = vmatpush1.msra.mxu0 %v539
  %541 = vmatprep.subr.mxu0 0.0
  %v542 = vand.u32 %v38, 4294901760
  %v543 = vsub.f32 %v38, %v542
  %v544 = vand.u32 %v543, 4294901760
  %545 = vmatpush1.msra.mxu0 %v544
  %546 = vmatprep.subr.mxu0 0.0
  %v547 = vand.u32 %v37, 4294901760
  %v548 = vsub.f32 %v37, %v547
  %v549 = vand.u32 %v548, 4294901760
  %550 = vmatpush1.msra.mxu0 %v549
  %551 = vmatprep.subr.mxu0 0.0
  %v552 = vand.u32 %v36, 4294901760
  %v553 = vsub.f32 %v36, %v552
  %v554 = vand.u32 %v553, 4294901760
  %555 = vmatpush1.msra.mxu0 %v554
  %556 = vmatprep.subr.mxu0 0.0
  %v557 = vand.u32 %v35, 4294901760
  %v558 = vsub.f32 %v35, %v557
  %v559 = vand.u32 %v558, 4294901760
  %560 = vmatpush1.msra.mxu0 %v559
  %561 = vmatprep.subr.mxu0 0.0
  %v562 = vand.u32 %v34, 4294901760
  %v563 = vsub.f32 %v34, %v562
  %v564 = vand.u32 %v563, 4294901760
  %565 = vmatpush1.msra.mxu0 %v564
  %566 = vmatprep.subr.mxu0 0.0
  %v567 = vand.u32 %v33, 4294901760
  %v568 = vsub.f32 %v33, %v567
  %v569 = vand.u32 %v568, 4294901760
  %570 = vmatpush1.msra.mxu0 %v569
  %571 = vmatprep.subr.mxu0 0.0
  %572 = vmatpush2.msra.mxu0 0.0
  %573 = vmatprep.subr.mxu0 0.0
  %574 = vmatpush2.msra.mxu0 0.0
  %575 = vmatprep.subr.mxu0 0.0
  %576 = vmatpush2.msra.mxu0 0.0
  %577 = vmatprep.subr.mxu0 0.0
  %578 = vmatpush2.msra.mxu0 0.0
  %579 = vmatprep.subr.mxu0 0.0
  %580 = vmatpush2.msra.mxu0 0.0
  %581 = vmatprep.subr.mxu0 0.0
  %582 = vmatpush2.msra.mxu0 0.0
  %583 = vmatprep.subr.mxu0 0.0
  %584 = vmatpush2.msra.mxu0 0.0
  %585 = vmatprep.subr.mxu0 0.0
  %586 = vmatpush2.msra.mxu0 0.0
  %587 = vmatprep.subr.mxu0 0.0
  %588 = vmatpush2.msra.mxu0 0.0
  %589 = vmatprep.subr.mxu0 0.0
  %590 = vmatpush2.msra.mxu0 0.0
  %591 = vmatprep.subr.mxu0 0.0
  %592 = vmatpush2.msra.mxu0 0.0
  %593 = vmatprep.subr.mxu0 0.0
  %594 = vmatpush2.msra.mxu0 0.0
  %595 = vmatprep.subr.mxu0 0.0
  %596 = vmatpush2.msra.mxu0 0.0
  %597 = vmatprep.subr.mxu0 0.0
  %598 = vmatpush2.msra.mxu0 0.0
  %599 = vmatprep.subr.mxu0 0.0
  %600 = vmatpush2.msra.mxu0 0.0
  %601 = vmatprep.subr.mxu0 0.0
  %602 = vmatpush2.msra.mxu0 0.0
  %603 = vmatprep.mubr.f32.mxu0 0.0
  %v604 = vand.u32 %v32, 4294901760
  %605 = vmatmul.mubr.f32.gmra.mxu0 %v604
  %v606 = vpop.f32.mrf.mxu0
  %v607 = vadd.f32 %v488, %v606
  %v608 = vpop.f32.mrf.mxu0
  %609 = vdwg.mxu0
  %610 = vmatprep.subr.mxu0 0.0
  %v611 = vand.u32 %v48, 4294901760
  %612 = vmatpush1.msra.mxu0 %v611
  %613 = vmatprep.subr.mxu0 0.0
  %v614 = vand.u32 %v47, 4294901760
  %615 = vmatpush1.msra.mxu0 %v614
  %616 = vmatprep.subr.mxu0 0.0
  %v617 = vand.u32 %v46, 4294901760
  %618 = vmatpush1.msra.mxu0 %v617
  %619 = vmatprep.subr.mxu0 0.0
  %v620 = vand.u32 %v45, 4294901760
  %621 = vmatpush1.msra.mxu0 %v620
  %622 = vmatprep.subr.mxu0 0.0
  %v623 = vand.u32 %v44, 4294901760
  %624 = vmatpush1.msra.mxu0 %v623
  %625 = vmatprep.subr.mxu0 0.0
  %v626 = vand.u32 %v43, 4294901760
  %627 = vmatpush1.msra.mxu0 %v626
  %628 = vmatprep.subr.mxu0 0.0
  %v629 = vand.u32 %v42, 4294901760
  %630 = vmatpush1.msra.mxu0 %v629
  %631 = vmatprep.subr.mxu0 0.0
  %v632 = vand.u32 %v41, 4294901760
  %633 = vmatpush1.msra.mxu0 %v632
  %634 = vmatprep.subr.mxu0 0.0
  %v635 = vand.u32 %v40, 4294901760
  %636 = vmatpush1.msra.mxu0 %v635
  %637 = vmatprep.subr.mxu0 0.0
  %v638 = vand.u32 %v39, 4294901760
  %639 = vmatpush1.msra.mxu0 %v638
  %640 = vmatprep.subr.mxu0 0.0
  %v641 = vand.u32 %v38, 4294901760
  %642 = vmatpush1.msra.mxu0 %v641
  %643 = vmatprep.subr.mxu0 0.0
  %v644 = vand.u32 %v37, 4294901760
  %645 = vmatpush1.msra.mxu0 %v644
  %646 = vmatprep.subr.mxu0 0.0
  %v647 = vand.u32 %v36, 4294901760
  %648 = vmatpush1.msra.mxu0 %v647
  %649 = vmatprep.subr.mxu0 0.0
  %v650 = vand.u32 %v35, 4294901760
  %651 = vmatpush1.msra.mxu0 %v650
  %652 = vmatprep.subr.mxu0 0.0
  %v653 = vand.u32 %v34, 4294901760
  %654 = vmatpush1.msra.mxu0 %v653
  %655 = vmatprep.subr.mxu0 0.0
  %v656 = vand.u32 %v33, 4294901760
  %657 = vmatpush1.msra.mxu0 %v656
  %658 = vmatprep.subr.mxu0 0.0
  %659 = vmatpush2.msra.mxu0 0.0
  %660 = vmatprep.subr.mxu0 0.0
  %661 = vmatpush2.msra.mxu0 0.0
  %662 = vmatprep.subr.mxu0 0.0
  %663 = vmatpush2.msra.mxu0 0.0
  %664 = vmatprep.subr.mxu0 0.0
  %665 = vmatpush2.msra.mxu0 0.0
  %666 = vmatprep.subr.mxu0 0.0
  %667 = vmatpush2.msra.mxu0 0.0
  %668 = vmatprep.subr.mxu0 0.0
  %669 = vmatpush2.msra.mxu0 0.0
  %670 = vmatprep.subr.mxu0 0.0
  %671 = vmatpush2.msra.mxu0 0.0
  %672 = vmatprep.subr.mxu0 0.0
  %673 = vmatpush2.msra.mxu0 0.0
  %674 = vmatprep.subr.mxu0 0.0
  %675 = vmatpush2.msra.mxu0 0.0
  %676 = vmatprep.subr.mxu0 0.0
  %677 = vmatpush2.msra.mxu0 0.0
  %678 = vmatprep.subr.mxu0 0.0
  %679 = vmatpush2.msra.mxu0 0.0
  %680 = vmatprep.subr.mxu0 0.0
  %681 = vmatpush2.msra.mxu0 0.0
  %682 = vmatprep.subr.mxu0 0.0
  %683 = vmatpush2.msra.mxu0 0.0
  %684 = vmatprep.subr.mxu0 0.0
  %685 = vmatpush2.msra.mxu0 0.0
  %686 = vmatprep.subr.mxu0 0.0
  %687 = vmatpush2.msra.mxu0 0.0
  %688 = vmatprep.subr.mxu0 0.0
  %689 = vmatpush2.msra.mxu0 0.0
  %690 = vmatprep.mubr.f32.mxu0 0.0
  %v691 = vand.u32 %v32, 4294901760
  %692 = vmatmul.mubr.f32.gmra.mxu0 %v691
  %v693 = vpop.f32.mrf.mxu0
  %v694 = vadd.f32 %v607, %v693
  %v695 = vpop.f32.mrf.mxu0
  %696 = vdwg.mxu0
  %v697 = vmax.f32 %v694, 0.0
  %v698 = vld [vmem:[%s3] sm:$0xff]
  %v699 = vld [vmem:[%s3 + $0x8] sm:$0xff]
  %v700 = vld [vmem:[%s3 + $0x10] sm:$0xff]
  %v701 = vld [vmem:[%s3 + $0x18] sm:$0xff]
  %v702 = vld [vmem:[%s3 + $0x20] sm:$0xff]
  %v703 = vld [vmem:[%s3 + $0x28] sm:$0xff]
  %v704 = vld [vmem:[%s3 + $0x30] sm:$0xff]
  %v705 = vld [vmem:[%s3 + $0x38] sm:$0xff]
  %v706 = vld [vmem:[%s3 + $0x40] sm:$0xff]
  %v707 = vld [vmem:[%s3 + $0x48] sm:$0xff]
  %v708 = vld [vmem:[%s3 + $0x50] sm:$0xff]
  %v709 = vld [vmem:[%s3 + $0x58] sm:$0xff]
  %v710 = vld [vmem:[%s3 + $0x60] sm:$0xff]
  %v711 = vld [vmem:[%s3 + $0x68] sm:$0xff]
  %v712 = vld [vmem:[%s3 + $0x70] sm:$0xff]
  %v713 = vld [vmem:[%s3 + $0x78] sm:$0xff]
  %v714 = vld [vmem:[%s4] sm:$0x1]
  %v716 = vlaneseq
  %v717 = vshrl.u32 %v716, 7
  %v718 = vsub.s32 0, %v717
  %v719 = vrot.slane %v714, %v718
  %721 = vmatprep.subr.mxu0 0.0
  %v722 = vand.u32 %v713, 4294901760
  %723 = vmatpush1.msra.mxu0 %v722
  %724 = vmatprep.subr.mxu0 0.0
  %v725 = vand.u32 %v712, 4294901760
  %726 = vmatpush1.msra.mxu0 %v725
  %727 = vmatprep.subr.mxu0 0.0
  %v728 = vand.u32 %v711, 4294901760
  %729 = vmatpush1.msra.mxu0 %v728
  %730 = vmatprep.subr.mxu0 0.0
  %v731 = vand.u32 %v710, 4294901760
  %732 = vmatpush1.msra.mxu0 %v731
  %733 = vmatprep.subr.mxu0 0.0
  %v734 = vand.u32 %v709, 4294901760
  %735 = vmatpush1.msra.mxu0 %v734
  %736 = vmatprep.subr.mxu0 0.0
  %v737 = vand.u32 %v708, 4294901760
  %738 = vmatpush1.msra.mxu0 %v737
  %739 = vmatprep.subr.mxu0 0.0
  %v740 = vand.u32 %v707, 4294901760
  %741 = vmatpush1.msra.mxu0 %v740
  %742 = vmatprep.subr.mxu0 0.0
  %v743 = vand.u32 %v706, 4294901760
  %744 = vmatpush1.msra.mxu0 %v743
  %745 = vmatprep.subr.mxu0 0.0
  %v746 = vand.u32 %v705, 4294901760
  %747 = vmatpush1.msra.mxu0 %v746
  %748 = vmatprep.subr.mxu0 0.0
  %v749 = vand.u32 %v704, 4294901760
  %750 = vmatpush1.msra.mxu0 %v749
  %751 = vmatprep.subr.mxu0 0.0
  %v752 = vand.u32 %v703, 4294901760
  %753 = vmatpush1.msra.mxu0 %v752
  %754 = vmatprep.subr.mxu0 0.0
  %v755 = vand.u32 %v702, 4294901760
  %756 = vmatpush1.msra.mxu0 %v755
  %757 = vmatprep.subr.mxu0 0.0
  %v758 = vand.u32 %v701, 4294901760
  %759 = vmatpush1.msra.mxu0 %v758
  %760 = vmatprep.subr.mxu0 0.0
  %v761 = vand.u32 %v700, 4294901760
  %762 = vmatpush1.msra.mxu0 %v761
  %763 = vmatprep.subr.mxu0 0.0
  %v764 = vand.u32 %v699, 4294901760
  %765 = vmatpush1.msra.mxu0 %v764
  %766 = vmatprep.subr.mxu0 0.0
  %v767 = vand.u32 %v698, 4294901760
  %768 = vmatpush1.msra.mxu0 %v767
  %769 = vmatprep.subr.mxu0 0.0
  %770 = vmatpush2.msra.mxu0 0.0
  %771 = vmatprep.subr.mxu0 0.0
  %772 = vmatpush2.msra.mxu0 0.0
  %773 = vmatprep.subr.mxu0 0.0
  %774 = vmatpush2.msra.mxu0 0.0
  %775 = vmatprep.subr.mxu0 0.0
  %776 = vmatpush2.msra.mxu0 0.0
  %777 = vmatprep.subr.mxu0 0.0
  %778 = vmatpush2.msra.mxu0 0.0
  %779 = vmatprep.subr.mxu0 0.0
  %780 = vmatpush2.msra.mxu0 0.0
  %781 = vmatprep.subr.mxu0 0.0
  %782 = vmatpush2.msra.mxu0 0.0
  %783 = vmatprep.subr.mxu0 0.0
  %784 = vmatpush2.msra.mxu0 0.0
  %785 = vmatprep.subr.mxu0 0.0
  %786 = vmatpush2.msra.mxu0 0.0
  %787 = vmatprep.subr.mxu0 0.0
  %788 = vmatpush2.msra.mxu0 0.0
  %789 = vmatprep.subr.mxu0 0.0
  %790 = vmatpush2.msra.mxu0 0.0
  %791 = vmatprep.subr.mxu0 0.0
  %792 = vmatpush2.msra.mxu0 0.0
  %793 = vmatprep.subr.mxu0 0.0
  %794 = vmatpush2.msra.mxu0 0.0
  %795 = vmatprep.subr.mxu0 0.0
  %796 = vmatpush2.msra.mxu0 0.0
  %797 = vmatprep.subr.mxu0 0.0
  %798 = vmatpush2.msra.mxu0 0.0
  %799 = vmatprep.subr.mxu0 0.0
  %800 = vmatpush2.msra.mxu0 0.0
  %801 = vmatprep.mubr.f32.mxu0 0.0
  %v802 = vand.u32 %v697, 4294901760
  %v803 = vsub.f32 %v697, %v802
  %v804 = vand.u32 %v803, 4294901760
  %v805 = vsub.f32 %v803, %v804
  %v806 = vand.u32 %v805, 4294901760
  %807 = vmatmul.mubr.f32.gmra.mxu0 %v806
  %v808 = vpop.f32.mrf.mxu0
  %v809 = vadd.f32 %v719, %v808
  %v810 = vpop.f32.mrf.mxu0
  %811 = vdwg.mxu0
  %812 = vmatprep.subr.mxu0 0.0
  %v813 = vand.u32 %v713, 4294901760
  %v814 = vsub.f32 %v713, %v813
  %v815 = vand.u32 %v814, 4294901760
  %v816 = vsub.f32 %v814, %v815
  %v817 = vand.u32 %v816, 4294901760
  %818 = vmatpush1.msra.mxu0 %v817
  %819 = vmatprep.subr.mxu0 0.0
  %v820 = vand.u32 %v712, 4294901760
  %v821 = vsub.f32 %v712, %v820
  %v822 = vand.u32 %v821, 4294901760
  %v823 = vsub.f32 %v821, %v822
  %v824 = vand.u32 %v823, 4294901760
  %825 = vmatpush1.msra.mxu0 %v824
  %826 = vmatprep.subr.mxu0 0.0
  %v827 = vand.u32 %v711, 4294901760
  %v828 = vsub.f32 %v711, %v827
  %v829 = vand.u32 %v828, 4294901760
  %v830 = vsub.f32 %v828, %v829
  %v831 = vand.u32 %v830, 4294901760
  %832 = vmatpush1.msra.mxu0 %v831
  %833 = vmatprep.subr.mxu0 0.0
  %v834 = vand.u32 %v710, 4294901760
  %v835 = vsub.f32 %v710, %v834
  %v836 = vand.u32 %v835, 4294901760
  %v837 = vsub.f32 %v835, %v836
  %v838 = vand.u32 %v837, 4294901760
  %839 = vmatpush1.msra.mxu0 %v838
  %840 = vmatprep.subr.mxu0 0.0
  %v841 = vand.u32 %v709, 4294901760
  %v842 = vsub.f32 %v709, %v841
  %v843 = vand.u32 %v842, 4294901760
  %v844 = vsub.f32 %v842, %v843
  %v845 = vand.u32 %v844, 4294901760
  %846 = vmatpush1.msra.mxu0 %v845
  %847 = vmatprep.subr.mxu0 0.0
  %v848 = vand.u32 %v708, 4294901760
  %v849 = vsub.f32 %v708, %v848
  %v850 = vand.u32 %v849, 4294901760
  %v851 = vsub.f32 %v849, %v850
  %v852 = vand.u32 %v851, 4294901760
  %853 = vmatpush1.msra.mxu0 %v852
  %854 = vmatprep.subr.mxu0 0.0
  %v855 = vand.u32 %v707, 4294901760
  %v856 = vsub.f32 %v707, %v855
  %v857 = vand.u32 %v856, 4294901760
  %v858 = vsub.f32 %v856, %v857
  %v859 = vand.u32 %v858, 4294901760
  %860 = vmatpush1.msra.mxu0 %v859
  %861 = vmatprep.subr.mxu0 0.0
  %v862 = vand.u32 %v706, 4294901760
  %v863 = vsub.f32 %v706, %v862
  %v864 = vand.u32 %v863, 4294901760
  %v865 = vsub.f32 %v863, %v864
  %v866 = vand.u32 %v865, 4294901760
  %867 = vmatpush1.msra.mxu0 %v866
  %868 = vmatprep.subr.mxu0 0.0
  %v869 = vand.u32 %v705, 4294901760
  %v870 = vsub.f32 %v705, %v869
  %v871 = vand.u32 %v870, 4294901760
  %v872 = vsub.f32 %v870, %v871
  %v873 = vand.u32 %v872, 4294901760
  %874 = vmatpush1.msra.mxu0 %v873
  %875 = vmatprep.subr.mxu0 0.0
  %v876 = vand.u32 %v704, 4294901760
  %v877 = vsub.f32 %v704, %v876
  %v878 = vand.u32 %v877, 4294901760
  %v879 = vsub.f32 %v877, %v878
  %v880 = vand.u32 %v879, 4294901760
  %881 = vmatpush1.msra.mxu0 %v880
  %882 = vmatprep.subr.mxu0 0.0
  %v883 = vand.u32 %v703, 4294901760
  %v884 = vsub.f32 %v703, %v883
  %v885 = vand.u32 %v884, 4294901760
  %v886 = vsub.f32 %v884, %v885
  %v887 = vand.u32 %v886, 4294901760
  %888 = vmatpush1.msra.mxu0 %v887
  %889 = vmatprep.subr.mxu0 0.0
  %v890 = vand.u32 %v702, 4294901760
  %v891 = vsub.f32 %v702, %v890
  %v892 = vand.u32 %v891, 4294901760
  %v893 = vsub.f32 %v891, %v892
  %v894 = vand.u32 %v893, 4294901760
  %895 = vmatpush1.msra.mxu0 %v894
  %896 = vmatprep.subr.mxu0 0.0
  %v897 = vand.u32 %v701, 4294901760
  %v898 = vsub.f32 %v701, %v897
  %v899 = vand.u32 %v898, 4294901760
  %v900 = vsub.f32 %v898, %v899
  %v901 = vand.u32 %v900, 4294901760
  %902 = vmatpush1.msra.mxu0 %v901
  %903 = vmatprep.subr.mxu0 0.0
  %v904 = vand.u32 %v700, 4294901760
  %v905 = vsub.f32 %v700, %v904
  %v906 = vand.u32 %v905, 4294901760
  %v907 = vsub.f32 %v905, %v906
  %v908 = vand.u32 %v907, 4294901760
  %909 = vmatpush1.msra.mxu0 %v908
  %910 = vmatprep.subr.mxu0 0.0
  %v911 = vand.u32 %v699, 4294901760
  %v912 = vsub.f32 %v699, %v911
  %v913 = vand.u32 %v912, 4294901760
  %v914 = vsub.f32 %v912, %v913
  %v915 = vand.u32 %v914, 4294901760
  %916 = vmatpush1.msra.mxu0 %v915
  %917 = vmatprep.subr.mxu0 0.0
  %v918 = vand.u32 %v698, 4294901760
  %v919 = vsub.f32 %v698, %v918
  %v920 = vand.u32 %v919, 4294901760
  %v921 = vsub.f32 %v919, %v920
  %v922 = vand.u32 %v921, 4294901760
  %923 = vmatpush1.msra.mxu0 %v922
  %924 = vmatprep.subr.mxu0 0.0
  %925 = vmatpush2.msra.mxu0 0.0
  %926 = vmatprep.subr.mxu0 0.0
  %927 = vmatpush2.msra.mxu0 0.0
  %928 = vmatprep.subr.mxu0 0.0
  %929 = vmatpush2.msra.mxu0 0.0
  %930 = vmatprep.subr.mxu0 0.0
  %931 = vmatpush2.msra.mxu0 0.0
  %932 = vmatprep.subr.mxu0 0.0
  %933 = vmatpush2.msra.mxu0 0.0
  %934 = vmatprep.subr.mxu0 0.0
  %935 = vmatpush2.msra.mxu0 0.0
  %936 = vmatprep.subr.mxu0 0.0
  %937 = vmatpush2.msra.mxu0 0.0
  %938 = vmatprep.subr.mxu0 0.0
  %939 = vmatpush2.msra.mxu0 0.0
  %940 = vmatprep.subr.mxu0 0.0
  %941 = vmatpush2.msra.mxu0 0.0
  %942 = vmatprep.subr.mxu0 0.0
  %943 = vmatpush2.msra.mxu0 0.0
  %944 = vmatprep.subr.mxu0 0.0
  %945 = vmatpush2.msra.mxu0 0.0
  %946 = vmatprep.subr.mxu0 0.0
  %947 = vmatpush2.msra.mxu0 0.0
  %948 = vmatprep.subr.mxu0 0.0
  %949 = vmatpush2.msra.mxu0 0.0
  %950 = vmatprep.subr.mxu0 0.0
  %951 = vmatpush2.msra.mxu0 0.0
  %952 = vmatprep.subr.mxu0 0.0
  %953 = vmatpush2.msra.mxu0 0.0
  %954 = vmatprep.subr.mxu0 0.0
  %955 = vmatpush2.msra.mxu0 0.0
  %956 = vmatprep.mubr.f32.mxu0 0.0
  %v957 = vand.u32 %v697, 4294901760
  %958 = vmatmul.mubr.f32.gmra.mxu0 %v957
  %v959 = vpop.f32.mrf.mxu0
  %v960 = vadd.f32 %v809, %v959
  %v961 = vpop.f32.mrf.mxu0
  %962 = vdwg.mxu0
  %963 = vmatprep.subr.mxu0 0.0
  %v964 = vand.u32 %v713, 4294901760
  %v965 = vsub.f32 %v713, %v964
  %966 = vmatpush1.msra.mxu0 %v965
  %967 = vmatprep.subr.mxu0 0.0
  %v968 = vand.u32 %v712, 4294901760
  %v969 = vsub.f32 %v712, %v968
  %970 = vmatpush1.msra.mxu0 %v969
  %971 = vmatprep.subr.mxu0 0.0
  %v972 = vand.u32 %v711, 4294901760
  %v973 = vsub.f32 %v711, %v972
  %974 = vmatpush1.msra.mxu0 %v973
  %975 = vmatprep.subr.mxu0 0.0
  %v976 = vand.u32 %v710, 4294901760
  %v977 = vsub.f32 %v710, %v976
  %978 = vmatpush1.msra.mxu0 %v977
  %979 = vmatprep.subr.mxu0 0.0
  %v980 = vand.u32 %v709, 4294901760
  %v981 = vsub.f32 %v709, %v980
  %982 = vmatpush1.msra.mxu0 %v981
  %983 = vmatprep.subr.mxu0 0.0
  %v984 = vand.u32 %v708, 4294901760
  %v985 = vsub.f32 %v708, %v984
  %986 = vmatpush1.msra.mxu0 %v985
  %987 = vmatprep.subr.mxu0 0.0
  %v988 = vand.u32 %v707, 4294901760
  %v989 = vsub.f32 %v707, %v988
  %990 = vmatpush1.msra.mxu0 %v989
  %991 = vmatprep.subr.mxu0 0.0
  %v992 = vand.u32 %v706, 4294901760
  %v993 = vsub.f32 %v706, %v992
  %994 = vmatpush1.msra.mxu0 %v993
  %995 = vmatprep.subr.mxu0 0.0
  %v996 = vand.u32 %v705, 4294901760
  %v997 = vsub.f32 %v705, %v996
  %998 = vmatpush1.msra.mxu0 %v997
  %999 = vmatprep.subr.mxu0 0.0
  %v1000 = vand.u32 %v704, 4294901760
  %v1001 = vsub.f32 %v704, %v1000
  %1002 = vmatpush1.msra.mxu0 %v1001
  %1003 = vmatprep.subr.mxu0 0.0
  %v1004 = vand.u32 %v703, 4294901760
  %v1005 = vsub.f32 %v703, %v1004
  %1006 = vmatpush1.msra.mxu0 %v1005
  %1007 = vmatprep.subr.mxu0 0.0
  %v1008 = vand.u32 %v702, 4294901760
  %v1009 = vsub.f32 %v702, %v1008
  %1010 = vmatpush1.msra.mxu0 %v1009
  %1011 = vmatprep.subr.mxu0 0.0
  %v1012 = vand.u32 %v701, 4294901760
  %v1013 = vsub.f32 %v701, %v1012
  %1014 = vmatpush1.msra.mxu0 %v1013
  %1015 = vmatprep.subr.mxu0 0.0
  %v1016 = vand.u32 %v700, 4294901760
  %v1017 = vsub.f32 %v700, %v1016
  %1018 = vmatpush1.msra.mxu0 %v1017
  %1019 = vmatprep.subr.mxu0 0.0
  %v1020 = vand.u32 %v699, 4294901760
  %v1021 = vsub.f32 %v699, %v1020
  %1022 = vmatpush1.msra.mxu0 %v1021
  %1023 = vmatprep.subr.mxu0 0.0
  %v1024 = vand.u32 %v698, 4294901760
  %v1025 = vsub.f32 %v698, %v1024
  %1026 = vmatpush1.msra.mxu0 %v1025
  %1027 = vmatprep.subr.mxu0 0.0
  %1028 = vmatpush2.msra.mxu0 0.0
  %1029 = vmatprep.subr.mxu0 0.0
  %1030 = vmatpush2.msra.mxu0 0.0
  %1031 = vmatprep.subr.mxu0 0.0
  %1032 = vmatpush2.msra.mxu0 0.0
  %1033 = vmatprep.subr.mxu0 0.0
  %1034 = vmatpush2.msra.mxu0 0.0
  %1035 = vmatprep.subr.mxu0 0.0
  %1036 = vmatpush2.msra.mxu0 0.0
  %1037 = vmatprep.subr.mxu0 0.0
  %1038 = vmatpush2.msra.mxu0 0.0
  %1039 = vmatprep.subr.mxu0 0.0
  %1040 = vmatpush2.msra.mxu0 0.0
  %1041 = vmatprep.subr.mxu0 0.0
  %1042 = vmatpush2.msra.mxu0 0.0
  %1043 = vmatprep.subr.mxu0 0.0
  %1044 = vmatpush2.msra.mxu0 0.0
  %1045 = vmatprep.subr.mxu0 0.0
  %1046 = vmatpush2.msra.mxu0 0.0
  %1047 = vmatprep.subr.mxu0 0.0
  %1048 = vmatpush2.msra.mxu0 0.0
  %1049 = vmatprep.subr.mxu0 0.0
  %1050 = vmatpush2.msra.mxu0 0.0
  %1051 = vmatprep.subr.mxu0 0.0
  %1052 = vmatpush2.msra.mxu0 0.0
  %1053 = vmatprep.subr.mxu0 0.0
  %1054 = vmatpush2.msra.mxu0 0.0
  %1055 = vmatprep.subr.mxu0 0.0
  %1056 = vmatpush2.msra.mxu0 0.0
  %1057 = vmatprep.subr.mxu0 0.0
  %1058 = vmatpush2.msra.mxu0 0.0
  %1059 = vmatprep.mubr.f32.mxu0 0.0
  %v1060 = vand.u32 %v697, 4294901760
  %v1061 = vsub.f32 %v697, %v1060
  %1062 = vmatmul.mubr.f32.gmra.mxu0 %v1061
  %v1063 = vpop.f32.mrf.mxu0
  %v1064 = vadd.f32 %v960, %v1063
  %v1065 = vpop.f32.mrf.mxu0
  %1066 = vdwg.mxu0
  %1067 = vmatprep.subr.mxu0 0.0
  %v1068 = vand.u32 %v713, 4294901760
  %1069 = vmatpush1.msra.mxu0 %v1068
  %1070 = vmatprep.subr.mxu0 0.0
  %v1071 = vand.u32 %v712, 4294901760
  %1072 = vmatpush1.msra.mxu0 %v1071
  %1073 = vmatprep.subr.mxu0 0.0
  %v1074 = vand.u32 %v711, 4294901760
  %1075 = vmatpush1.msra.mxu0 %v1074
  %1076 = vmatprep.subr.mxu0 0.0
  %v1077 = vand.u32 %v710, 4294901760
  %1078 = vmatpush1.msra.mxu0 %v1077
  %1079 = vmatprep.subr.mxu0 0.0
  %v1080 = vand.u32 %v709, 4294901760
  %1081 = vmatpush1.msra.mxu0 %v1080
  %1082 = vmatprep.subr.mxu0 0.0
  %v1083 = vand.u32 %v708, 4294901760
  %1084 = vmatpush1.msra.mxu0 %v1083
  %1085 = vmatprep.subr.mxu0 0.0
  %v1086 = vand.u32 %v707, 4294901760
  %1087 = vmatpush1.msra.mxu0 %v1086
  %1088 = vmatprep.subr.mxu0 0.0
  %v1089 = vand.u32 %v706, 4294901760
  %1090 = vmatpush1.msra.mxu0 %v1089
  %1091 = vmatprep.subr.mxu0 0.0
  %v1092 = vand.u32 %v705, 4294901760
  %1093 = vmatpush1.msra.mxu0 %v1092
  %1094 = vmatprep.subr.mxu0 0.0
  %v1095 = vand.u32 %v704, 4294901760
  %1096 = vmatpush1.msra.mxu0 %v1095
  %1097 = vmatprep.subr.mxu0 0.0
  %v1098 = vand.u32 %v703, 4294901760
  %1099 = vmatpush1.msra.mxu0 %v1098
  %1100 = vmatprep.subr.mxu0 0.0
  %v1101 = vand.u32 %v702, 4294901760
  %1102 = vmatpush1.msra.mxu0 %v1101
  %1103 = vmatprep.subr.mxu0 0.0
  %v1104 = vand.u32 %v701, 4294901760
  %1105 = vmatpush1.msra.mxu0 %v1104
  %1106 = vmatprep.subr.mxu0 0.0
  %v1107 = vand.u32 %v700, 4294901760
  %1108 = vmatpush1.msra.mxu0 %v1107
  %1109 = vmatprep.subr.mxu0 0.0
  %v1110 = vand.u32 %v699, 4294901760
  %1111 = vmatpush1.msra.mxu0 %v1110
  %1112 = vmatprep.subr.mxu0 0.0
  %v1113 = vand.u32 %v698, 4294901760
  %1114 = vmatpush1.msra.mxu0 %v1113
  %1115 = vmatprep.subr.mxu0 0.0
  %1116 = vmatpush2.msra.mxu0 0.0
  %1117 = vmatprep.subr.mxu0 0.0
  %1118 = vmatpush2.msra.mxu0 0.0
  %1119 = vmatprep.subr.mxu0 0.0
  %1120 = vmatpush2.msra.mxu0 0.0
  %1121 = vmatprep.subr.mxu0 0.0
  %1122 = vmatpush2.msra.mxu0 0.0
  %1123 = vmatprep.subr.mxu0 0.0
  %1124 = vmatpush2.msra.mxu0 0.0
  %1125 = vmatprep.subr.mxu0 0.0
  %1126 = vmatpush2.msra.mxu0 0.0
  %1127 = vmatprep.subr.mxu0 0.0
  %1128 = vmatpush2.msra.mxu0 0.0
  %1129 = vmatprep.subr.mxu0 0.0
  %1130 = vmatpush2.msra.mxu0 0.0
  %1131 = vmatprep.subr.mxu0 0.0
  %1132 = vmatpush2.msra.mxu0 0.0
  %1133 = vmatprep.subr.mxu0 0.0
  %1134 = vmatpush2.msra.mxu0 0.0
  %1135 = vmatprep.subr.mxu0 0.0
  %1136 = vmatpush2.msra.mxu0 0.0
  %1137 = vmatprep.subr.mxu0 0.0
  %1138 = vmatpush2.msra.mxu0 0.0
  %1139 = vmatprep.subr.mxu0 0.0
  %1140 = vmatpush2.msra.mxu0 0.0
  %1141 = vmatprep.subr.mxu0 0.0
  %1142 = vmatpush2.msra.mxu0 0.0
  %1143 = vmatprep.subr.mxu0 0.0
  %1144 = vmatpush2.msra.mxu0 0.0
  %1145 = vmatprep.subr.mxu0 0.0
  %1146 = vmatpush2.msra.mxu0 0.0
  %1147 = vmatprep.mubr.f32.mxu0 0.0
  %v1148 = vand.u32 %v697, 4294901760
  %v1149 = vsub.f32 %v697, %v1148
  %v1150 = vand.u32 %v1149, 4294901760
  %1151 = vmatmul.mubr.f32.gmra.mxu0 %v1150
  %v1152 = vpop.f32.mrf.mxu0
  %v1153 = vadd.f32 %v1064, %v1152
  %v1154 = vpop.f32.mrf.mxu0
  %1155 = vdwg.mxu0
  %1156 = vmatprep.subr.mxu0 0.0
  %v1157 = vand.u32 %v713, 4294901760
  %v1158 = vsub.f32 %v713, %v1157
  %v1159 = vand.u32 %v1158, 4294901760
  %1160 = vmatpush1.msra.mxu0 %v1159
  %1161 = vmatprep.subr.mxu0 0.0
  %v1162 = vand.u32 %v712, 4294901760
  %v1163 = vsub.f32 %v712, %v1162
  %v1164 = vand.u32 %v1163, 4294901760
  %1165 = vmatpush1.msra.mxu0 %v1164
  %1166 = vmatprep.subr.mxu0 0.0
  %v1167 = vand.u32 %v711, 4294901760
  %v1168 = vsub.f32 %v711, %v1167
  %v1169 = vand.u32 %v1168, 4294901760
  %1170 = vmatpush1.msra.mxu0 %v1169
  %1171 = vmatprep.subr.mxu0 0.0
  %v1172 = vand.u32 %v710, 4294901760
  %v1173 = vsub.f32 %v710, %v1172
  %v1174 = vand.u32 %v1173, 4294901760
  %1175 = vmatpush1.msra.mxu0 %v1174
  %1176 = vmatprep.subr.mxu0 0.0
  %v1177 = vand.u32 %v709, 4294901760
  %v1178 = vsub.f32 %v709, %v1177
  %v1179 = vand.u32 %v1178, 4294901760
  %1180 = vmatpush1.msra.mxu0 %v1179
  %1181 = vmatprep.subr.mxu0 0.0
  %v1182 = vand.u32 %v708, 4294901760
  %v1183 = vsub.f32 %v708, %v1182
  %v1184 = vand.u32 %v1183, 4294901760
  %1185 = vmatpush1.msra.mxu0 %v1184
  %1186 = vmatprep.subr.mxu0 0.0
  %v1187 = vand.u32 %v707, 4294901760
  %v1188 = vsub.f32 %v707, %v1187
  %v1189 = vand.u32 %v1188, 4294901760
  %1190 = vmatpush1.msra.mxu0 %v1189
  %1191 = vmatprep.subr.mxu0 0.0
  %v1192 = vand.u32 %v706, 4294901760
  %v1193 = vsub.f32 %v706, %v1192
  %v1194 = vand.u32 %v1193, 4294901760
  %1195 = vmatpush1.msra.mxu0 %v1194
  %1196 = vmatprep.subr.mxu0 0.0
  %v1197 = vand.u32 %v705, 4294901760
  %v1198 = vsub.f32 %v705, %v1197
  %v1199 = vand.u32 %v1198, 4294901760
  %1200 = vmatpush1.msra.mxu0 %v1199
  %1201 = vmatprep.subr.mxu0 0.0
  %v1202 = vand.u32 %v704, 4294901760
  %v1203 = vsub.f32 %v704, %v1202
  %v1204 = vand.u32 %v1203, 4294901760
  %1205 = vmatpush1.msra.mxu0 %v1204
  %1206 = vmatprep.subr.mxu0 0.0
  %v1207 = vand.u32 %v703, 4294901760
  %v1208 = vsub.f32 %v703, %v1207
  %v1209 = vand.u32 %v1208, 4294901760
  %1210 = vmatpush1.msra.mxu0 %v1209
  %1211 = vmatprep.subr.mxu0 0.0
  %v1212 = vand.u32 %v702, 4294901760
  %v1213 = vsub.f32 %v702, %v1212
  %v1214 = vand.u32 %v1213, 4294901760
  %1215 = vmatpush1.msra.mxu0 %v1214
  %1216 = vmatprep.subr.mxu0 0.0
  %v1217 = vand.u32 %v701, 4294901760
  %v1218 = vsub.f32 %v701, %v1217
  %v1219 = vand.u32 %v1218, 4294901760
  %1220 = vmatpush1.msra.mxu0 %v1219
  %1221 = vmatprep.subr.mxu0 0.0
  %v1222 = vand.u32 %v700, 4294901760
  %v1223 = vsub.f32 %v700, %v1222
  %v1224 = vand.u32 %v1223, 4294901760
  %1225 = vmatpush1.msra.mxu0 %v1224
  %1226 = vmatprep.subr.mxu0 0.0
  %v1227 = vand.u32 %v699, 4294901760
  %v1228 = vsub.f32 %v699, %v1227
  %v1229 = vand.u32 %v1228, 4294901760
  %1230 = vmatpush1.msra.mxu0 %v1229
  %1231 = vmatprep.subr.mxu0 0.0
  %v1232 = vand.u32 %v698, 4294901760
  %v1233 = vsub.f32 %v698, %v1232
  %v1234 = vand.u32 %v1233, 4294901760
  %1235 = vmatpush1.msra.mxu0 %v1234
  %1236 = vmatprep.subr.mxu0 0.0
  %1237 = vmatpush2.msra.mxu0 0.0
  %1238 = vmatprep.subr.mxu0 0.0
  %1239 = vmatpush2.msra.mxu0 0.0
  %1240 = vmatprep.subr.mxu0 0.0
  %1241 = vmatpush2.msra.mxu0 0.0
  %1242 = vmatprep.subr.mxu0 0.0
  %1243 = vmatpush2.msra.mxu0 0.0
  %1244 = vmatprep.subr.mxu0 0.0
  %1245 = vmatpush2.msra.mxu0 0.0
  %1246 = vmatprep.subr.mxu0 0.0
  %1247 = vmatpush2.msra.mxu0 0.0
  %1248 = vmatprep.subr.mxu0 0.0
  %1249 = vmatpush2.msra.mxu0 0.0
  %1250 = vmatprep.subr.mxu0 0.0
  %1251 = vmatpush2.msra.mxu0 0.0
  %1252 = vmatprep.subr.mxu0 0.0
  %1253 = vmatpush2.msra.mxu0 0.0
  %1254 = vmatprep.subr.mxu0 0.0
  %1255 = vmatpush2.msra.mxu0 0.0
  %1256 = vmatprep.subr.mxu0 0.0
  %1257 = vmatpush2.msra.mxu0 0.0
  %1258 = vmatprep.subr.mxu0 0.0
  %1259 = vmatpush2.msra.mxu0 0.0
  %1260 = vmatprep.subr.mxu0 0.0
  %1261 = vmatpush2.msra.mxu0 0.0
  %1262 = vmatprep.subr.mxu0 0.0
  %1263 = vmatpush2.msra.mxu0 0.0
  %1264 = vmatprep.subr.mxu0 0.0
  %1265 = vmatpush2.msra.mxu0 0.0
  %1266 = vmatprep.subr.mxu0 0.0
  %1267 = vmatpush2.msra.mxu0 0.0
  %1268 = vmatprep.mubr.f32.mxu0 0.0
  %v1269 = vand.u32 %v697, 4294901760
  %1270 = vmatmul.mubr.f32.gmra.mxu0 %v1269
  %v1271 = vpop.f32.mrf.mxu0
  %v1272 = vadd.f32 %v1153, %v1271
  %v1273 = vpop.f32.mrf.mxu0
  %1274 = vdwg.mxu0
  %1275 = vmatprep.subr.mxu0 0.0
  %v1276 = vand.u32 %v713, 4294901760
  %1277 = vmatpush1.msra.mxu0 %v1276
  %1278 = vmatprep.subr.mxu0 0.0
  %v1279 = vand.u32 %v712, 4294901760
  %1280 = vmatpush1.msra.mxu0 %v1279
  %1281 = vmatprep.subr.mxu0 0.0
  %v1282 = vand.u32 %v711, 4294901760
  %1283 = vmatpush1.msra.mxu0 %v1282
  %1284 = vmatprep.subr.mxu0 0.0
  %v1285 = vand.u32 %v710, 4294901760
  %1286 = vmatpush1.msra.mxu0 %v1285
  %1287 = vmatprep.subr.mxu0 0.0
  %v1288 = vand.u32 %v709, 4294901760
  %1289 = vmatpush1.msra.mxu0 %v1288
  %1290 = vmatprep.subr.mxu0 0.0
  %v1291 = vand.u32 %v708, 4294901760
  %1292 = vmatpush1.msra.mxu0 %v1291
  %1293 = vmatprep.subr.mxu0 0.0
  %v1294 = vand.u32 %v707, 4294901760
  %1295 = vmatpush1.msra.mxu0 %v1294
  %1296 = vmatprep.subr.mxu0 0.0
  %v1297 = vand.u32 %v706, 4294901760
  %1298 = vmatpush1.msra.mxu0 %v1297
  %1299 = vmatprep.subr.mxu0 0.0
  %v1300 = vand.u32 %v705, 4294901760
  %1301 = vmatpush1.msra.mxu0 %v1300
  %1302 = vmatprep.subr.mxu0 0.0
  %v1303 = vand.u32 %v704, 4294901760
  %1304 = vmatpush1.msra.mxu0 %v1303
  %1305 = vmatprep.subr.mxu0 0.0
  %v1306 = vand.u32 %v703, 4294901760
  %1307 = vmatpush1.msra.mxu0 %v1306
  %1308 = vmatprep.subr.mxu0 0.0
  %v1309 = vand.u32 %v702, 4294901760
  %1310 = vmatpush1.msra.mxu0 %v1309
  %1311 = vmatprep.subr.mxu0 0.0
  %v1312 = vand.u32 %v701, 4294901760
  %1313 = vmatpush1.msra.mxu0 %v1312
  %1314 = vmatprep.subr.mxu0 0.0
  %v1315 = vand.u32 %v700, 4294901760
  %1316 = vmatpush1.msra.mxu0 %v1315
  %1317 = vmatprep.subr.mxu0 0.0
  %v1318 = vand.u32 %v699, 4294901760
  %1319 = vmatpush1.msra.mxu0 %v1318
  %1320 = vmatprep.subr.mxu0 0.0
  %v1321 = vand.u32 %v698, 4294901760
  %1322 = vmatpush1.msra.mxu0 %v1321
  %1323 = vmatprep.subr.mxu0 0.0
  %1324 = vmatpush2.msra.mxu0 0.0
  %1325 = vmatprep.subr.mxu0 0.0
  %1326 = vmatpush2.msra.mxu0 0.0
  %1327 = vmatprep.subr.mxu0 0.0
  %1328 = vmatpush2.msra.mxu0 0.0
  %1329 = vmatprep.subr.mxu0 0.0
  %1330 = vmatpush2.msra.mxu0 0.0
  %1331 = vmatprep.subr.mxu0 0.0
  %1332 = vmatpush2.msra.mxu0 0.0
  %1333 = vmatprep.subr.mxu0 0.0
  %1334 = vmatpush2.msra.mxu0 0.0
  %1335 = vmatprep.subr.mxu0 0.0
  %1336 = vmatpush2.msra.mxu0 0.0
  %1337 = vmatprep.subr.mxu0 0.0
  %1338 = vmatpush2.msra.mxu0 0.0
  %1339 = vmatprep.subr.mxu0 0.0
  %1340 = vmatpush2.msra.mxu0 0.0
  %1341 = vmatprep.subr.mxu0 0.0
  %1342 = vmatpush2.msra.mxu0 0.0
  %1343 = vmatprep.subr.mxu0 0.0
  %1344 = vmatpush2.msra.mxu0 0.0
  %1345 = vmatprep.subr.mxu0 0.0
  %1346 = vmatpush2.msra.mxu0 0.0
  %1347 = vmatprep.subr.mxu0 0.0
  %1348 = vmatpush2.msra.mxu0 0.0
  %1349 = vmatprep.subr.mxu0 0.0
  %1350 = vmatpush2.msra.mxu0 0.0
  %1351 = vmatprep.subr.mxu0 0.0
  %1352 = vmatpush2.msra.mxu0 0.0
  %1353 = vmatprep.subr.mxu0 0.0
  %1354 = vmatpush2.msra.mxu0 0.0
  %1355 = vmatprep.mubr.f32.mxu0 0.0
  %v1356 = vand.u32 %v697, 4294901760
  %1357 = vmatmul.mubr.f32.gmra.mxu0 %v1356
  %v1358 = vpop.f32.mrf.mxu0
  %v1359 = vadd.f32 %v1272, %v1358
  %v1360 = vpop.f32.mrf.mxu0
  %1361 = vdwg.mxu0
  %v1362 = vmax.f32 %v1359, 0.0
  %v1363 = vld [vmem:[%s5] sm:$0xff]
  %v1364 = vld [vmem:[%s5 + $0x8] sm:$0xff]
  %v1365 = vld [vmem:[%s5 + $0x10] sm:$0xff]
  %v1366 = vld [vmem:[%s5 + $0x18] sm:$0xff]
  %v1367 = vld [vmem:[%s5 + $0x20] sm:$0xff]
  %v1368 = vld [vmem:[%s5 + $0x28] sm:$0xff]
  %v1369 = vld [vmem:[%s5 + $0x30] sm:$0xff]
  %v1370 = vld [vmem:[%s5 + $0x38] sm:$0xff]
  %v1371 = vld [vmem:[%s5 + $0x40] sm:$0xff]
  %v1372 = vld [vmem:[%s5 + $0x48] sm:$0xff]
  %v1373 = vld [vmem:[%s5 + $0x50] sm:$0xff]
  %v1374 = vld [vmem:[%s5 + $0x58] sm:$0xff]
  %v1375 = vld [vmem:[%s5 + $0x60] sm:$0xff]
  %v1376 = vld [vmem:[%s5 + $0x68] sm:$0xff]
  %v1377 = vld [vmem:[%s5 + $0x70] sm:$0xff]
  %v1378 = vld [vmem:[%s5 + $0x78] sm:$0xff]
  %v1379 = vld [vmem:[%s6] sm:$0x1]
  %v1381 = vlaneseq
  %v1382 = vshrl.u32 %v1381, 7
  %v1383 = vsub.s32 0, %v1382
  %v1384 = vrot.slane %v1379, %v1383
  %1386 = vmatprep.subr.mxu0 0.0
  %v1387 = vand.u32 %v1378, 4294901760
  %1388 = vmatpush1.msra.mxu0 %v1387
  %1389 = vmatprep.subr.mxu0 0.0
  %v1390 = vand.u32 %v1377, 4294901760
  %1391 = vmatpush1.msra.mxu0 %v1390
  %1392 = vmatprep.subr.mxu0 0.0
  %v1393 = vand.u32 %v1376, 4294901760
  %1394 = vmatpush1.msra.mxu0 %v1393
  %1395 = vmatprep.subr.mxu0 0.0
  %v1396 = vand.u32 %v1375, 4294901760
  %1397 = vmatpush1.msra.mxu0 %v1396
  %1398 = vmatprep.subr.mxu0 0.0
  %v1399 = vand.u32 %v1374, 4294901760
  %1400 = vmatpush1.msra.mxu0 %v1399
  %1401 = vmatprep.subr.mxu0 0.0
  %v1402 = vand.u32 %v1373, 4294901760
  %1403 = vmatpush1.msra.mxu0 %v1402
  %1404 = vmatprep.subr.mxu0 0.0
  %v1405 = vand.u32 %v1372, 4294901760
  %1406 = vmatpush1.msra.mxu0 %v1405
  %1407 = vmatprep.subr.mxu0 0.0
  %v1408 = vand.u32 %v1371, 4294901760
  %1409 = vmatpush1.msra.mxu0 %v1408
  %1410 = vmatprep.subr.mxu0 0.0
  %v1411 = vand.u32 %v1370, 4294901760
  %1412 = vmatpush1.msra.mxu0 %v1411
  %1413 = vmatprep.subr.mxu0 0.0
  %v1414 = vand.u32 %v1369, 4294901760
  %1415 = vmatpush1.msra.mxu0 %v1414
  %1416 = vmatprep.subr.mxu0 0.0
  %v1417 = vand.u32 %v1368, 4294901760
  %1418 = vmatpush1.msra.mxu0 %v1417
  %1419 = vmatprep.subr.mxu0 0.0
  %v1420 = vand.u32 %v1367, 4294901760
  %1421 = vmatpush1.msra.mxu0 %v1420
  %1422 = vmatprep.subr.mxu0 0.0
  %v1423 = vand.u32 %v1366, 4294901760
  %1424 = vmatpush1.msra.mxu0 %v1423
  %1425 = vmatprep.subr.mxu0 0.0
  %v1426 = vand.u32 %v1365, 4294901760
  %1427 = vmatpush1.msra.mxu0 %v1426
  %1428 = vmatprep.subr.mxu0 0.0
  %v1429 = vand.u32 %v1364, 4294901760
  %1430 = vmatpush1.msra.mxu0 %v1429
  %1431 = vmatprep.subr.mxu0 0.0
  %v1432 = vand.u32 %v1363, 4294901760
  %1433 = vmatpush1.msra.mxu0 %v1432
  %1434 = vmatprep.subr.mxu0 0.0
  %1435 = vmatpush2.msra.mxu0 0.0
  %1436 = vmatprep.subr.mxu0 0.0
  %1437 = vmatpush2.msra.mxu0 0.0
  %1438 = vmatprep.subr.mxu0 0.0
  %1439 = vmatpush2.msra.mxu0 0.0
  %1440 = vmatprep.subr.mxu0 0.0
  %1441 = vmatpush2.msra.mxu0 0.0
  %1442 = vmatprep.subr.mxu0 0.0
  %1443 = vmatpush2.msra.mxu0 0.0
  %1444 = vmatprep.subr.mxu0 0.0
  %1445 = vmatpush2.msra.mxu0 0.0
  %1446 = vmatprep.subr.mxu0 0.0
  %1447 = vmatpush2.msra.mxu0 0.0
  %1448 = vmatprep.subr.mxu0 0.0
  %1449 = vmatpush2.msra.mxu0 0.0
  %1450 = vmatprep.subr.mxu0 0.0
  %1451 = vmatpush2.msra.mxu0 0.0
  %1452 = vmatprep.subr.mxu0 0.0
  %1453 = vmatpush2.msra.mxu0 0.0
  %1454 = vmatprep.subr.mxu0 0.0
  %1455 = vmatpush2.msra.mxu0 0.0
  %1456 = vmatprep.subr.mxu0 0.0
  %1457 = vmatpush2.msra.mxu0 0.0
  %1458 = vmatprep.subr.mxu0 0.0
  %1459 = vmatpush2.msra.mxu0 0.0
  %1460 = vmatprep.subr.mxu0 0.0
  %1461 = vmatpush2.msra.mxu0 0.0
  %1462 = vmatprep.subr.mxu0 0.0
  %1463 = vmatpush2.msra.mxu0 0.0
  %1464 = vmatprep.subr.mxu0 0.0
  %1465 = vmatpush2.msra.mxu0 0.0
  %1466 = vmatprep.mubr.f32.mxu0 0.0
  %v1467 = vand.u32 %v1362, 4294901760
  %v1468 = vsub.f32 %v1362, %v1467
  %v1469 = vand.u32 %v1468, 4294901760
  %v1470 = vsub.f32 %v1468, %v1469
  %v1471 = vand.u32 %v1470, 4294901760
  %1472 = vmatmul.mubr.f32.gmra.mxu0 %v1471
  %v1473 = vpop.f32.mrf.mxu0
  %v1474 = vadd.f32 %v1384, %v1473
  %v1475 = vpop.f32.mrf.mxu0
  %1476 = vdwg.mxu0
  %1477 = vmatprep.subr.mxu0 0.0
  %v1478 = vand.u32 %v1378, 4294901760
  %v1479 = vsub.f32 %v1378, %v1478
  %v1480 = vand.u32 %v1479, 4294901760
  %v1481 = vsub.f32 %v1479, %v1480
  %v1482 = vand.u32 %v1481, 4294901760
  %1483 = vmatpush1.msra.mxu0 %v1482
  %1484 = vmatprep.subr.mxu0 0.0
  %v1485 = vand.u32 %v1377, 4294901760
  %v1486 = vsub.f32 %v1377, %v1485
  %v1487 = vand.u32 %v1486, 4294901760
  %v1488 = vsub.f32 %v1486, %v1487
  %v1489 = vand.u32 %v1488, 4294901760
  %1490 = vmatpush1.msra.mxu0 %v1489
  %1491 = vmatprep.subr.mxu0 0.0
  %v1492 = vand.u32 %v1376, 4294901760
  %v1493 = vsub.f32 %v1376, %v1492
  %v1494 = vand.u32 %v1493, 4294901760
  %v1495 = vsub.f32 %v1493, %v1494
  %v1496 = vand.u32 %v1495, 4294901760
  %1497 = vmatpush1.msra.mxu0 %v1496
  %1498 = vmatprep.subr.mxu0 0.0
  %v1499 = vand.u32 %v1375, 4294901760
  %v1500 = vsub.f32 %v1375, %v1499
  %v1501 = vand.u32 %v1500, 4294901760
  %v1502 = vsub.f32 %v1500, %v1501
  %v1503 = vand.u32 %v1502, 4294901760
  %1504 = vmatpush1.msra.mxu0 %v1503
  %1505 = vmatprep.subr.mxu0 0.0
  %v1506 = vand.u32 %v1374, 4294901760
  %v1507 = vsub.f32 %v1374, %v1506
  %v1508 = vand.u32 %v1507, 4294901760
  %v1509 = vsub.f32 %v1507, %v1508
  %v1510 = vand.u32 %v1509, 4294901760
  %1511 = vmatpush1.msra.mxu0 %v1510
  %1512 = vmatprep.subr.mxu0 0.0
  %v1513 = vand.u32 %v1373, 4294901760
  %v1514 = vsub.f32 %v1373, %v1513
  %v1515 = vand.u32 %v1514, 4294901760
  %v1516 = vsub.f32 %v1514, %v1515
  %v1517 = vand.u32 %v1516, 4294901760
  %1518 = vmatpush1.msra.mxu0 %v1517
  %1519 = vmatprep.subr.mxu0 0.0
  %v1520 = vand.u32 %v1372, 4294901760
  %v1521 = vsub.f32 %v1372, %v1520
  %v1522 = vand.u32 %v1521, 4294901760
  %v1523 = vsub.f32 %v1521, %v1522
  %v1524 = vand.u32 %v1523, 4294901760
  %1525 = vmatpush1.msra.mxu0 %v1524
  %1526 = vmatprep.subr.mxu0 0.0
  %v1527 = vand.u32 %v1371, 4294901760
  %v1528 = vsub.f32 %v1371, %v1527
  %v1529 = vand.u32 %v1528, 4294901760
  %v1530 = vsub.f32 %v1528, %v1529
  %v1531 = vand.u32 %v1530, 4294901760
  %1532 = vmatpush1.msra.mxu0 %v1531
  %1533 = vmatprep.subr.mxu0 0.0
  %v1534 = vand.u32 %v1370, 4294901760
  %v1535 = vsub.f32 %v1370, %v1534
  %v1536 = vand.u32 %v1535, 4294901760
  %v1537 = vsub.f32 %v1535, %v1536
  %v1538 = vand.u32 %v1537, 4294901760
  %1539 = vmatpush1.msra.mxu0 %v1538
  %1540 = vmatprep.subr.mxu0 0.0
  %v1541 = vand.u32 %v1369, 4294901760
  %v1542 = vsub.f32 %v1369, %v1541
  %v1543 = vand.u32 %v1542, 4294901760
  %v1544 = vsub.f32 %v1542, %v1543
  %v1545 = vand.u32 %v1544, 4294901760
  %1546 = vmatpush1.msra.mxu0 %v1545
  %1547 = vmatprep.subr.mxu0 0.0
  %v1548 = vand.u32 %v1368, 4294901760
  %v1549 = vsub.f32 %v1368, %v1548
  %v1550 = vand.u32 %v1549, 4294901760
  %v1551 = vsub.f32 %v1549, %v1550
  %v1552 = vand.u32 %v1551, 4294901760
  %1553 = vmatpush1.msra.mxu0 %v1552
  %1554 = vmatprep.subr.mxu0 0.0
  %v1555 = vand.u32 %v1367, 4294901760
  %v1556 = vsub.f32 %v1367, %v1555
  %v1557 = vand.u32 %v1556, 4294901760
  %v1558 = vsub.f32 %v1556, %v1557
  %v1559 = vand.u32 %v1558, 4294901760
  %1560 = vmatpush1.msra.mxu0 %v1559
  %1561 = vmatprep.subr.mxu0 0.0
  %v1562 = vand.u32 %v1366, 4294901760
  %v1563 = vsub.f32 %v1366, %v1562
  %v1564 = vand.u32 %v1563, 4294901760
  %v1565 = vsub.f32 %v1563, %v1564
  %v1566 = vand.u32 %v1565, 4294901760
  %1567 = vmatpush1.msra.mxu0 %v1566
  %1568 = vmatprep.subr.mxu0 0.0
  %v1569 = vand.u32 %v1365, 4294901760
  %v1570 = vsub.f32 %v1365, %v1569
  %v1571 = vand.u32 %v1570, 4294901760
  %v1572 = vsub.f32 %v1570, %v1571
  %v1573 = vand.u32 %v1572, 4294901760
  %1574 = vmatpush1.msra.mxu0 %v1573
  %1575 = vmatprep.subr.mxu0 0.0
  %v1576 = vand.u32 %v1364, 4294901760
  %v1577 = vsub.f32 %v1364, %v1576
  %v1578 = vand.u32 %v1577, 4294901760
  %v1579 = vsub.f32 %v1577, %v1578
  %v1580 = vand.u32 %v1579, 4294901760
  %1581 = vmatpush1.msra.mxu0 %v1580
  %1582 = vmatprep.subr.mxu0 0.0
  %v1583 = vand.u32 %v1363, 4294901760
  %v1584 = vsub.f32 %v1363, %v1583
  %v1585 = vand.u32 %v1584, 4294901760
  %v1586 = vsub.f32 %v1584, %v1585
  %v1587 = vand.u32 %v1586, 4294901760
  %1588 = vmatpush1.msra.mxu0 %v1587
  %1589 = vmatprep.subr.mxu0 0.0
  %1590 = vmatpush2.msra.mxu0 0.0
  %1591 = vmatprep.subr.mxu0 0.0
  %1592 = vmatpush2.msra.mxu0 0.0
  %1593 = vmatprep.subr.mxu0 0.0
  %1594 = vmatpush2.msra.mxu0 0.0
  %1595 = vmatprep.subr.mxu0 0.0
  %1596 = vmatpush2.msra.mxu0 0.0
  %1597 = vmatprep.subr.mxu0 0.0
  %1598 = vmatpush2.msra.mxu0 0.0
  %1599 = vmatprep.subr.mxu0 0.0
  %1600 = vmatpush2.msra.mxu0 0.0
  %1601 = vmatprep.subr.mxu0 0.0
  %1602 = vmatpush2.msra.mxu0 0.0
  %1603 = vmatprep.subr.mxu0 0.0
  %1604 = vmatpush2.msra.mxu0 0.0
  %1605 = vmatprep.subr.mxu0 0.0
  %1606 = vmatpush2.msra.mxu0 0.0
  %1607 = vmatprep.subr.mxu0 0.0
  %1608 = vmatpush2.msra.mxu0 0.0
  %1609 = vmatprep.subr.mxu0 0.0
  %1610 = vmatpush2.msra.mxu0 0.0
  %1611 = vmatprep.subr.mxu0 0.0
  %1612 = vmatpush2.msra.mxu0 0.0
  %1613 = vmatprep.subr.mxu0 0.0
  %1614 = vmatpush2.msra.mxu0 0.0
  %1615 = vmatprep.subr.mxu0 0.0
  %1616 = vmatpush2.msra.mxu0 0.0
  %1617 = vmatprep.subr.mxu0 0.0
  %1618 = vmatpush2.msra.mxu0 0.0
  %1619 = vmatprep.subr.mxu0 0.0
  %1620 = vmatpush2.msra.mxu0 0.0
  %1621 = vmatprep.mubr.f32.mxu0 0.0
  %v1622 = vand.u32 %v1362, 4294901760
  %1623 = vmatmul.mubr.f32.gmra.mxu0 %v1622
  %v1624 = vpop.f32.mrf.mxu0
  %v1625 = vadd.f32 %v1474, %v1624
  %v1626 = vpop.f32.mrf.mxu0
  %1627 = vdwg.mxu0
  %1628 = vmatprep.subr.mxu0 0.0
  %v1629 = vand.u32 %v1378, 4294901760
  %v1630 = vsub.f32 %v1378, %v1629
  %1631 = vmatpush1.msra.mxu0 %v1630
  %1632 = vmatprep.subr.mxu0 0.0
  %v1633 = vand.u32 %v1377, 4294901760
  %v1634 = vsub.f32 %v1377, %v1633
  %1635 = vmatpush1.msra.mxu0 %v1634
  %1636 = vmatprep.subr.mxu0 0.0
  %v1637 = vand.u32 %v1376, 4294901760
  %v1638 = vsub.f32 %v1376, %v1637
  %1639 = vmatpush1.msra.mxu0 %v1638
  %1640 = vmatprep.subr.mxu0 0.0
  %v1641 = vand.u32 %v1375, 4294901760
  %v1642 = vsub.f32 %v1375, %v1641
  %1643 = vmatpush1.msra.mxu0 %v1642
  %1644 = vmatprep.subr.mxu0 0.0
  %v1645 = vand.u32 %v1374, 4294901760
  %v1646 = vsub.f32 %v1374, %v1645
  %1647 = vmatpush1.msra.mxu0 %v1646
  %1648 = vmatprep.subr.mxu0 0.0
  %v1649 = vand.u32 %v1373, 4294901760
  %v1650 = vsub.f32 %v1373, %v1649
  %1651 = vmatpush1.msra.mxu0 %v1650
  %1652 = vmatprep.subr.mxu0 0.0
  %v1653 = vand.u32 %v1372, 4294901760
  %v1654 = vsub.f32 %v1372, %v1653
  %1655 = vmatpush1.msra.mxu0 %v1654
  %1656 = vmatprep.subr.mxu0 0.0
  %v1657 = vand.u32 %v1371, 4294901760
  %v1658 = vsub.f32 %v1371, %v1657
  %1659 = vmatpush1.msra.mxu0 %v1658
  %1660 = vmatprep.subr.mxu0 0.0
  %v1661 = vand.u32 %v1370, 4294901760
  %v1662 = vsub.f32 %v1370, %v1661
  %1663 = vmatpush1.msra.mxu0 %v1662
  %1664 = vmatprep.subr.mxu0 0.0
  %v1665 = vand.u32 %v1369, 4294901760
  %v1666 = vsub.f32 %v1369, %v1665
  %1667 = vmatpush1.msra.mxu0 %v1666
  %1668 = vmatprep.subr.mxu0 0.0
  %v1669 = vand.u32 %v1368, 4294901760
  %v1670 = vsub.f32 %v1368, %v1669
  %1671 = vmatpush1.msra.mxu0 %v1670
  %1672 = vmatprep.subr.mxu0 0.0
  %v1673 = vand.u32 %v1367, 4294901760
  %v1674 = vsub.f32 %v1367, %v1673
  %1675 = vmatpush1.msra.mxu0 %v1674
  %1676 = vmatprep.subr.mxu0 0.0
  %v1677 = vand.u32 %v1366, 4294901760
  %v1678 = vsub.f32 %v1366, %v1677
  %1679 = vmatpush1.msra.mxu0 %v1678
  %1680 = vmatprep.subr.mxu0 0.0
  %v1681 = vand.u32 %v1365, 4294901760
  %v1682 = vsub.f32 %v1365, %v1681
  %1683 = vmatpush1.msra.mxu0 %v1682
  %1684 = vmatprep.subr.mxu0 0.0
  %v1685 = vand.u32 %v1364, 4294901760
  %v1686 = vsub.f32 %v1364, %v1685
  %1687 = vmatpush1.msra.mxu0 %v1686
  %1688 = vmatprep.subr.mxu0 0.0
  %v1689 = vand.u32 %v1363, 4294901760
  %v1690 = vsub.f32 %v1363, %v1689
  %1691 = vmatpush1.msra.mxu0 %v1690
  %1692 = vmatprep.subr.mxu0 0.0
  %1693 = vmatpush2.msra.mxu0 0.0
  %1694 = vmatprep.subr.mxu0 0.0
  %1695 = vmatpush2.msra.mxu0 0.0
  %1696 = vmatprep.subr.mxu0 0.0
  %1697 = vmatpush2.msra.mxu0 0.0
  %1698 = vmatprep.subr.mxu0 0.0
  %1699 = vmatpush2.msra.mxu0 0.0
  %1700 = vmatprep.subr.mxu0 0.0
  %1701 = vmatpush2.msra.mxu0 0.0
  %1702 = vmatprep.subr.mxu0 0.0
  %1703 = vmatpush2.msra.mxu0 0.0
  %1704 = vmatprep.subr.mxu0 0.0
  %1705 = vmatpush2.msra.mxu0 0.0
  %1706 = vmatprep.subr.mxu0 0.0
  %1707 = vmatpush2.msra.mxu0 0.0
  %1708 = vmatprep.subr.mxu0 0.0
  %1709 = vmatpush2.msra.mxu0 0.0
  %1710 = vmatprep.subr.mxu0 0.0
  %1711 = vmatpush2.msra.mxu0 0.0
  %1712 = vmatprep.subr.mxu0 0.0
  %1713 = vmatpush2.msra.mxu0 0.0
  %1714 = vmatprep.subr.mxu0 0.0
  %1715 = vmatpush2.msra.mxu0 0.0
  %1716 = vmatprep.subr.mxu0 0.0
  %1717 = vmatpush2.msra.mxu0 0.0
  %1718 = vmatprep.subr.mxu0 0.0
  %1719 = vmatpush2.msra.mxu0 0.0
  %1720 = vmatprep.subr.mxu0 0.0
  %1721 = vmatpush2.msra.mxu0 0.0
  %1722 = vmatprep.subr.mxu0 0.0
  %1723 = vmatpush2.msra.mxu0 0.0
  %1724 = vmatprep.mubr.f32.mxu0 0.0
  %v1725 = vand.u32 %v1362, 4294901760
  %v1726 = vsub.f32 %v1362, %v1725
  %1727 = vmatmul.mubr.f32.gmra.mxu0 %v1726
  %v1728 = vpop.f32.mrf.mxu0
  %v1729 = vadd.f32 %v1625, %v1728
  %v1730 = vpop.f32.mrf.mxu0
  %1731 = vdwg.mxu0
  %1732 = vmatprep.subr.mxu0 0.0
  %v1733 = vand.u32 %v1378, 4294901760
  %1734 = vmatpush1.msra.mxu0 %v1733
  %1735 = vmatprep.subr.mxu0 0.0
  %v1736 = vand.u32 %v1377, 4294901760
  %1737 = vmatpush1.msra.mxu0 %v1736
  %1738 = vmatprep.subr.mxu0 0.0
  %v1739 = vand.u32 %v1376, 4294901760
  %1740 = vmatpush1.msra.mxu0 %v1739
  %1741 = vmatprep.subr.mxu0 0.0
  %v1742 = vand.u32 %v1375, 4294901760
  %1743 = vmatpush1.msra.mxu0 %v1742
  %1744 = vmatprep.subr.mxu0 0.0
  %v1745 = vand.u32 %v1374, 4294901760
  %1746 = vmatpush1.msra.mxu0 %v1745
  %1747 = vmatprep.subr.mxu0 0.0
  %v1748 = vand.u32 %v1373, 4294901760
  %1749 = vmatpush1.msra.mxu0 %v1748
  %1750 = vmatprep.subr.mxu0 0.0
  %v1751 = vand.u32 %v1372, 4294901760
  %1752 = vmatpush1.msra.mxu0 %v1751
  %1753 = vmatprep.subr.mxu0 0.0
  %v1754 = vand.u32 %v1371, 4294901760
  %1755 = vmatpush1.msra.mxu0 %v1754
  %1756 = vmatprep.subr.mxu0 0.0
  %v1757 = vand.u32 %v1370, 4294901760
  %1758 = vmatpush1.msra.mxu0 %v1757
  %1759 = vmatprep.subr.mxu0 0.0
  %v1760 = vand.u32 %v1369, 4294901760
  %1761 = vmatpush1.msra.mxu0 %v1760
  %1762 = vmatprep.subr.mxu0 0.0
  %v1763 = vand.u32 %v1368, 4294901760
  %1764 = vmatpush1.msra.mxu0 %v1763
  %1765 = vmatprep.subr.mxu0 0.0
  %v1766 = vand.u32 %v1367, 4294901760
  %1767 = vmatpush1.msra.mxu0 %v1766
  %1768 = vmatprep.subr.mxu0 0.0
  %v1769 = vand.u32 %v1366, 4294901760
  %1770 = vmatpush1.msra.mxu0 %v1769
  %1771 = vmatprep.subr.mxu0 0.0
  %v1772 = vand.u32 %v1365, 4294901760
  %1773 = vmatpush1.msra.mxu0 %v1772
  %1774 = vmatprep.subr.mxu0 0.0
  %v1775 = vand.u32 %v1364, 4294901760
  %1776 = vmatpush1.msra.mxu0 %v1775
  %1777 = vmatprep.subr.mxu0 0.0
  %v1778 = vand.u32 %v1363, 4294901760
  %1779 = vmatpush1.msra.mxu0 %v1778
  %1780 = vmatprep.subr.mxu0 0.0
  %1781 = vmatpush2.msra.mxu0 0.0
  %1782 = vmatprep.subr.mxu0 0.0
  %1783 = vmatpush2.msra.mxu0 0.0
  %1784 = vmatprep.subr.mxu0 0.0
  %1785 = vmatpush2.msra.mxu0 0.0
  %1786 = vmatprep.subr.mxu0 0.0
  %1787 = vmatpush2.msra.mxu0 0.0
  %1788 = vmatprep.subr.mxu0 0.0
  %1789 = vmatpush2.msra.mxu0 0.0
  %1790 = vmatprep.subr.mxu0 0.0
  %1791 = vmatpush2.msra.mxu0 0.0
  %1792 = vmatprep.subr.mxu0 0.0
  %1793 = vmatpush2.msra.mxu0 0.0
  %1794 = vmatprep.subr.mxu0 0.0
  %1795 = vmatpush2.msra.mxu0 0.0
  %1796 = vmatprep.subr.mxu0 0.0
  %1797 = vmatpush2.msra.mxu0 0.0
  %1798 = vmatprep.subr.mxu0 0.0
  %1799 = vmatpush2.msra.mxu0 0.0
  %1800 = vmatprep.subr.mxu0 0.0
  %1801 = vmatpush2.msra.mxu0 0.0
  %1802 = vmatprep.subr.mxu0 0.0
  %1803 = vmatpush2.msra.mxu0 0.0
  %1804 = vmatprep.subr.mxu0 0.0
  %1805 = vmatpush2.msra.mxu0 0.0
  %1806 = vmatprep.subr.mxu0 0.0
  %1807 = vmatpush2.msra.mxu0 0.0
  %1808 = vmatprep.subr.mxu0 0.0
  %1809 = vmatpush2.msra.mxu0 0.0
  %1810 = vmatprep.subr.mxu0 0.0
  %1811 = vmatpush2.msra.mxu0 0.0
  %1812 = vmatprep.mubr.f32.mxu0 0.0
  %v1813 = vand.u32 %v1362, 4294901760
  %v1814 = vsub.f32 %v1362, %v1813
  %v1815 = vand.u32 %v1814, 4294901760
  %1816 = vmatmul.mubr.f32.gmra.mxu0 %v1815
  %v1817 = vpop.f32.mrf.mxu0
  %v1818 = vadd.f32 %v1729, %v1817
  %v1819 = vpop.f32.mrf.mxu0
  %1820 = vdwg.mxu0
  %1821 = vmatprep.subr.mxu0 0.0
  %v1822 = vand.u32 %v1378, 4294901760
  %v1823 = vsub.f32 %v1378, %v1822
  %v1824 = vand.u32 %v1823, 4294901760
  %1825 = vmatpush1.msra.mxu0 %v1824
  %1826 = vmatprep.subr.mxu0 0.0
  %v1827 = vand.u32 %v1377, 4294901760
  %v1828 = vsub.f32 %v1377, %v1827
  %v1829 = vand.u32 %v1828, 4294901760
  %1830 = vmatpush1.msra.mxu0 %v1829
  %1831 = vmatprep.subr.mxu0 0.0
  %v1832 = vand.u32 %v1376, 4294901760
  %v1833 = vsub.f32 %v1376, %v1832
  %v1834 = vand.u32 %v1833, 4294901760
  %1835 = vmatpush1.msra.mxu0 %v1834
  %1836 = vmatprep.subr.mxu0 0.0
  %v1837 = vand.u32 %v1375, 4294901760
  %v1838 = vsub.f32 %v1375, %v1837
  %v1839 = vand.u32 %v1838, 4294901760
  %1840 = vmatpush1.msra.mxu0 %v1839
  %1841 = vmatprep.subr.mxu0 0.0
  %v1842 = vand.u32 %v1374, 4294901760
  %v1843 = vsub.f32 %v1374, %v1842
  %v1844 = vand.u32 %v1843, 4294901760
  %1845 = vmatpush1.msra.mxu0 %v1844
  %1846 = vmatprep.subr.mxu0 0.0
  %v1847 = vand.u32 %v1373, 4294901760
  %v1848 = vsub.f32 %v1373, %v1847
  %v1849 = vand.u32 %v1848, 4294901760
  %1850 = vmatpush1.msra.mxu0 %v1849
  %1851 = vmatprep.subr.mxu0 0.0
  %v1852 = vand.u32 %v1372, 4294901760
  %v1853 = vsub.f32 %v1372, %v1852
  %v1854 = vand.u32 %v1853, 4294901760
  %1855 = vmatpush1.msra.mxu0 %v1854
  %1856 = vmatprep.subr.mxu0 0.0
  %v1857 = vand.u32 %v1371, 4294901760
  %v1858 = vsub.f32 %v1371, %v1857
  %v1859 = vand.u32 %v1858, 4294901760
  %1860 = vmatpush1.msra.mxu0 %v1859
  %1861 = vmatprep.subr.mxu0 0.0
  %v1862 = vand.u32 %v1370, 4294901760
  %v1863 = vsub.f32 %v1370, %v1862
  %v1864 = vand.u32 %v1863, 4294901760
  %1865 = vmatpush1.msra.mxu0 %v1864
  %1866 = vmatprep.subr.mxu0 0.0
  %v1867 = vand.u32 %v1369, 4294901760
  %v1868 = vsub.f32 %v1369, %v1867
  %v1869 = vand.u32 %v1868, 4294901760
  %1870 = vmatpush1.msra.mxu0 %v1869
  %1871 = vmatprep.subr.mxu0 0.0
  %v1872 = vand.u32 %v1368, 4294901760
  %v1873 = vsub.f32 %v1368, %v1872
  %v1874 = vand.u32 %v1873, 4294901760
  %1875 = vmatpush1.msra.mxu0 %v1874
  %1876 = vmatprep.subr.mxu0 0.0
  %v1877 = vand.u32 %v1367, 4294901760
  %v1878 = vsub.f32 %v1367, %v1877
  %v1879 = vand.u32 %v1878, 4294901760
  %1880 = vmatpush1.msra.mxu0 %v1879
  %1881 = vmatprep.subr.mxu0 0.0
  %v1882 = vand.u32 %v1366, 4294901760
  %v1883 = vsub.f32 %v1366, %v1882
  %v1884 = vand.u32 %v1883, 4294901760
  %1885 = vmatpush1.msra.mxu0 %v1884
  %1886 = vmatprep.subr.mxu0 0.0
  %v1887 = vand.u32 %v1365, 4294901760
  %v1888 = vsub.f32 %v1365, %v1887
  %v1889 = vand.u32 %v1888, 4294901760
  %1890 = vmatpush1.msra.mxu0 %v1889
  %1891 = vmatprep.subr.mxu0 0.0
  %v1892 = vand.u32 %v1364, 4294901760
  %v1893 = vsub.f32 %v1364, %v1892
  %v1894 = vand.u32 %v1893, 4294901760
  %1895 = vmatpush1.msra.mxu0 %v1894
  %1896 = vmatprep.subr.mxu0 0.0
  %v1897 = vand.u32 %v1363, 4294901760
  %v1898 = vsub.f32 %v1363, %v1897
  %v1899 = vand.u32 %v1898, 4294901760
  %1900 = vmatpush1.msra.mxu0 %v1899
  %1901 = vmatprep.subr.mxu0 0.0
  %1902 = vmatpush2.msra.mxu0 0.0
  %1903 = vmatprep.subr.mxu0 0.0
  %1904 = vmatpush2.msra.mxu0 0.0
  %1905 = vmatprep.subr.mxu0 0.0
  %1906 = vmatpush2.msra.mxu0 0.0
  %1907 = vmatprep.subr.mxu0 0.0
  %1908 = vmatpush2.msra.mxu0 0.0
  %1909 = vmatprep.subr.mxu0 0.0
  %1910 = vmatpush2.msra.mxu0 0.0
  %1911 = vmatprep.subr.mxu0 0.0
  %1912 = vmatpush2.msra.mxu0 0.0
  %1913 = vmatprep.subr.mxu0 0.0
  %1914 = vmatpush2.msra.mxu0 0.0
  %1915 = vmatprep.subr.mxu0 0.0
  %1916 = vmatpush2.msra.mxu0 0.0
  %1917 = vmatprep.subr.mxu0 0.0
  %1918 = vmatpush2.msra.mxu0 0.0
  %1919 = vmatprep.subr.mxu0 0.0
  %1920 = vmatpush2.msra.mxu0 0.0
  %1921 = vmatprep.subr.mxu0 0.0
  %1922 = vmatpush2.msra.mxu0 0.0
  %1923 = vmatprep.subr.mxu0 0.0
  %1924 = vmatpush2.msra.mxu0 0.0
  %1925 = vmatprep.subr.mxu0 0.0
  %1926 = vmatpush2.msra.mxu0 0.0
  %1927 = vmatprep.subr.mxu0 0.0
  %1928 = vmatpush2.msra.mxu0 0.0
  %1929 = vmatprep.subr.mxu0 0.0
  %1930 = vmatpush2.msra.mxu0 0.0
  %1931 = vmatprep.subr.mxu0 0.0
  %1932 = vmatpush2.msra.mxu0 0.0
  %1933 = vmatprep.mubr.f32.mxu0 0.0
  %v1934 = vand.u32 %v1362, 4294901760
  %1935 = vmatmul.mubr.f32.gmra.mxu0 %v1934
  %v1936 = vpop.f32.mrf.mxu0
  %v1937 = vadd.f32 %v1818, %v1936
  %v1938 = vpop.f32.mrf.mxu0
  %1939 = vdwg.mxu0
  %1940 = vmatprep.subr.mxu0 0.0
  %v1941 = vand.u32 %v1378, 4294901760
  %1942 = vmatpush1.msra.mxu0 %v1941
  %1943 = vmatprep.subr.mxu0 0.0
  %v1944 = vand.u32 %v1377, 4294901760
  %1945 = vmatpush1.msra.mxu0 %v1944
  %1946 = vmatprep.subr.mxu0 0.0
  %v1947 = vand.u32 %v1376, 4294901760
  %1948 = vmatpush1.msra.mxu0 %v1947
  %1949 = vmatprep.subr.mxu0 0.0
  %v1950 = vand.u32 %v1375, 4294901760
  %1951 = vmatpush1.msra.mxu0 %v1950
  %1952 = vmatprep.subr.mxu0 0.0
  %v1953 = vand.u32 %v1374, 4294901760
  %1954 = vmatpush1.msra.mxu0 %v1953
  %1955 = vmatprep.subr.mxu0 0.0
  %v1956 = vand.u32 %v1373, 4294901760
  %1957 = vmatpush1.msra.mxu0 %v1956
  %1958 = vmatprep.subr.mxu0 0.0
  %v1959 = vand.u32 %v1372, 4294901760
  %1960 = vmatpush1.msra.mxu0 %v1959
  %1961 = vmatprep.subr.mxu0 0.0
  %v1962 = vand.u32 %v1371, 4294901760
  %1963 = vmatpush1.msra.mxu0 %v1962
  %1964 = vmatprep.subr.mxu0 0.0
  %v1965 = vand.u32 %v1370, 4294901760
  %1966 = vmatpush1.msra.mxu0 %v1965
  %1967 = vmatprep.subr.mxu0 0.0
  %v1968 = vand.u32 %v1369, 4294901760
  %1969 = vmatpush1.msra.mxu0 %v1968
  %1970 = vmatprep.subr.mxu0 0.0
  %v1971 = vand.u32 %v1368, 4294901760
  %1972 = vmatpush1.msra.mxu0 %v1971
  %1973 = vmatprep.subr.mxu0 0.0
  %v1974 = vand.u32 %v1367, 4294901760
  %1975 = vmatpush1.msra.mxu0 %v1974
  %1976 = vmatprep.subr.mxu0 0.0
  %v1977 = vand.u32 %v1366, 4294901760
  %1978 = vmatpush1.msra.mxu0 %v1977
  %1979 = vmatprep.subr.mxu0 0.0
  %v1980 = vand.u32 %v1365, 4294901760
  %1981 = vmatpush1.msra.mxu0 %v1980
  %1982 = vmatprep.subr.mxu0 0.0
  %v1983 = vand.u32 %v1364, 4294901760
  %1984 = vmatpush1.msra.mxu0 %v1983
  %1985 = vmatprep.subr.mxu0 0.0
  %v1986 = vand.u32 %v1363, 4294901760
  %1987 = vmatpush1.msra.mxu0 %v1986
  %1988 = vmatprep.subr.mxu0 0.0
  %1989 = vmatpush2.msra.mxu0 0.0
  %1990 = vmatprep.subr.mxu0 0.0
  %1991 = vmatpush2.msra.mxu0 0.0
  %1992 = vmatprep.subr.mxu0 0.0
  %1993 = vmatpush2.msra.mxu0 0.0
  %1994 = vmatprep.subr.mxu0 0.0
  %1995 = vmatpush2.msra.mxu0 0.0
  %1996 = vmatprep.subr.mxu0 0.0
  %1997 = vmatpush2.msra.mxu0 0.0
  %1998 = vmatprep.subr.mxu0 0.0
  %1999 = vmatpush2.msra.mxu0 0.0
  %2000 = vmatprep.subr.mxu0 0.0
  %2001 = vmatpush2.msra.mxu0 0.0
  %2002 = vmatprep.subr.mxu0 0.0
  %2003 = vmatpush2.msra.mxu0 0.0
  %2004 = vmatprep.subr.mxu0 0.0
  %2005 = vmatpush2.msra.mxu0 0.0
  %2006 = vmatprep.subr.mxu0 0.0
  %2007 = vmatpush2.msra.mxu0 0.0
  %2008 = vmatprep.subr.mxu0 0.0
  %2009 = vmatpush2.msra.mxu0 0.0
  %2010 = vmatprep.subr.mxu0 0.0
  %2011 = vmatpush2.msra.mxu0 0.0
  %2012 = vmatprep.subr.mxu0 0.0
  %2013 = vmatpush2.msra.mxu0 0.0
  %2014 = vmatprep.subr.mxu0 0.0
  %2015 = vmatpush2.msra.mxu0 0.0
  %2016 = vmatprep.subr.mxu0 0.0
  %2017 = vmatpush2.msra.mxu0 0.0
  %2018 = vmatprep.subr.mxu0 0.0
  %2019 = vmatpush2.msra.mxu0 0.0
  %2020 = vmatprep.mubr.f32.mxu0 0.0
  %v2021 = vand.u32 %v1362, 4294901760
  %2022 = vmatmul.mubr.f32.gmra.mxu0 %v2021
  %v2023 = vpop.f32.mrf.mxu0
  %v2024 = vadd.f32 %v1937, %v2023
  %v2025 = vpop.f32.mrf.mxu0
  %2026 = vdwg.mxu0
  %v2027 = vmax.f32 %v2024, 0.0
  %v2028 = vld [vmem:[%s7] sm:$0xff]
  %v2029 = vld [vmem:[%s7 + $0x8] sm:$0xff]
  %v2030 = vld [vmem:[%s7 + $0x10] sm:$0xff]
  %v2031 = vld [vmem:[%s7 + $0x18] sm:$0xff]
  %v2032 = vld [vmem:[%s7 + $0x20] sm:$0xff]
  %v2033 = vld [vmem:[%s7 + $0x28] sm:$0xff]
  %v2034 = vld [vmem:[%s7 + $0x30] sm:$0xff]
  %v2035 = vld [vmem:[%s7 + $0x38] sm:$0xff]
  %v2036 = vld [vmem:[%s7 + $0x40] sm:$0xff]
  %v2037 = vld [vmem:[%s7 + $0x48] sm:$0xff]
  %v2038 = vld [vmem:[%s7 + $0x50] sm:$0xff]
  %v2039 = vld [vmem:[%s7 + $0x58] sm:$0xff]
  %v2040 = vld [vmem:[%s7 + $0x60] sm:$0xff]
  %v2041 = vld [vmem:[%s7 + $0x68] sm:$0xff]
  %v2042 = vld [vmem:[%s7 + $0x70] sm:$0xff]
  %v2043 = vld [vmem:[%s7 + $0x78] sm:$0xff]
  %v2044 = vld [vmem:[%s8] sm:$0x1]
  %v2046 = vlaneseq
  %v2047 = vshrl.u32 %v2046, 7
  %v2048 = vsub.s32 0, %v2047
  %v2049 = vrot.slane %v2044, %v2048
  %2051 = vmatprep.subr.mxu0 0.0
  %v2052 = vand.u32 %v2043, 4294901760
  %2053 = vmatpush1.msra.mxu0 %v2052
  %2054 = vmatprep.subr.mxu0 0.0
  %v2055 = vand.u32 %v2042, 4294901760
  %2056 = vmatpush1.msra.mxu0 %v2055
  %2057 = vmatprep.subr.mxu0 0.0
  %v2058 = vand.u32 %v2041, 4294901760
  %2059 = vmatpush1.msra.mxu0 %v2058
  %2060 = vmatprep.subr.mxu0 0.0
  %v2061 = vand.u32 %v2040, 4294901760
  %2062 = vmatpush1.msra.mxu0 %v2061
  %2063 = vmatprep.subr.mxu0 0.0
  %v2064 = vand.u32 %v2039, 4294901760
  %2065 = vmatpush1.msra.mxu0 %v2064
  %2066 = vmatprep.subr.mxu0 0.0
  %v2067 = vand.u32 %v2038, 4294901760
  %2068 = vmatpush1.msra.mxu0 %v2067
  %2069 = vmatprep.subr.mxu0 0.0
  %v2070 = vand.u32 %v2037, 4294901760
  %2071 = vmatpush1.msra.mxu0 %v2070
  %2072 = vmatprep.subr.mxu0 0.0
  %v2073 = vand.u32 %v2036, 4294901760
  %2074 = vmatpush1.msra.mxu0 %v2073
  %2075 = vmatprep.subr.mxu0 0.0
  %v2076 = vand.u32 %v2035, 4294901760
  %2077 = vmatpush1.msra.mxu0 %v2076
  %2078 = vmatprep.subr.mxu0 0.0
  %v2079 = vand.u32 %v2034, 4294901760
  %2080 = vmatpush1.msra.mxu0 %v2079
  %2081 = vmatprep.subr.mxu0 0.0
  %v2082 = vand.u32 %v2033, 4294901760
  %2083 = vmatpush1.msra.mxu0 %v2082
  %2084 = vmatprep.subr.mxu0 0.0
  %v2085 = vand.u32 %v2032, 4294901760
  %2086 = vmatpush1.msra.mxu0 %v2085
  %2087 = vmatprep.subr.mxu0 0.0
  %v2088 = vand.u32 %v2031, 4294901760
  %2089 = vmatpush1.msra.mxu0 %v2088
  %2090 = vmatprep.subr.mxu0 0.0
  %v2091 = vand.u32 %v2030, 4294901760
  %2092 = vmatpush1.msra.mxu0 %v2091
  %2093 = vmatprep.subr.mxu0 0.0
  %v2094 = vand.u32 %v2029, 4294901760
  %2095 = vmatpush1.msra.mxu0 %v2094
  %2096 = vmatprep.subr.mxu0 0.0
  %v2097 = vand.u32 %v2028, 4294901760
  %2098 = vmatpush1.msra.mxu0 %v2097
  %2099 = vmatprep.subr.mxu0 0.0
  %2100 = vmatpush2.msra.mxu0 0.0
  %2101 = vmatprep.subr.mxu0 0.0
  %2102 = vmatpush2.msra.mxu0 0.0
  %2103 = vmatprep.subr.mxu0 0.0
  %2104 = vmatpush2.msra.mxu0 0.0
  %2105 = vmatprep.subr.mxu0 0.0
  %2106 = vmatpush2.msra.mxu0 0.0
  %2107 = vmatprep.subr.mxu0 0.0
  %2108 = vmatpush2.msra.mxu0 0.0
  %2109 = vmatprep.subr.mxu0 0.0
  %2110 = vmatpush2.msra.mxu0 0.0
  %2111 = vmatprep.subr.mxu0 0.0
  %2112 = vmatpush2.msra.mxu0 0.0
  %2113 = vmatprep.subr.mxu0 0.0
  %2114 = vmatpush2.msra.mxu0 0.0
  %2115 = vmatprep.subr.mxu0 0.0
  %2116 = vmatpush2.msra.mxu0 0.0
  %2117 = vmatprep.subr.mxu0 0.0
  %2118 = vmatpush2.msra.mxu0 0.0
  %2119 = vmatprep.subr.mxu0 0.0
  %2120 = vmatpush2.msra.mxu0 0.0
  %2121 = vmatprep.subr.mxu0 0.0
  %2122 = vmatpush2.msra.mxu0 0.0
  %2123 = vmatprep.subr.mxu0 0.0
  %2124 = vmatpush2.msra.mxu0 0.0
  %2125 = vmatprep.subr.mxu0 0.0
  %2126 = vmatpush2.msra.mxu0 0.0
  %2127 = vmatprep.subr.mxu0 0.0
  %2128 = vmatpush2.msra.mxu0 0.0
  %2129 = vmatprep.subr.mxu0 0.0
  %2130 = vmatpush2.msra.mxu0 0.0
  %2131 = vmatprep.mubr.f32.mxu0 0.0
  %v2132 = vand.u32 %v2027, 4294901760
  %v2133 = vsub.f32 %v2027, %v2132
  %v2134 = vand.u32 %v2133, 4294901760
  %v2135 = vsub.f32 %v2133, %v2134
  %v2136 = vand.u32 %v2135, 4294901760
  %2137 = vmatmul.mubr.f32.gmra.mxu0 %v2136
  %v2138 = vpop.f32.mrf.mxu0
  %v2139 = vadd.f32 %v2049, %v2138
  %v2140 = vpop.f32.mrf.mxu0
  %2141 = vdwg.mxu0
  %2142 = vmatprep.subr.mxu0 0.0
  %v2143 = vand.u32 %v2043, 4294901760
  %v2144 = vsub.f32 %v2043, %v2143
  %v2145 = vand.u32 %v2144, 4294901760
  %v2146 = vsub.f32 %v2144, %v2145
  %v2147 = vand.u32 %v2146, 4294901760
  %2148 = vmatpush1.msra.mxu0 %v2147
  %2149 = vmatprep.subr.mxu0 0.0
  %v2150 = vand.u32 %v2042, 4294901760
  %v2151 = vsub.f32 %v2042, %v2150
  %v2152 = vand.u32 %v2151, 4294901760
  %v2153 = vsub.f32 %v2151, %v2152
  %v2154 = vand.u32 %v2153, 4294901760
  %2155 = vmatpush1.msra.mxu0 %v2154
  %2156 = vmatprep.subr.mxu0 0.0
  %v2157 = vand.u32 %v2041, 4294901760
  %v2158 = vsub.f32 %v2041, %v2157
  %v2159 = vand.u32 %v2158, 4294901760
  %v2160 = vsub.f32 %v2158, %v2159
  %v2161 = vand.u32 %v2160, 4294901760
  %2162 = vmatpush1.msra.mxu0 %v2161
  %2163 = vmatprep.subr.mxu0 0.0
  %v2164 = vand.u32 %v2040, 4294901760
  %v2165 = vsub.f32 %v2040, %v2164
  %v2166 = vand.u32 %v2165, 4294901760
  %v2167 = vsub.f32 %v2165, %v2166
  %v2168 = vand.u32 %v2167, 4294901760
  %2169 = vmatpush1.msra.mxu0 %v2168
  %2170 = vmatprep.subr.mxu0 0.0
  %v2171 = vand.u32 %v2039, 4294901760
  %v2172 = vsub.f32 %v2039, %v2171
  %v2173 = vand.u32 %v2172, 4294901760
  %v2174 = vsub.f32 %v2172, %v2173
  %v2175 = vand.u32 %v2174, 4294901760
  %2176 = vmatpush1.msra.mxu0 %v2175
  %2177 = vmatprep.subr.mxu0 0.0
  %v2178 = vand.u32 %v2038, 4294901760
  %v2179 = vsub.f32 %v2038, %v2178
  %v2180 = vand.u32 %v2179, 4294901760
  %v2181 = vsub.f32 %v2179, %v2180
  %v2182 = vand.u32 %v2181, 4294901760
  %2183 = vmatpush1.msra.mxu0 %v2182
  %2184 = vmatprep.subr.mxu0 0.0
  %v2185 = vand.u32 %v2037, 4294901760
  %v2186 = vsub.f32 %v2037, %v2185
  %v2187 = vand.u32 %v2186, 4294901760
  %v2188 = vsub.f32 %v2186, %v2187
  %v2189 = vand.u32 %v2188, 4294901760
  %2190 = vmatpush1.msra.mxu0 %v2189
  %2191 = vmatprep.subr.mxu0 0.0
  %v2192 = vand.u32 %v2036, 4294901760
  %v2193 = vsub.f32 %v2036, %v2192
  %v2194 = vand.u32 %v2193, 4294901760
  %v2195 = vsub.f32 %v2193, %v2194
  %v2196 = vand.u32 %v2195, 4294901760
  %2197 = vmatpush1.msra.mxu0 %v2196
  %2198 = vmatprep.subr.mxu0 0.0
  %v2199 = vand.u32 %v2035, 4294901760
  %v2200 = vsub.f32 %v2035, %v2199
  %v2201 = vand.u32 %v2200, 4294901760
  %v2202 = vsub.f32 %v2200, %v2201
  %v2203 = vand.u32 %v2202, 4294901760
  %2204 = vmatpush1.msra.mxu0 %v2203
  %2205 = vmatprep.subr.mxu0 0.0
  %v2206 = vand.u32 %v2034, 4294901760
  %v2207 = vsub.f32 %v2034, %v2206
  %v2208 = vand.u32 %v2207, 4294901760
  %v2209 = vsub.f32 %v2207, %v2208
  %v2210 = vand.u32 %v2209, 4294901760
  %2211 = vmatpush1.msra.mxu0 %v2210
  %2212 = vmatprep.subr.mxu0 0.0
  %v2213 = vand.u32 %v2033, 4294901760
  %v2214 = vsub.f32 %v2033, %v2213
  %v2215 = vand.u32 %v2214, 4294901760
  %v2216 = vsub.f32 %v2214, %v2215
  %v2217 = vand.u32 %v2216, 4294901760
  %2218 = vmatpush1.msra.mxu0 %v2217
  %2219 = vmatprep.subr.mxu0 0.0
  %v2220 = vand.u32 %v2032, 4294901760
  %v2221 = vsub.f32 %v2032, %v2220
  %v2222 = vand.u32 %v2221, 4294901760
  %v2223 = vsub.f32 %v2221, %v2222
  %v2224 = vand.u32 %v2223, 4294901760
  %2225 = vmatpush1.msra.mxu0 %v2224
  %2226 = vmatprep.subr.mxu0 0.0
  %v2227 = vand.u32 %v2031, 4294901760
  %v2228 = vsub.f32 %v2031, %v2227
  %v2229 = vand.u32 %v2228, 4294901760
  %v2230 = vsub.f32 %v2228, %v2229
  %v2231 = vand.u32 %v2230, 4294901760
  %2232 = vmatpush1.msra.mxu0 %v2231
  %2233 = vmatprep.subr.mxu0 0.0
  %v2234 = vand.u32 %v2030, 4294901760
  %v2235 = vsub.f32 %v2030, %v2234
  %v2236 = vand.u32 %v2235, 4294901760
  %v2237 = vsub.f32 %v2235, %v2236
  %v2238 = vand.u32 %v2237, 4294901760
  %2239 = vmatpush1.msra.mxu0 %v2238
  %2240 = vmatprep.subr.mxu0 0.0
  %v2241 = vand.u32 %v2029, 4294901760
  %v2242 = vsub.f32 %v2029, %v2241
  %v2243 = vand.u32 %v2242, 4294901760
  %v2244 = vsub.f32 %v2242, %v2243
  %v2245 = vand.u32 %v2244, 4294901760
  %2246 = vmatpush1.msra.mxu0 %v2245
  %2247 = vmatprep.subr.mxu0 0.0
  %v2248 = vand.u32 %v2028, 4294901760
  %v2249 = vsub.f32 %v2028, %v2248
  %v2250 = vand.u32 %v2249, 4294901760
  %v2251 = vsub.f32 %v2249, %v2250
  %v2252 = vand.u32 %v2251, 4294901760
  %2253 = vmatpush1.msra.mxu0 %v2252
  %2254 = vmatprep.subr.mxu0 0.0
  %2255 = vmatpush2.msra.mxu0 0.0
  %2256 = vmatprep.subr.mxu0 0.0
  %2257 = vmatpush2.msra.mxu0 0.0
  %2258 = vmatprep.subr.mxu0 0.0
  %2259 = vmatpush2.msra.mxu0 0.0
  %2260 = vmatprep.subr.mxu0 0.0
  %2261 = vmatpush2.msra.mxu0 0.0
  %2262 = vmatprep.subr.mxu0 0.0
  %2263 = vmatpush2.msra.mxu0 0.0
  %2264 = vmatprep.subr.mxu0 0.0
  %2265 = vmatpush2.msra.mxu0 0.0
  %2266 = vmatprep.subr.mxu0 0.0
  %2267 = vmatpush2.msra.mxu0 0.0
  %2268 = vmatprep.subr.mxu0 0.0
  %2269 = vmatpush2.msra.mxu0 0.0
  %2270 = vmatprep.subr.mxu0 0.0
  %2271 = vmatpush2.msra.mxu0 0.0
  %2272 = vmatprep.subr.mxu0 0.0
  %2273 = vmatpush2.msra.mxu0 0.0
  %2274 = vmatprep.subr.mxu0 0.0
  %2275 = vmatpush2.msra.mxu0 0.0
  %2276 = vmatprep.subr.mxu0 0.0
  %2277 = vmatpush2.msra.mxu0 0.0
  %2278 = vmatprep.subr.mxu0 0.0
  %2279 = vmatpush2.msra.mxu0 0.0
  %2280 = vmatprep.subr.mxu0 0.0
  %2281 = vmatpush2.msra.mxu0 0.0
  %2282 = vmatprep.subr.mxu0 0.0
  %2283 = vmatpush2.msra.mxu0 0.0
  %2284 = vmatprep.subr.mxu0 0.0
  %2285 = vmatpush2.msra.mxu0 0.0
  %2286 = vmatprep.mubr.f32.mxu0 0.0
  %v2287 = vand.u32 %v2027, 4294901760
  %2288 = vmatmul.mubr.f32.gmra.mxu0 %v2287
  %v2289 = vpop.f32.mrf.mxu0
  %v2290 = vadd.f32 %v2139, %v2289
  %v2291 = vpop.f32.mrf.mxu0
  %2292 = vdwg.mxu0
  %2293 = vmatprep.subr.mxu0 0.0
  %v2294 = vand.u32 %v2043, 4294901760
  %v2295 = vsub.f32 %v2043, %v2294
  %2296 = vmatpush1.msra.mxu0 %v2295
  %2297 = vmatprep.subr.mxu0 0.0
  %v2298 = vand.u32 %v2042, 4294901760
  %v2299 = vsub.f32 %v2042, %v2298
  %2300 = vmatpush1.msra.mxu0 %v2299
  %2301 = vmatprep.subr.mxu0 0.0
  %v2302 = vand.u32 %v2041, 4294901760
  %v2303 = vsub.f32 %v2041, %v2302
  %2304 = vmatpush1.msra.mxu0 %v2303
  %2305 = vmatprep.subr.mxu0 0.0
  %v2306 = vand.u32 %v2040, 4294901760
  %v2307 = vsub.f32 %v2040, %v2306
  %2308 = vmatpush1.msra.mxu0 %v2307
  %2309 = vmatprep.subr.mxu0 0.0
  %v2310 = vand.u32 %v2039, 4294901760
  %v2311 = vsub.f32 %v2039, %v2310
  %2312 = vmatpush1.msra.mxu0 %v2311
  %2313 = vmatprep.subr.mxu0 0.0
  %v2314 = vand.u32 %v2038, 4294901760
  %v2315 = vsub.f32 %v2038, %v2314
  %2316 = vmatpush1.msra.mxu0 %v2315
  %2317 = vmatprep.subr.mxu0 0.0
  %v2318 = vand.u32 %v2037, 4294901760
  %v2319 = vsub.f32 %v2037, %v2318
  %2320 = vmatpush1.msra.mxu0 %v2319
  %2321 = vmatprep.subr.mxu0 0.0
  %v2322 = vand.u32 %v2036, 4294901760
  %v2323 = vsub.f32 %v2036, %v2322
  %2324 = vmatpush1.msra.mxu0 %v2323
  %2325 = vmatprep.subr.mxu0 0.0
  %v2326 = vand.u32 %v2035, 4294901760
  %v2327 = vsub.f32 %v2035, %v2326
  %2328 = vmatpush1.msra.mxu0 %v2327
  %2329 = vmatprep.subr.mxu0 0.0
  %v2330 = vand.u32 %v2034, 4294901760
  %v2331 = vsub.f32 %v2034, %v2330
  %2332 = vmatpush1.msra.mxu0 %v2331
  %2333 = vmatprep.subr.mxu0 0.0
  %v2334 = vand.u32 %v2033, 4294901760
  %v2335 = vsub.f32 %v2033, %v2334
  %2336 = vmatpush1.msra.mxu0 %v2335
  %2337 = vmatprep.subr.mxu0 0.0
  %v2338 = vand.u32 %v2032, 4294901760
  %v2339 = vsub.f32 %v2032, %v2338
  %2340 = vmatpush1.msra.mxu0 %v2339
  %2341 = vmatprep.subr.mxu0 0.0
  %v2342 = vand.u32 %v2031, 4294901760
  %v2343 = vsub.f32 %v2031, %v2342
  %2344 = vmatpush1.msra.mxu0 %v2343
  %2345 = vmatprep.subr.mxu0 0.0
  %v2346 = vand.u32 %v2030, 4294901760
  %v2347 = vsub.f32 %v2030, %v2346
  %2348 = vmatpush1.msra.mxu0 %v2347
  %2349 = vmatprep.subr.mxu0 0.0
  %v2350 = vand.u32 %v2029, 4294901760
  %v2351 = vsub.f32 %v2029, %v2350
  %2352 = vmatpush1.msra.mxu0 %v2351
  %2353 = vmatprep.subr.mxu0 0.0
  %v2354 = vand.u32 %v2028, 4294901760
  %v2355 = vsub.f32 %v2028, %v2354
  %2356 = vmatpush1.msra.mxu0 %v2355
  %2357 = vmatprep.subr.mxu0 0.0
  %2358 = vmatpush2.msra.mxu0 0.0
  %2359 = vmatprep.subr.mxu0 0.0
  %2360 = vmatpush2.msra.mxu0 0.0
  %2361 = vmatprep.subr.mxu0 0.0
  %2362 = vmatpush2.msra.mxu0 0.0
  %2363 = vmatprep.subr.mxu0 0.0
  %2364 = vmatpush2.msra.mxu0 0.0
  %2365 = vmatprep.subr.mxu0 0.0
  %2366 = vmatpush2.msra.mxu0 0.0
  %2367 = vmatprep.subr.mxu0 0.0
  %2368 = vmatpush2.msra.mxu0 0.0
  %2369 = vmatprep.subr.mxu0 0.0
  %2370 = vmatpush2.msra.mxu0 0.0
  %2371 = vmatprep.subr.mxu0 0.0
  %2372 = vmatpush2.msra.mxu0 0.0
  %2373 = vmatprep.subr.mxu0 0.0
  %2374 = vmatpush2.msra.mxu0 0.0
  %2375 = vmatprep.subr.mxu0 0.0
  %2376 = vmatpush2.msra.mxu0 0.0
  %2377 = vmatprep.subr.mxu0 0.0
  %2378 = vmatpush2.msra.mxu0 0.0
  %2379 = vmatprep.subr.mxu0 0.0
  %2380 = vmatpush2.msra.mxu0 0.0
  %2381 = vmatprep.subr.mxu0 0.0
  %2382 = vmatpush2.msra.mxu0 0.0
  %2383 = vmatprep.subr.mxu0 0.0
  %2384 = vmatpush2.msra.mxu0 0.0
  %2385 = vmatprep.subr.mxu0 0.0
  %2386 = vmatpush2.msra.mxu0 0.0
  %2387 = vmatprep.subr.mxu0 0.0
  %2388 = vmatpush2.msra.mxu0 0.0
  %2389 = vmatprep.mubr.f32.mxu0 0.0
  %v2390 = vand.u32 %v2027, 4294901760
  %v2391 = vsub.f32 %v2027, %v2390
  %2392 = vmatmul.mubr.f32.gmra.mxu0 %v2391
  %v2393 = vpop.f32.mrf.mxu0
  %v2394 = vadd.f32 %v2290, %v2393
  %v2395 = vpop.f32.mrf.mxu0
  %2396 = vdwg.mxu0
  %2397 = vmatprep.subr.mxu0 0.0
  %v2398 = vand.u32 %v2043, 4294901760
  %2399 = vmatpush1.msra.mxu0 %v2398
  %2400 = vmatprep.subr.mxu0 0.0
  %v2401 = vand.u32 %v2042, 4294901760
  %2402 = vmatpush1.msra.mxu0 %v2401
  %2403 = vmatprep.subr.mxu0 0.0
  %v2404 = vand.u32 %v2041, 4294901760
  %2405 = vmatpush1.msra.mxu0 %v2404
  %2406 = vmatprep.subr.mxu0 0.0
  %v2407 = vand.u32 %v2040, 4294901760
  %2408 = vmatpush1.msra.mxu0 %v2407
  %2409 = vmatprep.subr.mxu0 0.0
  %v2410 = vand.u32 %v2039, 4294901760
  %2411 = vmatpush1.msra.mxu0 %v2410
  %2412 = vmatprep.subr.mxu0 0.0
  %v2413 = vand.u32 %v2038, 4294901760
  %2414 = vmatpush1.msra.mxu0 %v2413
  %2415 = vmatprep.subr.mxu0 0.0
  %v2416 = vand.u32 %v2037, 4294901760
  %2417 = vmatpush1.msra.mxu0 %v2416
  %2418 = vmatprep.subr.mxu0 0.0
  %v2419 = vand.u32 %v2036, 4294901760
  %2420 = vmatpush1.msra.mxu0 %v2419
  %2421 = vmatprep.subr.mxu0 0.0
  %v2422 = vand.u32 %v2035, 4294901760
  %2423 = vmatpush1.msra.mxu0 %v2422
  %2424 = vmatprep.subr.mxu0 0.0
  %v2425 = vand.u32 %v2034, 4294901760
  %2426 = vmatpush1.msra.mxu0 %v2425
  %2427 = vmatprep.subr.mxu0 0.0
  %v2428 = vand.u32 %v2033, 4294901760
  %2429 = vmatpush1.msra.mxu0 %v2428
  %2430 = vmatprep.subr.mxu0 0.0
  %v2431 = vand.u32 %v2032, 4294901760
  %2432 = vmatpush1.msra.mxu0 %v2431
  %2433 = vmatprep.subr.mxu0 0.0
  %v2434 = vand.u32 %v2031, 4294901760
  %2435 = vmatpush1.msra.mxu0 %v2434
  %2436 = vmatprep.subr.mxu0 0.0
  %v2437 = vand.u32 %v2030, 4294901760
  %2438 = vmatpush1.msra.mxu0 %v2437
  %2439 = vmatprep.subr.mxu0 0.0
  %v2440 = vand.u32 %v2029, 4294901760
  %2441 = vmatpush1.msra.mxu0 %v2440
  %2442 = vmatprep.subr.mxu0 0.0
  %v2443 = vand.u32 %v2028, 4294901760
  %2444 = vmatpush1.msra.mxu0 %v2443
  %2445 = vmatprep.subr.mxu0 0.0
  %2446 = vmatpush2.msra.mxu0 0.0
  %2447 = vmatprep.subr.mxu0 0.0
  %2448 = vmatpush2.msra.mxu0 0.0
  %2449 = vmatprep.subr.mxu0 0.0
  %2450 = vmatpush2.msra.mxu0 0.0
  %2451 = vmatprep.subr.mxu0 0.0
  %2452 = vmatpush2.msra.mxu0 0.0
  %2453 = vmatprep.subr.mxu0 0.0
  %2454 = vmatpush2.msra.mxu0 0.0
  %2455 = vmatprep.subr.mxu0 0.0
  %2456 = vmatpush2.msra.mxu0 0.0
  %2457 = vmatprep.subr.mxu0 0.0
  %2458 = vmatpush2.msra.mxu0 0.0
  %2459 = vmatprep.subr.mxu0 0.0
  %2460 = vmatpush2.msra.mxu0 0.0
  %2461 = vmatprep.subr.mxu0 0.0
  %2462 = vmatpush2.msra.mxu0 0.0
  %2463 = vmatprep.subr.mxu0 0.0
  %2464 = vmatpush2.msra.mxu0 0.0
  %2465 = vmatprep.subr.mxu0 0.0
  %2466 = vmatpush2.msra.mxu0 0.0
  %2467 = vmatprep.subr.mxu0 0.0
  %2468 = vmatpush2.msra.mxu0 0.0
  %2469 = vmatprep.subr.mxu0 0.0
  %2470 = vmatpush2.msra.mxu0 0.0
  %2471 = vmatprep.subr.mxu0 0.0
  %2472 = vmatpush2.msra.mxu0 0.0
  %2473 = vmatprep.subr.mxu0 0.0
  %2474 = vmatpush2.msra.mxu0 0.0
  %2475 = vmatprep.subr.mxu0 0.0
  %2476 = vmatpush2.msra.mxu0 0.0
  %2477 = vmatprep.mubr.f32.mxu0 0.0
  %v2478 = vand.u32 %v2027, 4294901760
  %v2479 = vsub.f32 %v2027, %v2478
  %v2480 = vand.u32 %v2479, 4294901760
  %2481 = vmatmul.mubr.f32.gmra.mxu0 %v2480
  %v2482 = vpop.f32.mrf.mxu0
  %v2483 = vadd.f32 %v2394, %v2482
  %v2484 = vpop.f32.mrf.mxu0
  %2485 = vdwg.mxu0
  %2486 = vmatprep.subr.mxu0 0.0
  %v2487 = vand.u32 %v2043, 4294901760
  %v2488 = vsub.f32 %v2043, %v2487
  %v2489 = vand.u32 %v2488, 4294901760
  %2490 = vmatpush1.msra.mxu0 %v2489
  %2491 = vmatprep.subr.mxu0 0.0
  %v2492 = vand.u32 %v2042, 4294901760
  %v2493 = vsub.f32 %v2042, %v2492
  %v2494 = vand.u32 %v2493, 4294901760
  %2495 = vmatpush1.msra.mxu0 %v2494
  %2496 = vmatprep.subr.mxu0 0.0
  %v2497 = vand.u32 %v2041, 4294901760
  %v2498 = vsub.f32 %v2041, %v2497
  %v2499 = vand.u32 %v2498, 4294901760
  %2500 = vmatpush1.msra.mxu0 %v2499
  %2501 = vmatprep.subr.mxu0 0.0
  %v2502 = vand.u32 %v2040, 4294901760
  %v2503 = vsub.f32 %v2040, %v2502
  %v2504 = vand.u32 %v2503, 4294901760
  %2505 = vmatpush1.msra.mxu0 %v2504
  %2506 = vmatprep.subr.mxu0 0.0
  %v2507 = vand.u32 %v2039, 4294901760
  %v2508 = vsub.f32 %v2039, %v2507
  %v2509 = vand.u32 %v2508, 4294901760
  %2510 = vmatpush1.msra.mxu0 %v2509
  %2511 = vmatprep.subr.mxu0 0.0
  %v2512 = vand.u32 %v2038, 4294901760
  %v2513 = vsub.f32 %v2038, %v2512
  %v2514 = vand.u32 %v2513, 4294901760
  %2515 = vmatpush1.msra.mxu0 %v2514
  %2516 = vmatprep.subr.mxu0 0.0
  %v2517 = vand.u32 %v2037, 4294901760
  %v2518 = vsub.f32 %v2037, %v2517
  %v2519 = vand.u32 %v2518, 4294901760
  %2520 = vmatpush1.msra.mxu0 %v2519
  %2521 = vmatprep.subr.mxu0 0.0
  %v2522 = vand.u32 %v2036, 4294901760
  %v2523 = vsub.f32 %v2036, %v2522
  %v2524 = vand.u32 %v2523, 4294901760
  %2525 = vmatpush1.msra.mxu0 %v2524
  %2526 = vmatprep.subr.mxu0 0.0
  %v2527 = vand.u32 %v2035, 4294901760
  %v2528 = vsub.f32 %v2035, %v2527
  %v2529 = vand.u32 %v2528, 4294901760
  %2530 = vmatpush1.msra.mxu0 %v2529
  %2531 = vmatprep.subr.mxu0 0.0
  %v2532 = vand.u32 %v2034, 4294901760
  %v2533 = vsub.f32 %v2034, %v2532
  %v2534 = vand.u32 %v2533, 4294901760
  %2535 = vmatpush1.msra.mxu0 %v2534
  %2536 = vmatprep.subr.mxu0 0.0
  %v2537 = vand.u32 %v2033, 4294901760
  %v2538 = vsub.f32 %v2033, %v2537
  %v2539 = vand.u32 %v2538, 4294901760
  %2540 = vmatpush1.msra.mxu0 %v2539
  %2541 = vmatprep.subr.mxu0 0.0
  %v2542 = vand.u32 %v2032, 4294901760
  %v2543 = vsub.f32 %v2032, %v2542
  %v2544 = vand.u32 %v2543, 4294901760
  %2545 = vmatpush1.msra.mxu0 %v2544
  %2546 = vmatprep.subr.mxu0 0.0
  %v2547 = vand.u32 %v2031, 4294901760
  %v2548 = vsub.f32 %v2031, %v2547
  %v2549 = vand.u32 %v2548, 4294901760
  %2550 = vmatpush1.msra.mxu0 %v2549
  %2551 = vmatprep.subr.mxu0 0.0
  %v2552 = vand.u32 %v2030, 4294901760
  %v2553 = vsub.f32 %v2030, %v2552
  %v2554 = vand.u32 %v2553, 4294901760
  %2555 = vmatpush1.msra.mxu0 %v2554
  %2556 = vmatprep.subr.mxu0 0.0
  %v2557 = vand.u32 %v2029, 4294901760
  %v2558 = vsub.f32 %v2029, %v2557
  %v2559 = vand.u32 %v2558, 4294901760
  %2560 = vmatpush1.msra.mxu0 %v2559
  %2561 = vmatprep.subr.mxu0 0.0
  %v2562 = vand.u32 %v2028, 4294901760
  %v2563 = vsub.f32 %v2028, %v2562
  %v2564 = vand.u32 %v2563, 4294901760
  %2565 = vmatpush1.msra.mxu0 %v2564
  %2566 = vmatprep.subr.mxu0 0.0
  %2567 = vmatpush2.msra.mxu0 0.0
  %2568 = vmatprep.subr.mxu0 0.0
  %2569 = vmatpush2.msra.mxu0 0.0
  %2570 = vmatprep.subr.mxu0 0.0
  %2571 = vmatpush2.msra.mxu0 0.0
  %2572 = vmatprep.subr.mxu0 0.0
  %2573 = vmatpush2.msra.mxu0 0.0
  %2574 = vmatprep.subr.mxu0 0.0
  %2575 = vmatpush2.msra.mxu0 0.0
  %2576 = vmatprep.subr.mxu0 0.0
  %2577 = vmatpush2.msra.mxu0 0.0
  %2578 = vmatprep.subr.mxu0 0.0
  %2579 = vmatpush2.msra.mxu0 0.0
  %2580 = vmatprep.subr.mxu0 0.0
  %2581 = vmatpush2.msra.mxu0 0.0
  %2582 = vmatprep.subr.mxu0 0.0
  %2583 = vmatpush2.msra.mxu0 0.0
  %2584 = vmatprep.subr.mxu0 0.0
  %2585 = vmatpush2.msra.mxu0 0.0
  %2586 = vmatprep.subr.mxu0 0.0
  %2587 = vmatpush2.msra.mxu0 0.0
  %2588 = vmatprep.subr.mxu0 0.0
  %2589 = vmatpush2.msra.mxu0 0.0
  %2590 = vmatprep.subr.mxu0 0.0
  %2591 = vmatpush2.msra.mxu0 0.0
  %2592 = vmatprep.subr.mxu0 0.0
  %2593 = vmatpush2.msra.mxu0 0.0
  %2594 = vmatprep.subr.mxu0 0.0
  %2595 = vmatpush2.msra.mxu0 0.0
  %2596 = vmatprep.subr.mxu0 0.0
  %2597 = vmatpush2.msra.mxu0 0.0
  %2598 = vmatprep.mubr.f32.mxu0 0.0
  %v2599 = vand.u32 %v2027, 4294901760
  %2600 = vmatmul.mubr.f32.gmra.mxu0 %v2599
  %v2601 = vpop.f32.mrf.mxu0
  %v2602 = vadd.f32 %v2483, %v2601
  %v2603 = vpop.f32.mrf.mxu0
  %2604 = vdwg.mxu0
  %2605 = vmatprep.subr.mxu0 0.0
  %v2606 = vand.u32 %v2043, 4294901760
  %2607 = vmatpush1.msra.mxu0 %v2606
  %2608 = vmatprep.subr.mxu0 0.0
  %v2609 = vand.u32 %v2042, 4294901760
  %2610 = vmatpush1.msra.mxu0 %v2609
  %2611 = vmatprep.subr.mxu0 0.0
  %v2612 = vand.u32 %v2041, 4294901760
  %2613 = vmatpush1.msra.mxu0 %v2612
  %2614 = vmatprep.subr.mxu0 0.0
  %v2615 = vand.u32 %v2040, 4294901760
  %2616 = vmatpush1.msra.mxu0 %v2615
  %2617 = vmatprep.subr.mxu0 0.0
  %v2618 = vand.u32 %v2039, 4294901760
  %2619 = vmatpush1.msra.mxu0 %v2618
  %2620 = vmatprep.subr.mxu0 0.0
  %v2621 = vand.u32 %v2038, 4294901760
  %2622 = vmatpush1.msra.mxu0 %v2621
  %2623 = vmatprep.subr.mxu0 0.0
  %v2624 = vand.u32 %v2037, 4294901760
  %2625 = vmatpush1.msra.mxu0 %v2624
  %2626 = vmatprep.subr.mxu0 0.0
  %v2627 = vand.u32 %v2036, 4294901760
  %2628 = vmatpush1.msra.mxu0 %v2627
  %2629 = vmatprep.subr.mxu0 0.0
  %v2630 = vand.u32 %v2035, 4294901760
  %2631 = vmatpush1.msra.mxu0 %v2630
  %2632 = vmatprep.subr.mxu0 0.0
  %v2633 = vand.u32 %v2034, 4294901760
  %2634 = vmatpush1.msra.mxu0 %v2633
  %2635 = vmatprep.subr.mxu0 0.0
  %v2636 = vand.u32 %v2033, 4294901760
  %2637 = vmatpush1.msra.mxu0 %v2636
  %2638 = vmatprep.subr.mxu0 0.0
  %v2639 = vand.u32 %v2032, 4294901760
  %2640 = vmatpush1.msra.mxu0 %v2639
  %2641 = vmatprep.subr.mxu0 0.0
  %v2642 = vand.u32 %v2031, 4294901760
  %2643 = vmatpush1.msra.mxu0 %v2642
  %2644 = vmatprep.subr.mxu0 0.0
  %v2645 = vand.u32 %v2030, 4294901760
  %2646 = vmatpush1.msra.mxu0 %v2645
  %2647 = vmatprep.subr.mxu0 0.0
  %v2648 = vand.u32 %v2029, 4294901760
  %2649 = vmatpush1.msra.mxu0 %v2648
  %2650 = vmatprep.subr.mxu0 0.0
  %v2651 = vand.u32 %v2028, 4294901760
  %2652 = vmatpush1.msra.mxu0 %v2651
  %2653 = vmatprep.subr.mxu0 0.0
  %2654 = vmatpush2.msra.mxu0 0.0
  %2655 = vmatprep.subr.mxu0 0.0
  %2656 = vmatpush2.msra.mxu0 0.0
  %2657 = vmatprep.subr.mxu0 0.0
  %2658 = vmatpush2.msra.mxu0 0.0
  %2659 = vmatprep.subr.mxu0 0.0
  %2660 = vmatpush2.msra.mxu0 0.0
  %2661 = vmatprep.subr.mxu0 0.0
  %2662 = vmatpush2.msra.mxu0 0.0
  %2663 = vmatprep.subr.mxu0 0.0
  %2664 = vmatpush2.msra.mxu0 0.0
  %2665 = vmatprep.subr.mxu0 0.0
  %2666 = vmatpush2.msra.mxu0 0.0
  %2667 = vmatprep.subr.mxu0 0.0
  %2668 = vmatpush2.msra.mxu0 0.0
  %2669 = vmatprep.subr.mxu0 0.0
  %2670 = vmatpush2.msra.mxu0 0.0
  %2671 = vmatprep.subr.mxu0 0.0
  %2672 = vmatpush2.msra.mxu0 0.0
  %2673 = vmatprep.subr.mxu0 0.0
  %2674 = vmatpush2.msra.mxu0 0.0
  %2675 = vmatprep.subr.mxu0 0.0
  %2676 = vmatpush2.msra.mxu0 0.0
  %2677 = vmatprep.subr.mxu0 0.0
  %2678 = vmatpush2.msra.mxu0 0.0
  %2679 = vmatprep.subr.mxu0 0.0
  %2680 = vmatpush2.msra.mxu0 0.0
  %2681 = vmatprep.subr.mxu0 0.0
  %2682 = vmatpush2.msra.mxu0 0.0
  %2683 = vmatprep.subr.mxu0 0.0
  %2684 = vmatpush2.msra.mxu0 0.0
  %2685 = vmatprep.mubr.f32.mxu0 0.0
  %v2686 = vand.u32 %v2027, 4294901760
  %2687 = vmatmul.mubr.f32.gmra.mxu0 %v2686
  %v2688 = vpop.f32.mrf.mxu0
  %v2689 = vadd.f32 %v2602, %v2688
  %v2690 = vpop.f32.mrf.mxu0
  %2691 = vdwg.mxu0
  %2692 = vst [vmem:[%s9] sm:$0xff] %v2689
  // Predicated region
  $region38: #{mlp_forward.1} parent=0 // pred_check
    _
  $region39: #{mlp_forward.1} parent=0 // pred_check_branch
    %2694 = sbr.rel (0) target = $region41
  $region40: #{mlp_forward.1} parent=0 // pred_region
    _
  $region41: #{mlp_forward.1} parent=0 // pred_fallthru
    _
  // Predicated region
  $region42: #{mlp_forward.1} parent=0 // pred_check
    _
  $region43: #{mlp_forward.1} parent=0 // pred_check_branch
    %2696 = sbr.rel (0) target = $region45
  $region44: #{mlp_forward.1} parent=0 // pred_region
    _
  $region45: #{mlp_forward.1} parent=0 // pred_fallthru
    _

// kernel: mlp_forward.1
$region0: #{mlp_forward.1}
  #allocation0 [shape = 'u32[]', space=smem, size = 0x4, offset = 0x4, fixed_abs, tag = 'smem constant byte address 0x4 - core index']
  #allocation1 [shape = 'u32[144,128]{1,0:T(1,128)}', space=vmem, size = 0x12000, scoped, tag = 'internal scratch']
  %s0 = inlined_call_operand.vmem [shape: f32[8,128], index: 0, kind: input, shape index: {}]
  %s1 = inlined_call_operand.vmem [shape: f32[128,128], index: 1, kind: input, shape index: {}]
  %s2 = inlined_call_operand.vmem [shape: f32[1,128], index: 2, kind: input, shape index: {}]
  %s3 = inlined_call_operand.vmem [shape: f32[128,128], index: 3, kind: input, shape index: {}]
  %s4 = inlined_call_operand.vmem [shape: f32[1,128], index: 4, kind: input, shape index: {}]
  %s5 = inlined_call_operand.vmem [shape: f32[128,128], index: 5, kind: input, shape index: {}]
  %s6 = inlined_call_operand.vmem [shape: f32[1,128], index: 6, kind: input, shape index: {}]
  %s7 = inlined_call_operand.vmem [shape: f32[128,128], index: 7, kind: input, shape index: {}]
  %s8 = inlined_call_operand.vmem [shape: f32[1,128], index: 8, kind: input, shape index: {}]
  %s9 = inlined_call_operand.vmem [shape: f32[8,128], index: 9, kind: output, shape index: {}]
  %s10 = sld [smem:[#allocation0]]
  $region46: #{mlp_forward.1} parent=0
    _
  %s12 = ssub.s32 1, %s10
  %s13 = scalar_select 0, %s12, %s10
  // Predicated region
  $region2: #{mlp_forward.1} parent=0 // pred_check
    _
  $region3: #{mlp_forward.1} parent=0 // pred_check_branch
    %15 = sbr.rel (0) target = $region5
  $region4: #{mlp_forward.1} parent=0 // pred_region
    _
  $region5: #{mlp_forward.1} parent=0 // pred_fallthru
    _
  // Predicated region
  $region6: #{mlp_forward.1} parent=0 // pred_check
    _
  $region7: #{mlp_forward.1} parent=0 // pred_check_branch
    %17 = sbr.rel (0) target = $region9
  $region8: #{mlp_forward.1} parent=0 // pred_region
    _
  $region9: #{mlp_forward.1} parent=0 // pred_fallthru
    _
  // Predicated region
  $region10: #{mlp_forward.1} parent=0 // pred_check
    _
  $region11: #{mlp_forward.1} parent=0 // pred_check_branch
    %19 = sbr.rel (0) target = $region13
  $region12: #{mlp_forward.1} parent=0 // pred_region
    _
  $region13: #{mlp_forward.1} parent=0 // pred_fallthru
    _
  // Predicated region
  $region14: #{mlp_forward.1} parent=0 // pred_check
    _
  $region15: #{mlp_forward.1} parent=0 // pred_check_branch
    %21 = sbr.rel (0) target = $region17
  $region16: #{mlp_forward.1} parent=0 // pred_region
    _
  $region17: #{mlp_forward.1} parent=0 // pred_fallthru
    _
  // Predicated region
  $region18: #{mlp_forward.1} parent=0 // pred_check
    _
  $region19: #{mlp_forward.1} parent=0 // pred_check_branch
    %23 = sbr.rel (0) target = $region21
  $region20: #{mlp_forward.1} parent=0 // pred_region
    _
  $region21: #{mlp_forward.1} parent=0 // pred_fallthru
    _
  // Predicated region
  $region22: #{mlp_forward.1} parent=0 // pred_check
    _
  $region23: #{mlp_forward.1} parent=0 // pred_check_branch
    %25 = sbr.rel (0) target = $region25
  $region24: #{mlp_forward.1} parent=0 // pred_region
    _
  $region25: #{mlp_forward.1} parent=0 // pred_fallthru
    _
  // Predicated region
  $region26: #{mlp_forward.1} parent=0 // pred_check
    _
  $region27: #{mlp_forward.1} parent=0 // pred_check_branch
    %27 = sbr.rel (0) target = $region29
  $region28: #{mlp_forward.1} parent=0 // pred_region
    _
  $region29: #{mlp_forward.1} parent=0 // pred_fallthru
    _
  // Predicated region
  $region30: #{mlp_forward.1} parent=0 // pred_check
    _
  $region31: #{mlp_forward.1} parent=0 // pred_check_branch
    %29 = sbr.rel (0) target = $region33
  $region32: #{mlp_forward.1} parent=0 // pred_region
    _
  $region33: #{mlp_forward.1} parent=0 // pred_fallthru
    _
  // Predicated region
  $region34: #{mlp_forward.1} parent=0 // pred_check
    _
  $region35: #{mlp_forward.1} parent=0 // pred_check_branch
    %31 = sbr.rel (0) target = $region37
  $region36: #{mlp_forward.1} parent=0 // pred_region
    _
  $region37: #{mlp_forward.1} parent=0 // pred_fallthru
    _
  %v32 = vld [vmem:[%s0] sm:$0xff]
  %v33 = vld [vmem:[%s1] sm:$0xff]
  %v34 = vld [vmem:[%s1 + $0x8] sm:$0xff]
  %v35 = vld [vmem:[%s1 + $0x10] sm:$0xff]
  %v36 = vld [vmem:[%s1 + $0x18] sm:$0xff]
  %v37 = vld [vmem:[%s1 + $0x20] sm:$0xff]
  %v38 = vld [vmem:[%s1 + $0x28] sm:$0xff]
  %v39 = vld [vmem:[%s1 + $0x30] sm:$0xff]
  %v40 = vld [vmem:[%s1 + $0x38] sm:$0xff]
  %v41 = vld [vmem:[%s1 + $0x40] sm:$0xff]
  %v42 = vld [vmem:[%s1 + $0x48] sm:$0xff]
  %v43 = vld [vmem:[%s1 + $0x50] sm:$0xff]
  %v44 = vld [vmem:[%s1 + $0x58] sm:$0xff]
  %v45 = vld [vmem:[%s1 + $0x60] sm:$0xff]
  %v46 = vld [vmem:[%s1 + $0x68] sm:$0xff]
  %v47 = vld [vmem:[%s1 + $0x70] sm:$0xff]
  %v48 = vld [vmem:[%s1 + $0x78] sm:$0xff]
  %v49 = vld [vmem:[%s2] sm:$0x1]
  %v51 = vlaneseq
  %v52 = vshrl.u32 %v51, 7
  %v53 = vsub.s32 0, %v52
  %v54 = vrot.slane %v49, %v53
  %56 = vmatprep.subr.mxu0 0.0
  %v57 = vand.u32 %v48, 4294901760
  %58 = vmatpush1.msra.mxu0 %v57
  %59 = vmatprep.subr.mxu0 0.0
  %v60 = vand.u32 %v47, 4294901760
  %61 = vmatpush1.msra.mxu0 %v60
  %62 = vmatprep.subr.mxu0 0.0
  %v63 = vand.u32 %v46, 4294901760
  %64 = vmatpush1.msra.mxu0 %v63
  %65 = vmatprep.subr.mxu0 0.0
  %v66 = vand.u32 %v45, 4294901760
  %67 = vmatpush1.msra.mxu0 %v66
  %68 = vmatprep.subr.mxu0 0.0
  %v69 = vand.u32 %v44, 4294901760
  %70 = vmatpush1.msra.mxu0 %v69
  %71 = vmatprep.subr.mxu0 0.0
  %v72 = vand.u32 %v43, 4294901760
  %73 = vmatpush1.msra.mxu0 %v72
  %74 = vmatprep.subr.mxu0 0.0
  %v75 = vand.u32 %v42, 4294901760
  %76 = vmatpush1.msra.mxu0 %v75
  %77 = vmatprep.subr.mxu0 0.0
  %v78 = vand.u32 %v41, 4294901760
  %79 = vmatpush1.msra.mxu0 %v78
  %80 = vmatprep.subr.mxu0 0.0
  %v81 = vand.u32 %v40, 4294901760
  %82 = vmatpush1.msra.mxu0 %v81
  %83 = vmatprep.subr.mxu0 0.0
  %v84 = vand.u32 %v39, 4294901760
  %85 = vmatpush1.msra.mxu0 %v84
  %86 = vmatprep.subr.mxu0 0.0
  %v87 = vand.u32 %v38, 4294901760
  %88 = vmatpush1.msra.mxu0 %v87
  %89 = vmatprep.subr.mxu0 0.0
  %v90 = vand.u32 %v37, 4294901760
  %91 = vmatpush1.msra.mxu0 %v90
  %92 = vmatprep.subr.mxu0 0.0
  %v93 = vand.u32 %v36, 4294901760
  %94 = vmatpush1.msra.mxu0 %v93
  %95 = vmatprep.subr.mxu0 0.0
  %v96 = vand.u32 %v35, 4294901760
  %97 = vmatpush1.msra.mxu0 %v96
  %98 = vmatprep.subr.mxu0 0.0
  %v99 = vand.u32 %v34, 4294901760
  %100 = vmatpush1.msra.mxu0 %v99
  %101 = vmatprep.subr.mxu0 0.0
  %v102 = vand.u32 %v33, 4294901760
  %103 = vmatpush1.msra.mxu0 %v102
  %104 = vmatprep.subr.mxu0 0.0
  %105 = vmatpush2.msra.mxu0 0.0
  %106 = vmatprep.subr.mxu0 0.0
  %107 = vmatpush2.msra.mxu0 0.0
  %108 = vmatprep.subr.mxu0 0.0
  %109 = vmatpush2.msra.mxu0 0.0
  %110 = vmatprep.subr.mxu0 0.0
  %111 = vmatpush2.msra.mxu0 0.0
  %112 = vmatprep.subr.mxu0 0.0
  %113 = vmatpush2.msra.mxu0 0.0
  %114 = vmatprep.subr.mxu0 0.0
  %115 = vmatpush2.msra.mxu0 0.0
  %116 = vmatprep.subr.mxu0 0.0
  %117 = vmatpush2.msra.mxu0 0.0
  %118 = vmatprep.subr.mxu0 0.0
  %119 = vmatpush2.msra.mxu0 0.0
  %120 = vmatprep.subr.mxu0 0.0
  %121 = vmatpush2.msra.mxu0 0.0
  %122 = vmatprep.subr.mxu0 0.0
  %123 = vmatpush2.msra.mxu0 0.0
  %124 = vmatprep.subr.mxu0 0.0
  %125 = vmatpush2.msra.mxu0 0.0
  %126 = vmatprep.subr.mxu0 0.0
  %127 = vmatpush2.msra.mxu0 0.0
  %128 = vmatprep.subr.mxu0 0.0
  %129 = vmatpush2.msra.mxu0 0.0
  %130 = vmatprep.subr.mxu0 0.0
  %131 = vmatpush2.msra.mxu0 0.0
  %132 = vmatprep.subr.mxu0 0.0
  %133 = vmatpush2.msra.mxu0 0.0
  %134 = vmatprep.subr.mxu0 0.0
  %135 = vmatpush2.msra.mxu0 0.0
  %136 = vmatprep.mubr.f32.mxu0 0.0
  %v137 = vand.u32 %v32, 4294901760
  %v138 = vsub.f32 %v32, %v137
  %v139 = vand.u32 %v138, 4294901760
  %v140 = vsub.f32 %v138, %v139
  %v141 = vand.u32 %v140, 4294901760
  %142 = vmatmul.mubr.f32.gmra.mxu0 %v141
  %v143 = vpop.f32.mrf.mxu0
  %v144 = vadd.f32 %v54, %v143
  %v145 = vpop.f32.mrf.mxu0
  %146 = vdwg.mxu0
  %147 = vmatprep.subr.mxu0 0.0
  %v148 = vand.u32 %v48, 4294901760
  %v149 = vsub.f32 %v48, %v148
  %v150 = vand.u32 %v149, 4294901760
  %v151 = vsub.f32 %v149, %v150
  %v152 = vand.u32 %v151, 4294901760
  %153 = vmatpush1.msra.mxu0 %v152
  %154 = vmatprep.subr.mxu0 0.0
  %v155 = vand.u32 %v47, 4294901760
  %v156 = vsub.f32 %v47, %v155
  %v157 = vand.u32 %v156, 4294901760
  %v158 = vsub.f32 %v156, %v157
  %v159 = vand.u32 %v158, 4294901760
  %160 = vmatpush1.msra.mxu0 %v159
  %161 = vmatprep.subr.mxu0 0.0
  %v162 = vand.u32 %v46, 4294901760
  %v163 = vsub.f32 %v46, %v162
  %v164 = vand.u32 %v163, 4294901760
  %v165 = vsub.f32 %v163, %v164
  %v166 = vand.u32 %v165, 4294901760
  %167 = vmatpush1.msra.mxu0 %v166
  %168 = vmatprep.subr.mxu0 0.0
  %v169 = vand.u32 %v45, 4294901760
  %v170 = vsub.f32 %v45, %v169
  %v171 = vand.u32 %v170, 4294901760
  %v172 = vsub.f32 %v170, %v171
  %v173 = vand.u32 %v172, 4294901760
  %174 = vmatpush1.msra.mxu0 %v173
  %175 = vmatprep.subr.mxu0 0.0
  %v176 = vand.u32 %v44, 4294901760
  %v177 = vsub.f32 %v44, %v176
  %v178 = vand.u32 %v177, 4294901760
  %v179 = vsub.f32 %v177, %v178
  %v180 = vand.u32 %v179, 4294901760
  %181 = vmatpush1.msra.mxu0 %v180
  %182 = vmatprep.subr.mxu0 0.0
  %v183 = vand.u32 %v43, 4294901760
  %v184 = vsub.f32 %v43, %v183
  %v185 = vand.u32 %v184, 4294901760
  %v186 = vsub.f32 %v184, %v185
  %v187 = vand.u32 %v186, 4294901760
  %188 = vmatpush1.msra.mxu0 %v187
  %189 = vmatprep.subr.mxu0 0.0
  %v190 = vand.u32 %v42, 4294901760
  %v191 = vsub.f32 %v42, %v190
  %v192 = vand.u32 %v191, 4294901760
  %v193 = vsub.f32 %v191, %v192
  %v194 = vand.u32 %v193, 4294901760
  %195 = vmatpush1.msra.mxu0 %v194
  %196 = vmatprep.subr.mxu0 0.0
  %v197 = vand.u32 %v41, 4294901760
  %v198 = vsub.f32 %v41, %v197
  %v199 = vand.u32 %v198, 4294901760
  %v200 = vsub.f32 %v198, %v199
  %v201 = vand.u32 %v200, 4294901760
  %202 = vmatpush1.msra.mxu0 %v201
  %203 = vmatprep.subr.mxu0 0.0
  %v204 = vand.u32 %v40, 4294901760
  %v205 = vsub.f32 %v40, %v204
  %v206 = vand.u32 %v205, 4294901760
  %v207 = vsub.f32 %v205, %v206
  %v208 = vand.u32 %v207, 4294901760
  %209 = vmatpush1.msra.mxu0 %v208
  %210 = vmatprep.subr.mxu0 0.0
  %v211 = vand.u32 %v39, 4294901760
  %v212 = vsub.f32 %v39, %v211
  %v213 = vand.u32 %v212, 4294901760
  %v214 = vsub.f32 %v212, %v213
  %v215 = vand.u32 %v214, 4294901760
  %216 = vmatpush1.msra.mxu0 %v215
  %217 = vmatprep.subr.mxu0 0.0
  %v218 = vand.u32 %v38, 4294901760
  %v219 = vsub.f32 %v38, %v218
  %v220 = vand.u32 %v219, 4294901760
  %v221 = vsub.f32 %v219, %v220
  %v222 = vand.u32 %v221, 4294901760
  %223 = vmatpush1.msra.mxu0 %v222
  %224 = vmatprep.subr.mxu0 0.0
  %v225 = vand.u32 %v37, 4294901760
  %v226 = vsub.f32 %v37, %v225
  %v227 = vand.u32 %v226, 4294901760
  %v228 = vsub.f32 %v226, %v227
  %v229 = vand.u32 %v228, 4294901760
  %230 = vmatpush1.msra.mxu0 %v229
  %231 = vmatprep.subr.mxu0 0.0
  %v232 = vand.u32 %v36, 4294901760
  %v233 = vsub.f32 %v36, %v232
  %v234 = vand.u32 %v233, 4294901760
  %v235 = vsub.f32 %v233, %v234
  %v236 = vand.u32 %v235, 4294901760
  %237 = vmatpush1.msra.mxu0 %v236
  %238 = vmatprep.subr.mxu0 0.0
  %v239 = vand.u32 %v35, 4294901760
  %v240 = vsub.f32 %v35, %v239
  %v241 = vand.u32 %v240, 4294901760
  %v242 = vsub.f32 %v240, %v241
  %v243 = vand.u32 %v242, 4294901760
  %244 = vmatpush1.msra.mxu0 %v243
  %245 = vmatprep.subr.mxu0 0.0
  %v246 = vand.u32 %v34, 4294901760
  %v247 = vsub.f32 %v34, %v246
  %v248 = vand.u32 %v247, 4294901760
  %v249 = vsub.f32 %v247, %v248
  %v250 = vand.u32 %v249, 4294901760
  %251 = vmatpush1.msra.mxu0 %v250
  %252 = vmatprep.subr.mxu0 0.0
  %v253 = vand.u32 %v33, 4294901760
  %v254 = vsub.f32 %v33, %v253
  %v255 = vand.u32 %v254, 4294901760
  %v256 = vsub.f32 %v254, %v255
  %v257 = vand.u32 %v256, 4294901760
  %258 = vmatpush1.msra.mxu0 %v257
  %259 = vmatprep.subr.mxu0 0.0
  %260 = vmatpush2.msra.mxu0 0.0
  %261 = vmatprep.subr.mxu0 0.0
  %262 = vmatpush2.msra.mxu0 0.0
  %263 = vmatprep.subr.mxu0 0.0
  %264 = vmatpush2.msra.mxu0 0.0
  %265 = vmatprep.subr.mxu0 0.0
  %266 = vmatpush2.msra.mxu0 0.0
  %267 = vmatprep.subr.mxu0 0.0
  %268 = vmatpush2.msra.mxu0 0.0
  %269 = vmatprep.subr.mxu0 0.0
  %270 = vmatpush2.msra.mxu0 0.0
  %271 = vmatprep.subr.mxu0 0.0
  %272 = vmatpush2.msra.mxu0 0.0
  %273 = vmatprep.subr.mxu0 0.0
  %274 = vmatpush2.msra.mxu0 0.0
  %275 = vmatprep.subr.mxu0 0.0
  %276 = vmatpush2.msra.mxu0 0.0
  %277 = vmatprep.subr.mxu0 0.0
  %278 = vmatpush2.msra.mxu0 0.0
  %279 = vmatprep.subr.mxu0 0.0
  %280 = vmatpush2.msra.mxu0 0.0
  %281 = vmatprep.subr.mxu0 0.0
  %282 = vmatpush2.msra.mxu0 0.0
  %283 = vmatprep.subr.mxu0 0.0
  %284 = vmatpush2.msra.mxu0 0.0
  %285 = vmatprep.subr.mxu0 0.0
  %286 = vmatpush2.msra.mxu0 0.0
  %287 = vmatprep.subr.mxu0 0.0
  %288 = vmatpush2.msra.mxu0 0.0
  %289 = vmatprep.subr.mxu0 0.0
  %290 = vmatpush2.msra.mxu0 0.0
  %291 = vmatprep.mubr.f32.mxu0 0.0
  %v292 = vand.u32 %v32, 4294901760
  %293 = vmatmul.mubr.f32.gmra.mxu0 %v292
  %v294 = vpop.f32.mrf.mxu0
  %v295 = vadd.f32 %v144, %v294
  %v296 = vpop.f32.mrf.mxu0
  %297 = vdwg.mxu0
  %298 = vmatprep.subr.mxu0 0.0
  %v299 = vand.u32 %v48, 4294901760
  %v300 = vsub.f32 %v48, %v299
  %301 = vmatpush1.msra.mxu0 %v300
  %302 = vmatprep.subr.mxu0 0.0
  %v303 = vand.u32 %v47, 4294901760
  %v304 = vsub.f32 %v47, %v303
  %305 = vmatpush1.msra.mxu0 %v304
  %306 = vmatprep.subr.mxu0 0.0
  %v307 = vand.u32 %v46, 4294901760
  %v308 = vsub.f32 %v46, %v307
  %309 = vmatpush1.msra.mxu0 %v308
  %310 = vmatprep.subr.mxu0 0.0
  %v311 = vand.u32 %v45, 4294901760
  %v312 = vsub.f32 %v45, %v311
  %313 = vmatpush1.msra.mxu0 %v312
  %314 = vmatprep.subr.mxu0 0.0
  %v315 = vand.u32 %v44, 4294901760
  %v316 = vsub.f32 %v44, %v315
  %317 = vmatpush1.msra.mxu0 %v316
  %318 = vmatprep.subr.mxu0 0.0
  %v319 = vand.u32 %v43, 4294901760
  %v320 = vsub.f32 %v43, %v319
  %321 = vmatpush1.msra.mxu0 %v320
  %322 = vmatprep.subr.mxu0 0.0
  %v323 = vand.u32 %v42, 4294901760
  %v324 = vsub.f32 %v42, %v323
  %325 = vmatpush1.msra.mxu0 %v324
  %326 = vmatprep.subr.mxu0 0.0
  %v327 = vand.u32 %v41, 4294901760
  %v328 = vsub.f32 %v41, %v327
  %329 = vmatpush1.msra.mxu0 %v328
  %330 = vmatprep.subr.mxu0 0.0
  %v331 = vand.u32 %v40, 4294901760
  %v332 = vsub.f32 %v40, %v331
  %333 = vmatpush1.msra.mxu0 %v332
  %334 = vmatprep.subr.mxu0 0.0
  %v335 = vand.u32 %v39, 4294901760
  %v336 = vsub.f32 %v39, %v335
  %337 = vmatpush1.msra.mxu0 %v336
  %338 = vmatprep.subr.mxu0 0.0
  %v339 = vand.u32 %v38, 4294901760
  %v340 = vsub.f32 %v38, %v339
  %341 = vmatpush1.msra.mxu0 %v340
  %342 = vmatprep.subr.mxu0 0.0
  %v343 = vand.u32 %v37, 4294901760
  %v344 = vsub.f32 %v37, %v343
  %345 = vmatpush1.msra.mxu0 %v344
  %346 = vmatprep.subr.mxu0 0.0
  %v347 = vand.u32 %v36, 4294901760
  %v348 = vsub.f32 %v36, %v347
  %349 = vmatpush1.msra.mxu0 %v348
  %350 = vmatprep.subr.mxu0 0.0
  %v351 = vand.u32 %v35, 4294901760
  %v352 = vsub.f32 %v35, %v351
  %353 = vmatpush1.msra.mxu0 %v352
  %354 = vmatprep.subr.mxu0 0.0
  %v355 = vand.u32 %v34, 4294901760
  %v356 = vsub.f32 %v34, %v355
  %357 = vmatpush1.msra.mxu0 %v356
  %358 = vmatprep.subr.mxu0 0.0
  %v359 = vand.u32 %v33, 4294901760
  %v360 = vsub.f32 %v33, %v359
  %361 = vmatpush1.msra.mxu0 %v360
  %362 = vmatprep.subr.mxu0 0.0
  %363 = vmatpush2.msra.mxu0 0.0
  %364 = vmatprep.subr.mxu0 0.0
  %365 = vmatpush2.msra.mxu0 0.0
  %366 = vmatprep.subr.mxu0 0.0
  %367 = vmatpush2.msra.mxu0 0.0
  %368 = vmatprep.subr.mxu0 0.0
  %369 = vmatpush2.msra.mxu0 0.0
  %370 = vmatprep.subr.mxu0 0.0
  %371 = vmatpush2.msra.mxu0 0.0
  %372 = vmatprep.subr.mxu0 0.0
  %373 = vmatpush2.msra.mxu0 0.0
  %374 = vmatprep.subr.mxu0 0.0
  %375 = vmatpush2.msra.mxu0 0.0
  %376 = vmatprep.subr.mxu0 0.0
  %377 = vmatpush2.msra.mxu0 0.0
  %378 = vmatprep.subr.mxu0 0.0
  %379 = vmatpush2.msra.mxu0 0.0
  %380 = vmatprep.subr.mxu0 0.0
  %381 = vmatpush2.msra.mxu0 0.0
  %382 = vmatprep.subr.mxu0 0.0
  %383 = vmatpush2.msra.mxu0 0.0
  %384 = vmatprep.subr.mxu0 0.0
  %385 = vmatpush2.msra.mxu0 0.0
  %386 = vmatprep.subr.mxu0 0.0
  %387 = vmatpush2.msra.mxu0 0.0
  %388 = vmatprep.subr.mxu0 0.0
  %389 = vmatpush2.msra.mxu0 0.0
  %390 = vmatprep.subr.mxu0 0.0
  %391 = vmatpush2.msra.mxu0 0.0
  %392 = vmatprep.subr.mxu0 0.0
  %393 = vmatpush2.msra.mxu0 0.0
  %394 = vmatprep.mubr.f32.mxu0 0.0
  %v395 = vand.u32 %v32, 4294901760
  %v396 = vsub.f32 %v32, %v395
  %397 = vmatmul.mubr.f32.gmra.mxu0 %v396
  %v398 = vpop.f32.mrf.mxu0
  %v399 = vadd.f32 %v295, %v398
  %v400 = vpop.f32.mrf.mxu0
  %401 = vdwg.mxu0
  %402 = vmatprep.subr.mxu0 0.0
  %v403 = vand.u32 %v48, 4294901760
  %404 = vmatpush1.msra.mxu0 %v403
  %405 = vmatprep.subr.mxu0 0.0
  %v406 = vand.u32 %v47, 4294901760
  %407 = vmatpush1.msra.mxu0 %v406
  %408 = vmatprep.subr.mxu0 0.0
  %v409 = vand.u32 %v46, 4294901760
  %410 = vmatpush1.msra.mxu0 %v409
  %411 = vmatprep.subr.mxu0 0.0
  %v412 = vand.u32 %v45, 4294901760
  %413 = vmatpush1.msra.mxu0 %v412
  %414 = vmatprep.subr.mxu0 0.0
  %v415 = vand.u32 %v44, 4294901760
  %416 = vmatpush1.msra.mxu0 %v415
  %417 = vmatprep.subr.mxu0 0.0
  %v418 = vand.u32 %v43, 4294901760
  %419 = vmatpush1.msra.mxu0 %v418
  %420 = vmatprep.subr.mxu0 0.0
  %v421 = vand.u32 %v42, 4294901760
  %422 = vmatpush1.msra.mxu0 %v421
  %423 = vmatprep.subr.mxu0 0.0
  %v424 = vand.u32 %v41, 4294901760
  %425 = vmatpush1.msra.mxu0 %v424
  %426 = vmatprep.subr.mxu0 0.0
  %v427 = vand.u32 %v40, 4294901760
  %428 = vmatpush1.msra.mxu0 %v427
  %429 = vmatprep.subr.mxu0 0.0
  %v430 = vand.u32 %v39, 4294901760
  %431 = vmatpush1.msra.mxu0 %v430
  %432 = vmatprep.subr.mxu0 0.0
  %v433 = vand.u32 %v38, 4294901760
  %434 = vmatpush1.msra.mxu0 %v433
  %435 = vmatprep.subr.mxu0 0.0
  %v436 = vand.u32 %v37, 4294901760
  %437 = vmatpush1.msra.mxu0 %v436
  %438 = vmatprep.subr.mxu0 0.0
  %v439 = vand.u32 %v36, 4294901760
  %440 = vmatpush1.msra.mxu0 %v439
  %441 = vmatprep.subr.mxu0 0.0
  %v442 = vand.u32 %v35, 4294901760
  %443 = vmatpush1.msra.mxu0 %v442
  %444 = vmatprep.subr.mxu0 0.0
  %v445 = vand.u32 %v34, 4294901760
  %446 = vmatpush1.msra.mxu0 %v445
  %447 = vmatprep.subr.mxu0 0.0
  %v448 = vand.u32 %v33, 4294901760
  %449 = vmatpush1.msra.mxu0 %v448
  %450 = vmatprep.subr.mxu0 0.0
  %451 = vmatpush2.msra.mxu0 0.0
  %452 = vmatprep.subr.mxu0 0.0
  %453 = vmatpush2.msra.mxu0 0.0
  %454 = vmatprep.subr.mxu0 0.0
  %455 = vmatpush2.msra.mxu0 0.0
  %456 = vmatprep.subr.mxu0 0.0
  %457 = vmatpush2.msra.mxu0 0.0
  %458 = vmatprep.subr.mxu0 0.0
  %459 = vmatpush2.msra.mxu0 0.0
  %460 = vmatprep.subr.mxu0 0.0
  %461 = vmatpush2.msra.mxu0 0.0
  %462 = vmatprep.subr.mxu0 0.0
  %463 = vmatpush2.msra.mxu0 0.0
  %464 = vmatprep.subr.mxu0 0.0
  %465 = vmatpush2.msra.mxu0 0.0
  %466 = vmatprep.subr.mxu0 0.0
  %467 = vmatpush2.msra.mxu0 0.0
  %468 = vmatprep.subr.mxu0 0.0
  %469 = vmatpush2.msra.mxu0 0.0
  %470 = vmatprep.subr.mxu0 0.0
  %471 = vmatpush2.msra.mxu0 0.0
  %472 = vmatprep.subr.mxu0 0.0
  %473 = vmatpush2.msra.mxu0 0.0
  %474 = vmatprep.subr.mxu0 0.0
  %475 = vmatpush2.msra.mxu0 0.0
  %476 = vmatprep.subr.mxu0 0.0
  %477 = vmatpush2.msra.mxu0 0.0
  %478 = vmatprep.subr.mxu0 0.0
  %479 = vmatpush2.msra.mxu0 0.0
  %480 = vmatprep.subr.mxu0 0.0
  %481 = vmatpush2.msra.mxu0 0.0
  %482 = vmatprep.mubr.f32.mxu0 0.0
  %v483 = vand.u32 %v32, 4294901760
  %v484 = vsub.f32 %v32, %v483
  %v485 = vand.u32 %v484, 4294901760
  %486 = vmatmul.mubr.f32.gmra.mxu0 %v485
  %v487 = vpop.f32.mrf.mxu0
  %v488 = vadd.f32 %v399, %v487
  %v489 = vpop.f32.mrf.mxu0
  %490 = vdwg.mxu0
  %491 = vmatprep.subr.mxu0 0.0
  %v492 = vand.u32 %v48, 4294901760
  %v493 = vsub.f32 %v48, %v492
  %v494 = vand.u32 %v493, 4294901760
  %495 = vmatpush1.msra.mxu0 %v494
  %496 = vmatprep.subr.mxu0 0.0
  %v497 = vand.u32 %v47, 4294901760
  %v498 = vsub.f32 %v47, %v497
  %v499 = vand.u32 %v498, 4294901760
  %500 = vmatpush1.msra.mxu0 %v499
  %501 = vmatprep.subr.mxu0 0.0
  %v502 = vand.u32 %v46, 4294901760
  %v503 = vsub.f32 %v46, %v502
  %v504 = vand.u32 %v503, 4294901760
  %505 = vmatpush1.msra.mxu0 %v504
  %506 = vmatprep.subr.mxu0 0.0
  %v507 = vand.u32 %v45, 4294901760
  %v508 = vsub.f32 %v45, %v507
  %v509 = vand.u32 %v508, 4294901760
  %510 = vmatpush1.msra.mxu0 %v509
  %511 = vmatprep.subr.mxu0 0.0
  %v512 = vand.u32 %v44, 4294901760
  %v513 = vsub.f32 %v44, %v512
  %v514 = vand.u32 %v513, 4294901760
  %515 = vmatpush1.msra.mxu0 %v514
  %516 = vmatprep.subr.mxu0 0.0
  %v517 = vand.u32 %v43, 4294901760
  %v518 = vsub.f32 %v43, %v517
  %v519 = vand.u32 %v518, 4294901760
  %520 = vmatpush1.msra.mxu0 %v519
  %521 = vmatprep.subr.mxu0 0.0
  %v522 = vand.u32 %v42, 4294901760
  %v523 = vsub.f32 %v42, %v522
  %v524 = vand.u32 %v523, 4294901760
  %525 = vmatpush1.msra.mxu0 %v524
  %526 = vmatprep.subr.mxu0 0.0
  %v527 = vand.u32 %v41, 4294901760
  %v528 = vsub.f32 %v41, %v527
  %v529 = vand.u32 %v528, 4294901760
  %530 = vmatpush1.msra.mxu0 %v529
  %531 = vmatprep.subr.mxu0 0.0
  %v532 = vand.u32 %v40, 4294901760
  %v533 = vsub.f32 %v40, %v532
  %v534 = vand.u32 %v533, 4294901760
  %535 = vmatpush1.msra.mxu0 %v534
  %536 = vmatprep.subr.mxu0 0.0
  %v537 = vand.u32 %v39, 4294901760
  %v538 = vsub.f32 %v39, %v537
  %v539 = vand.u32 %v538, 4294901760
  %540 = vmatpush1.msra.mxu0 %v539
  %541 = vmatprep.subr.mxu0 0.0
  %v542 = vand.u32 %v38, 4294901760
  %v543 = vsub.f32 %v38, %v542
  %v544 = vand.u32 %v543, 4294901760
  %545 = vmatpush1.msra.mxu0 %v544
  %546 = vmatprep.subr.mxu0 0.0
  %v547 = vand.u32 %v37, 4294901760
  %v548 = vsub.f32 %v37, %v547
  %v549 = vand.u32 %v548, 4294901760
  %550 = vmatpush1.msra.mxu0 %v549
  %551 = vmatprep.subr.mxu0 0.0
  %v552 = vand.u32 %v36, 4294901760
  %v553 = vsub.f32 %v36, %v552
  %v554 = vand.u32 %v553, 4294901760
  %555 = vmatpush1.msra.mxu0 %v554
  %556 = vmatprep.subr.mxu0 0.0
  %v557 = vand.u32 %v35, 4294901760
  %v558 = vsub.f32 %v35, %v557
  %v559 = vand.u32 %v558, 4294901760
  %560 = vmatpush1.msra.mxu0 %v559
  %561 = vmatprep.subr.mxu0 0.0
  %v562 = vand.u32 %v34, 4294901760
  %v563 = vsub.f32 %v34, %v562
  %v564 = vand.u32 %v563, 4294901760
  %565 = vmatpush1.msra.mxu0 %v564
  %566 = vmatprep.subr.mxu0 0.0
  %v567 = vand.u32 %v33, 4294901760
  %v568 = vsub.f32 %v33, %v567
  %v569 = vand.u32 %v568, 4294901760
  %570 = vmatpush1.msra.mxu0 %v569
  %571 = vmatprep.subr.mxu0 0.0
  %572 = vmatpush2.msra.mxu0 0.0
  %573 = vmatprep.subr.mxu0 0.0
  %574 = vmatpush2.msra.mxu0 0.0
  %575 = vmatprep.subr.mxu0 0.0
  %576 = vmatpush2.msra.mxu0 0.0
  %577 = vmatprep.subr.mxu0 0.0
  %578 = vmatpush2.msra.mxu0 0.0
  %579 = vmatprep.subr.mxu0 0.0
  %580 = vmatpush2.msra.mxu0 0.0
  %581 = vmatprep.subr.mxu0 0.0
  %582 = vmatpush2.msra.mxu0 0.0
  %583 = vmatprep.subr.mxu0 0.0
  %584 = vmatpush2.msra.mxu0 0.0
  %585 = vmatprep.subr.mxu0 0.0
  %586 = vmatpush2.msra.mxu0 0.0
  %587 = vmatprep.subr.mxu0 0.0
  %588 = vmatpush2.msra.mxu0 0.0
  %589 = vmatprep.subr.mxu0 0.0
  %590 = vmatpush2.msra.mxu0 0.0
  %591 = vmatprep.subr.mxu0 0.0
  %592 = vmatpush2.msra.mxu0 0.0
  %593 = vmatprep.subr.mxu0 0.0
  %594 = vmatpush2.msra.mxu0 0.0
  %595 = vmatprep.subr.mxu0 0.0
  %596 = vmatpush2.msra.mxu0 0.0
  %597 = vmatprep.subr.mxu0 0.0
  %598 = vmatpush2.msra.mxu0 0.0
  %599 = vmatprep.subr.mxu0 0.0
  %600 = vmatpush2.msra.mxu0 0.0
  %601 = vmatprep.subr.mxu0 0.0
  %602 = vmatpush2.msra.mxu0 0.0
  %603 = vmatprep.mubr.f32.mxu0 0.0
  %v604 = vand.u32 %v32, 4294901760
  %605 = vmatmul.mubr.f32.gmra.mxu0 %v604
  %v606 = vpop.f32.mrf.mxu0
  %v607 = vadd.f32 %v488, %v606
  %v608 = vpop.f32.mrf.mxu0
  %609 = vdwg.mxu0
  %610 = vmatprep.subr.mxu0 0.0
  %v611 = vand.u32 %v48, 4294901760
  %612 = vmatpush1.msra.mxu0 %v611
  %613 = vmatprep.subr.mxu0 0.0
  %v614 = vand.u32 %v47, 4294901760
  %615 = vmatpush1.msra.mxu0 %v614
  %616 = vmatprep.subr.mxu0 0.0
  %v617 = vand.u32 %v46, 4294901760
  %618 = vmatpush1.msra.mxu0 %v617
  %619 = vmatprep.subr.mxu0 0.0
  %v620 = vand.u32 %v45, 4294901760
  %621 = vmatpush1.msra.mxu0 %v620
  %622 = vmatprep.subr.mxu0 0.0
  %v623 = vand.u32 %v44, 4294901760
  %624 = vmatpush1.msra.mxu0 %v623
  %625 = vmatprep.subr.mxu0 0.0
  %v626 = vand.u32 %v43, 4294901760
  %627 = vmatpush1.msra.mxu0 %v626
  %628 = vmatprep.subr.mxu0 0.0
  %v629 = vand.u32 %v42, 4294901760
  %630 = vmatpush1.msra.mxu0 %v629
  %631 = vmatprep.subr.mxu0 0.0
  %v632 = vand.u32 %v41, 4294901760
  %633 = vmatpush1.msra.mxu0 %v632
  %634 = vmatprep.subr.mxu0 0.0
  %v635 = vand.u32 %v40, 4294901760
  %636 = vmatpush1.msra.mxu0 %v635
  %637 = vmatprep.subr.mxu0 0.0
  %v638 = vand.u32 %v39, 4294901760
  %639 = vmatpush1.msra.mxu0 %v638
  %640 = vmatprep.subr.mxu0 0.0
  %v641 = vand.u32 %v38, 4294901760
  %642 = vmatpush1.msra.mxu0 %v641
  %643 = vmatprep.subr.mxu0 0.0
  %v644 = vand.u32 %v37, 4294901760
  %645 = vmatpush1.msra.mxu0 %v644
  %646 = vmatprep.subr.mxu0 0.0
  %v647 = vand.u32 %v36, 4294901760
  %648 = vmatpush1.msra.mxu0 %v647
  %649 = vmatprep.subr.mxu0 0.0
  %v650 = vand.u32 %v35, 4294901760
  %651 = vmatpush1.msra.mxu0 %v650
  %652 = vmatprep.subr.mxu0 0.0
  %v653 = vand.u32 %v34, 4294901760
  %654 = vmatpush1.msra.mxu0 %v653
  %655 = vmatprep.subr.mxu0 0.0
  %v656 = vand.u32 %v33, 4294901760
  %657 = vmatpush1.msra.mxu0 %v656
  %658 = vmatprep.subr.mxu0 0.0
  %659 = vmatpush2.msra.mxu0 0.0
  %660 = vmatprep.subr.mxu0 0.0
  %661 = vmatpush2.msra.mxu0 0.0
  %662 = vmatprep.subr.mxu0 0.0
  %663 = vmatpush2.msra.mxu0 0.0
  %664 = vmatprep.subr.mxu0 0.0
  %665 = vmatpush2.msra.mxu0 0.0
  %666 = vmatprep.subr.mxu0 0.0
  %667 = vmatpush2.msra.mxu0 0.0
  %668 = vmatprep.subr.mxu0 0.0
  %669 = vmatpush2.msra.mxu0 0.0
  %670 = vmatprep.subr.mxu0 0.0
  %671 = vmatpush2.msra.mxu0 0.0
  %672 = vmatprep.subr.mxu0 0.0
  %673 = vmatpush2.msra.mxu0 0.0
  %674 = vmatprep.subr.mxu0 0.0
  %675 = vmatpush2.msra.mxu0 0.0
  %676 = vmatprep.subr.mxu0 0.0
  %677 = vmatpush2.msra.mxu0 0.0
  %678 = vmatprep.subr.mxu0 0.0
  %679 = vmatpush2.msra.mxu0 0.0
  %680 = vmatprep.subr.mxu0 0.0
  %681 = vmatpush2.msra.mxu0 0.0
  %682 = vmatprep.subr.mxu0 0.0
  %683 = vmatpush2.msra.mxu0 0.0
  %684 = vmatprep.subr.mxu0 0.0
  %685 = vmatpush2.msra.mxu0 0.0
  %686 = vmatprep.subr.mxu0 0.0
  %687 = vmatpush2.msra.mxu0 0.0
  %688 = vmatprep.subr.mxu0 0.0
  %689 = vmatpush2.msra.mxu0 0.0
  %690 = vmatprep.mubr.f32.mxu0 0.0
  %v691 = vand.u32 %v32, 4294901760
  %692 = vmatmul.mubr.f32.gmra.mxu0 %v691
  %v693 = vpop.f32.mrf.mxu0
  %v694 = vadd.f32 %v607, %v693
  %v695 = vpop.f32.mrf.mxu0
  %696 = vdwg.mxu0
  %v697 = vmax.f32 %v694, 0.0
  %v698 = vld [vmem:[%s3] sm:$0xff]
  %v699 = vld [vmem:[%s3 + $0x8] sm:$0xff]
  %v700 = vld [vmem:[%s3 + $0x10] sm:$0xff]
  %v701 = vld [vmem:[%s3 + $0x18] sm:$0xff]
  %v702 = vld [vmem:[%s3 + $0x20] sm:$0xff]
  %v703 = vld [vmem:[%s3 + $0x28] sm:$0xff]
  %v704 = vld [vmem:[%s3 + $0x30] sm:$0xff]
  %v705 = vld [vmem:[%s3 + $0x38] sm:$0xff]
  %v706 = vld [vmem:[%s3 + $0x40] sm:$0xff]
  %v707 = vld [vmem:[%s3 + $0x48] sm:$0xff]
  %v708 = vld [vmem:[%s3 + $0x50] sm:$0xff]
  %v709 = vld [vmem:[%s3 + $0x58] sm:$0xff]
  %v710 = vld [vmem:[%s3 + $0x60] sm:$0xff]
  %v711 = vld [vmem:[%s3 + $0x68] sm:$0xff]
  %v712 = vld [vmem:[%s3 + $0x70] sm:$0xff]
  %v713 = vld [vmem:[%s3 + $0x78] sm:$0xff]
  %v714 = vld [vmem:[%s4] sm:$0x1]
  %v716 = vlaneseq
  %v717 = vshrl.u32 %v716, 7
  %v718 = vsub.s32 0, %v717
  %v719 = vrot.slane %v714, %v718
  %721 = vmatprep.subr.mxu0 0.0
  %v722 = vand.u32 %v713, 4294901760
  %723 = vmatpush1.msra.mxu0 %v722
  %724 = vmatprep.subr.mxu0 0.0
  %v725 = vand.u32 %v712, 4294901760
  %726 = vmatpush1.msra.mxu0 %v725
  %727 = vmatprep.subr.mxu0 0.0
  %v728 = vand.u32 %v711, 4294901760
  %729 = vmatpush1.msra.mxu0 %v728
  %730 = vmatprep.subr.mxu0 0.0
  %v731 = vand.u32 %v710, 4294901760
  %732 = vmatpush1.msra.mxu0 %v731
  %733 = vmatprep.subr.mxu0 0.0
  %v734 = vand.u32 %v709, 4294901760
  %735 = vmatpush1.msra.mxu0 %v734
  %736 = vmatprep.subr.mxu0 0.0
  %v737 = vand.u32 %v708, 4294901760
  %738 = vmatpush1.msra.mxu0 %v737
  %739 = vmatprep.subr.mxu0 0.0
  %v740 = vand.u32 %v707, 4294901760
  %741 = vmatpush1.msra.mxu0 %v740
  %742 = vmatprep.subr.mxu0 0.0
  %v743 = vand.u32 %v706, 4294901760
  %744 = vmatpush1.msra.mxu0 %v743
  %745 = vmatprep.subr.mxu0 0.0
  %v746 = vand.u32 %v705, 4294901760
  %747 = vmatpush1.msra.mxu0 %v746
  %748 = vmatprep.subr.mxu0 0.0
  %v749 = vand.u32 %v704, 4294901760
  %750 = vmatpush1.msra.mxu0 %v749
  %751 = vmatprep.subr.mxu0 0.0
  %v752 = vand.u32 %v703, 4294901760
  %753 = vmatpush1.msra.mxu0 %v752
  %754 = vmatprep.subr.mxu0 0.0
  %v755 = vand.u32 %v702, 4294901760
  %756 = vmatpush1.msra.mxu0 %v755
  %757 = vmatprep.subr.mxu0 0.0
  %v758 = vand.u32 %v701, 4294901760
  %759 = vmatpush1.msra.mxu0 %v758
  %760 = vmatprep.subr.mxu0 0.0
  %v761 = vand.u32 %v700, 4294901760
  %762 = vmatpush1.msra.mxu0 %v761
  %763 = vmatprep.subr.mxu0 0.0
  %v764 = vand.u32 %v699, 4294901760
  %765 = vmatpush1.msra.mxu0 %v764
  %766 = vmatprep.subr.mxu0 0.0
  %v767 = vand.u32 %v698, 4294901760
  %768 = vmatpush1.msra.mxu0 %v767
  %769 = vmatprep.subr.mxu0 0.0
  %770 = vmatpush2.msra.mxu0 0.0
  %771 = vmatprep.subr.mxu0 0.0
  %772 = vmatpush2.msra.mxu0 0.0
  %773 = vmatprep.subr.mxu0 0.0
  %774 = vmatpush2.msra.mxu0 0.0
  %775 = vmatprep.subr.mxu0 0.0
  %776 = vmatpush2.msra.mxu0 0.0
  %777 = vmatprep.subr.mxu0 0.0
  %778 = vmatpush2.msra.mxu0 0.0
  %779 = vmatprep.subr.mxu0 0.0
  %780 = vmatpush2.msra.mxu0 0.0
  %781 = vmatprep.subr.mxu0 0.0
  %782 = vmatpush2.msra.mxu0 0.0
  %783 = vmatprep.subr.mxu0 0.0
  %784 = vmatpush2.msra.mxu0 0.0
  %785 = vmatprep.subr.mxu0 0.0
  %786 = vmatpush2.msra.mxu0 0.0
  %787 = vmatprep.subr.mxu0 0.0
  %788 = vmatpush2.msra.mxu0 0.0
  %789 = vmatprep.subr.mxu0 0.0
  %790 = vmatpush2.msra.mxu0 0.0
  %791 = vmatprep.subr.mxu0 0.0
  %792 = vmatpush2.msra.mxu0 0.0
  %793 = vmatprep.subr.mxu0 0.0
  %794 = vmatpush2.msra.mxu0 0.0
  %795 = vmatprep.subr.mxu0 0.0
  %796 = vmatpush2.msra.mxu0 0.0
  %797 = vmatprep.subr.mxu0 0.0
  %798 = vmatpush2.msra.mxu0 0.0
  %799 = vmatprep.subr.mxu0 0.0
  %800 = vmatpush2.msra.mxu0 0.0
  %801 = vmatprep.mubr.f32.mxu0 0.0
  %v802 = vand.u32 %v697, 4294901760
  %v803 = vsub.f32 %v697, %v802
  %v804 = vand.u32 %v803, 4294901760
  %v805 = vsub.f32 %v803, %v804
  %v806 = vand.u32 %v805, 4294901760
  %807 = vmatmul.mubr.f32.gmra.mxu0 %v806
  %v808 = vpop.f32.mrf.mxu0
  %v809 = vadd.f32 %v719, %v808
  %v810 = vpop.f32.mrf.mxu0
  %811 = vdwg.mxu0
  %812 = vmatprep.subr.mxu0 0.0
  %v813 = vand.u32 %v713, 4294901760
  %v814 = vsub.f32 %v713, %v813
  %v815 = vand.u32 %v814, 4294901760
  %v816 = vsub.f32 %v814, %v815
  %v817 = vand.u32 %v816, 4294901760
  %818 = vmatpush1.msra.mxu0 %v817
  %819 = vmatprep.subr.mxu0 0.0
  %v820 = vand.u32 %v712, 4294901760
  %v821 = vsub.f32 %v712, %v820
  %v822 = vand.u32 %v821, 4294901760
  %v823 = vsub.f32 %v821, %v822
  %v824 = vand.u32 %v823, 4294901760
  %825 = vmatpush1.msra.mxu0 %v824
  %826 = vmatprep.subr.mxu0 0.0
  %v827 = vand.u32 %v711, 4294901760
  %v828 = vsub.f32 %v711, %v827
  %v829 = vand.u32 %v828, 4294901760
  %v830 = vsub.f32 %v828, %v829
  %v831 = vand.u32 %v830, 4294901760
  %832 = vmatpush1.msra.mxu0 %v831
  %833 = vmatprep.subr.mxu0 0.0
  %v834 = vand.u32 %v710, 4294901760
  %v835 = vsub.f32 %v710, %v834
  %v836 = vand.u32 %v835, 4294901760
  %v837 = vsub.f32 %v835, %v836
  %v838 = vand.u32 %v837, 4294901760
  %839 = vmatpush1.msra.mxu0 %v838
  %840 = vmatprep.subr.mxu0 0.0
  %v841 = vand.u32 %v709, 4294901760
  %v842 = vsub.f32 %v709, %v841
  %v843 = vand.u32 %v842, 4294901760
  %v844 = vsub.f32 %v842, %v843
  %v845 = vand.u32 %v844, 4294901760
  %846 = vmatpush1.msra.mxu0 %v845
  %847 = vmatprep.subr.mxu0 0.0
  %v848 = vand.u32 %v708, 4294901760
  %v849 = vsub.f32 %v708, %v848
  %v850 = vand.u32 %v849, 4294901760
  %v851 = vsub.f32 %v849, %v850
  %v852 = vand.u32 %v851, 4294901760
  %853 = vmatpush1.msra.mxu0 %v852
  %854 = vmatprep.subr.mxu0 0.0
  %v855 = vand.u32 %v707, 4294901760
  %v856 = vsub.f32 %v707, %v855
  %v857 = vand.u32 %v856, 4294901760
  %v858 = vsub.f32 %v856, %v857
  %v859 = vand.u32 %v858, 4294901760
  %860 = vmatpush1.msra.mxu0 %v859
  %861 = vmatprep.subr.mxu0 0.0
  %v862 = vand.u32 %v706, 4294901760
  %v863 = vsub.f32 %v706, %v862
  %v864 = vand.u32 %v863, 4294901760
  %v865 = vsub.f32 %v863, %v864
  %v866 = vand.u32 %v865, 4294901760
  %867 = vmatpush1.msra.mxu0 %v866
  %868 = vmatprep.subr.mxu0 0.0
  %v869 = vand.u32 %v705, 4294901760
  %v870 = vsub.f32 %v705, %v869
  %v871 = vand.u32 %v870, 4294901760
  %v872 = vsub.f32 %v870, %v871
  %v873 = vand.u32 %v872, 4294901760
  %874 = vmatpush1.msra.mxu0 %v873
  %875 = vmatprep.subr.mxu0 0.0
  %v876 = vand.u32 %v704, 4294901760
  %v877 = vsub.f32 %v704, %v876
  %v878 = vand.u32 %v877, 4294901760
  %v879 = vsub.f32 %v877, %v878
  %v880 = vand.u32 %v879, 4294901760
  %881 = vmatpush1.msra.mxu0 %v880
  %882 = vmatprep.subr.mxu0 0.0
  %v883 = vand.u32 %v703, 4294901760
  %v884 = vsub.f32 %v703, %v883
  %v885 = vand.u32 %v884, 4294901760
  %v886 = vsub.f32 %v884, %v885
  %v887 = vand.u32 %v886, 4294901760
  %888 = vmatpush1.msra.mxu0 %v887
  %889 = vmatprep.subr.mxu0 0.0
  %v890 = vand.u32 %v702, 4294901760
  %v891 = vsub.f32 %v702, %v890
  %v892 = vand.u32 %v891, 4294901760
  %v893 = vsub.f32 %v891, %v892
  %v894 = vand.u32 %v893, 4294901760
  %895 = vmatpush1.msra.mxu0 %v894
  %896 = vmatprep.subr.mxu0 0.0
  %v897 = vand.u32 %v701, 4294901760
  %v898 = vsub.f32 %v701, %v897
  %v899 = vand.u32 %v898, 4294901760
  %v900 = vsub.f32 %v898, %v899
  %v901 = vand.u32 %v900, 4294901760
  %902 = vmatpush1.msra.mxu0 %v901
  %903 = vmatprep.subr.mxu0 0.0
  %v904 = vand.u32 %v700, 4294901760
  %v905 = vsub.f32 %v700, %v904
  %v906 = vand.u32 %v905, 4294901760
  %v907 = vsub.f32 %v905, %v906
  %v908 = vand.u32 %v907, 4294901760
  %909 = vmatpush1.msra.mxu0 %v908
  %910 = vmatprep.subr.mxu0 0.0
  %v911 = vand.u32 %v699, 4294901760
  %v912 = vsub.f32 %v699, %v911
  %v913 = vand.u32 %v912, 4294901760
  %v914 = vsub.f32 %v912, %v913
  %v915 = vand.u32 %v914, 4294901760
  %916 = vmatpush1.msra.mxu0 %v915
  %917 = vmatprep.subr.mxu0 0.0
  %v918 = vand.u32 %v698, 4294901760
  %v919 = vsub.f32 %v698, %v918
  %v920 = vand.u32 %v919, 4294901760
  %v921 = vsub.f32 %v919, %v920
  %v922 = vand.u32 %v921, 4294901760
  %923 = vmatpush1.msra.mxu0 %v922
  %924 = vmatprep.subr.mxu0 0.0
  %925 = vmatpush2.msra.mxu0 0.0
  %926 = vmatprep.subr.mxu0 0.0
  %927 = vmatpush2.msra.mxu0 0.0
  %928 = vmatprep.subr.mxu0 0.0
  %929 = vmatpush2.msra.mxu0 0.0
  %930 = vmatprep.subr.mxu0 0.0
  %931 = vmatpush2.msra.mxu0 0.0
  %932 = vmatprep.subr.mxu0 0.0
  %933 = vmatpush2.msra.mxu0 0.0
  %934 = vmatprep.subr.mxu0 0.0
  %935 = vmatpush2.msra.mxu0 0.0
  %936 = vmatprep.subr.mxu0 0.0
  %937 = vmatpush2.msra.mxu0 0.0
  %938 = vmatprep.subr.mxu0 0.0
  %939 = vmatpush2.msra.mxu0 0.0
  %940 = vmatprep.subr.mxu0 0.0
  %941 = vmatpush2.msra.mxu0 0.0
  %942 = vmatprep.subr.mxu0 0.0
  %943 = vmatpush2.msra.mxu0 0.0
  %944 = vmatprep.subr.mxu0 0.0
  %945 = vmatpush2.msra.mxu0 0.0
  %946 = vmatprep.subr.mxu0 0.0
  %947 = vmatpush2.msra.mxu0 0.0
  %948 = vmatprep.subr.mxu0 0.0
  %949 = vmatpush2.msra.mxu0 0.0
  %950 = vmatprep.subr.mxu0 0.0
  %951 = vmatpush2.msra.mxu0 0.0
  %952 = vmatprep.subr.mxu0 0.0
  %953 = vmatpush2.msra.mxu0 0.0
  %954 = vmatprep.subr.mxu0 0.0
  %955 = vmatpush2.msra.mxu0 0.0
  %956 = vmatprep.mubr.f32.mxu0 0.0
  %v957 = vand.u32 %v697, 4294901760
  %958 = vmatmul.mubr.f32.gmra.mxu0 %v957
  %v959 = vpop.f32.mrf.mxu0
  %v960 = vadd.f32 %v809, %v959
  %v961 = vpop.f32.mrf.mxu0
  %962 = vdwg.mxu0
  %963 = vmatprep.subr.mxu0 0.0
  %v964 = vand.u32 %v713, 4294901760
  %v965 = vsub.f32 %v713, %v964
  %966 = vmatpush1.msra.mxu0 %v965
  %967 = vmatprep.subr.mxu0 0.0
  %v968 = vand.u32 %v712, 4294901760
  %v969 = vsub.f32 %v712, %v968
  %970 = vmatpush1.msra.mxu0 %v969
  %971 = vmatprep.subr.mxu0 0.0
  %v972 = vand.u32 %v711, 4294901760
  %v973 = vsub.f32 %v711, %v972
  %974 = vmatpush1.msra.mxu0 %v973
  %975 = vmatprep.subr.mxu0 0.0
  %v976 = vand.u32 %v710, 4294901760
  %v977 = vsub.f32 %v710, %v976
  %978 = vmatpush1.msra.mxu0 %v977
  %979 = vmatprep.subr.mxu0 0.0
  %v980 = vand.u32 %v709, 4294901760
  %v981 = vsub.f32 %v709, %v980
  %982 = vmatpush1.msra.mxu0 %v981
  %983 = vmatprep.subr.mxu0 0.0
  %v984 = vand.u32 %v708, 4294901760
  %v985 = vsub.f32 %v708, %v984
  %986 = vmatpush1.msra.mxu0 %v985
  %987 = vmatprep.subr.mxu0 0.0
  %v988 = vand.u32 %v707, 4294901760
  %v989 = vsub.f32 %v707, %v988
  %990 = vmatpush1.msra.mxu0 %v989
  %991 = vmatprep.subr.mxu0 0.0
  %v992 = vand.u32 %v706, 4294901760
  %v993 = vsub.f32 %v706, %v992
  %994 = vmatpush1.msra.mxu0 %v993
  %995 = vmatprep.subr.mxu0 0.0
  %v996 = vand.u32 %v705, 4294901760
  %v997 = vsub.f32 %v705, %v996
  %998 = vmatpush1.msra.mxu0 %v997
  %999 = vmatprep.subr.mxu0 0.0
  %v1000 = vand.u32 %v704, 4294901760
  %v1001 = vsub.f32 %v704, %v1000
  %1002 = vmatpush1.msra.mxu0 %v1001
  %1003 = vmatprep.subr.mxu0 0.0
  %v1004 = vand.u32 %v703, 4294901760
  %v1005 = vsub.f32 %v703, %v1004
  %1006 = vmatpush1.msra.mxu0 %v1005
  %1007 = vmatprep.subr.mxu0 0.0
  %v1008 = vand.u32 %v702, 4294901760
  %v1009 = vsub.f32 %v702, %v1008
  %1010 = vmatpush1.msra.mxu0 %v1009
  %1011 = vmatprep.subr.mxu0 0.0
  %v1012 = vand.u32 %v701, 4294901760
  %v1013 = vsub.f32 %v701, %v1012
  %1014 = vmatpush1.msra.mxu0 %v1013
  %1015 = vmatprep.subr.mxu0 0.0
  %v1016 = vand.u32 %v700, 4294901760
  %v1017 = vsub.f32 %v700, %v1016
  %1018 = vmatpush1.msra.mxu0 %v1017
  %1019 = vmatprep.subr.mxu0 0.0
  %v1020 = vand.u32 %v699, 4294901760
  %v1021 = vsub.f32 %v699, %v1020
  %1022 = vmatpush1.msra.mxu0 %v1021
  %1023 = vmatprep.subr.mxu0 0.0
  %v1024 = vand.u32 %v698, 4294901760
  %v1025 = vsub.f32 %v698, %v1024
  %1026 = vmatpush1.msra.mxu0 %v1025
  %1027 = vmatprep.subr.mxu0 0.0
  %1028 = vmatpush2.msra.mxu0 0.0
  %1029 = vmatprep.subr.mxu0 0.0
  %1030 = vmatpush2.msra.mxu0 0.0
  %1031 = vmatprep.subr.mxu0 0.0
  %1032 = vmatpush2.msra.mxu0 0.0
  %1033 = vmatprep.subr.mxu0 0.0
  %1034 = vmatpush2.msra.mxu0 0.0
  %1035 = vmatprep.subr.mxu0 0.0
  %1036 = vmatpush2.msra.mxu0 0.0
  %1037 = vmatprep.subr.mxu0 0.0
  %1038 = vmatpush2.msra.mxu0 0.0
  %1039 = vmatprep.subr.mxu0 0.0
  %1040 = vmatpush2.msra.mxu0 0.0
  %1041 = vmatprep.subr.mxu0 0.0
  %1042 = vmatpush2.msra.mxu0 0.0
  %1043 = vmatprep.subr.mxu0 0.0
  %1044 = vmatpush2.msra.mxu0 0.0
  %1045 = vmatprep.subr.mxu0 0.0
  %1046 = vmatpush2.msra.mxu0 0.0
  %1047 = vmatprep.subr.mxu0 0.0
  %1048 = vmatpush2.msra.mxu0 0.0
  %1049 = vmatprep.subr.mxu0 0.0
  %1050 = vmatpush2.msra.mxu0 0.0
  %1051 = vmatprep.subr.mxu0 0.0
  %1052 = vmatpush2.msra.mxu0 0.0
  %1053 = vmatprep.subr.mxu0 0.0
  %1054 = vmatpush2.msra.mxu0 0.0
  %1055 = vmatprep.subr.mxu0 0.0
  %1056 = vmatpush2.msra.mxu0 0.0
  %1057 = vmatprep.subr.mxu0 0.0
  %1058 = vmatpush2.msra.mxu0 0.0
  %1059 = vmatprep.mubr.f32.mxu0 0.0
  %v1060 = vand.u32 %v697, 4294901760
  %v1061 = vsub.f32 %v697, %v1060
  %1062 = vmatmul.mubr.f32.gmra.mxu0 %v1061
  %v1063 = vpop.f32.mrf.mxu0
  %v1064 = vadd.f32 %v960, %v1063
  %v1065 = vpop.f32.mrf.mxu0
  %1066 = vdwg.mxu0
  %1067 = vmatprep.subr.mxu0 0.0
  %v1068 = vand.u32 %v713, 4294901760
  %1069 = vmatpush1.msra.mxu0 %v1068
  %1070 = vmatprep.subr.mxu0 0.0
  %v1071 = vand.u32 %v712, 4294901760
  %1072 = vmatpush1.msra.mxu0 %v1071
  %1073 = vmatprep.subr.mxu0 0.0
  %v1074 = vand.u32 %v711, 4294901760
  %1075 = vmatpush1.msra.mxu0 %v1074
  %1076 = vmatprep.subr.mxu0 0.0
  %v1077 = vand.u32 %v710, 4294901760
  %1078 = vmatpush1.msra.mxu0 %v1077
  %1079 = vmatprep.subr.mxu0 0.0
  %v1080 = vand.u32 %v709, 4294901760
  %1081 = vmatpush1.msra.mxu0 %v1080
  %1082 = vmatprep.subr.mxu0 0.0
  %v1083 = vand.u32 %v708, 4294901760
  %1084 = vmatpush1.msra.mxu0 %v1083
  %1085 = vmatprep.subr.mxu0 0.0
  %v1086 = vand.u32 %v707, 4294901760
  %1087 = vmatpush1.msra.mxu0 %v1086
  %1088 = vmatprep.subr.mxu0 0.0
  %v1089 = vand.u32 %v706, 4294901760
  %1090 = vmatpush1.msra.mxu0 %v1089
  %1091 = vmatprep.subr.mxu0 0.0
  %v1092 = vand.u32 %v705, 4294901760
  %1093 = vmatpush1.msra.mxu0 %v1092
  %1094 = vmatprep.subr.mxu0 0.0
  %v1095 = vand.u32 %v704, 4294901760
  %1096 = vmatpush1.msra.mxu0 %v1095
  %1097 = vmatprep.subr.mxu0 0.0
  %v1098 = vand.u32 %v703, 4294901760
  %1099 = vmatpush1.msra.mxu0 %v1098
  %1100 = vmatprep.subr.mxu0 0.0
  %v1101 = vand.u32 %v702, 4294901760
  %1102 = vmatpush1.msra.mxu0 %v1101
  %1103 = vmatprep.subr.mxu0 0.0
  %v1104 = vand.u32 %v701, 4294901760
  %1105 = vmatpush1.msra.mxu0 %v1104
  %1106 = vmatprep.subr.mxu0 0.0
  %v1107 = vand.u32 %v700, 4294901760
  %1108 = vmatpush1.msra.mxu0 %v1107
  %1109 = vmatprep.subr.mxu0 0.0
  %v1110 = vand.u32 %v699, 4294901760
  %1111 = vmatpush1.msra.mxu0 %v1110
  %1112 = vmatprep.subr.mxu0 0.0
  %v1113 = vand.u32 %v698, 4294901760
  %1114 = vmatpush1.msra.mxu0 %v1113
  %1115 = vmatprep.subr.mxu0 0.0
  %1116 = vmatpush2.msra.mxu0 0.0
  %1117 = vmatprep.subr.mxu0 0.0
  %1118 = vmatpush2.msra.mxu0 0.0
  %1119 = vmatprep.subr.mxu0 0.0
  %1120 = vmatpush2.msra.mxu0 0.0
  %1121 = vmatprep.subr.mxu0 0.0
  %1122 = vmatpush2.msra.mxu0 0.0
  %1123 = vmatprep.subr.mxu0 0.0
  %1124 = vmatpush2.msra.mxu0 0.0
  %1125 = vmatprep.subr.mxu0 0.0
  %1126 = vmatpush2.msra.mxu0 0.0
  %1127 = vmatprep.subr.mxu0 0.0
  %1128 = vmatpush2.msra.mxu0 0.0
  %1129 = vmatprep.subr.mxu0 0.0
  %1130 = vmatpush2.msra.mxu0 0.0
  %1131 = vmatprep.subr.mxu0 0.0
  %1132 = vmatpush2.msra.mxu0 0.0
  %1133 = vmatprep.subr.mxu0 0.0
  %1134 = vmatpush2.msra.mxu0 0.0
  %1135 = vmatprep.subr.mxu0 0.0
  %1136 = vmatpush2.msra.mxu0 0.0
  %1137 = vmatprep.subr.mxu0 0.0
  %1138 = vmatpush2.msra.mxu0 0.0
  %1139 = vmatprep.subr.mxu0 0.0
  %1140 = vmatpush2.msra.mxu0 0.0
  %1141 = vmatprep.subr.mxu0 0.0
  %1142 = vmatpush2.msra.mxu0 0.0
  %1143 = vmatprep.subr.mxu0 0.0
  %1144 = vmatpush2.msra.mxu0 0.0
  %1145 = vmatprep.subr.mxu0 0.0
  %1146 = vmatpush2.msra.mxu0 0.0
  %1147 = vmatprep.mubr.f32.mxu0 0.0
  %v1148 = vand.u32 %v697, 4294901760
  %v1149 = vsub.f32 %v697, %v1148
  %v1150 = vand.u32 %v1149, 4294901760
  %1151 = vmatmul.mubr.f32.gmra.mxu0 %v1150
  %v1152 = vpop.f32.mrf.mxu0
  %v1153 = vadd.f32 %v1064, %v1152
  %v1154 = vpop.f32.mrf.mxu0
  %1155 = vdwg.mxu0
  %1156 = vmatprep.subr.mxu0 0.0
  %v1157 = vand.u32 %v713, 4294901760
  %v1158 = vsub.f32 %v713, %v1157
  %v1159 = vand.u32 %v1158, 4294901760
  %1160 = vmatpush1.msra.mxu0 %v1159
  %1161 = vmatprep.subr.mxu0 0.0
  %v1162 = vand.u32 %v712, 4294901760
  %v1163 = vsub.f32 %v712, %v1162
  %v1164 = vand.u32 %v1163, 4294901760
  %1165 = vmatpush1.msra.mxu0 %v1164
  %1166 = vmatprep.subr.mxu0 0.0
  %v1167 = vand.u32 %v711, 4294901760
  %v1168 = vsub.f32 %v711, %v1167
  %v1169 = vand.u32 %v1168, 4294901760
  %1170 = vmatpush1.msra.mxu0 %v1169
  %1171 = vmatprep.subr.mxu0 0.0
  %v1172 = vand.u32 %v710, 4294901760
  %v1173 = vsub.f32 %v710, %v1172
  %v1174 = vand.u32 %v1173, 4294901760
  %1175 = vmatpush1.msra.mxu0 %v1174
  %1176 = vmatprep.subr.mxu0 0.0
  %v1177 = vand.u32 %v709, 4294901760
  %v1178 = vsub.f32 %v709, %v1177
  %v1179 = vand.u32 %v1178, 4294901760
  %1180 = vmatpush1.msra.mxu0 %v1179
  %1181 = vmatprep.subr.mxu0 0.0
  %v1182 = vand.u32 %v708, 4294901760
  %v1183 = vsub.f32 %v708, %v1182
  %v1184 = vand.u32 %v1183, 4294901760
  %1185 = vmatpush1.msra.mxu0 %v1184
  %1186 = vmatprep.subr.mxu0 0.0
  %v1187 = vand.u32 %v707, 4294901760
  %v1188 = vsub.f32 %v707, %v1187
  %v1189 = vand.u32 %v1188, 4294901760
  %1190 = vmatpush1.msra.mxu0 %v1189
  %1191 = vmatprep.subr.mxu0 0.0
  %v1192 = vand.u32 %v706, 4294901760
  %v1193 = vsub.f32 %v706, %v1192
  %v1194 = vand.u32 %v1193, 4294901760
  %1195 = vmatpush1.msra.mxu0 %v1194
  %1196 = vmatprep.subr.mxu0 0.0
  %v1197 = vand.u32 %v705, 4294901760
  %v1198 = vsub.f32 %v705, %v1197
  %v1199 = vand.u32 %v1198, 4294901760
  %1200 = vmatpush1.msra.mxu0 %v1199
  %1201 = vmatprep.subr.mxu0 0.0
  %v1202 = vand.u32 %v704, 4294901760
  %v1203 = vsub.f32 %v704, %v1202
  %v1204 = vand.u32 %v1203, 4294901760
  %1205 = vmatpush1.msra.mxu0 %v1204
  %1206 = vmatprep.subr.mxu0 0.0
  %v1207 = vand.u32 %v703, 4294901760
  %v1208 = vsub.f32 %v703, %v1207
  %v1209 = vand.u32 %v1208, 4294901760
  %1210 = vmatpush1.msra.mxu0 %v1209
  %1211 = vmatprep.subr.mxu0 0.0
  %v1212 = vand.u32 %v702, 4294901760
  %v1213 = vsub.f32 %v702, %v1212
  %v1214 = vand.u32 %v1213, 4294901760
  %1215 = vmatpush1.msra.mxu0 %v1214
  %1216 = vmatprep.subr.mxu0 0.0
  %v1217 = vand.u32 %v701, 4294901760
  %v1218 = vsub.f32 %v701, %v1217
  %v1219 = vand.u32 %v1218, 4294901760
  %1220 = vmatpush1.msra.mxu0 %v1219
  %1221 = vmatprep.subr.mxu0 0.0
  %v1222 = vand.u32 %v700, 4294901760
  %v1223 = vsub.f32 %v700, %v1222
  %v1224 = vand.u32 %v1223, 4294901760
  %1225 = vmatpush1.msra.mxu0 %v1224
  %1226 = vmatprep.subr.mxu0 0.0
  %v1227 = vand.u32 %v699, 4294901760
  %v1228 = vsub.f32 %v699, %v1227
  %v1229 = vand.u32 %v1228, 4294901760
  %1230 = vmatpush1.msra.mxu0 %v1229
  %1231 = vmatprep.subr.mxu0 0.0
  %v1232 = vand.u32 %v698, 4294901760
  %v1233 = vsub.f32 %v698, %v1232
  %v1234 = vand.u32 %v1233, 4294901760
  %1235 = vmatpush1.msra.mxu0 %v1234
  %1236 = vmatprep.subr.mxu0 0.0
  %1237 = vmatpush2.msra.mxu0 0.0
  %1238 = vmatprep.subr.mxu0 0.0
  %1239 = vmatpush2.msra.mxu0 0.0
  %1240 = vmatprep.subr.mxu0 0.0
  %1241 = vmatpush2.msra.mxu0 0.0
  %1242 = vmatprep.subr.mxu0 0.0
  %1243 = vmatpush2.msra.mxu0 0.0
  %1244 = vmatprep.subr.mxu0 0.0
  %1245 = vmatpush2.msra.mxu0 0.0
  %1246 = vmatprep.subr.mxu0 0.0
  %1247 = vmatpush2.msra.mxu0 0.0
  %1248 = vmatprep.subr.mxu0 0.0
  %1249 = vmatpush2.msra.mxu0 0.0
  %1250 = vmatprep.subr.mxu0 0.0
  %1251 = vmatpush2.msra.mxu0 0.0
  %1252 = vmatprep.subr.mxu0 0.0
  %1253 = vmatpush2.msra.mxu0 0.0
  %1254 = vmatprep.subr.mxu0 0.0
  %1255 = vmatpush2.msra.mxu0 0.0
  %1256 = vmatprep.subr.mxu0 0.0
  %1257 = vmatpush2.msra.mxu0 0.0
  %1258 = vmatprep.subr.mxu0 0.0
  %1259 = vmatpush2.msra.mxu0 0.0
  %1260 = vmatprep.subr.mxu0 0.0
  %1261 = vmatpush2.msra.mxu0 0.0
  %1262 = vmatprep.subr.mxu0 0.0
  %1263 = vmatpush2.msra.mxu0 0.0
  %1264 = vmatprep.subr.mxu0 0.0
  %1265 = vmatpush2.msra.mxu0 0.0
  %1266 = vmatprep.subr.mxu0 0.0
  %1267 = vmatpush2.msra.mxu0 0.0
  %1268 = vmatprep.mubr.f32.mxu0 0.0
  %v1269 = vand.u32 %v697, 4294901760
  %1270 = vmatmul.mubr.f32.gmra.mxu0 %v1269
  %v1271 = vpop.f32.mrf.mxu0
  %v1272 = vadd.f32 %v1153, %v1271
  %v1273 = vpop.f32.mrf.mxu0
  %1274 = vdwg.mxu0
  %1275 = vmatprep.subr.mxu0 0.0
  %v1276 = vand.u32 %v713, 4294901760
  %1277 = vmatpush1.msra.mxu0 %v1276
  %1278 = vmatprep.subr.mxu0 0.0
  %v1279 = vand.u32 %v712, 4294901760
  %1280 = vmatpush1.msra.mxu0 %v1279
  %1281 = vmatprep.subr.mxu0 0.0
  %v1282 = vand.u32 %v711, 4294901760
  %1283 = vmatpush1.msra.mxu0 %v1282
  %1284 = vmatprep.subr.mxu0 0.0
  %v1285 = vand.u32 %v710, 4294901760
  %1286 = vmatpush1.msra.mxu0 %v1285
  %1287 = vmatprep.subr.mxu0 0.0
  %v1288 = vand.u32 %v709, 4294901760
  %1289 = vmatpush1.msra.mxu0 %v1288
  %1290 = vmatprep.subr.mxu0 0.0
  %v1291 = vand.u32 %v708, 4294901760
  %1292 = vmatpush1.msra.mxu0 %v1291
  %1293 = vmatprep.subr.mxu0 0.0
  %v1294 = vand.u32 %v707, 4294901760
  %1295 = vmatpush1.msra.mxu0 %v1294
  %1296 = vmatprep.subr.mxu0 0.0
  %v1297 = vand.u32 %v706, 4294901760
  %1298 = vmatpush1.msra.mxu0 %v1297
  %1299 = vmatprep.subr.mxu0 0.0
  %v1300 = vand.u32 %v705, 4294901760
  %1301 = vmatpush1.msra.mxu0 %v1300
  %1302 = vmatprep.subr.mxu0 0.0
  %v1303 = vand.u32 %v704, 4294901760
  %1304 = vmatpush1.msra.mxu0 %v1303
  %1305 = vmatprep.subr.mxu0 0.0
  %v1306 = vand.u32 %v703, 4294901760
  %1307 = vmatpush1.msra.mxu0 %v1306
  %1308 = vmatprep.subr.mxu0 0.0
  %v1309 = vand.u32 %v702, 4294901760
  %1310 = vmatpush1.msra.mxu0 %v1309
  %1311 = vmatprep.subr.mxu0 0.0
  %v1312 = vand.u32 %v701, 4294901760
  %1313 = vmatpush1.msra.mxu0 %v1312
  %1314 = vmatprep.subr.mxu0 0.0
  %v1315 = vand.u32 %v700, 4294901760
  %1316 = vmatpush1.msra.mxu0 %v1315
  %1317 = vmatprep.subr.mxu0 0.0
  %v1318 = vand.u32 %v699, 4294901760
  %1319 = vmatpush1.msra.mxu0 %v1318
  %1320 = vmatprep.subr.mxu0 0.0
  %v1321 = vand.u32 %v698, 4294901760
  %1322 = vmatpush1.msra.mxu0 %v1321
  %1323 = vmatprep.subr.mxu0 0.0
  %1324 = vmatpush2.msra.mxu0 0.0
  %1325 = vmatprep.subr.mxu0 0.0
  %1326 = vmatpush2.msra.mxu0 0.0
  %1327 = vmatprep.subr.mxu0 0.0
  %1328 = vmatpush2.msra.mxu0 0.0
  %1329 = vmatprep.subr.mxu0 0.0
  %1330 = vmatpush2.msra.mxu0 0.0
  %1331 = vmatprep.subr.mxu0 0.0
  %1332 = vmatpush2.msra.mxu0 0.0
  %1333 = vmatprep.subr.mxu0 0.0
  %1334 = vmatpush2.msra.mxu0 0.0
  %1335 = vmatprep.subr.mxu0 0.0
  %1336 = vmatpush2.msra.mxu0 0.0
  %1337 = vmatprep.subr.mxu0 0.0
  %1338 = vmatpush2.msra.mxu0 0.0
  %1339 = vmatprep.subr.mxu0 0.0
  %1340 = vmatpush2.msra.mxu0 0.0
  %1341 = vmatprep.subr.mxu0 0.0
  %1342 = vmatpush2.msra.mxu0 0.0
  %1343 = vmatprep.subr.mxu0 0.0
  %1344 = vmatpush2.msra.mxu0 0.0
  %1345 = vmatprep.subr.mxu0 0.0
  %1346 = vmatpush2.msra.mxu0 0.0
  %1347 = vmatprep.subr.mxu0 0.0
  %1348 = vmatpush2.msra.mxu0 0.0
  %1349 = vmatprep.subr.mxu0 0.0
  %1350 = vmatpush2.msra.mxu0 0.0
  %1351 = vmatprep.subr.mxu0 0.0
  %1352 = vmatpush2.msra.mxu0 0.0
  %1353 = vmatprep.subr.mxu0 0.0
  %1354 = vmatpush2.msra.mxu0 0.0
  %1355 = vmatprep.mubr.f32.mxu0 0.0
  %v1356 = vand.u32 %v697, 4294901760
  %1357 = vmatmul.mubr.f32.gmra.mxu0 %v1356
  %v1358 = vpop.f32.mrf.mxu0
  %v1359 = vadd.f32 %v1272, %v1358
  %v1360 = vpop.f32.mrf.mxu0
  %1361 = vdwg.mxu0
  %v1362 = vmax.f32 %v1359, 0.0
  %v1363 = vld [vmem:[%s5] sm:$0xff]
  %v1364 = vld [vmem:[%s5 + $0x8] sm:$0xff]
  %v1365 = vld [vmem:[%s5 + $0x10] sm:$0xff]
  %v1366 = vld [vmem:[%s5 + $0x18] sm:$0xff]
  %v1367 = vld [vmem:[%s5 + $0x20] sm:$0xff]
  %v1368 = vld [vmem:[%s5 + $0x28] sm:$0xff]
  %v1369 = vld [vmem:[%s5 + $0x30] sm:$0xff]
  %v1370 = vld [vmem:[%s5 + $0x38] sm:$0xff]
  %v1371 = vld [vmem:[%s5 + $0x40] sm:$0xff]
  %v1372 = vld [vmem:[%s5 + $0x48] sm:$0xff]
  %v1373 = vld [vmem:[%s5 + $0x50] sm:$0xff]
  %v1374 = vld [vmem:[%s5 + $0x58] sm:$0xff]
  %v1375 = vld [vmem:[%s5 + $0x60] sm:$0xff]
  %v1376 = vld [vmem:[%s5 + $0x68] sm:$0xff]
  %v1377 = vld [vmem:[%s5 + $0x70] sm:$0xff]
  %v1378 = vld [vmem:[%s5 + $0x78] sm:$0xff]
  %v1379 = vld [vmem:[%s6] sm:$0x1]
  %v1381 = vlaneseq
  %v1382 = vshrl.u32 %v1381, 7
  %v1383 = vsub.s32 0, %v1382
  %v1384 = vrot.slane %v1379, %v1383
  %1386 = vmatprep.subr.mxu0 0.0
  %v1387 = vand.u32 %v1378, 4294901760
  %1388 = vmatpush1.msra.mxu0 %v1387
  %1389 = vmatprep.subr.mxu0 0.0
  %v1390 = vand.u32 %v1377, 4294901760
  %1391 = vmatpush1.msra.mxu0 %v1390
  %1392 = vmatprep.subr.mxu0 0.0
  %v1393 = vand.u32 %v1376, 4294901760
  %1394 = vmatpush1.msra.mxu0 %v1393
  %1395 = vmatprep.subr.mxu0 0.0
  %v1396 = vand.u32 %v1375, 4294901760
  %1397 = vmatpush1.msra.mxu0 %v1396
  %1398 = vmatprep.subr.mxu0 0.0
  %v1399 = vand.u32 %v1374, 4294901760
  %1400 = vmatpush1.msra.mxu0 %v1399
  %1401 = vmatprep.subr.mxu0 0.0
  %v1402 = vand.u32 %v1373, 4294901760
  %1403 = vmatpush1.msra.mxu0 %v1402
  %1404 = vmatprep.subr.mxu0 0.0
  %v1405 = vand.u32 %v1372, 4294901760
  %1406 = vmatpush1.msra.mxu0 %v1405
  %1407 = vmatprep.subr.mxu0 0.0
  %v1408 = vand.u32 %v1371, 4294901760
  %1409 = vmatpush1.msra.mxu0 %v1408
  %1410 = vmatprep.subr.mxu0 0.0
  %v1411 = vand.u32 %v1370, 4294901760
  %1412 = vmatpush1.msra.mxu0 %v1411
  %1413 = vmatprep.subr.mxu0 0.0
  %v1414 = vand.u32 %v1369, 4294901760
  %1415 = vmatpush1.msra.mxu0 %v1414
  %1416 = vmatprep.subr.mxu0 0.0
  %v1417 = vand.u32 %v1368, 4294901760
  %1418 = vmatpush1.msra.mxu0 %v1417
  %1419 = vmatprep.subr.mxu0 0.0
  %v1420 = vand.u32 %v1367, 4294901760
  %1421 = vmatpush1.msra.mxu0 %v1420
  %1422 = vmatprep.subr.mxu0 0.0
  %v1423 = vand.u32 %v1366, 4294901760
  %1424 = vmatpush1.msra.mxu0 %v1423
  %1425 = vmatprep.subr.mxu0 0.0
  %v1426 = vand.u32 %v1365, 4294901760
  %1427 = vmatpush1.msra.mxu0 %v1426
  %1428 = vmatprep.subr.mxu0 0.0
  %v1429 = vand.u32 %v1364, 4294901760
  %1430 = vmatpush1.msra.mxu0 %v1429
  %1431 = vmatprep.subr.mxu0 0.0
  %v1432 = vand.u32 %v1363, 4294901760
  %1433 = vmatpush1.msra.mxu0 %v1432
  %1434 = vmatprep.subr.mxu0 0.0
  %1435 = vmatpush2.msra.mxu0 0.0
  %1436 = vmatprep.subr.mxu0 0.0
  %1437 = vmatpush2.msra.mxu0 0.0
  %1438 = vmatprep.subr.mxu0 0.0
  %1439 = vmatpush2.msra.mxu0 0.0
  %1440 = vmatprep.subr.mxu0 0.0
  %1441 = vmatpush2.msra.mxu0 0.0
  %1442 = vmatprep.subr.mxu0 0.0
  %1443 = vmatpush2.msra.mxu0 0.0
  %1444 = vmatprep.subr.mxu0 0.0
  %1445 = vmatpush2.msra.mxu0 0.0
  %1446 = vmatprep.subr.mxu0 0.0
  %1447 = vmatpush2.msra.mxu0 0.0
  %1448 = vmatprep.subr.mxu0 0.0
  %1449 = vmatpush2.msra.mxu0 0.0
  %1450 = vmatprep.subr.mxu0 0.0
  %1451 = vmatpush2.msra.mxu0 0.0
  %1452 = vmatprep.subr.mxu0 0.0
  %1453 = vmatpush2.msra.mxu0 0.0
  %1454 = vmatprep.subr.mxu0 0.0
  %1455 = vmatpush2.msra.mxu0 0.0
  %1456 = vmatprep.subr.mxu0 0.0
  %1457 = vmatpush2.msra.mxu0 0.0
  %1458 = vmatprep.subr.mxu0 0.0
  %1459 = vmatpush2.msra.mxu0 0.0
  %1460 = vmatprep.subr.mxu0 0.0
  %1461 = vmatpush2.msra.mxu0 0.0
  %1462 = vmatprep.subr.mxu0 0.0
  %1463 = vmatpush2.msra.mxu0 0.0
  %1464 = vmatprep.subr.mxu0 0.0
  %1465 = vmatpush2.msra.mxu0 0.0
  %1466 = vmatprep.mubr.f32.mxu0 0.0
  %v1467 = vand.u32 %v1362, 4294901760
  %v1468 = vsub.f32 %v1362, %v1467
  %v1469 = vand.u32 %v1468, 4294901760
  %v1470 = vsub.f32 %v1468, %v1469
  %v1471 = vand.u32 %v1470, 4294901760
  %1472 = vmatmul.mubr.f32.gmra.mxu0 %v1471
  %v1473 = vpop.f32.mrf.mxu0
  %v1474 = vadd.f32 %v1384, %v1473
  %v1475 = vpop.f32.mrf.mxu0
  %1476 = vdwg.mxu0
  %1477 = vmatprep.subr.mxu0 0.0
  %v1478 = vand.u32 %v1378, 4294901760
  %v1479 = vsub.f32 %v1378, %v1478
  %v1480 = vand.u32 %v1479, 4294901760
  %v1481 = vsub.f32 %v1479, %v1480
  %v1482 = vand.u32 %v1481, 4294901760
  %1483 = vmatpush1.msra.mxu0 %v1482
  %1484 = vmatprep.subr.mxu0 0.0
  %v1485 = vand.u32 %v1377, 4294901760
  %v1486 = vsub.f32 %v1377, %v1485
  %v1487 = vand.u32 %v1486, 4294901760
  %v1488 = vsub.f32 %v1486, %v1487
  %v1489 = vand.u32 %v1488, 4294901760
  %1490 = vmatpush1.msra.mxu0 %v1489
  %1491 = vmatprep.subr.mxu0 0.0
  %v1492 = vand.u32 %v1376, 4294901760
  %v1493 = vsub.f32 %v1376, %v1492
  %v1494 = vand.u32 %v1493, 4294901760
  %v1495 = vsub.f32 %v1493, %v1494
  %v1496 = vand.u32 %v1495, 4294901760
  %1497 = vmatpush1.msra.mxu0 %v1496
  %1498 = vmatprep.subr.mxu0 0.0
  %v1499 = vand.u32 %v1375, 4294901760
  %v1500 = vsub.f32 %v1375, %v1499
  %v1501 = vand.u32 %v1500, 4294901760
  %v1502 = vsub.f32 %v1500, %v1501
  %v1503 = vand.u32 %v1502, 4294901760
  %1504 = vmatpush1.msra.mxu0 %v1503
  %1505 = vmatprep.subr.mxu0 0.0
  %v1506 = vand.u32 %v1374, 4294901760
  %v1507 = vsub.f32 %v1374, %v1506
  %v1508 = vand.u32 %v1507, 4294901760
  %v1509 = vsub.f32 %v1507, %v1508
  %v1510 = vand.u32 %v1509, 4294901760
  %1511 = vmatpush1.msra.mxu0 %v1510
  %1512 = vmatprep.subr.mxu0 0.0
  %v1513 = vand.u32 %v1373, 4294901760
  %v1514 = vsub.f32 %v1373, %v1513
  %v1515 = vand.u32 %v1514, 4294901760
  %v1516 = vsub.f32 %v1514, %v1515
  %v1517 = vand.u32 %v1516, 4294901760
  %1518 = vmatpush1.msra.mxu0 %v1517
  %1519 = vmatprep.subr.mxu0 0.0
  %v1520 = vand.u32 %v1372, 4294901760
  %v1521 = vsub.f32 %v1372, %v1520
  %v1522 = vand.u32 %v1521, 4294901760
  %v1523 = vsub.f32 %v1521, %v1522
  %v1524 = vand.u32 %v1523, 4294901760
  %1525 = vmatpush1.msra.mxu0 %v1524
  %1526 = vmatprep.subr.mxu0 0.0
  %v1527 = vand.u32 %v1371, 4294901760
  %v1528 = vsub.f32 %v1371, %v1527
  %v1529 = vand.u32 %v1528, 4294901760
  %v1530 = vsub.f32 %v1528, %v1529
  %v1531 = vand.u32 %v1530, 4294901760
  %1532 = vmatpush1.msra.mxu0 %v1531
  %1533 = vmatprep.subr.mxu0 0.0
  %v1534 = vand.u32 %v1370, 4294901760
  %v1535 = vsub.f32 %v1370, %v1534
  %v1536 = vand.u32 %v1535, 4294901760
  %v1537 = vsub.f32 %v1535, %v1536
  %v1538 = vand.u32 %v1537, 4294901760
  %1539 = vmatpush1.msra.mxu0 %v1538
  %1540 = vmatprep.subr.mxu0 0.0
  %v1541 = vand.u32 %v1369, 4294901760
  %v1542 = vsub.f32 %v1369, %v1541
  %v1543 = vand.u32 %v1542, 4294901760
  %v1544 = vsub.f32 %v1542, %v1543
  %v1545 = vand.u32 %v1544, 4294901760
  %1546 = vmatpush1.msra.mxu0 %v1545
  %1547 = vmatprep.subr.mxu0 0.0
  %v1548 = vand.u32 %v1368, 4294901760
  %v1549 = vsub.f32 %v1368, %v1548
  %v1550 = vand.u32 %v1549, 4294901760
  %v1551 = vsub.f32 %v1549, %v1550
  %v1552 = vand.u32 %v1551, 4294901760
  %1553 = vmatpush1.msra.mxu0 %v1552
  %1554 = vmatprep.subr.mxu0 0.0
  %v1555 = vand.u32 %v1367, 4294901760
  %v1556 = vsub.f32 %v1367, %v1555
  %v1557 = vand.u32 %v1556, 4294901760
  %v1558 = vsub.f32 %v1556, %v1557
  %v1559 = vand.u32 %v1558, 4294901760
  %1560 = vmatpush1.msra.mxu0 %v1559
  %1561 = vmatprep.subr.mxu0 0.0
  %v1562 = vand.u32 %v1366, 4294901760
  %v1563 = vsub.f32 %v1366, %v1562
  %v1564 = vand.u32 %v1563, 4294901760
  %v1565 = vsub.f32 %v1563, %v1564
  %v1566 = vand.u32 %v1565, 4294901760
  %1567 = vmatpush1.msra.mxu0 %v1566
  %1568 = vmatprep.subr.mxu0 0.0
  %v1569 = vand.u32 %v1365, 4294901760
  %v1570 = vsub.f32 %v1365, %v1569
  %v1571 = vand.u32 %v1570, 4294901760
  %v1572 = vsub.f32 %v1570, %v1571
  %v1573 = vand.u32 %v1572, 4294901760
  %1574 = vmatpush1.msra.mxu0 %v1573
  %1575 = vmatprep.subr.mxu0 0.0
  %v1576 = vand.u32 %v1364, 4294901760
  %v1577 = vsub.f32 %v1364, %v1576
  %v1578 = vand.u32 %v1577, 4294901760
  %v1579 = vsub.f32 %v1577, %v1578
  %v1580 = vand.u32 %v1579, 4294901760
  %1581 = vmatpush1.msra.mxu0 %v1580
  %1582 = vmatprep.subr.mxu0 0.0
  %v1583 = vand.u32 %v1363, 4294901760
  %v1584 = vsub.f32 %v1363, %v1583
  %v1585 = vand.u32 %v1584, 4294901760
  %v1586 = vsub.f32 %v1584, %v1585
  %v1587 = vand.u32 %v1586, 4294901760
  %1588 = vmatpush1.msra.mxu0 %v1587
  %1589 = vmatprep.subr.mxu0 0.0
  %1590 = vmatpush2.msra.mxu0 0.0
  %1591 = vmatprep.subr.mxu0 0.0
  %1592 = vmatpush2.msra.mxu0 0.0
  %1593 = vmatprep.subr.mxu0 0.0
  %1594 = vmatpush2.msra.mxu0 0.0
  %1595 = vmatprep.subr.mxu0 0.0
  %1596 = vmatpush2.msra.mxu0 0.0
  %1597 = vmatprep.subr.mxu0 0.0
  %1598 = vmatpush2.msra.mxu0 0.0
  %1599 = vmatprep.subr.mxu0 0.0
  %1600 = vmatpush2.msra.mxu0 0.0
  %1601 = vmatprep.subr.mxu0 0.0
  %1602 = vmatpush2.msra.mxu0 0.0
  %1603 = vmatprep.subr.mxu0 0.0
  %1604 = vmatpush2.msra.mxu0 0.0
  %1605 = vmatprep.subr.mxu0 0.0
  %1606 = vmatpush2.msra.mxu0 0.0
  %1607 = vmatprep.subr.mxu0 0.0
  %1608 = vmatpush2.msra.mxu0 0.0
  %1609 = vmatprep.subr.mxu0 0.0
  %1610 = vmatpush2.msra.mxu0 0.0
  %1611 = vmatprep.subr.mxu0 0.0
  %1612 = vmatpush2.msra.mxu0 0.0
  %1613 = vmatprep.subr.mxu0 0.0
  %1614 = vmatpush2.msra.mxu0 0.0
  %1615 = vmatprep.subr.mxu0 0.0
  %1616 = vmatpush2.msra.mxu0 0.0
  %1617 = vmatprep.subr.mxu0 0.0
  %1618 = vmatpush2.msra.mxu0 0.0
  %1619 = vmatprep.subr.mxu0 0.0
  %1620 = vmatpush2.msra.mxu0 0.0
  %1621 = vmatprep.mubr.f32.mxu0 0.0
  %v1622 = vand.u32 %v1362, 4294901760
  %1623 = vmatmul.mubr.f32.gmra.mxu0 %v1622
  %v1624 = vpop.f32.mrf.mxu0
  %v1625 = vadd.f32 %v1474, %v1624
  %v1626 = vpop.f32.mrf.mxu0
  %1627 = vdwg.mxu0
  %1628 = vmatprep.subr.mxu0 0.0
  %v1629 = vand.u32 %v1378, 4294901760
  %v1630 = vsub.f32 %v1378, %v1629
  %1631 = vmatpush1.msra.mxu0 %v1630
  %1632 = vmatprep.subr.mxu0 0.0
  %v1633 = vand.u32 %v1377, 4294901760
  %v1634 = vsub.f32 %v1377, %v1633
  %1635 = vmatpush1.msra.mxu0 %v1634
  %1636 = vmatprep.subr.mxu0 0.0
  %v1637 = vand.u32 %v1376, 4294901760
  %v1638 = vsub.f32 %v1376, %v1637
  %1639 = vmatpush1.msra.mxu0 %v1638
  %1640 = vmatprep.subr.mxu0 0.0
  %v1641 = vand.u32 %v1375, 4294901760
  %v1642 = vsub.f32 %v1375, %v1641
  %1643 = vmatpush1.msra.mxu0 %v1642
  %1644 = vmatprep.subr.mxu0 0.0
  %v1645 = vand.u32 %v1374, 4294901760
  %v1646 = vsub.f32 %v1374, %v1645
  %1647 = vmatpush1.msra.mxu0 %v1646
  %1648 = vmatprep.subr.mxu0 0.0
  %v1649 = vand.u32 %v1373, 4294901760
  %v1650 = vsub.f32 %v1373, %v1649
  %1651 = vmatpush1.msra.mxu0 %v1650
  %1652 = vmatprep.subr.mxu0 0.0
  %v1653 = vand.u32 %v1372, 4294901760
  %v1654 = vsub.f32 %v1372, %v1653
  %1655 = vmatpush1.msra.mxu0 %v1654
  %1656 = vmatprep.subr.mxu0 0.0
  %v1657 = vand.u32 %v1371, 4294901760
  %v1658 = vsub.f32 %v1371, %v1657
  %1659 = vmatpush1.msra.mxu0 %v1658
  %1660 = vmatprep.subr.mxu0 0.0
  %v1661 = vand.u32 %v1370, 4294901760
  %v1662 = vsub.f32 %v1370, %v1661
  %1663 = vmatpush1.msra.mxu0 %v1662
  %1664 = vmatprep.subr.mxu0 0.0
  %v1665 = vand.u32 %v1369, 4294901760
  %v1666 = vsub.f32 %v1369, %v1665
  %1667 = vmatpush1.msra.mxu0 %v1666
  %1668 = vmatprep.subr.mxu0 0.0
  %v1669 = vand.u32 %v1368, 4294901760
  %v1670 = vsub.f32 %v1368, %v1669
  %1671 = vmatpush1.msra.mxu0 %v1670
  %1672 = vmatprep.subr.mxu0 0.0
  %v1673 = vand.u32 %v1367, 4294901760
  %v1674 = vsub.f32 %v1367, %v1673
  %1675 = vmatpush1.msra.mxu0 %v1674
  %1676 = vmatprep.subr.mxu0 0.0
  %v1677 = vand.u32 %v1366, 4294901760
  %v1678 = vsub.f32 %v1366, %v1677
  %1679 = vmatpush1.msra.mxu0 %v1678
  %1680 = vmatprep.subr.mxu0 0.0
  %v1681 = vand.u32 %v1365, 4294901760
  %v1682 = vsub.f32 %v1365, %v1681
  %1683 = vmatpush1.msra.mxu0 %v1682
  %1684 = vmatprep.subr.mxu0 0.0
  %v1685 = vand.u32 %v1364, 4294901760
  %v1686 = vsub.f32 %v1364, %v1685
  %1687 = vmatpush1.msra.mxu0 %v1686
  %1688 = vmatprep.subr.mxu0 0.0
  %v1689 = vand.u32 %v1363, 4294901760
  %v1690 = vsub.f32 %v1363, %v1689
  %1691 = vmatpush1.msra.mxu0 %v1690
  %1692 = vmatprep.subr.mxu0 0.0
  %1693 = vmatpush2.msra.mxu0 0.0
  %1694 = vmatprep.subr.mxu0 0.0
  %1695 = vmatpush2.msra.mxu0 0.0
  %1696 = vmatprep.subr.mxu0 0.0
  %1697 = vmatpush2.msra.mxu0 0.0
  %1698 = vmatprep.subr.mxu0 0.0
  %1699 = vmatpush2.msra.mxu0 0.0
  %1700 = vmatprep.subr.mxu0 0.0
  %1701 = vmatpush2.msra.mxu0 0.0
  %1702 = vmatprep.subr.mxu0 0.0
  %1703 = vmatpush2.msra.mxu0 0.0
  %1704 = vmatprep.subr.mxu0 0.0
  %1705 = vmatpush2.msra.mxu0 0.0
  %1706 = vmatprep.subr.mxu0 0.0
  %1707 = vmatpush2.msra.mxu0 0.0
  %1708 = vmatprep.subr.mxu0 0.0
  %1709 = vmatpush2.msra.mxu0 0.0
  %1710 = vmatprep.subr.mxu0 0.0
  %1711 = vmatpush2.msra.mxu0 0.0
  %1712 = vmatprep.subr.mxu0 0.0
  %1713 = vmatpush2.msra.mxu0 0.0
  %1714 = vmatprep.subr.mxu0 0.0
  %1715 = vmatpush2.msra.mxu0 0.0
  %1716 = vmatprep.subr.mxu0 0.0
  %1717 = vmatpush2.msra.mxu0 0.0
  %1718 = vmatprep.subr.mxu0 0.0
  %1719 = vmatpush2.msra.mxu0 0.0
  %1720 = vmatprep.subr.mxu0 0.0
  %1721 = vmatpush2.msra.mxu0 0.0
  %1722 = vmatprep.subr.mxu0 0.0
  %1723 = vmatpush2.msra.mxu0 0.0
  %1724 = vmatprep.mubr.f32.mxu0 0.0
  %v1725 = vand.u32 %v1362, 4294901760
  %v1726 = vsub.f32 %v1362, %v1725
  %1727 = vmatmul.mubr.f32.gmra.mxu0 %v1726
  %v1728 = vpop.f32.mrf.mxu0
  %v1729 = vadd.f32 %v1625, %v1728
  %v1730 = vpop.f32.mrf.mxu0
  %1731 = vdwg.mxu0
  %1732 = vmatprep.subr.mxu0 0.0
  %v1733 = vand.u32 %v1378, 4294901760
  %1734 = vmatpush1.msra.mxu0 %v1733
  %1735 = vmatprep.subr.mxu0 0.0
  %v1736 = vand.u32 %v1377, 4294901760
  %1737 = vmatpush1.msra.mxu0 %v1736
  %1738 = vmatprep.subr.mxu0 0.0
  %v1739 = vand.u32 %v1376, 4294901760
  %1740 = vmatpush1.msra.mxu0 %v1739
  %1741 = vmatprep.subr.mxu0 0.0
  %v1742 = vand.u32 %v1375, 4294901760
  %1743 = vmatpush1.msra.mxu0 %v1742
  %1744 = vmatprep.subr.mxu0 0.0
  %v1745 = vand.u32 %v1374, 4294901760
  %1746 = vmatpush1.msra.mxu0 %v1745
  %1747 = vmatprep.subr.mxu0 0.0
  %v1748 = vand.u32 %v1373, 4294901760
  %1749 = vmatpush1.msra.mxu0 %v1748
  %1750 = vmatprep.subr.mxu0 0.0
  %v1751 = vand.u32 %v1372, 4294901760
  %1752 = vmatpush1.msra.mxu0 %v1751
  %1753 = vmatprep.subr.mxu0 0.0
  %v1754 = vand.u32 %v1371, 4294901760
  %1755 = vmatpush1.msra.mxu0 %v1754
  %1756 = vmatprep.subr.mxu0 0.0
  %v1757 = vand.u32 %v1370, 4294901760
  %1758 = vmatpush1.msra.mxu0 %v1757
  %1759 = vmatprep.subr.mxu0 0.0
  %v1760 = vand.u32 %v1369, 4294901760
  %1761 = vmatpush1.msra.mxu0 %v1760
  %1762 = vmatprep.subr.mxu0 0.0
  %v1763 = vand.u32 %v1368, 4294901760
  %1764 = vmatpush1.msra.mxu0 %v1763
  %1765 = vmatprep.subr.mxu0 0.0
  %v1766 = vand.u32 %v1367, 4294901760
  %1767 = vmatpush1.msra.mxu0 %v1766
  %1768 = vmatprep.subr.mxu0 0.0
  %v1769 = vand.u32 %v1366, 4294901760
  %1770 = vmatpush1.msra.mxu0 %v1769
  %1771 = vmatprep.subr.mxu0 0.0
  %v1772 = vand.u32 %v1365, 4294901760
  %1773 = vmatpush1.msra.mxu0 %v1772
  %1774 = vmatprep.subr.mxu0 0.0
  %v1775 = vand.u32 %v1364, 4294901760
  %1776 = vmatpush1.msra.mxu0 %v1775
  %1777 = vmatprep.subr.mxu0 0.0
  %v1778 = vand.u32 %v1363, 4294901760
  %1779 = vmatpush1.msra.mxu0 %v1778
  %1780 = vmatprep.subr.mxu0 0.0
  %1781 = vmatpush2.msra.mxu0 0.0
  %1782 = vmatprep.subr.mxu0 0.0
  %1783 = vmatpush2.msra.mxu0 0.0
  %1784 = vmatprep.subr.mxu0 0.0
  %1785 = vmatpush2.msra.mxu0 0.0
  %1786 = vmatprep.subr.mxu0 0.0
  %1787 = vmatpush2.msra.mxu0 0.0
  %1788 = vmatprep.subr.mxu0 0.0
  %1789 = vmatpush2.msra.mxu0 0.0
  %1790 = vmatprep.subr.mxu0 0.0
  %1791 = vmatpush2.msra.mxu0 0.0
  %1792 = vmatprep.subr.mxu0 0.0
  %1793 = vmatpush2.msra.mxu0 0.0
  %1794 = vmatprep.subr.mxu0 0.0
  %1795 = vmatpush2.msra.mxu0 0.0
  %1796 = vmatprep.subr.mxu0 0.0
  %1797 = vmatpush2.msra.mxu0 0.0
  %1798 = vmatprep.subr.mxu0 0.0
  %1799 = vmatpush2.msra.mxu0 0.0
  %1800 = vmatprep.subr.mxu0 0.0
  %1801 = vmatpush2.msra.mxu0 0.0
  %1802 = vmatprep.subr.mxu0 0.0
  %1803 = vmatpush2.msra.mxu0 0.0
  %1804 = vmatprep.subr.mxu0 0.0
  %1805 = vmatpush2.msra.mxu0 0.0
  %1806 = vmatprep.subr.mxu0 0.0
  %1807 = vmatpush2.msra.mxu0 0.0
  %1808 = vmatprep.subr.mxu0 0.0
  %1809 = vmatpush2.msra.mxu0 0.0
  %1810 = vmatprep.subr.mxu0 0.0
  %1811 = vmatpush2.msra.mxu0 0.0
  %1812 = vmatprep.mubr.f32.mxu0 0.0
  %v1813 = vand.u32 %v1362, 4294901760
  %v1814 = vsub.f32 %v1362, %v1813
  %v1815 = vand.u32 %v1814, 4294901760
  %1816 = vmatmul.mubr.f32.gmra.mxu0 %v1815
  %v1817 = vpop.f32.mrf.mxu0
  %v1818 = vadd.f32 %v1729, %v1817
  %v1819 = vpop.f32.mrf.mxu0
  %1820 = vdwg.mxu0
  %1821 = vmatprep.subr.mxu0 0.0
  %v1822 = vand.u32 %v1378, 4294901760
  %v1823 = vsub.f32 %v1378, %v1822
  %v1824 = vand.u32 %v1823, 4294901760
  %1825 = vmatpush1.msra.mxu0 %v1824
  %1826 = vmatprep.subr.mxu0 0.0
  %v1827 = vand.u32 %v1377, 4294901760
  %v1828 = vsub.f32 %v1377, %v1827
  %v1829 = vand.u32 %v1828, 4294901760
  %1830 = vmatpush1.msra.mxu0 %v1829
  %1831 = vmatprep.subr.mxu0 0.0
  %v1832 = vand.u32 %v1376, 4294901760
  %v1833 = vsub.f32 %v1376, %v1832
  %v1834 = vand.u32 %v1833, 4294901760
  %1835 = vmatpush1.msra.mxu0 %v1834
  %1836 = vmatprep.subr.mxu0 0.0
  %v1837 = vand.u32 %v1375, 4294901760
  %v1838 = vsub.f32 %v1375, %v1837
  %v1839 = vand.u32 %v1838, 4294901760
  %1840 = vmatpush1.msra.mxu0 %v1839
  %1841 = vmatprep.subr.mxu0 0.0
  %v1842 = vand.u32 %v1374, 4294901760
  %v1843 = vsub.f32 %v1374, %v1842
  %v1844 = vand.u32 %v1843, 4294901760
  %1845 = vmatpush1.msra.mxu0 %v1844
  %1846 = vmatprep.subr.mxu0 0.0
  %v1847 = vand.u32 %v1373, 4294901760
  %v1848 = vsub.f32 %v1373, %v1847
  %v1849 = vand.u32 %v1848, 4294901760
  %1850 = vmatpush1.msra.mxu0 %v1849
  %1851 = vmatprep.subr.mxu0 0.0
  %v1852 = vand.u32 %v1372, 4294901760
  %v1853 = vsub.f32 %v1372, %v1852
  %v1854 = vand.u32 %v1853, 4294901760
  %1855 = vmatpush1.msra.mxu0 %v1854
  %1856 = vmatprep.subr.mxu0 0.0
  %v1857 = vand.u32 %v1371, 4294901760
  %v1858 = vsub.f32 %v1371, %v1857
  %v1859 = vand.u32 %v1858, 4294901760
  %1860 = vmatpush1.msra.mxu0 %v1859
  %1861 = vmatprep.subr.mxu0 0.0
  %v1862 = vand.u32 %v1370, 4294901760
  %v1863 = vsub.f32 %v1370, %v1862
  %v1864 = vand.u32 %v1863, 4294901760
  %1865 = vmatpush1.msra.mxu0 %v1864
  %1866 = vmatprep.subr.mxu0 0.0
  %v1867 = vand.u32 %v1369, 4294901760
  %v1868 = vsub.f32 %v1369, %v1867
  %v1869 = vand.u32 %v1868, 4294901760
  %1870 = vmatpush1.msra.mxu0 %v1869
  %1871 = vmatprep.subr.mxu0 0.0
  %v1872 = vand.u32 %v1368, 4294901760
  %v1873 = vsub.f32 %v1368, %v1872
  %v1874 = vand.u32 %v1873, 4294901760
  %1875 = vmatpush1.msra.mxu0 %v1874
  %1876 = vmatprep.subr.mxu0 0.0
  %v1877 = vand.u32 %v1367, 4294901760
  %v1878 = vsub.f32 %v1367, %v1877
  %v1879 = vand.u32 %v1878, 4294901760
  %1880 = vmatpush1.msra.mxu0 %v1879
  %1881 = vmatprep.subr.mxu0 0.0
  %v1882 = vand.u32 %v1366, 4294901760
  %v1883 = vsub.f32 %v1366, %v1882
  %v1884 = vand.u32 %v1883, 4294901760
  %1885 = vmatpush1.msra.mxu0 %v1884
  %1886 = vmatprep.subr.mxu0 0.0
  %v1887 = vand.u32 %v1365, 4294901760
  %v1888 = vsub.f32 %v1365, %v1887
  %v1889 = vand.u32 %v1888, 4294901760
  %1890 = vmatpush1.msra.mxu0 %v1889
  %1891 = vmatprep.subr.mxu0 0.0
  %v1892 = vand.u32 %v1364, 4294901760
  %v1893 = vsub.f32 %v1364, %v1892
  %v1894 = vand.u32 %v1893, 4294901760
  %1895 = vmatpush1.msra.mxu0 %v1894
  %1896 = vmatprep.subr.mxu0 0.0
  %v1897 = vand.u32 %v1363, 4294901760
  %v1898 = vsub.f32 %v1363, %v1897
  %v1899 = vand.u32 %v1898, 4294901760
  %1900 = vmatpush1.msra.mxu0 %v1899
  %1901 = vmatprep.subr.mxu0 0.0
  %1902 = vmatpush2.msra.mxu0 0.0
  %1903 = vmatprep.subr.mxu0 0.0
  %1904 = vmatpush2.msra.mxu0 0.0
  %1905 = vmatprep.subr.mxu0 0.0
  %1906 = vmatpush2.msra.mxu0 0.0
  %1907 = vmatprep.subr.mxu0 0.0
  %1908 = vmatpush2.msra.mxu0 0.0
  %1909 = vmatprep.subr.mxu0 0.0
  %1910 = vmatpush2.msra.mxu0 0.0
  %1911 = vmatprep.subr.mxu0 0.0
  %1912 = vmatpush2.msra.mxu0 0.0
  %1913 = vmatprep.subr.mxu0 0.0
  %1914 = vmatpush2.msra.mxu0 0.0
  %1915 = vmatprep.subr.mxu0 0.0
  %1916 = vmatpush2.msra.mxu0 0.0
  %1917 = vmatprep.subr.mxu0 0.0
  %1918 = vmatpush2.msra.mxu0 0.0
  %1919 = vmatprep.subr.mxu0 0.0
  %1920 = vmatpush2.msra.mxu0 0.0
  %1921 = vmatprep.subr.mxu0 0.0
  %1922 = vmatpush2.msra.mxu0 0.0
  %1923 = vmatprep.subr.mxu0 0.0
  %1924 = vmatpush2.msra.mxu0 0.0
  %1925 = vmatprep.subr.mxu0 0.0
  %1926 = vmatpush2.msra.mxu0 0.0
  %1927 = vmatprep.subr.mxu0 0.0
  %1928 = vmatpush2.msra.mxu0 0.0
  %1929 = vmatprep.subr.mxu0 0.0
  %1930 = vmatpush2.msra.mxu0 0.0
  %1931 = vmatprep.subr.mxu0 0.0
  %1932 = vmatpush2.msra.mxu0 0.0
  %1933 = vmatprep.mubr.f32.mxu0 0.0
  %v1934 = vand.u32 %v1362, 4294901760
  %1935 = vmatmul.mubr.f32.gmra.mxu0 %v1934
  %v1936 = vpop.f32.mrf.mxu0
  %v1937 = vadd.f32 %v1818, %v1936
  %v1938 = vpop.f32.mrf.mxu0
  %1939 = vdwg.mxu0
  %1940 = vmatprep.subr.mxu0 0.0
  %v1941 = vand.u32 %v1378, 4294901760
  %1942 = vmatpush1.msra.mxu0 %v1941
  %1943 = vmatprep.subr.mxu0 0.0
  %v1944 = vand.u32 %v1377, 4294901760
  %1945 = vmatpush1.msra.mxu0 %v1944
  %1946 = vmatprep.subr.mxu0 0.0
  %v1947 = vand.u32 %v1376, 4294901760
  %1948 = vmatpush1.msra.mxu0 %v1947
  %1949 = vmatprep.subr.mxu0 0.0
  %v1950 = vand.u32 %v1375, 4294901760
  %1951 = vmatpush1.msra.mxu0 %v1950
  %1952 = vmatprep.subr.mxu0 0.0
  %v1953 = vand.u32 %v1374, 4294901760
  %1954 = vmatpush1.msra.mxu0 %v1953
  %1955 = vmatprep.subr.mxu0 0.0
  %v1956 = vand.u32 %v1373, 4294901760
  %1957 = vmatpush1.msra.mxu0 %v1956
  %1958 = vmatprep.subr.mxu0 0.0
  %v1959 = vand.u32 %v1372, 4294901760
  %1960 = vmatpush1.msra.mxu0 %v1959
  %1961 = vmatprep.subr.mxu0 0.0
  %v1962 = vand.u32 %v1371, 4294901760
  %1963 = vmatpush1.msra.mxu0 %v1962
  %1964 = vmatprep.subr.mxu0 0.0
  %v1965 = vand.u32 %v1370, 4294901760
  %1966 = vmatpush1.msra.mxu0 %v1965
  %1967 = vmatprep.subr.mxu0 0.0
  %v1968 = vand.u32 %v1369, 4294901760
  %1969 = vmatpush1.msra.mxu0 %v1968
  %1970 = vmatprep.subr.mxu0 0.0
  %v1971 = vand.u32 %v1368, 4294901760
  %1972 = vmatpush1.msra.mxu0 %v1971
  %1973 = vmatprep.subr.mxu0 0.0
  %v1974 = vand.u32 %v1367, 4294901760
  %1975 = vmatpush1.msra.mxu0 %v1974
  %1976 = vmatprep.subr.mxu0 0.0
  %v1977 = vand.u32 %v1366, 4294901760
  %1978 = vmatpush1.msra.mxu0 %v1977
  %1979 = vmatprep.subr.mxu0 0.0
  %v1980 = vand.u32 %v1365, 4294901760
  %1981 = vmatpush1.msra.mxu0 %v1980
  %1982 = vmatprep.subr.mxu0 0.0
  %v1983 = vand.u32 %v1364, 4294901760
  %1984 = vmatpush1.msra.mxu0 %v1983
  %1985 = vmatprep.subr.mxu0 0.0
  %v1986 = vand.u32 %v1363, 4294901760
  %1987 = vmatpush1.msra.mxu0 %v1986
  %1988 = vmatprep.subr.mxu0 0.0
  %1989 = vmatpush2.msra.mxu0 0.0
  %1990 = vmatprep.subr.mxu0 0.0
  %1991 = vmatpush2.msra.mxu0 0.0
  %1992 = vmatprep.subr.mxu0 0.0
  %1993 = vmatpush2.msra.mxu0 0.0
  %1994 = vmatprep.subr.mxu0 0.0
  %1995 = vmatpush2.msra.mxu0 0.0
  %1996 = vmatprep.subr.mxu0 0.0
  %1997 = vmatpush2.msra.mxu0 0.0
  %1998 = vmatprep.subr.mxu0 0.0
  %1999 = vmatpush2.msra.mxu0 0.0
  %2000 = vmatprep.subr.mxu0 0.0
  %2001 = vmatpush2.msra.mxu0 0.0
  %2002 = vmatprep.subr.mxu0 0.0
  %2003 = vmatpush2.msra.mxu0 0.0
  %2004 = vmatprep.subr.mxu0 0.0
  %2005 = vmatpush2.msra.mxu0 0.0
  %2006 = vmatprep.subr.mxu0 0.0
  %2007 = vmatpush2.msra.mxu0 0.0
  %2008 = vmatprep.subr.mxu0 0.0
  %2009 = vmatpush2.msra.mxu0 0.0
  %2010 = vmatprep.subr.mxu0 0.0
  %2011 = vmatpush2.msra.mxu0 0.0
  %2012 = vmatprep.subr.mxu0 0.0
  %2013 = vmatpush2.msra.mxu0 0.0
  %2014 = vmatprep.subr.mxu0 0.0
  %2015 = vmatpush2.msra.mxu0 0.0
  %2016 = vmatprep.subr.mxu0 0.0
  %2017 = vmatpush2.msra.mxu0 0.0
  %2018 = vmatprep.subr.mxu0 0.0
  %2019 = vmatpush2.msra.mxu0 0.0
  %2020 = vmatprep.mubr.f32.mxu0 0.0
  %v2021 = vand.u32 %v1362, 4294901760
  %2022 = vmatmul.mubr.f32.gmra.mxu0 %v2021
  %v2023 = vpop.f32.mrf.mxu0
  %v2024 = vadd.f32 %v1937, %v2023
  %v2025 = vpop.f32.mrf.mxu0
  %2026 = vdwg.mxu0
  %v2027 = vmax.f32 %v2024, 0.0
  %v2028 = vld [vmem:[%s7] sm:$0xff]
  %v2029 = vld [vmem:[%s7 + $0x8] sm:$0xff]
  %v2030 = vld [vmem:[%s7 + $0x10] sm:$0xff]
  %v2031 = vld [vmem:[%s7 + $0x18] sm:$0xff]
  %v2032 = vld [vmem:[%s7 + $0x20] sm:$0xff]
  %v2033 = vld [vmem:[%s7 + $0x28] sm:$0xff]
  %v2034 = vld [vmem:[%s7 + $0x30] sm:$0xff]
  %v2035 = vld [vmem:[%s7 + $0x38] sm:$0xff]
  %v2036 = vld [vmem:[%s7 + $0x40] sm:$0xff]
  %v2037 = vld [vmem:[%s7 + $0x48] sm:$0xff]
  %v2038 = vld [vmem:[%s7 + $0x50] sm:$0xff]
  %v2039 = vld [vmem:[%s7 + $0x58] sm:$0xff]
  %v2040 = vld [vmem:[%s7 + $0x60] sm:$0xff]
  %v2041 = vld [vmem:[%s7 + $0x68] sm:$0xff]
  %v2042 = vld [vmem:[%s7 + $0x70] sm:$0xff]
  %v2043 = vld [vmem:[%s7 + $0x78] sm:$0xff]
  %v2044 = vld [vmem:[%s8] sm:$0x1]
  %v2046 = vlaneseq
  %v2047 = vshrl.u32 %v2046, 7
  %v2048 = vsub.s32 0, %v2047
  %v2049 = vrot.slane %v2044, %v2048
  %2051 = vmatprep.subr.mxu0 0.0
  %v2052 = vand.u32 %v2043, 4294901760
  %2053 = vmatpush1.msra.mxu0 %v2052
  %2054 = vmatprep.subr.mxu0 0.0
  %v2055 = vand.u32 %v2042, 4294901760
  %2056 = vmatpush1.msra.mxu0 %v2055
  %2057 = vmatprep.subr.mxu0 0.0
  %v2058 = vand.u32 %v2041, 4294901760
  %2059 = vmatpush1.msra.mxu0 %v2058
  %2060 = vmatprep.subr.mxu0 0.0
  %v2061 = vand.u32 %v2040, 4294901760
  %2062 = vmatpush1.msra.mxu0 %v2061
  %2063 = vmatprep.subr.mxu0 0.0
  %v2064 = vand.u32 %v2039, 4294901760
  %2065 = vmatpush1.msra.mxu0 %v2064
  %2066 = vmatprep.subr.mxu0 0.0
  %v2067 = vand.u32 %v2038, 4294901760
  %2068 = vmatpush1.msra.mxu0 %v2067
  %2069 = vmatprep.subr.mxu0 0.0
  %v2070 = vand.u32 %v2037, 4294901760
  %2071 = vmatpush1.msra.mxu0 %v2070
  %2072 = vmatprep.subr.mxu0 0.0
  %v2073 = vand.u32 %v2036, 4294901760
  %2074 = vmatpush1.msra.mxu0 %v2073
  %2075 = vmatprep.subr.mxu0 0.0
  %v2076 = vand.u32 %v2035, 4294901760
  %2077 = vmatpush1.msra.mxu0 %v2076
  %2078 = vmatprep.subr.mxu0 0.0
  %v2079 = vand.u32 %v2034, 4294901760
  %2080 = vmatpush1.msra.mxu0 %v2079
  %2081 = vmatprep.subr.mxu0 0.0
  %v2082 = vand.u32 %v2033, 4294901760
  %2083 = vmatpush1.msra.mxu0 %v2082
  %2084 = vmatprep.subr.mxu0 0.0
  %v2085 = vand.u32 %v2032, 4294901760
  %2086 = vmatpush1.msra.mxu0 %v2085
  %2087 = vmatprep.subr.mxu0 0.0
  %v2088 = vand.u32 %v2031, 4294901760
  %2089 = vmatpush1.msra.mxu0 %v2088
  %2090 = vmatprep.subr.mxu0 0.0
  %v2091 = vand.u32 %v2030, 4294901760
  %2092 = vmatpush1.msra.mxu0 %v2091
  %2093 = vmatprep.subr.mxu0 0.0
  %v2094 = vand.u32 %v2029, 4294901760
  %2095 = vmatpush1.msra.mxu0 %v2094
  %2096 = vmatprep.subr.mxu0 0.0
  %v2097 = vand.u32 %v2028, 4294901760
  %2098 = vmatpush1.msra.mxu0 %v2097
  %2099 = vmatprep.subr.mxu0 0.0
  %2100 = vmatpush2.msra.mxu0 0.0
  %2101 = vmatprep.subr.mxu0 0.0
  %2102 = vmatpush2.msra.mxu0 0.0
  %2103 = vmatprep.subr.mxu0 0.0
  %2104 = vmatpush2.msra.mxu0 0.0
  %2105 = vmatprep.subr.mxu0 0.0
  %2106 = vmatpush2.msra.mxu0 0.0
  %2107 = vmatprep.subr.mxu0 0.0
  %2108 = vmatpush2.msra.mxu0 0.0
  %2109 = vmatprep.subr.mxu0 0.0
  %2110 = vmatpush2.msra.mxu0 0.0
  %2111 = vmatprep.subr.mxu0 0.0
  %2112 = vmatpush2.msra.mxu0 0.0
  %2113 = vmatprep.subr.mxu0 0.0
  %2114 = vmatpush2.msra.mxu0 0.0
  %2115 = vmatprep.subr.mxu0 0.0
  %2116 = vmatpush2.msra.mxu0 0.0
  %2117 = vmatprep.subr.mxu0 0.0
  %2118 = vmatpush2.msra.mxu0 0.0
  %2119 = vmatprep.subr.mxu0 0.0
  %2120 = vmatpush2.msra.mxu0 0.0
  %2121 = vmatprep.subr.mxu0 0.0
  %2122 = vmatpush2.msra.mxu0 0.0
  %2123 = vmatprep.subr.mxu0 0.0
  %2124 = vmatpush2.msra.mxu0 0.0
  %2125 = vmatprep.subr.mxu0 0.0
  %2126 = vmatpush2.msra.mxu0 0.0
  %2127 = vmatprep.subr.mxu0 0.0
  %2128 = vmatpush2.msra.mxu0 0.0
  %2129 = vmatprep.subr.mxu0 0.0
  %2130 = vmatpush2.msra.mxu0 0.0
  %2131 = vmatprep.mubr.f32.mxu0 0.0
  %v2132 = vand.u32 %v2027, 4294901760
  %v2133 = vsub.f32 %v2027, %v2132
  %v2134 = vand.u32 %v2133, 4294901760
  %v2135 = vsub.f32 %v2133, %v2134
  %v2136 = vand.u32 %v2135, 4294901760
  %2137 = vmatmul.mubr.f32.gmra.mxu0 %v2136
  %v2138 = vpop.f32.mrf.mxu0
  %v2139 = vadd.f32 %v2049, %v2138
  %v2140 = vpop.f32.mrf.mxu0
  %2141 = vdwg.mxu0
  %2142 = vmatprep.subr.mxu0 0.0
  %v2143 = vand.u32 %v2043, 4294901760
  %v2144 = vsub.f32 %v2043, %v2143
  %v2145 = vand.u32 %v2144, 4294901760
  %v2146 = vsub.f32 %v2144, %v2145
  %v2147 = vand.u32 %v2146, 4294901760
  %2148 = vmatpush1.msra.mxu0 %v2147
  %2149 = vmatprep.subr.mxu0 0.0
  %v2150 = vand.u32 %v2042, 4294901760
  %v2151 = vsub.f32 %v2042, %v2150
  %v2152 = vand.u32 %v2151, 4294901760
  %v2153 = vsub.f32 %v2151, %v2152
  %v2154 = vand.u32 %v2153, 4294901760
  %2155 = vmatpush1.msra.mxu0 %v2154
  %2156 = vmatprep.subr.mxu0 0.0
  %v2157 = vand.u32 %v2041, 4294901760
  %v2158 = vsub.f32 %v2041, %v2157
  %v2159 = vand.u32 %v2158, 4294901760
  %v2160 = vsub.f32 %v2158, %v2159
  %v2161 = vand.u32 %v2160, 4294901760
  %2162 = vmatpush1.msra.mxu0 %v2161
  %2163 = vmatprep.subr.mxu0 0.0
  %v2164 = vand.u32 %v2040, 4294901760
  %v2165 = vsub.f32 %v2040, %v2164
  %v2166 = vand.u32 %v2165, 4294901760
  %v2167 = vsub.f32 %v2165, %v2166
  %v2168 = vand.u32 %v2167, 4294901760
  %2169 = vmatpush1.msra.mxu0 %v2168
  %2170 = vmatprep.subr.mxu0 0.0
  %v2171 = vand.u32 %v2039, 4294901760
  %v2172 = vsub.f32 %v2039, %v2171
  %v2173 = vand.u32 %v2172, 4294901760
  %v2174 = vsub.f32 %v2172, %v2173
  %v2175 = vand.u32 %v2174, 4294901760
  %2176 = vmatpush1.msra.mxu0 %v2175
  %2177 = vmatprep.subr.mxu0 0.0
  %v2178 = vand.u32 %v2038, 4294901760
  %v2179 = vsub.f32 %v2038, %v2178
  %v2180 = vand.u32 %v2179, 4294901760
  %v2181 = vsub.f32 %v2179, %v2180
  %v2182 = vand.u32 %v2181, 4294901760
  %2183 = vmatpush1.msra.mxu0 %v2182
  %2184 = vmatprep.subr.mxu0 0.0
  %v2185 = vand.u32 %v2037, 4294901760
  %v2186 = vsub.f32 %v2037, %v2185
  %v2187 = vand.u32 %v2186, 4294901760
  %v2188 = vsub.f32 %v2186, %v2187
  %v2189 = vand.u32 %v2188, 4294901760
  %2190 = vmatpush1.msra.mxu0 %v2189
  %2191 = vmatprep.subr.mxu0 0.0
  %v2192 = vand.u32 %v2036, 4294901760
  %v2193 = vsub.f32 %v2036, %v2192
  %v2194 = vand.u32 %v2193, 4294901760
  %v2195 = vsub.f32 %v2193, %v2194
  %v2196 = vand.u32 %v2195, 4294901760
  %2197 = vmatpush1.msra.mxu0 %v2196
  %2198 = vmatprep.subr.mxu0 0.0
  %v2199 = vand.u32 %v2035, 4294901760
  %v2200 = vsub.f32 %v2035, %v2199
  %v2201 = vand.u32 %v2200, 4294901760
  %v2202 = vsub.f32 %v2200, %v2201
  %v2203 = vand.u32 %v2202, 4294901760
  %2204 = vmatpush1.msra.mxu0 %v2203
  %2205 = vmatprep.subr.mxu0 0.0
  %v2206 = vand.u32 %v2034, 4294901760
  %v2207 = vsub.f32 %v2034, %v2206
  %v2208 = vand.u32 %v2207, 4294901760
  %v2209 = vsub.f32 %v2207, %v2208
  %v2210 = vand.u32 %v2209, 4294901760
  %2211 = vmatpush1.msra.mxu0 %v2210
  %2212 = vmatprep.subr.mxu0 0.0
  %v2213 = vand.u32 %v2033, 4294901760
  %v2214 = vsub.f32 %v2033, %v2213
  %v2215 = vand.u32 %v2214, 4294901760
  %v2216 = vsub.f32 %v2214, %v2215
  %v2217 = vand.u32 %v2216, 4294901760
  %2218 = vmatpush1.msra.mxu0 %v2217
  %2219 = vmatprep.subr.mxu0 0.0
  %v2220 = vand.u32 %v2032, 4294901760
  %v2221 = vsub.f32 %v2032, %v2220
  %v2222 = vand.u32 %v2221, 4294901760
  %v2223 = vsub.f32 %v2221, %v2222
  %v2224 = vand.u32 %v2223, 4294901760
  %2225 = vmatpush1.msra.mxu0 %v2224
  %2226 = vmatprep.subr.mxu0 0.0
  %v2227 = vand.u32 %v2031, 4294901760
  %v2228 = vsub.f32 %v2031, %v2227
  %v2229 = vand.u32 %v2228, 4294901760
  %v2230 = vsub.f32 %v2228, %v2229
  %v2231 = vand.u32 %v2230, 4294901760
  %2232 = vmatpush1.msra.mxu0 %v2231
  %2233 = vmatprep.subr.mxu0 0.0
  %v2234 = vand.u32 %v2030, 4294901760
  %v2235 = vsub.f32 %v2030, %v2234
  %v2236 = vand.u32 %v2235, 4294901760
  %v2237 = vsub.f32 %v2235, %v2236
  %v2238 = vand.u32 %v2237, 4294901760
  %2239 = vmatpush1.msra.mxu0 %v2238
  %2240 = vmatprep.subr.mxu0 0.0
  %v2241 = vand.u32 %v2029, 4294901760
  %v2242 = vsub.f32 %v2029, %v2241
  %v2243 = vand.u32 %v2242, 4294901760
  %v2244 = vsub.f32 %v2242, %v2243
  %v2245 = vand.u32 %v2244, 4294901760
  %2246 = vmatpush1.msra.mxu0 %v2245
  %2247 = vmatprep.subr.mxu0 0.0
  %v2248 = vand.u32 %v2028, 4294901760
  %v2249 = vsub.f32 %v2028, %v2248
  %v2250 = vand.u32 %v2249, 4294901760
  %v2251 = vsub.f32 %v2249, %v2250
  %v2252 = vand.u32 %v2251, 4294901760
  %2253 = vmatpush1.msra.mxu0 %v2252
  %2254 = vmatprep.subr.mxu0 0.0
  %2255 = vmatpush2.msra.mxu0 0.0
  %2256 = vmatprep.subr.mxu0 0.0
  %2257 = vmatpush2.msra.mxu0 0.0
  %2258 = vmatprep.subr.mxu0 0.0
  %2259 = vmatpush2.msra.mxu0 0.0
  %2260 = vmatprep.subr.mxu0 0.0
  %2261 = vmatpush2.msra.mxu0 0.0
  %2262 = vmatprep.subr.mxu0 0.0
  %2263 = vmatpush2.msra.mxu0 0.0
  %2264 = vmatprep.subr.mxu0 0.0
  %2265 = vmatpush2.msra.mxu0 0.0
  %2266 = vmatprep.subr.mxu0 0.0
  %2267 = vmatpush2.msra.mxu0 0.0
  %2268 = vmatprep.subr.mxu0 0.0
  %2269 = vmatpush2.msra.mxu0 0.0
  %2270 = vmatprep.subr.mxu0 0.0
  %2271 = vmatpush2.msra.mxu0 0.0
  %2272 = vmatprep.subr.mxu0 0.0
  %2273 = vmatpush2.msra.mxu0 0.0
  %2274 = vmatprep.subr.mxu0 0.0
  %2275 = vmatpush2.msra.mxu0 0.0
  %2276 = vmatprep.subr.mxu0 0.0
  %2277 = vmatpush2.msra.mxu0 0.0
  %2278 = vmatprep.subr.mxu0 0.0
  %2279 = vmatpush2.msra.mxu0 0.0
  %2280 = vmatprep.subr.mxu0 0.0
  %2281 = vmatpush2.msra.mxu0 0.0
  %2282 = vmatprep.subr.mxu0 0.0
  %2283 = vmatpush2.msra.mxu0 0.0
  %2284 = vmatprep.subr.mxu0 0.0
  %2285 = vmatpush2.msra.mxu0 0.0
  %2286 = vmatprep.mubr.f32.mxu0 0.0
  %v2287 = vand.u32 %v2027, 4294901760
  %2288 = vmatmul.mubr.f32.gmra.mxu0 %v2287
  %v2289 = vpop.f32.mrf.mxu0
  %v2290 = vadd.f32 %v2139, %v2289
  %v2291 = vpop.f32.mrf.mxu0
  %2292 = vdwg.mxu0
  %2293 = vmatprep.subr.mxu0 0.0
  %v2294 = vand.u32 %v2043, 4294901760
  %v2295 = vsub.f32 %v2043, %v2294
  %2296 = vmatpush1.msra.mxu0 %v2295
  %2297 = vmatprep.subr.mxu0 0.0
  %v2298 = vand.u32 %v2042, 4294901760
  %v2299 = vsub.f32 %v2042, %v2298
  %2300 = vmatpush1.msra.mxu0 %v2299
  %2301 = vmatprep.subr.mxu0 0.0
  %v2302 = vand.u32 %v2041, 4294901760
  %v2303 = vsub.f32 %v2041, %v2302
  %2304 = vmatpush1.msra.mxu0 %v2303
  %2305 = vmatprep.subr.mxu0 0.0
  %v2306 = vand.u32 %v2040, 4294901760
  %v2307 = vsub.f32 %v2040, %v2306
  %2308 = vmatpush1.msra.mxu0 %v2307
  %2309 = vmatprep.subr.mxu0 0.0
  %v2310 = vand.u32 %v2039, 4294901760
  %v2311 = vsub.f32 %v2039, %v2310
  %2312 = vmatpush1.msra.mxu0 %v2311
  %2313 = vmatprep.subr.mxu0 0.0
  %v2314 = vand.u32 %v2038, 4294901760
  %v2315 = vsub.f32 %v2038, %v2314
  %2316 = vmatpush1.msra.mxu0 %v2315
  %2317 = vmatprep.subr.mxu0 0.0
  %v2318 = vand.u32 %v2037, 4294901760
  %v2319 = vsub.f32 %v2037, %v2318
  %2320 = vmatpush1.msra.mxu0 %v2319
  %2321 = vmatprep.subr.mxu0 0.0
  %v2322 = vand.u32 %v2036, 4294901760
  %v2323 = vsub.f32 %v2036, %v2322
  %2324 = vmatpush1.msra.mxu0 %v2323
  %2325 = vmatprep.subr.mxu0 0.0
  %v2326 = vand.u32 %v2035, 4294901760
  %v2327 = vsub.f32 %v2035, %v2326
  %2328 = vmatpush1.msra.mxu0 %v2327
  %2329 = vmatprep.subr.mxu0 0.0
  %v2330 = vand.u32 %v2034, 4294901760
  %v2331 = vsub.f32 %v2034, %v2330
  %2332 = vmatpush1.msra.mxu0 %v2331
  %2333 = vmatprep.subr.mxu0 0.0
  %v2334 = vand.u32 %v2033, 4294901760
  %v2335 = vsub.f32 %v2033, %v2334
  %2336 = vmatpush1.msra.mxu0 %v2335
  %2337 = vmatprep.subr.mxu0 0.0
  %v2338 = vand.u32 %v2032, 4294901760
  %v2339 = vsub.f32 %v2032, %v2338
  %2340 = vmatpush1.msra.mxu0 %v2339
  %2341 = vmatprep.subr.mxu0 0.0
  %v2342 = vand.u32 %v2031, 4294901760
  %v2343 = vsub.f32 %v2031, %v2342
  %2344 = vmatpush1.msra.mxu0 %v2343
  %2345 = vmatprep.subr.mxu0 0.0
  %v2346 = vand.u32 %v2030, 4294901760
  %v2347 = vsub.f32 %v2030, %v2346
  %2348 = vmatpush1.msra.mxu0 %v2347
  %2349 = vmatprep.subr.mxu0 0.0
  %v2350 = vand.u32 %v2029, 4294901760
  %v2351 = vsub.f32 %v2029, %v2350
  %2352 = vmatpush1.msra.mxu0 %v2351
  %2353 = vmatprep.subr.mxu0 0.0
  %v2354 = vand.u32 %v2028, 4294901760
  %v2355 = vsub.f32 %v2028, %v2354
  %2356 = vmatpush1.msra.mxu0 %v2355
  %2357 = vmatprep.subr.mxu0 0.0
  %2358 = vmatpush2.msra.mxu0 0.0
  %2359 = vmatprep.subr.mxu0 0.0
  %2360 = vmatpush2.msra.mxu0 0.0
  %2361 = vmatprep.subr.mxu0 0.0
  %2362 = vmatpush2.msra.mxu0 0.0
  %2363 = vmatprep.subr.mxu0 0.0
  %2364 = vmatpush2.msra.mxu0 0.0
  %2365 = vmatprep.subr.mxu0 0.0
  %2366 = vmatpush2.msra.mxu0 0.0
  %2367 = vmatprep.subr.mxu0 0.0
  %2368 = vmatpush2.msra.mxu0 0.0
  %2369 = vmatprep.subr.mxu0 0.0
  %2370 = vmatpush2.msra.mxu0 0.0
  %2371 = vmatprep.subr.mxu0 0.0
  %2372 = vmatpush2.msra.mxu0 0.0
  %2373 = vmatprep.subr.mxu0 0.0
  %2374 = vmatpush2.msra.mxu0 0.0
  %2375 = vmatprep.subr.mxu0 0.0
  %2376 = vmatpush2.msra.mxu0 0.0
  %2377 = vmatprep.subr.mxu0 0.0
  %2378 = vmatpush2.msra.mxu0 0.0
  %2379 = vmatprep.subr.mxu0 0.0
  %2380 = vmatpush2.msra.mxu0 0.0
  %2381 = vmatprep.subr.mxu0 0.0
  %2382 = vmatpush2.msra.mxu0 0.0
  %2383 = vmatprep.subr.mxu0 0.0
  %2384 = vmatpush2.msra.mxu0 0.0
  %2385 = vmatprep.subr.mxu0 0.0
  %2386 = vmatpush2.msra.mxu0 0.0
  %2387 = vmatprep.subr.mxu0 0.0
  %2388 = vmatpush2.msra.mxu0 0.0
  %2389 = vmatprep.mubr.f32.mxu0 0.0
  %v2390 = vand.u32 %v2027, 4294901760
  %v2391 = vsub.f32 %v2027, %v2390
  %2392 = vmatmul.mubr.f32.gmra.mxu0 %v2391
  %v2393 = vpop.f32.mrf.mxu0
  %v2394 = vadd.f32 %v2290, %v2393
  %v2395 = vpop.f32.mrf.mxu0
  %2396 = vdwg.mxu0
  %2397 = vmatprep.subr.mxu0 0.0
  %v2398 = vand.u32 %v2043, 4294901760
  %2399 = vmatpush1.msra.mxu0 %v2398
  %2400 = vmatprep.subr.mxu0 0.0
  %v2401 = vand.u32 %v2042, 4294901760
  %2402 = vmatpush1.msra.mxu0 %v2401
  %2403 = vmatprep.subr.mxu0 0.0
  %v2404 = vand.u32 %v2041, 4294901760
  %2405 = vmatpush1.msra.mxu0 %v2404
  %2406 = vmatprep.subr.mxu0 0.0
  %v2407 = vand.u32 %v2040, 4294901760
  %2408 = vmatpush1.msra.mxu0 %v2407
  %2409 = vmatprep.subr.mxu0 0.0
  %v2410 = vand.u32 %v2039, 4294901760
  %2411 = vmatpush1.msra.mxu0 %v2410
  %2412 = vmatprep.subr.mxu0 0.0
  %v2413 = vand.u32 %v2038, 4294901760
  %2414 = vmatpush1.msra.mxu0 %v2413
  %2415 = vmatprep.subr.mxu0 0.0
  %v2416 = vand.u32 %v2037, 4294901760
  %2417 = vmatpush1.msra.mxu0 %v2416
  %2418 = vmatprep.subr.mxu0 0.0
  %v2419 = vand.u32 %v2036, 4294901760
  %2420 = vmatpush1.msra.mxu0 %v2419
  %2421 = vmatprep.subr.mxu0 0.0
  %v2422 = vand.u32 %v2035, 4294901760
  %2423 = vmatpush1.msra.mxu0 %v2422
  %2424 = vmatprep.subr.mxu0 0.0
  %v2425 = vand.u32 %v2034, 4294901760
  %2426 = vmatpush1.msra.mxu0 %v2425
  %2427 = vmatprep.subr.mxu0 0.0
  %v2428 = vand.u32 %v2033, 4294901760
  %2429 = vmatpush1.msra.mxu0 %v2428
  %2430 = vmatprep.subr.mxu0 0.0
  %v2431 = vand.u32 %v2032, 4294901760
  %2432 = vmatpush1.msra.mxu0 %v2431
  %2433 = vmatprep.subr.mxu0 0.0
  %v2434 = vand.u32 %v2031, 4294901760
  %2435 = vmatpush1.msra.mxu0 %v2434
  %2436 = vmatprep.subr.mxu0 0.0
  %v2437 = vand.u32 %v2030, 4294901760
  %2438 = vmatpush1.msra.mxu0 %v2437
  %2439 = vmatprep.subr.mxu0 0.0
  %v2440 = vand.u32 %v2029, 4294901760
  %2441 = vmatpush1.msra.mxu0 %v2440
  %2442 = vmatprep.subr.mxu0 0.0
  %v2443 = vand.u32 %v2028, 4294901760
  %2444 = vmatpush1.msra.mxu0 %v2443
  %2445 = vmatprep.subr.mxu0 0.0
  %2446 = vmatpush2.msra.mxu0 0.0
  %2447 = vmatprep.subr.mxu0 0.0
  %2448 = vmatpush2.msra.mxu0 0.0
  %2449 = vmatprep.subr.mxu0 0.0
  %2450 = vmatpush2.msra.mxu0 0.0
  %2451 = vmatprep.subr.mxu0 0.0
  %2452 = vmatpush2.msra.mxu0 0.0
  %2453 = vmatprep.subr.mxu0 0.0
  %2454 = vmatpush2.msra.mxu0 0.0
  %2455 = vmatprep.subr.mxu0 0.0
  %2456 = vmatpush2.msra.mxu0 0.0
  %2457 = vmatprep.subr.mxu0 0.0
  %2458 = vmatpush2.msra.mxu0 0.0
  %2459 = vmatprep.subr.mxu0 0.0
  %2460 = vmatpush2.msra.mxu0 0.0
  %2461 = vmatprep.subr.mxu0 0.0
  %2462 = vmatpush2.msra.mxu0 0.0
  %2463 = vmatprep.subr.mxu0 0.0
  %2464 = vmatpush2.msra.mxu0 0.0
  %2465 = vmatprep.subr.mxu0 0.0
  %2466 = vmatpush2.msra.mxu0 0.0
  %2467 = vmatprep.subr.mxu0 0.0
  %2468 = vmatpush2.msra.mxu0 0.0
  %2469 = vmatprep.subr.mxu0 0.0
  %2470 = vmatpush2.msra.mxu0 0.0
  %2471 = vmatprep.subr.mxu0 0.0
  %2472 = vmatpush2.msra.mxu0 0.0
  %2473 = vmatprep.subr.mxu0 0.0
  %2474 = vmatpush2.msra.mxu0 0.0
  %2475 = vmatprep.subr.mxu0 0.0
  %2476 = vmatpush2.msra.mxu0 0.0
  %2477 = vmatprep.mubr.f32.mxu0 0.0
  %v2478 = vand.u32 %v2027, 4294901760
  %v2479 = vsub.f32 %v2027, %v2478
  %v2480 = vand.u32 %v2479, 4294901760
  %2481 = vmatmul.mubr.f32.gmra.mxu0 %v2480
  %v2482 = vpop.f32.mrf.mxu0
  %v2483 = vadd.f32 %v2394, %v2482
  %v2484 = vpop.f32.mrf.mxu0
  %2485 = vdwg.mxu0
  %2486 = vmatprep.subr.mxu0 0.0
  %v2487 = vand.u32 %v2043, 4294901760
  %v2488 = vsub.f32 %v2043, %v2487
  %v2489 = vand.u32 %v2488, 4294901760
  %2490 = vmatpush1.msra.mxu0 %v2489
  %2491 = vmatprep.subr.mxu0 0.0
  %v2492 = vand.u32 %v2042, 4294901760
  %v2493 = vsub.f32 %v2042, %v2492
  %v2494 = vand.u32 %v2493, 4294901760
  %2495 = vmatpush1.msra.mxu0 %v2494
  %2496 = vmatprep.subr.mxu0 0.0
  %v2497 = vand.u32 %v2041, 4294901760
  %v2498 = vsub.f32 %v2041, %v2497
  %v2499 = vand.u32 %v2498, 4294901760
  %2500 = vmatpush1.msra.mxu0 %v2499
  %2501 = vmatprep.subr.mxu0 0.0
  %v2502 = vand.u32 %v2040, 4294901760
  %v2503 = vsub.f32 %v2040, %v2502
  %v2504 = vand.u32 %v2503, 4294901760
  %2505 = vmatpush1.msra.mxu0 %v2504
  %2506 = vmatprep.subr.mxu0 0.0
  %v2507 = vand.u32 %v2039, 4294901760
  %v2508 = vsub.f32 %v2039, %v2507
  %v2509 = vand.u32 %v2508, 4294901760
  %2510 = vmatpush1.msra.mxu0 %v2509
  %2511 = vmatprep.subr.mxu0 0.0
  %v2512 = vand.u32 %v2038, 4294901760
  %v2513 = vsub.f32 %v2038, %v2512
  %v2514 = vand.u32 %v2513, 4294901760
  %2515 = vmatpush1.msra.mxu0 %v2514
  %2516 = vmatprep.subr.mxu0 0.0
  %v2517 = vand.u32 %v2037, 4294901760
  %v2518 = vsub.f32 %v2037, %v2517
  %v2519 = vand.u32 %v2518, 4294901760
  %2520 = vmatpush1.msra.mxu0 %v2519
  %2521 = vmatprep.subr.mxu0 0.0
  %v2522 = vand.u32 %v2036, 4294901760
  %v2523 = vsub.f32 %v2036, %v2522
  %v2524 = vand.u32 %v2523, 4294901760
  %2525 = vmatpush1.msra.mxu0 %v2524
  %2526 = vmatprep.subr.mxu0 0.0
  %v2527 = vand.u32 %v2035, 4294901760
  %v2528 = vsub.f32 %v2035, %v2527
  %v2529 = vand.u32 %v2528, 4294901760
  %2530 = vmatpush1.msra.mxu0 %v2529
  %2531 = vmatprep.subr.mxu0 0.0
  %v2532 = vand.u32 %v2034, 4294901760
  %v2533 = vsub.f32 %v2034, %v2532
  %v2534 = vand.u32 %v2533, 4294901760
  %2535 = vmatpush1.msra.mxu0 %v2534
  %2536 = vmatprep.subr.mxu0 0.0
  %v2537 = vand.u32 %v2033, 4294901760
  %v2538 = vsub.f32 %v2033, %v2537
  %v2539 = vand.u32 %v2538, 4294901760
  %2540 = vmatpush1.msra.mxu0 %v2539
  %2541 = vmatprep.subr.mxu0 0.0
  %v2542 = vand.u32 %v2032, 4294901760
  %v2543 = vsub.f32 %v2032, %v2542
  %v2544 = vand.u32 %v2543, 4294901760
  %2545 = vmatpush1.msra.mxu0 %v2544
  %2546 = vmatprep.subr.mxu0 0.0
  %v2547 = vand.u32 %v2031, 4294901760
  %v2548 = vsub.f32 %v2031, %v2547
  %v2549 = vand.u32 %v2548, 4294901760
  %2550 = vmatpush1.msra.mxu0 %v2549
  %2551 = vmatprep.subr.mxu0 0.0
  %v2552 = vand.u32 %v2030, 4294901760
  %v2553 = vsub.f32 %v2030, %v2552
  %v2554 = vand.u32 %v2553, 4294901760
  %2555 = vmatpush1.msra.mxu0 %v2554
  %2556 = vmatprep.subr.mxu0 0.0
  %v2557 = vand.u32 %v2029, 4294901760
  %v2558 = vsub.f32 %v2029, %v2557
  %v2559 = vand.u32 %v2558, 4294901760
  %2560 = vmatpush1.msra.mxu0 %v2559
  %2561 = vmatprep.subr.mxu0 0.0
  %v2562 = vand.u32 %v2028, 4294901760
  %v2563 = vsub.f32 %v2028, %v2562
  %v2564 = vand.u32 %v2563, 4294901760
  %2565 = vmatpush1.msra.mxu0 %v2564
  %2566 = vmatprep.subr.mxu0 0.0
  %2567 = vmatpush2.msra.mxu0 0.0
  %2568 = vmatprep.subr.mxu0 0.0
  %2569 = vmatpush2.msra.mxu0 0.0
  %2570 = vmatprep.subr.mxu0 0.0
  %2571 = vmatpush2.msra.mxu0 0.0
  %2572 = vmatprep.subr.mxu0 0.0
  %2573 = vmatpush2.msra.mxu0 0.0
  %2574 = vmatprep.subr.mxu0 0.0
  %2575 = vmatpush2.msra.mxu0 0.0
  %2576 = vmatprep.subr.mxu0 0.0
  %2577 = vmatpush2.msra.mxu0 0.0
  %2578 = vmatprep.subr.mxu0 0.0
  %2579 = vmatpush2.msra.mxu0 0.0
  %2580 = vmatprep.subr.mxu0 0.0
  %2581 = vmatpush2.msra.mxu0 0.0
  %2582 = vmatprep.subr.mxu0 0.0
  %2583 = vmatpush2.msra.mxu0 0.0
  %2584 = vmatprep.subr.mxu0 0.0
  %2585 = vmatpush2.msra.mxu0 0.0
  %2586 = vmatprep.subr.mxu0 0.0
  %2587 = vmatpush2.msra.mxu0 0.0
  %2588 = vmatprep.subr.mxu0 0.0
  %2589 = vmatpush2.msra.mxu0 0.0
  %2590 = vmatprep.subr.mxu0 0.0
  %2591 = vmatpush2.msra.mxu0 0.0
  %2592 = vmatprep.subr.mxu0 0.0
  %2593 = vmatpush2.msra.mxu0 0.0
  %2594 = vmatprep.subr.mxu0 0.0
  %2595 = vmatpush2.msra.mxu0 0.0
  %2596 = vmatprep.subr.mxu0 0.0
  %2597 = vmatpush2.msra.mxu0 0.0
  %2598 = vmatprep.mubr.f32.mxu0 0.0
  %v2599 = vand.u32 %v2027, 4294901760
  %2600 = vmatmul.mubr.f32.gmra.mxu0 %v2599
  %v2601 = vpop.f32.mrf.mxu0
  %v2602 = vadd.f32 %v2483, %v2601
  %v2603 = vpop.f32.mrf.mxu0
  %2604 = vdwg.mxu0
  %2605 = vmatprep.subr.mxu0 0.0
  %v2606 = vand.u32 %v2043, 4294901760
  %2607 = vmatpush1.msra.mxu0 %v2606
  %2608 = vmatprep.subr.mxu0 0.0
  %v2609 = vand.u32 %v2042, 4294901760
  %2610 = vmatpush1.msra.mxu0 %v2609
  %2611 = vmatprep.subr.mxu0 0.0
  %v2612 = vand.u32 %v2041, 4294901760
  %2613 = vmatpush1.msra.mxu0 %v2612
  %2614 = vmatprep.subr.mxu0 0.0
  %v2615 = vand.u32 %v2040, 4294901760
  %2616 = vmatpush1.msra.mxu0 %v2615
  %2617 = vmatprep.subr.mxu0 0.0
  %v2618 = vand.u32 %v2039, 4294901760
  %2619 = vmatpush1.msra.mxu0 %v2618
  %2620 = vmatprep.subr.mxu0 0.0
  %v2621 = vand.u32 %v2038, 4294901760
  %2622 = vmatpush1.msra.mxu0 %v2621
  %2623 = vmatprep.subr.mxu0 0.0
  %v2624 = vand.u32 %v2037, 4294901760
  %2625 = vmatpush1.msra.mxu0 %v2624
  %2626 = vmatprep.subr.mxu0 0.0
  %v2627 = vand.u32 %v2036, 4294901760
  %2628 = vmatpush1.msra.mxu0 %v2627
  %2629 = vmatprep.subr.mxu0 0.0
  %v2630 = vand.u32 %v2035, 4294901760
  %2631 = vmatpush1.msra.mxu0 %v2630
  %2632 = vmatprep.subr.mxu0 0.0
  %v2633 = vand.u32 %v2034, 4294901760
  %2634 = vmatpush1.msra.mxu0 %v2633
  %2635 = vmatprep.subr.mxu0 0.0
  %v2636 = vand.u32 %v2033, 4294901760
  %2637 = vmatpush1.msra.mxu0 %v2636
  %2638 = vmatprep.subr.mxu0 0.0
  %v2639 = vand.u32 %v2032, 4294901760
  %2640 = vmatpush1.msra.mxu0 %v2639
  %2641 = vmatprep.subr.mxu0 0.0
  %v2642 = vand.u32 %v2031, 4294901760
  %2643 = vmatpush1.msra.mxu0 %v2642
  %2644 = vmatprep.subr.mxu0 0.0
  %v2645 = vand.u32 %v2030, 4294901760
  %2646 = vmatpush1.msra.mxu0 %v2645
  %2647 = vmatprep.subr.mxu0 0.0
  %v2648 = vand.u32 %v2029, 4294901760
  %2649 = vmatpush1.msra.mxu0 %v2648
  %2650 = vmatprep.subr.mxu0 0.0
  %v2651 = vand.u32 %v2028, 4294901760
  %2652 = vmatpush1.msra.mxu0 %v2651
  %2653 = vmatprep.subr.mxu0 0.0
  %2654 = vmatpush2.msra.mxu0 0.0
  %2655 = vmatprep.subr.mxu0 0.0
  %2656 = vmatpush2.msra.mxu0 0.0
  %2657 = vmatprep.subr.mxu0 0.0
  %2658 = vmatpush2.msra.mxu0 0.0
  %2659 = vmatprep.subr.mxu0 0.0
  %2660 = vmatpush2.msra.mxu0 0.0
  %2661 = vmatprep.subr.mxu0 0.0
  %2662 = vmatpush2.msra.mxu0 0.0
  %2663 = vmatprep.subr.mxu0 0.0
  %2664 = vmatpush2.msra.mxu0 0.0
  %2665 = vmatprep.subr.mxu0 0.0
  %2666 = vmatpush2.msra.mxu0 0.0
  %2667 = vmatprep.subr.mxu0 0.0
  %2668 = vmatpush2.msra.mxu0 0.0
  %2669 = vmatprep.subr.mxu0 0.0
  %2670 = vmatpush2.msra.mxu0 0.0
  %2671 = vmatprep.subr.mxu0 0.0
  %2672 = vmatpush2.msra.mxu0 0.0
  %2673 = vmatprep.subr.mxu0 0.0
  %2674 = vmatpush2.msra.mxu0 0.0
  %2675 = vmatprep.subr.mxu0 0.0
  %2676 = vmatpush2.msra.mxu0 0.0
  %2677 = vmatprep.subr.mxu0 0.0
  %2678 = vmatpush2.msra.mxu0 0.0
  %2679 = vmatprep.subr.mxu0 0.0
  %2680 = vmatpush2.msra.mxu0 0.0
  %2681 = vmatprep.subr.mxu0 0.0
  %2682 = vmatpush2.msra.mxu0 0.0
  %2683 = vmatprep.subr.mxu0 0.0
  %2684 = vmatpush2.msra.mxu0 0.0
  %2685 = vmatprep.mubr.f32.mxu0 0.0
  %v2686 = vand.u32 %v2027, 4294901760
  %2687 = vmatmul.mubr.f32.gmra.mxu0 %v2686
  %v2688 = vpop.f32.mrf.mxu0
  %v2689 = vadd.f32 %v2602, %v2688
  %v2690 = vpop.f32.mrf.mxu0
  %2691 = vdwg.mxu0
  %2692 = vst [vmem:[%s9] sm:$0xff] %v2689
  // Predicated region
  $region38: #{mlp_forward.1} parent=0 // pred_check
    _
  $region39: #{mlp_forward.1} parent=0 // pred_check_branch
    %2694 = sbr.rel (0) target = $region41
  $region40: #{mlp_forward.1} parent=0 // pred_region
    _
  $region41: #{mlp_forward.1} parent=0 // pred_fallthru
    _
  // Predicated region
  $region42: #{mlp_forward.1} parent=0 // pred_check
    _
  $region43: #{mlp_forward.1} parent=0 // pred_check_branch
    %2696 = sbr.rel (0) target = $region45
  $region44: #{mlp_forward.1} parent=0 // pred_region
    _
  $region45: #{mlp_forward.1} parent=0 // pred_fallthru
    _

// kernel: mlp_forward.1
$region0: #{mlp_forward.1}
  #allocation0 [shape = 'u32[]', space=smem, size = 0x4, offset = 0x4, fixed_abs, tag = 'smem constant byte address 0x4 - core index']
  #allocation1 [shape = 'u32[144,128]{1,0:T(1,128)}', space=vmem, size = 0x12000, scoped, tag = 'internal scratch']
  %s0 = inlined_call_operand.vmem [shape: f32[8,128], index: 0, kind: input, shape index: {}]
  %s1 = inlined_call_operand.vmem [shape: f32[128,128], index: 1, kind: input, shape index: {}]
  %s2 = inlined_call_operand.vmem [shape: f32[1,128], index: 2, kind: input, shape index: {}]
  %s3 = inlined_call_operand.vmem [shape: f32[128,128], index: 3, kind: input, shape index: {}]
  %s4 = inlined_call_operand.vmem [shape: f32[1,128], index: 4, kind: input, shape index: {}]
  %s5 = inlined_call_operand.vmem [shape: f32[128,128], index: 5, kind: input, shape index: {}]
  %s6 = inlined_call_operand.vmem [shape: f32[1,128], index: 6, kind: input, shape index: {}]
  %s7 = inlined_call_operand.vmem [shape: f32[128,128], index: 7, kind: input, shape index: {}]
  %s8 = inlined_call_operand.vmem [shape: f32[1,128], index: 8, kind: input, shape index: {}]
  %s9 = inlined_call_operand.vmem [shape: f32[8,128], index: 9, kind: output, shape index: {}]
  %s10 = sld [smem:[#allocation0]]
  $region46: #{mlp_forward.1} parent=0
    _
  %s12 = ssub.s32 1, %s10
  %s13 = scalar_select 0, %s12, %s10
  // Predicated region
  $region2: #{mlp_forward.1} parent=0 // pred_check
    _
  $region3: #{mlp_forward.1} parent=0 // pred_check_branch
    %15 = sbr.rel (0) target = $region5
  $region4: #{mlp_forward.1} parent=0 // pred_region
    _
  $region5: #{mlp_forward.1} parent=0 // pred_fallthru
    _
  // Predicated region
  $region6: #{mlp_forward.1} parent=0 // pred_check
    _
  $region7: #{mlp_forward.1} parent=0 // pred_check_branch
    %17 = sbr.rel (0) target = $region9
  $region8: #{mlp_forward.1} parent=0 // pred_region
    _
  $region9: #{mlp_forward.1} parent=0 // pred_fallthru
    _
  // Predicated region
  $region10: #{mlp_forward.1} parent=0 // pred_check
    _
  $region11: #{mlp_forward.1} parent=0 // pred_check_branch
    %19 = sbr.rel (0) target = $region13
  $region12: #{mlp_forward.1} parent=0 // pred_region
    _
  $region13: #{mlp_forward.1} parent=0 // pred_fallthru
    _
  // Predicated region
  $region14: #{mlp_forward.1} parent=0 // pred_check
    _
  $region15: #{mlp_forward.1} parent=0 // pred_check_branch
    %21 = sbr.rel (0) target = $region17
  $region16: #{mlp_forward.1} parent=0 // pred_region
    _
  $region17: #{mlp_forward.1} parent=0 // pred_fallthru
    _
  // Predicated region
  $region18: #{mlp_forward.1} parent=0 // pred_check
    _
  $region19: #{mlp_forward.1} parent=0 // pred_check_branch
    %23 = sbr.rel (0) target = $region21
  $region20: #{mlp_forward.1} parent=0 // pred_region
    _
  $region21: #{mlp_forward.1} parent=0 // pred_fallthru
    _
  // Predicated region
  $region22: #{mlp_forward.1} parent=0 // pred_check
    _
  $region23: #{mlp_forward.1} parent=0 // pred_check_branch
    %25 = sbr.rel (0) target = $region25
  $region24: #{mlp_forward.1} parent=0 // pred_region
    _
  $region25: #{mlp_forward.1} parent=0 // pred_fallthru
    _
  // Predicated region
  $region26: #{mlp_forward.1} parent=0 // pred_check
    _
  $region27: #{mlp_forward.1} parent=0 // pred_check_branch
    %27 = sbr.rel (0) target = $region29
  $region28: #{mlp_forward.1} parent=0 // pred_region
    _
  $region29: #{mlp_forward.1} parent=0 // pred_fallthru
    _
  // Predicated region
  $region30: #{mlp_forward.1} parent=0 // pred_check
    _
  $region31: #{mlp_forward.1} parent=0 // pred_check_branch
    %29 = sbr.rel (0) target = $region33
  $region32: #{mlp_forward.1} parent=0 // pred_region
    _
  $region33: #{mlp_forward.1} parent=0 // pred_fallthru
    _
  // Predicated region
  $region34: #{mlp_forward.1} parent=0 // pred_check
    _
  $region35: #{mlp_forward.1} parent=0 // pred_check_branch
    %31 = sbr.rel (0) target = $region37
  $region36: #{mlp_forward.1} parent=0 // pred_region
    _
  $region37: #{mlp_forward.1} parent=0 // pred_fallthru
    _
  %v32 = vld [vmem:[%s0] sm:$0xff]
  %v33 = vld [vmem:[%s1] sm:$0xff]
  %v34 = vld [vmem:[%s1 + $0x8] sm:$0xff]
  %v35 = vld [vmem:[%s1 + $0x10] sm:$0xff]
  %v36 = vld [vmem:[%s1 + $0x18] sm:$0xff]
  %v37 = vld [vmem:[%s1 + $0x20] sm:$0xff]
  %v38 = vld [vmem:[%s1 + $0x28] sm:$0xff]
  %v39 = vld [vmem:[%s1 + $0x30] sm:$0xff]
  %v40 = vld [vmem:[%s1 + $0x38] sm:$0xff]
  %v41 = vld [vmem:[%s1 + $0x40] sm:$0xff]
  %v42 = vld [vmem:[%s1 + $0x48] sm:$0xff]
  %v43 = vld [vmem:[%s1 + $0x50] sm:$0xff]
  %v44 = vld [vmem:[%s1 + $0x58] sm:$0xff]
  %v45 = vld [vmem:[%s1 + $0x60] sm:$0xff]
  %v46 = vld [vmem:[%s1 + $0x68] sm:$0xff]
  %v47 = vld [vmem:[%s1 + $0x70] sm:$0xff]
  %v48 = vld [vmem:[%s1 + $0x78] sm:$0xff]
  %v49 = vld [vmem:[%s2] sm:$0x1]
  %v51 = vlaneseq
  %v52 = vshrl.u32 %v51, 7
  %v53 = vsub.s32 0, %v52
  %v54 = vrot.slane %v49, %v53
  %56 = vmatprep.subr.mxu0 0.0
  %v57 = vand.u32 %v48, 4294901760
  %58 = vmatpush1.msra.mxu0 %v57
  %59 = vmatprep.subr.mxu0 0.0
  %v60 = vand.u32 %v47, 4294901760
  %61 = vmatpush1.msra.mxu0 %v60
  %62 = vmatprep.subr.mxu0 0.0
  %v63 = vand.u32 %v46, 4294901760
  %64 = vmatpush1.msra.mxu0 %v63
  %65 = vmatprep.subr.mxu0 0.0
  %v66 = vand.u32 %v45, 4294901760
  %67 = vmatpush1.msra.mxu0 %v66
  %68 = vmatprep.subr.mxu0 0.0
  %v69 = vand.u32 %v44, 4294901760
  %70 = vmatpush1.msra.mxu0 %v69
  %71 = vmatprep.subr.mxu0 0.0
  %v72 = vand.u32 %v43, 4294901760
  %73 = vmatpush1.msra.mxu0 %v72
  %74 = vmatprep.subr.mxu0 0.0
  %v75 = vand.u32 %v42, 4294901760
  %76 = vmatpush1.msra.mxu0 %v75
  %77 = vmatprep.subr.mxu0 0.0
  %v78 = vand.u32 %v41, 4294901760
  %79 = vmatpush1.msra.mxu0 %v78
  %80 = vmatprep.subr.mxu0 0.0
  %v81 = vand.u32 %v40, 4294901760
  %82 = vmatpush1.msra.mxu0 %v81
  %83 = vmatprep.subr.mxu0 0.0
  %v84 = vand.u32 %v39, 4294901760
  %85 = vmatpush1.msra.mxu0 %v84
  %86 = vmatprep.subr.mxu0 0.0
  %v87 = vand.u32 %v38, 4294901760
  %88 = vmatpush1.msra.mxu0 %v87
  %89 = vmatprep.subr.mxu0 0.0
  %v90 = vand.u32 %v37, 4294901760
  %91 = vmatpush1.msra.mxu0 %v90
  %92 = vmatprep.subr.mxu0 0.0
  %v93 = vand.u32 %v36, 4294901760
  %94 = vmatpush1.msra.mxu0 %v93
  %95 = vmatprep.subr.mxu0 0.0
  %v96 = vand.u32 %v35, 4294901760
  %97 = vmatpush1.msra.mxu0 %v96
  %98 = vmatprep.subr.mxu0 0.0
  %v99 = vand.u32 %v34, 4294901760
  %100 = vmatpush1.msra.mxu0 %v99
  %101 = vmatprep.subr.mxu0 0.0
  %v102 = vand.u32 %v33, 4294901760
  %103 = vmatpush1.msra.mxu0 %v102
  %104 = vmatprep.subr.mxu0 0.0
  %105 = vmatpush2.msra.mxu0 0.0
  %106 = vmatprep.subr.mxu0 0.0
  %107 = vmatpush2.msra.mxu0 0.0
  %108 = vmatprep.subr.mxu0 0.0
  %109 = vmatpush2.msra.mxu0 0.0
  %110 = vmatprep.subr.mxu0 0.0
  %111 = vmatpush2.msra.mxu0 0.0
  %112 = vmatprep.subr.mxu0 0.0
  %113 = vmatpush2.msra.mxu0 0.0
  %114 = vmatprep.subr.mxu0 0.0
  %115 = vmatpush2.msra.mxu0 0.0
  %116 = vmatprep.subr.mxu0 0.0
  %117 = vmatpush2.msra.mxu0 0.0
  %118 = vmatprep.subr.mxu0 0.0
  %119 = vmatpush2.msra.mxu0 0.0
  %120 = vmatprep.subr.mxu0 0.0
  %121 = vmatpush2.msra.mxu0 0.0
  %122 = vmatprep.subr.mxu0 0.0
  %123 = vmatpush2.msra.mxu0 0.0
  %124 = vmatprep.subr.mxu0 0.0
  %125 = vmatpush2.msra.mxu0 0.0
  %126 = vmatprep.subr.mxu0 0.0
  %127 = vmatpush2.msra.mxu0 0.0
  %128 = vmatprep.subr.mxu0 0.0
  %129 = vmatpush2.msra.mxu0 0.0
  %130 = vmatprep.subr.mxu0 0.0
  %131 = vmatpush2.msra.mxu0 0.0
  %132 = vmatprep.subr.mxu0 0.0
  %133 = vmatpush2.msra.mxu0 0.0
  %134 = vmatprep.subr.mxu0 0.0
  %135 = vmatpush2.msra.mxu0 0.0
  %136 = vmatprep.mubr.f32.mxu0 0.0
  %v137 = vand.u32 %v32, 4294901760
  %v138 = vsub.f32 %v32, %v137
  %v139 = vand.u32 %v138, 4294901760
  %v140 = vsub.f32 %v138, %v139
  %v141 = vand.u32 %v140, 4294901760
  %142 = vmatmul.mubr.f32.gmra.mxu0 %v141
  %v143 = vpop.f32.mrf.mxu0
  %v144 = vadd.f32 %v54, %v143
  %v145 = vpop.f32.mrf.mxu0
  %146 = vdwg.mxu0
  %147 = vmatprep.subr.mxu0 0.0
  %v148 = vand.u32 %v48, 4294901760
  %v149 = vsub.f32 %v48, %v148
  %v150 = vand.u32 %v149, 4294901760
  %v151 = vsub.f32 %v149, %v150
  %v152 = vand.u32 %v151, 4294901760
  %153 = vmatpush1.msra.mxu0 %v152
  %154 = vmatprep.subr.mxu0 0.0
  %v155 = vand.u32 %v47, 4294901760
  %v156 = vsub.f32 %v47, %v155
  %v157 = vand.u32 %v156, 4294901760
  %v158 = vsub.f32 %v156, %v157
  %v159 = vand.u32 %v158, 4294901760
  %160 = vmatpush1.msra.mxu0 %v159
  %161 = vmatprep.subr.mxu0 0.0
  %v162 = vand.u32 %v46, 4294901760
  %v163 = vsub.f32 %v46, %v162
  %v164 = vand.u32 %v163, 4294901760
  %v165 = vsub.f32 %v163, %v164
  %v166 = vand.u32 %v165, 4294901760
  %167 = vmatpush1.msra.mxu0 %v166
  %168 = vmatprep.subr.mxu0 0.0
  %v169 = vand.u32 %v45, 4294901760
  %v170 = vsub.f32 %v45, %v169
  %v171 = vand.u32 %v170, 4294901760
  %v172 = vsub.f32 %v170, %v171
  %v173 = vand.u32 %v172, 4294901760
  %174 = vmatpush1.msra.mxu0 %v173
  %175 = vmatprep.subr.mxu0 0.0
  %v176 = vand.u32 %v44, 4294901760
  %v177 = vsub.f32 %v44, %v176
  %v178 = vand.u32 %v177, 4294901760
  %v179 = vsub.f32 %v177, %v178
  %v180 = vand.u32 %v179, 4294901760
  %181 = vmatpush1.msra.mxu0 %v180
  %182 = vmatprep.subr.mxu0 0.0
  %v183 = vand.u32 %v43, 4294901760
  %v184 = vsub.f32 %v43, %v183
  %v185 = vand.u32 %v184, 4294901760
  %v186 = vsub.f32 %v184, %v185
  %v187 = vand.u32 %v186, 4294901760
  %188 = vmatpush1.msra.mxu0 %v187
  %189 = vmatprep.subr.mxu0 0.0
  %v190 = vand.u32 %v42, 4294901760
  %v191 = vsub.f32 %v42, %v190
  %v192 = vand.u32 %v191, 4294901760
  %v193 = vsub.f32 %v191, %v192
  %v194 = vand.u32 %v193, 4294901760
  %195 = vmatpush1.msra.mxu0 %v194
  %196 = vmatprep.subr.mxu0 0.0
  %v197 = vand.u32 %v41, 4294901760
  %v198 = vsub.f32 %v41, %v197
  %v199 = vand.u32 %v198, 4294901760
  %v200 = vsub.f32 %v198, %v199
  %v201 = vand.u32 %v200, 4294901760
  %202 = vmatpush1.msra.mxu0 %v201
  %203 = vmatprep.subr.mxu0 0.0
  %v204 = vand.u32 %v40, 4294901760
  %v205 = vsub.f32 %v40, %v204
  %v206 = vand.u32 %v205, 4294901760
  %v207 = vsub.f32 %v205, %v206
  %v208 = vand.u32 %v207, 4294901760
  %209 = vmatpush1.msra.mxu0 %v208
  %210 = vmatprep.subr.mxu0 0.0
  %v211 = vand.u32 %v39, 4294901760
  %v212 = vsub.f32 %v39, %v211
  %v213 = vand.u32 %v212, 4294901760
  %v214 = vsub.f32 %v212, %v213
  %v215 = vand.u32 %v214, 4294901760
  %216 = vmatpush1.msra.mxu0 %v215
  %217 = vmatprep.subr.mxu0 0.0
  %v218 = vand.u32 %v38, 4294901760
  %v219 = vsub.f32 %v38, %v218
  %v220 = vand.u32 %v219, 4294901760
  %v221 = vsub.f32 %v219, %v220
  %v222 = vand.u32 %v221, 4294901760
  %223 = vmatpush1.msra.mxu0 %v222
  %224 = vmatprep.subr.mxu0 0.0
  %v225 = vand.u32 %v37, 4294901760
  %v226 = vsub.f32 %v37, %v225
  %v227 = vand.u32 %v226, 4294901760
  %v228 = vsub.f32 %v226, %v227
  %v229 = vand.u32 %v228, 4294901760
  %230 = vmatpush1.msra.mxu0 %v229
  %231 = vmatprep.subr.mxu0 0.0
  %v232 = vand.u32 %v36, 4294901760
  %v233 = vsub.f32 %v36, %v232
  %v234 = vand.u32 %v233, 4294901760
  %v235 = vsub.f32 %v233, %v234
  %v236 = vand.u32 %v235, 4294901760
  %237 = vmatpush1.msra.mxu0 %v236
  %238 = vmatprep.subr.mxu0 0.0
  %v239 = vand.u32 %v35, 4294901760
  %v240 = vsub.f32 %v35, %v239
  %v241 = vand.u32 %v240, 4294901760
  %v242 = vsub.f32 %v240, %v241
  %v243 = vand.u32 %v242, 4294901760
  %244 = vmatpush1.msra.mxu0 %v243
  %245 = vmatprep.subr.mxu0 0.0
  %v246 = vand.u32 %v34, 4294901760
  %v247 = vsub.f32 %v34, %v246
  %v248 = vand.u32 %v247, 4294901760
  %v249 = vsub.f32 %v247, %v248
  %v250 = vand.u32 %v249, 4294901760
  %251 = vmatpush1.msra.mxu0 %v250
  %252 = vmatprep.subr.mxu0 0.0
  %v253 = vand.u32 %v33, 4294901760
  %v254 = vsub.f32 %v33, %v253
  %v255 = vand.u32 %v254, 4294901760
  %v256 = vsub.f32 %v254, %v255
  %v257 = vand.u32 %v256, 4294901760
  %258 = vmatpush1.msra.mxu0 %v257
  %259 = vmatprep.subr.mxu0 0.0
  %260 = vmatpush2.msra.mxu0 0.0
  %261 = vmatprep.subr.mxu0 0.0
  %262 = vmatpush2.msra.mxu0 0.0
  %263 = vmatprep.subr.mxu0 0.0
  %264 = vmatpush2.msra.mxu0 0.0
  %265 = vmatprep.subr.mxu0 0.0
  %266 = vmatpush2.msra.mxu0 0.0
  %267 = vmatprep.subr.mxu0 0.0
  %268 = vmatpush2.msra.mxu0 0.0
  %269 = vmatprep.subr.mxu0 0.0
  %270 = vmatpush2.msra.mxu0 0.0
  %271 = vmatprep.subr.mxu0 0.0
  %272 = vmatpush2.msra.mxu0 0.0
  %273 = vmatprep.subr.mxu0 0.0
  %274 = vmatpush2.msra.mxu0 0.0
  %275 = vmatprep.subr.mxu0 0.0
  %276 = vmatpush2.msra.mxu0 0.0
  %277 = vmatprep.subr.mxu0 0.0
  %278 = vmatpush2.msra.mxu0 0.0
  %279 = vmatprep.subr.mxu0 0.0
  %280 = vmatpush2.msra.mxu0 0.0
  %281 = vmatprep.subr.mxu0 0.0
  %282 = vmatpush2.msra.mxu0 0.0
  %283 = vmatprep.subr.mxu0 0.0
  %284 = vmatpush2.msra.mxu0 0.0
  %285 = vmatprep.subr.mxu0 0.0
  %286 = vmatpush2.msra.mxu0 0.0
  %287 = vmatprep.subr.mxu0 0.0
  %288 = vmatpush2.msra.mxu0 0.0
  %289 = vmatprep.subr.mxu0 0.0
  %290 = vmatpush2.msra.mxu0 0.0
  %291 = vmatprep.mubr.f32.mxu0 0.0
  %v292 = vand.u32 %v32, 4294901760
  %293 = vmatmul.mubr.f32.gmra.mxu0 %v292
  %v294 = vpop.f32.mrf.mxu0
  %v295 = vadd.f32 %v144, %v294
  %v296 = vpop.f32.mrf.mxu0
  %297 = vdwg.mxu0
  %298 = vmatprep.subr.mxu0 0.0
  %v299 = vand.u32 %v48, 4294901760
  %v300 = vsub.f32 %v48, %v299
  %301 = vmatpush1.msra.mxu0 %v300
  %302 = vmatprep.subr.mxu0 0.0
  %v303 = vand.u32 %v47, 4294901760
  %v304 = vsub.f32 %v47, %v303
  %305 = vmatpush1.msra.mxu0 %v304
  %306 = vmatprep.subr.mxu0 0.0
  %v307 = vand.u32 %v46, 4294901760
  %v308 = vsub.f32 %v46, %v307
  %309 = vmatpush1.msra.mxu0 %v308
  %310 = vmatprep.subr.mxu0 0.0
  %v311 = vand.u32 %v45, 4294901760
  %v312 = vsub.f32 %v45, %v311
  %313 = vmatpush1.msra.mxu0 %v312
  %314 = vmatprep.subr.mxu0 0.0
  %v315 = vand.u32 %v44, 4294901760
  %v316 = vsub.f32 %v44, %v315
  %317 = vmatpush1.msra.mxu0 %v316
  %318 = vmatprep.subr.mxu0 0.0
  %v319 = vand.u32 %v43, 4294901760
  %v320 = vsub.f32 %v43, %v319
  %321 = vmatpush1.msra.mxu0 %v320
  %322 = vmatprep.subr.mxu0 0.0
  %v323 = vand.u32 %v42, 4294901760
  %v324 = vsub.f32 %v42, %v323
  %325 = vmatpush1.msra.mxu0 %v324
  %326 = vmatprep.subr.mxu0 0.0
  %v327 = vand.u32 %v41, 4294901760
  %v328 = vsub.f32 %v41, %v327
  %329 = vmatpush1.msra.mxu0 %v328
  %330 = vmatprep.subr.mxu0 0.0
  %v331 = vand.u32 %v40, 4294901760
  %v332 = vsub.f32 %v40, %v331
  %333 = vmatpush1.msra.mxu0 %v332
  %334 = vmatprep.subr.mxu0 0.0
  %v335 = vand.u32 %v39, 4294901760
  %v336 = vsub.f32 %v39, %v335
  %337 = vmatpush1.msra.mxu0 %v336
  %338 = vmatprep.subr.mxu0 0.0
  %v339 = vand.u32 %v38, 4294901760
  %v340 = vsub.f32 %v38, %v339
  %341 = vmatpush1.msra.mxu0 %v340
  %342 = vmatprep.subr.mxu0 0.0
  %v343 = vand.u32 %v37, 4294901760
  %v344 = vsub.f32 %v37, %v343
  %345 = vmatpush1.msra.mxu0 %v344
  %346 = vmatprep.subr.mxu0 0.0
  %v347 = vand.u32 %v36, 4294901760
  %v348 = vsub.f32 %v36, %v347
  %349 = vmatpush1.msra.mxu0 %v348
  %350 = vmatprep.subr.mxu0 0.0
  %v351 = vand.u32 %v35, 4294901760
  %v352 = vsub.f32 %v35, %v351
  %353 = vmatpush1.msra.mxu0 %v352
  %354 = vmatprep.subr.mxu0 0.0
  %v355 = vand.u32 %v34, 4294901760
  %v356 = vsub.f32 %v34, %v355
  %357 = vmatpush1.msra.mxu0 %v356
  %358 = vmatprep.subr.mxu0 0.0
  %v359 = vand.u32 %v33, 4294901760
  %v360 = vsub.f32 %v33, %v359
  %361 = vmatpush1.msra.mxu0 %v360
  %362 = vmatprep.subr.mxu0 0.0
  %363 = vmatpush2.msra.mxu0 0.0
  %364 = vmatprep.subr.mxu0 0.0
  %365 = vmatpush2.msra.mxu0 0.0
  %366 = vmatprep.subr.mxu0 0.0
  %367 = vmatpush2.msra.mxu0 0.0
  %368 = vmatprep.subr.mxu0 0.0
  %369 = vmatpush2.msra.mxu0 0.0
  %370 = vmatprep.subr.mxu0 0.0
  %371 = vmatpush2.msra.mxu0 0.0
  %372 = vmatprep.subr.mxu0 0.0
  %373 = vmatpush2.msra.mxu0 0.0
  %374 = vmatprep.subr.mxu0 0.0
  %375 = vmatpush2.msra.mxu0 0.0
  %376 = vmatprep.subr.mxu0 0.0
  %377 = vmatpush2.msra.mxu0 0.0
  %378 = vmatprep.subr.mxu0 0.0
  %379 = vmatpush2.msra.mxu0 0.0
  %380 = vmatprep.subr.mxu0 0.0
  %381 = vmatpush2.msra.mxu0 0.0
  %382 = vmatprep.subr.mxu0 0.0
  %383 = vmatpush2.msra.mxu0 0.0
  %384 = vmatprep.subr.mxu0 0.0
  %385 = vmatpush2.msra.mxu0 0.0
  %386 = vmatprep.subr.mxu0 0.0
  %387 = vmatpush2.msra.mxu0 0.0
  %388 = vmatprep.subr.mxu0 0.0
  %389 = vmatpush2.msra.mxu0 0.0
  %390 = vmatprep.subr.mxu0 0.0
  %391 = vmatpush2.msra.mxu0 0.0
  %392 = vmatprep.subr.mxu0 0.0
  %393 = vmatpush2.msra.mxu0 0.0
  %394 = vmatprep.mubr.f32.mxu0 0.0
  %v395 = vand.u32 %v32, 4294901760
  %v396 = vsub.f32 %v32, %v395
  %397 = vmatmul.mubr.f32.gmra.mxu0 %v396
  %v398 = vpop.f32.mrf.mxu0
  %v399 = vadd.f32 %v295, %v398
  %v400 = vpop.f32.mrf.mxu0
  %401 = vdwg.mxu0
  %402 = vmatprep.subr.mxu0 0.0
  %v403 = vand.u32 %v48, 4294901760
  %404 = vmatpush1.msra.mxu0 %v403
  %405 = vmatprep.subr.mxu0 0.0
  %v406 = vand.u32 %v47, 4294901760
  %407 = vmatpush1.msra.mxu0 %v406
  %408 = vmatprep.subr.mxu0 0.0
  %v409 = vand.u32 %v46, 4294901760
  %410 = vmatpush1.msra.mxu0 %v409
  %411 = vmatprep.subr.mxu0 0.0
  %v412 = vand.u32 %v45, 4294901760
  %413 = vmatpush1.msra.mxu0 %v412
  %414 = vmatprep.subr.mxu0 0.0
  %v415 = vand.u32 %v44, 4294901760
  %416 = vmatpush1.msra.mxu0 %v415
  %417 = vmatprep.subr.mxu0 0.0
  %v418 = vand.u32 %v43, 4294901760
  %419 = vmatpush1.msra.mxu0 %v418
  %420 = vmatprep.subr.mxu0 0.0
  %v421 = vand.u32 %v42, 4294901760
  %422 = vmatpush1.msra.mxu0 %v421
  %423 = vmatprep.subr.mxu0 0.0
  %v424 = vand.u32 %v41, 4294901760
  %425 = vmatpush1.msra.mxu0 %v424
  %426 = vmatprep.subr.mxu0 0.0
  %v427 = vand.u32 %v40, 4294901760
  %428 = vmatpush1.msra.mxu0 %v427
  %429 = vmatprep.subr.mxu0 0.0
  %v430 = vand.u32 %v39, 4294901760
  %431 = vmatpush1.msra.mxu0 %v430
  %432 = vmatprep.subr.mxu0 0.0
  %v433 = vand.u32 %v38, 4294901760
  %434 = vmatpush1.msra.mxu0 %v433
  %435 = vmatprep.subr.mxu0 0.0
  %v436 = vand.u32 %v37, 4294901760
  %437 = vmatpush1.msra.mxu0 %v436
  %438 = vmatprep.subr.mxu0 0.0
  %v439 = vand.u32 %v36, 4294901760
  %440 = vmatpush1.msra.mxu0 %v439
  %441 = vmatprep.subr.mxu0 0.0
  %v442 = vand.u32 %v35, 4294901760
  %443 = vmatpush1.msra.mxu0 %v442
  %444 = vmatprep.subr.mxu0 0.0
  %v445 = vand.u32 %v34, 4294901760
  %446 = vmatpush1.msra.mxu0 %v445
  %447 = vmatprep.subr.mxu0 0.0
  %v448 = vand.u32 %v33, 4294901760
  %449 = vmatpush1.msra.mxu0 %v448
  %450 = vmatprep.subr.mxu0 0.0
  %451 = vmatpush2.msra.mxu0 0.0
  %452 = vmatprep.subr.mxu0 0.0
  %453 = vmatpush2.msra.mxu0 0.0
  %454 = vmatprep.subr.mxu0 0.0
  %455 = vmatpush2.msra.mxu0 0.0
  %456 = vmatprep.subr.mxu0 0.0
  %457 = vmatpush2.msra.mxu0 0.0
  %458 = vmatprep.subr.mxu0 0.0
  %459 = vmatpush2.msra.mxu0 0.0
  %460 = vmatprep.subr.mxu0 0.0
  %461 = vmatpush2.msra.mxu0 0.0
  %462 = vmatprep.subr.mxu0 0.0
  %463 = vmatpush2.msra.mxu0 0.0
  %464 = vmatprep.subr.mxu0 0.0
  %465 = vmatpush2.msra.mxu0 0.0
  %466 = vmatprep.subr.mxu0 0.0
  %467 = vmatpush2.msra.mxu0 0.0
  %468 = vmatprep.subr.mxu0 0.0
  %469 = vmatpush2.msra.mxu0 0.0
  %470 = vmatprep.subr.mxu0 0.0
  %471 = vmatpush2.msra.mxu0 0.0
  %472 = vmatprep.subr.mxu0 0.0
  %473 = vmatpush2.msra.mxu0 0.0
  %474 = vmatprep.subr.mxu0 0.0
  %475 = vmatpush2.msra.mxu0 0.0
  %476 = vmatprep.subr.mxu0 0.0
  %477 = vmatpush2.msra.mxu0 0.0
  %478 = vmatprep.subr.mxu0 0.0
  %479 = vmatpush2.msra.mxu0 0.0
  %480 = vmatprep.subr.mxu0 0.0
  %481 = vmatpush2.msra.mxu0 0.0
  %482 = vmatprep.mubr.f32.mxu0 0.0
  %v483 = vand.u32 %v32, 4294901760
  %v484 = vsub.f32 %v32, %v483
  %v485 = vand.u32 %v484, 4294901760
  %486 = vmatmul.mubr.f32.gmra.mxu0 %v485
  %v487 = vpop.f32.mrf.mxu0
  %v488 = vadd.f32 %v399, %v487
  %v489 = vpop.f32.mrf.mxu0
  %490 = vdwg.mxu0
  %491 = vmatprep.subr.mxu0 0.0
  %v492 = vand.u32 %v48, 4294901760
  %v493 = vsub.f32 %v48, %v492
  %v494 = vand.u32 %v493, 4294901760
  %495 = vmatpush1.msra.mxu0 %v494
  %496 = vmatprep.subr.mxu0 0.0
  %v497 = vand.u32 %v47, 4294901760
  %v498 = vsub.f32 %v47, %v497
  %v499 = vand.u32 %v498, 4294901760
  %500 = vmatpush1.msra.mxu0 %v499
  %501 = vmatprep.subr.mxu0 0.0
  %v502 = vand.u32 %v46, 4294901760
  %v503 = vsub.f32 %v46, %v502
  %v504 = vand.u32 %v503, 4294901760
  %505 = vmatpush1.msra.mxu0 %v504
  %506 = vmatprep.subr.mxu0 0.0
  %v507 = vand.u32 %v45, 4294901760
  %v508 = vsub.f32 %v45, %v507
  %v509 = vand.u32 %v508, 4294901760
  %510 = vmatpush1.msra.mxu0 %v509
  %511 = vmatprep.subr.mxu0 0.0
  %v512 = vand.u32 %v44, 4294901760
  %v513 = vsub.f32 %v44, %v512
  %v514 = vand.u32 %v513, 4294901760
  %515 = vmatpush1.msra.mxu0 %v514
  %516 = vmatprep.subr.mxu0 0.0
  %v517 = vand.u32 %v43, 4294901760
  %v518 = vsub.f32 %v43, %v517
  %v519 = vand.u32 %v518, 4294901760
  %520 = vmatpush1.msra.mxu0 %v519
  %521 = vmatprep.subr.mxu0 0.0
  %v522 = vand.u32 %v42, 4294901760
  %v523 = vsub.f32 %v42, %v522
  %v524 = vand.u32 %v523, 4294901760
  %525 = vmatpush1.msra.mxu0 %v524
  %526 = vmatprep.subr.mxu0 0.0
  %v527 = vand.u32 %v41, 4294901760
  %v528 = vsub.f32 %v41, %v527
  %v529 = vand.u32 %v528, 4294901760
  %530 = vmatpush1.msra.mxu0 %v529
  %531 = vmatprep.subr.mxu0 0.0
  %v532 = vand.u32 %v40, 4294901760
  %v533 = vsub.f32 %v40, %v532
  %v534 = vand.u32 %v533, 4294901760
  %535 = vmatpush1.msra.mxu0 %v534
  %536 = vmatprep.subr.mxu0 0.0
  %v537 = vand.u32 %v39, 4294901760
  %v538 = vsub.f32 %v39, %v537
  %v539 = vand.u32 %v538, 4294901760
  %540 = vmatpush1.msra.mxu0 %v539
  %541 = vmatprep.subr.mxu0 0.0
  %v542 = vand.u32 %v38, 4294901760
  %v543 = vsub.f32 %v38, %v542
  %v544 = vand.u32 %v543, 4294901760
  %545 = vmatpush1.msra.mxu0 %v544
  %546 = vmatprep.subr.mxu0 0.0
  %v547 = vand.u32 %v37, 4294901760
  %v548 = vsub.f32 %v37, %v547
  %v549 = vand.u32 %v548, 4294901760
  %550 = vmatpush1.msra.mxu0 %v549
  %551 = vmatprep.subr.mxu0 0.0
  %v552 = vand.u32 %v36, 4294901760
  %v553 = vsub.f32 %v36, %v552
  %v554 = vand.u32 %v553, 4294901760
  %555 = vmatpush1.msra.mxu0 %v554
  %556 = vmatprep.subr.mxu0 0.0
  %v557 = vand.u32 %v35, 4294901760
  %v558 = vsub.f32 %v35, %v557
  %v559 = vand.u32 %v558, 4294901760
  %560 = vmatpush1.msra.mxu0 %v559
  %561 = vmatprep.subr.mxu0 0.0
  %v562 = vand.u32 %v34, 4294901760
  %v563 = vsub.f32 %v34, %v562
  %v564 = vand.u32 %v563, 4294901760
  %565 = vmatpush1.msra.mxu0 %v564
  %566 = vmatprep.subr.mxu0 0.0
  %v567 = vand.u32 %v33, 4294901760
  %v568 = vsub.f32 %v33, %v567
  %v569 = vand.u32 %v568, 4294901760
  %570 = vmatpush1.msra.mxu0 %v569
  %571 = vmatprep.subr.mxu0 0.0
  %572 = vmatpush2.msra.mxu0 0.0
  %573 = vmatprep.subr.mxu0 0.0
  %574 = vmatpush2.msra.mxu0 0.0
  %575 = vmatprep.subr.mxu0 0.0
  %576 = vmatpush2.msra.mxu0 0.0
  %577 = vmatprep.subr.mxu0 0.0
  %578 = vmatpush2.msra.mxu0 0.0
  %579 = vmatprep.subr.mxu0 0.0
  %580 = vmatpush2.msra.mxu0 0.0
  %581 = vmatprep.subr.mxu0 0.0
  %582 = vmatpush2.msra.mxu0 0.0
  %583 = vmatprep.subr.mxu0 0.0
  %584 = vmatpush2.msra.mxu0 0.0
  %585 = vmatprep.subr.mxu0 0.0
  %586 = vmatpush2.msra.mxu0 0.0
  %587 = vmatprep.subr.mxu0 0.0
  %588 = vmatpush2.msra.mxu0 0.0
  %589 = vmatprep.subr.mxu0 0.0
  %590 = vmatpush2.msra.mxu0 0.0
  %591 = vmatprep.subr.mxu0 0.0
  %592 = vmatpush2.msra.mxu0 0.0
  %593 = vmatprep.subr.mxu0 0.0
  %594 = vmatpush2.msra.mxu0 0.0
  %595 = vmatprep.subr.mxu0 0.0
  %596 = vmatpush2.msra.mxu0 0.0
  %597 = vmatprep.subr.mxu0 0.0
  %598 = vmatpush2.msra.mxu0 0.0
  %599 = vmatprep.subr.mxu0 0.0
  %600 = vmatpush2.msra.mxu0 0.0
  %601 = vmatprep.subr.mxu0 0.0
  %602 = vmatpush2.msra.mxu0 0.0
  %603 = vmatprep.mubr.f32.mxu0 0.0
  %v604 = vand.u32 %v32, 4294901760
  %605 = vmatmul.mubr.f32.gmra.mxu0 %v604
  %v606 = vpop.f32.mrf.mxu0
  %v607 = vadd.f32 %v488, %v606
  %v608 = vpop.f32.mrf.mxu0
  %609 = vdwg.mxu0
  %610 = vmatprep.subr.mxu0 0.0
  %v611 = vand.u32 %v48, 4294901760
  %612 = vmatpush1.msra.mxu0 %v611
  %613 = vmatprep.subr.mxu0 0.0
  %v614 = vand.u32 %v47, 4294901760
  %615 = vmatpush1.msra.mxu0 %v614
  %616 = vmatprep.subr.mxu0 0.0
  %v617 = vand.u32 %v46, 4294901760
  %618 = vmatpush1.msra.mxu0 %v617
  %619 = vmatprep.subr.mxu0 0.0
  %v620 = vand.u32 %v45, 4294901760
  %621 = vmatpush1.msra.mxu0 %v620
  %622 = vmatprep.subr.mxu0 0.0
  %v623 = vand.u32 %v44, 4294901760
  %624 = vmatpush1.msra.mxu0 %v623
  %625 = vmatprep.subr.mxu0 0.0
  %v626 = vand.u32 %v43, 4294901760
  %627 = vmatpush1.msra.mxu0 %v626
  %628 = vmatprep.subr.mxu0 0.0
  %v629 = vand.u32 %v42, 4294901760
  %630 = vmatpush1.msra.mxu0 %v629
  %631 = vmatprep.subr.mxu0 0.0
  %v632 = vand.u32 %v41, 4294901760
  %633 = vmatpush1.msra.mxu0 %v632
  %634 = vmatprep.subr.mxu0 0.0
  %v635 = vand.u32 %v40, 4294901760
  %636 = vmatpush1.msra.mxu0 %v635
  %637 = vmatprep.subr.mxu0 0.0
  %v638 = vand.u32 %v39, 4294901760
  %639 = vmatpush1.msra.mxu0 %v638
  %640 = vmatprep.subr.mxu0 0.0
  %v641 = vand.u32 %v38, 4294901760
  %642 = vmatpush1.msra.mxu0 %v641
  %643 = vmatprep.subr.mxu0 0.0
  %v644 = vand.u32 %v37, 4294901760
  %645 = vmatpush1.msra.mxu0 %v644
  %646 = vmatprep.subr.mxu0 0.0
  %v647 = vand.u32 %v36, 4294901760
  %648 = vmatpush1.msra.mxu0 %v647
  %649 = vmatprep.subr.mxu0 0.0
  %v650 = vand.u32 %v35, 4294901760
  %651 = vmatpush1.msra.mxu0 %v650
  %652 = vmatprep.subr.mxu0 0.0
  %v653 = vand.u32 %v34, 4294901760
  %654 = vmatpush1.msra.mxu0 %v653
  %655 = vmatprep.subr.mxu0 0.0
  %v656 = vand.u32 %v33, 4294901760
  %657 = vmatpush1.msra.mxu0 %v656
  %658 = vmatprep.subr.mxu0 0.0
  %659 = vmatpush2.msra.mxu0 0.0
  %660 = vmatprep.subr.mxu0 0.0
  %661 = vmatpush2.msra.mxu0 0.0
  %662 = vmatprep.subr.mxu0 0.0
  %663 = vmatpush2.msra.mxu0 0.0
  %664 = vmatprep.subr.mxu0 0.0
  %665 = vmatpush2.msra.mxu0 0.0
  %666 = vmatprep.subr.mxu0 0.0
  %667 = vmatpush2.msra.mxu0 0.0
  %668 = vmatprep.subr.mxu0 0.0
  %669 = vmatpush2.msra.mxu0 0.0
  %670 = vmatprep.subr.mxu0 0.0
  %671 = vmatpush2.msra.mxu0 0.0
  %672 = vmatprep.subr.mxu0 0.0
  %673 = vmatpush2.msra.mxu0 0.0
  %674 = vmatprep.subr.mxu0 0.0
  %675 = vmatpush2.msra.mxu0 0.0
  %676 = vmatprep.subr.mxu0 0.0
  %677 = vmatpush2.msra.mxu0 0.0
  %678 = vmatprep.subr.mxu0 0.0
  %679 = vmatpush2.msra.mxu0 0.0
  %680 = vmatprep.subr.mxu0 0.0
  %681 = vmatpush2.msra.mxu0 0.0
  %682 = vmatprep.subr.mxu0 0.0
  %683 = vmatpush2.msra.mxu0 0.0
  %684 = vmatprep.subr.mxu0 0.0
  %685 = vmatpush2.msra.mxu0 0.0
  %686 = vmatprep.subr.mxu0 0.0
  %687 = vmatpush2.msra.mxu0 0.0
  %688 = vmatprep.subr.mxu0 0.0
  %689 = vmatpush2.msra.mxu0 0.0
  %690 = vmatprep.mubr.f32.mxu0 0.0
  %v691 = vand.u32 %v32, 4294901760
  %692 = vmatmul.mubr.f32.gmra.mxu0 %v691
  %v693 = vpop.f32.mrf.mxu0
  %v694 = vadd.f32 %v607, %v693
  %v695 = vpop.f32.mrf.mxu0
  %696 = vdwg.mxu0
  %v697 = vmax.f32 %v694, 0.0
  %v698 = vld [vmem:[%s3] sm:$0xff]
  %v699 = vld [vmem:[%s3 + $0x8] sm:$0xff]
  %v700 = vld [vmem:[%s3 + $0x10] sm:$0xff]
  %v701 = vld [vmem:[%s3 + $0x18] sm:$0xff]
  %v702 = vld [vmem:[%s3 + $0x20] sm:$0xff]
  %v703 = vld [vmem:[%s3 + $0x28] sm:$0xff]
  %v704 = vld [vmem:[%s3 + $0x30] sm:$0xff]
  %v705 = vld [vmem:[%s3 + $0x38] sm:$0xff]
  %v706 = vld [vmem:[%s3 + $0x40] sm:$0xff]
  %v707 = vld [vmem:[%s3 + $0x48] sm:$0xff]
  %v708 = vld [vmem:[%s3 + $0x50] sm:$0xff]
  %v709 = vld [vmem:[%s3 + $0x58] sm:$0xff]
  %v710 = vld [vmem:[%s3 + $0x60] sm:$0xff]
  %v711 = vld [vmem:[%s3 + $0x68] sm:$0xff]
  %v712 = vld [vmem:[%s3 + $0x70] sm:$0xff]
  %v713 = vld [vmem:[%s3 + $0x78] sm:$0xff]
  %v714 = vld [vmem:[%s4] sm:$0x1]
  %v716 = vlaneseq
  %v717 = vshrl.u32 %v716, 7
  %v718 = vsub.s32 0, %v717
  %v719 = vrot.slane %v714, %v718
  %721 = vmatprep.subr.mxu0 0.0
  %v722 = vand.u32 %v713, 4294901760
  %723 = vmatpush1.msra.mxu0 %v722
  %724 = vmatprep.subr.mxu0 0.0
  %v725 = vand.u32 %v712, 4294901760
  %726 = vmatpush1.msra.mxu0 %v725
  %727 = vmatprep.subr.mxu0 0.0
  %v728 = vand.u32 %v711, 4294901760
  %729 = vmatpush1.msra.mxu0 %v728
  %730 = vmatprep.subr.mxu0 0.0
  %v731 = vand.u32 %v710, 4294901760
  %732 = vmatpush1.msra.mxu0 %v731
  %733 = vmatprep.subr.mxu0 0.0
  %v734 = vand.u32 %v709, 4294901760
  %735 = vmatpush1.msra.mxu0 %v734
  %736 = vmatprep.subr.mxu0 0.0
  %v737 = vand.u32 %v708, 4294901760
  %738 = vmatpush1.msra.mxu0 %v737
  %739 = vmatprep.subr.mxu0 0.0
  %v740 = vand.u32 %v707, 4294901760
  %741 = vmatpush1.msra.mxu0 %v740
  %742 = vmatprep.subr.mxu0 0.0
  %v743 = vand.u32 %v706, 4294901760
  %744 = vmatpush1.msra.mxu0 %v743
  %745 = vmatprep.subr.mxu0 0.0
  %v746 = vand.u32 %v705, 4294901760
  %747 = vmatpush1.msra.mxu0 %v746
  %748 = vmatprep.subr.mxu0 0.0
  %v749 = vand.u32 %v704, 4294901760
  %750 = vmatpush1.msra.mxu0 %v749
  %751 = vmatprep.subr.mxu0 0.0
  %v752 = vand.u32 %v703, 4294901760
  %753 = vmatpush1.msra.mxu0 %v752
  %754 = vmatprep.subr.mxu0 0.0
  %v755 = vand.u32 %v702, 4294901760
  %756 = vmatpush1.msra.mxu0 %v755
  %757 = vmatprep.subr.mxu0 0.0
  %v758 = vand.u32 %v701, 4294901760
  %759 = vmatpush1.msra.mxu0 %v758
  %760 = vmatprep.subr.mxu0 0.0
  %v761 = vand.u32 %v700, 4294901760
  %762 = vmatpush1.msra.mxu0 %v761
  %763 = vmatprep.subr.mxu0 0.0
  %v764 = vand.u32 %v699, 4294901760
  %765 = vmatpush1.msra.mxu0 %v764
  %766 = vmatprep.subr.mxu0 0.0
  %v767 = vand.u32 %v698, 4294901760
  %768 = vmatpush1.msra.mxu0 %v767
  %769 = vmatprep.subr.mxu0 0.0
  %770 = vmatpush2.msra.mxu0 0.0
  %771 = vmatprep.subr.mxu0 0.0
  %772 = vmatpush2.msra.mxu0 0.0
  %773 = vmatprep.subr.mxu0 0.0
  %774 = vmatpush2.msra.mxu0 0.0
  %775 = vmatprep.subr.mxu0 0.0
  %776 = vmatpush2.msra.mxu0 0.0
  %777 = vmatprep.subr.mxu0 0.0
  %778 = vmatpush2.msra.mxu0 0.0
  %779 = vmatprep.subr.mxu0 0.0
  %780 = vmatpush2.msra.mxu0 0.0
  %781 = vmatprep.subr.mxu0 0.0
  %782 = vmatpush2.msra.mxu0 0.0
  %783 = vmatprep.subr.mxu0 0.0
  %784 = vmatpush2.msra.mxu0 0.0
  %785 = vmatprep.subr.mxu0 0.0
  %786 = vmatpush2.msra.mxu0 0.0
  %787 = vmatprep.subr.mxu0 0.0
  %788 = vmatpush2.msra.mxu0 0.0
  %789 = vmatprep.subr.mxu0 0.0
  %790 = vmatpush2.msra.mxu0 0.0
  %791 = vmatprep.subr.mxu0 0.0
  %792 = vmatpush2.msra.mxu0 0.0
  %793 = vmatprep.subr.mxu0 0.0
  %794 = vmatpush2.msra.mxu0 0.0
  %795 = vmatprep.subr.mxu0 0.0
  %796 = vmatpush2.msra.mxu0 0.0
  %797 = vmatprep.subr.mxu0 0.0
  %798 = vmatpush2.msra.mxu0 0.0
  %799 = vmatprep.subr.mxu0 0.0
  %800 = vmatpush2.msra.mxu0 0.0
  %801 = vmatprep.mubr.f32.mxu0 0.0
  %v802 = vand.u32 %v697, 4294901760
  %v803 = vsub.f32 %v697, %v802
  %v804 = vand.u32 %v803, 4294901760
  %v805 = vsub.f32 %v803, %v804
  %v806 = vand.u32 %v805, 4294901760
  %807 = vmatmul.mubr.f32.gmra.mxu0 %v806
  %v808 = vpop.f32.mrf.mxu0
  %v809 = vadd.f32 %v719, %v808
  %v810 = vpop.f32.mrf.mxu0
  %811 = vdwg.mxu0
  %812 = vmatprep.subr.mxu0 0.0
  %v813 = vand.u32 %v713, 4294901760
  %v814 = vsub.f32 %v713, %v813
  %v815 = vand.u32 %v814, 4294901760
  %v816 = vsub.f32 %v814, %v815
  %v817 = vand.u32 %v816, 4294901760
  %818 = vmatpush1.msra.mxu0 %v817
  %819 = vmatprep.subr.mxu0 0.0
  %v820 = vand.u32 %v712, 4294901760
  %v821 = vsub.f32 %v712, %v820
  %v822 = vand.u32 %v821, 4294901760
  %v823 = vsub.f32 %v821, %v822
  %v824 = vand.u32 %v823, 4294901760
  %825 = vmatpush1.msra.mxu0 %v824
  %826 = vmatprep.subr.mxu0 0.0
  %v827 = vand.u32 %v711, 4294901760
  %v828 = vsub.f32 %v711, %v827
  %v829 = vand.u32 %v828, 4294901760
  %v830 = vsub.f32 %v828, %v829
  %v831 = vand.u32 %v830, 4294901760
  %832 = vmatpush1.msra.mxu0 %v831
  %833 = vmatprep.subr.mxu0 0.0
  %v834 = vand.u32 %v710, 4294901760
  %v835 = vsub.f32 %v710, %v834
  %v836 = vand.u32 %v835, 4294901760
  %v837 = vsub.f32 %v835, %v836
  %v838 = vand.u32 %v837, 4294901760
  %839 = vmatpush1.msra.mxu0 %v838
  %840 = vmatprep.subr.mxu0 0.0
  %v841 = vand.u32 %v709, 4294901760
  %v842 = vsub.f32 %v709, %v841
  %v843 = vand.u32 %v842, 4294901760
  %v844 = vsub.f32 %v842, %v843
  %v845 = vand.u32 %v844, 4294901760
  %846 = vmatpush1.msra.mxu0 %v845
  %847 = vmatprep.subr.mxu0 0.0
  %v848 = vand.u32 %v708, 4294901760
  %v849 = vsub.f32 %v708, %v848
  %v850 = vand.u32 %v849, 4294901760
  %v851 = vsub.f32 %v849, %v850
  %v852 = vand.u32 %v851, 4294901760
  %853 = vmatpush1.msra.mxu0 %v852
  %854 = vmatprep.subr.mxu0 0.0
  %v855 = vand.u32 %v707, 4294901760
  %v856 = vsub.f32 %v707, %v855
  %v857 = vand.u32 %v856, 4294901760
  %v858 = vsub.f32 %v856, %v857
  %v859 = vand.u32 %v858, 4294901760
  %860 = vmatpush1.msra.mxu0 %v859
  %861 = vmatprep.subr.mxu0 0.0
  %v862 = vand.u32 %v706, 4294901760
  %v863 = vsub.f32 %v706, %v862
  %v864 = vand.u32 %v863, 4294901760
  %v865 = vsub.f32 %v863, %v864
  %v866 = vand.u32 %v865, 4294901760
  %867 = vmatpush1.msra.mxu0 %v866
  %868 = vmatprep.subr.mxu0 0.0
  %v869 = vand.u32 %v705, 4294901760
  %v870 = vsub.f32 %v705, %v869
  %v871 = vand.u32 %v870, 4294901760
  %v872 = vsub.f32 %v870, %v871
  %v873 = vand.u32 %v872, 4294901760
  %874 = vmatpush1.msra.mxu0 %v873
  %875 = vmatprep.subr.mxu0 0.0
  %v876 = vand.u32 %v704, 4294901760
  %v877 = vsub.f32 %v704, %v876
  %v878 = vand.u32 %v877, 4294901760
  %v879 = vsub.f32 %v877, %v878
  %v880 = vand.u32 %v879, 4294901760
  %881 = vmatpush1.msra.mxu0 %v880
  %882 = vmatprep.subr.mxu0 0.0
  %v883 = vand.u32 %v703, 4294901760
  %v884 = vsub.f32 %v703, %v883
  %v885 = vand.u32 %v884, 4294901760
  %v886 = vsub.f32 %v884, %v885
  %v887 = vand.u32 %v886, 4294901760
  %888 = vmatpush1.msra.mxu0 %v887
  %889 = vmatprep.subr.mxu0 0.0
  %v890 = vand.u32 %v702, 4294901760
  %v891 = vsub.f32 %v702, %v890
  %v892 = vand.u32 %v891, 4294901760
  %v893 = vsub.f32 %v891, %v892
  %v894 = vand.u32 %v893, 4294901760
  %895 = vmatpush1.msra.mxu0 %v894
  %896 = vmatprep.subr.mxu0 0.0
  %v897 = vand.u32 %v701, 4294901760
  %v898 = vsub.f32 %v701, %v897
  %v899 = vand.u32 %v898, 4294901760
  %v900 = vsub.f32 %v898, %v899
  %v901 = vand.u32 %v900, 4294901760
  %902 = vmatpush1.msra.mxu0 %v901
  %903 = vmatprep.subr.mxu0 0.0
  %v904 = vand.u32 %v700, 4294901760
  %v905 = vsub.f32 %v700, %v904
  %v906 = vand.u32 %v905, 4294901760
  %v907 = vsub.f32 %v905, %v906
  %v908 = vand.u32 %v907, 4294901760
  %909 = vmatpush1.msra.mxu0 %v908
  %910 = vmatprep.subr.mxu0 0.0
  %v911 = vand.u32 %v699, 4294901760
  %v912 = vsub.f32 %v699, %v911
  %v913 = vand.u32 %v912, 4294901760
  %v914 = vsub.f32 %v912, %v913
  %v915 = vand.u32 %v914, 4294901760
  %916 = vmatpush1.msra.mxu0 %v915
  %917 = vmatprep.subr.mxu0 0.0
  %v918 = vand.u32 %v698, 4294901760
  %v919 = vsub.f32 %v698, %v918
  %v920 = vand.u32 %v919, 4294901760
  %v921 = vsub.f32 %v919, %v920
  %v922 = vand.u32 %v921, 4294901760
  %923 = vmatpush1.msra.mxu0 %v922
  %924 = vmatprep.subr.mxu0 0.0
  %925 = vmatpush2.msra.mxu0 0.0
  %926 = vmatprep.subr.mxu0 0.0
  %927 = vmatpush2.msra.mxu0 0.0
  %928 = vmatprep.subr.mxu0 0.0
  %929 = vmatpush2.msra.mxu0 0.0
  %930 = vmatprep.subr.mxu0 0.0
  %931 = vmatpush2.msra.mxu0 0.0
  %932 = vmatprep.subr.mxu0 0.0
  %933 = vmatpush2.msra.mxu0 0.0
  %934 = vmatprep.subr.mxu0 0.0
  %935 = vmatpush2.msra.mxu0 0.0
  %936 = vmatprep.subr.mxu0 0.0
  %937 = vmatpush2.msra.mxu0 0.0
  %938 = vmatprep.subr.mxu0 0.0
  %939 = vmatpush2.msra.mxu0 0.0
  %940 = vmatprep.subr.mxu0 0.0
  %941 = vmatpush2.msra.mxu0 0.0
  %942 = vmatprep.subr.mxu0 0.0
  %943 = vmatpush2.msra.mxu0 0.0
  %944 = vmatprep.subr.mxu0 0.0
  %945 = vmatpush2.msra.mxu0 0.0
  %946 = vmatprep.subr.mxu0 0.0
  %947 = vmatpush2.msra.mxu0 0.0
  %948 = vmatprep.subr.mxu0 0.0
  %949 = vmatpush2.msra.mxu0 0.0
  %950 = vmatprep.subr.mxu0 0.0
  %951 = vmatpush2.msra.mxu0 0.0
  %952 = vmatprep.subr.mxu0 0.0
  %953 = vmatpush2.msra.mxu0 0.0
  %954 = vmatprep.subr.mxu0 0.0
  %955 = vmatpush2.msra.mxu0 0.0
  %956 = vmatprep.mubr.f32.mxu0 0.0
  %v957 = vand.u32 %v697, 4294901760
  %958 = vmatmul.mubr.f32.gmra.mxu0 %v957
  %v959 = vpop.f32.mrf.mxu0
  %v960 = vadd.f32 %v809, %v959
  %v961 = vpop.f32.mrf.mxu0
  %962 = vdwg.mxu0
  %963 = vmatprep.subr.mxu0 0.0
  %v964 = vand.u32 %v713, 4294901760
  %v965 = vsub.f32 %v713, %v964
  %966 = vmatpush1.msra.mxu0 %v965
  %967 = vmatprep.subr.mxu0 0.0
  %v968 = vand.u32 %v712, 4294901760
  %v969 = vsub.f32 %v712, %v968
  %970 = vmatpush1.msra.mxu0 %v969
  %971 = vmatprep.subr.mxu0 0.0
  %v972 = vand.u32 %v711, 4294901760
  %v973 = vsub.f32 %v711, %v972
  %974 = vmatpush1.msra.mxu0 %v973
  %975 = vmatprep.subr.mxu0 0.0
  %v976 = vand.u32 %v710, 4294901760
  %v977 = vsub.f32 %v710, %v976
  %978 = vmatpush1.msra.mxu0 %v977
  %979 = vmatprep.subr.mxu0 0.0
  %v980 = vand.u32 %v709, 4294901760
  %v981 = vsub.f32 %v709, %v980
  %982 = vmatpush1.msra.mxu0 %v981
  %983 = vmatprep.subr.mxu0 0.0
  %v984 = vand.u32 %v708, 4294901760
  %v985 = vsub.f32 %v708, %v984
  %986 = vmatpush1.msra.mxu0 %v985
  %987 = vmatprep.subr.mxu0 0.0
  %v988 = vand.u32 %v707, 4294901760
  %v989 = vsub.f32 %v707, %v988
  %990 = vmatpush1.msra.mxu0 %v989
  %991 = vmatprep.subr.mxu0 0.0
  %v992 = vand.u32 %v706, 4294901760
  %v993 = vsub.f32 %v706, %v992
  %994 = vmatpush1.msra.mxu0 %v993
  %995 = vmatprep.subr.mxu0 0.0
  %v996 = vand.u32 %v705, 4294901760
  %v997 = vsub.f32 %v705, %v996
  %998 = vmatpush1.msra.mxu0 %v997
  %999 = vmatprep.subr.mxu0 0.0
  %v1000 = vand.u32 %v704, 4294901760
  %v1001 = vsub.f32 %v704, %v1000
  %1002 = vmatpush1.msra.mxu0 %v1001
  %1003 = vmatprep.subr.mxu0 0.0
  %v1004 = vand.u32 %v703, 4294901760
  %v1005 = vsub.f32 %v703, %v1004
  %1006 = vmatpush1.msra.mxu0 %v1005
  %1007 = vmatprep.subr.mxu0 0.0
  %v1008 = vand.u32 %v702, 4294901760
  %v1009 = vsub.f32 %v702, %v1008
  %1010 = vmatpush1.msra.mxu0 %v1009
  %1011 = vmatprep.subr.mxu0 0.0
  %v1012 = vand.u32 %v701, 4294901760
  %v1013 = vsub.f32 %v701, %v1012
  %1014 = vmatpush1.msra.mxu0 %v1013
  %1015 = vmatprep.subr.mxu0 0.0
  %v1016 = vand.u32 %v700, 4294901760
  %v1017 = vsub.f32 %v700, %v1016
  %1018 = vmatpush1.msra.mxu0 %v1017
  %1019 = vmatprep.subr.mxu0 0.0
  %v1020 = vand.u32 %v699, 4294901760
  %v1021 = vsub.f32 %v699, %v1020
  %1022 = vmatpush1.msra.mxu0 %v1021
  %1023 = vmatprep.subr.mxu0 0.0
  %v1024 = vand.u32 %v698, 4294901760
  %v1025 = vsub.f32 %v698, %v1024
  %1026 = vmatpush1.msra.mxu0 %v1025
  %1027 = vmatprep.subr.mxu0 0.0
  %1028 = vmatpush2.msra.mxu0 0.0
  %1029 = vmatprep.subr.mxu0 0.0
  %1030 = vmatpush2.msra.mxu0 0.0
  %1031 = vmatprep.subr.mxu0 0.0
  %1032 = vmatpush2.msra.mxu0 0.0
  %1033 = vmatprep.subr.mxu0 0.0
  %1034 = vmatpush2.msra.mxu0 0.0
  %1035 = vmatprep.subr.mxu0 0.0
  %1036 = vmatpush2.msra.mxu0 0.0
  %1037 = vmatprep.subr.mxu0 0.0
  %1038 = vmatpush2.msra.mxu0 0.0
  %1039 = vmatprep.subr.mxu0 0.0
  %1040 = vmatpush2.msra.mxu0 0.0
  %1041 = vmatprep.subr.mxu0 0.0
  %1042 = vmatpush2.msra.mxu0 0.0
  %1043 = vmatprep.subr.mxu0 0.0
  %1044 = vmatpush2.msra.mxu0 0.0
  %1045 = vmatprep.subr.mxu0 0.0
  %1046 = vmatpush2.msra.mxu0 0.0
  %1047 = vmatprep.subr.mxu0 0.0
  %1048 = vmatpush2.msra.mxu0 0.0
  %1049 = vmatprep.subr.mxu0 0.0
  %1050 = vmatpush2.msra.mxu0 0.0
  %1051 = vmatprep.subr.mxu0 0.0
  %1052 = vmatpush2.msra.mxu0 0.0
  %1053 = vmatprep.subr.mxu0 0.0
  %1054 = vmatpush2.msra.mxu0 0.0
  %1055 = vmatprep.subr.mxu0 0.0
  %1056 = vmatpush2.msra.mxu0 0.0
  %1057 = vmatprep.subr.mxu0 0.0
  %1058 = vmatpush2.msra.mxu0 0.0
  %1059 = vmatprep.mubr.f32.mxu0 0.0
  %v1060 = vand.u32 %v697, 4294901760
  %v1061 = vsub.f32 %v697, %v1060
  %1062 = vmatmul.mubr.f32.gmra.mxu0 %v1061
  %v1063 = vpop.f32.mrf.mxu0
  %v1064 = vadd.f32 %v960, %v1063
  %v1065 = vpop.f32.mrf.mxu0
  %1066 = vdwg.mxu0
  %1067 = vmatprep.subr.mxu0 0.0
  %v1068 = vand.u32 %v713, 4294901760
  %1069 = vmatpush1.msra.mxu0 %v1068
  %1070 = vmatprep.subr.mxu0 0.0
  %v1071 = vand.u32 %v712, 4294901760
  %1072 = vmatpush1.msra.mxu0 %v1071
  %1073 = vmatprep.subr.mxu0 0.0
  %v1074 = vand.u32 %v711, 4294901760
  %1075 = vmatpush1.msra.mxu0 %v1074
  %1076 = vmatprep.subr.mxu0 0.0
  %v1077 = vand.u32 %v710, 4294901760
  %1078 = vmatpush1.msra.mxu0 %v1077
  %1079 = vmatprep.subr.mxu0 0.0
  %v1080 = vand.u32 %v709, 4294901760
  %1081 = vmatpush1.msra.mxu0 %v1080
  %1082 = vmatprep.subr.mxu0 0.0
  %v1083 = vand.u32 %v708, 4294901760
  %1084 = vmatpush1.msra.mxu0 %v1083
  %1085 = vmatprep.subr.mxu0 0.0
  %v1086 = vand.u32 %v707, 4294901760
  %1087 = vmatpush1.msra.mxu0 %v1086
  %1088 = vmatprep.subr.mxu0 0.0
  %v1089 = vand.u32 %v706, 4294901760
  %1090 = vmatpush1.msra.mxu0 %v1089
  %1091 = vmatprep.subr.mxu0 0.0
  %v1092 = vand.u32 %v705, 4294901760
  %1093 = vmatpush1.msra.mxu0 %v1092
  %1094 = vmatprep.subr.mxu0 0.0
  %v1095 = vand.u32 %v704, 4294901760
  %1096 = vmatpush1.msra.mxu0 %v1095
  %1097 = vmatprep.subr.mxu0 0.0
  %v1098 = vand.u32 %v703, 4294901760
  %1099 = vmatpush1.msra.mxu0 %v1098
  %1100 = vmatprep.subr.mxu0 0.0
  %v1101 = vand.u32 %v702, 4294901760
  %1102 = vmatpush1.msra.mxu0 %v1101
  %1103 = vmatprep.subr.mxu0 0.0
  %v1104 = vand.u32 %v701, 4294901760
  %1105 = vmatpush1.msra.mxu0 %v1104
  %1106 = vmatprep.subr.mxu0 0.0
  %v1107 = vand.u32 %v700, 4294901760
  %1108 = vmatpush1.msra.mxu0 %v1107
  %1109 = vmatprep.subr.mxu0 0.0
  %v1110 = vand.u32 %v699, 4294901760
  %1111 = vmatpush1.msra.mxu0 %v1110
  %1112 = vmatprep.subr.mxu0 0.0
  %v1113 = vand.u32 %v698, 4294901760
  %1114 = vmatpush1.msra.mxu0 %v1113
  %1115 = vmatprep.subr.mxu0 0.0
  %1116 = vmatpush2.msra.mxu0 0.0
  %1117 = vmatprep.subr.mxu0 0.0
  %1118 = vmatpush2.msra.mxu0 0.0
  %1119 = vmatprep.subr.mxu0 0.0
  %1120 = vmatpush2.msra.mxu0 0.0
  %1121 = vmatprep.subr.mxu0 0.0
  %1122 = vmatpush2.msra.mxu0 0.0
  %1123 = vmatprep.subr.mxu0 0.0
  %1124 = vmatpush2.msra.mxu0 0.0
  %1125 = vmatprep.subr.mxu0 0.0
  %1126 = vmatpush2.msra.mxu0 0.0
  %1127 = vmatprep.subr.mxu0 0.0
  %1128 = vmatpush2.msra.mxu0 0.0
  %1129 = vmatprep.subr.mxu0 0.0
  %1130 = vmatpush2.msra.mxu0 0.0
  %1131 = vmatprep.subr.mxu0 0.0
  %1132 = vmatpush2.msra.mxu0 0.0
  %1133 = vmatprep.subr.mxu0 0.0
  %1134 = vmatpush2.msra.mxu0 0.0
  %1135 = vmatprep.subr.mxu0 0.0
  %1136 = vmatpush2.msra.mxu0 0.0
  %1137 = vmatprep.subr.mxu0 0.0
  %1138 = vmatpush2.msra.mxu0 0.0
  %1139 = vmatprep.subr.mxu0 0.0
  %1140 = vmatpush2.msra.mxu0 0.0
  %1141 = vmatprep.subr.mxu0 0.0
  %1142 = vmatpush2.msra.mxu0 0.0
  %1143 = vmatprep.subr.mxu0 0.0
  %1144 = vmatpush2.msra.mxu0 0.0
  %1145 = vmatprep.subr.mxu0 0.0
  %1146 = vmatpush2.msra.mxu0 0.0
  %1147 = vmatprep.mubr.f32.mxu0 0.0
  %v1148 = vand.u32 %v697, 4294901760
  %v1149 = vsub.f32 %v697, %v1148
  %v1150 = vand.u32 %v1149, 4294901760
  %1151 = vmatmul.mubr.f32.gmra.mxu0 %v1150
  %v1152 = vpop.f32.mrf.mxu0
  %v1153 = vadd.f32 %v1064, %v1152
  %v1154 = vpop.f32.mrf.mxu0
  %1155 = vdwg.mxu0
  %1156 = vmatprep.subr.mxu0 0.0
  %v1157 = vand.u32 %v713, 4294901760
  %v1158 = vsub.f32 %v713, %v1157
  %v1159 = vand.u32 %v1158, 4294901760
  %1160 = vmatpush1.msra.mxu0 %v1159
  %1161 = vmatprep.subr.mxu0 0.0
  %v1162 = vand.u32 %v712, 4294901760
  %v1163 = vsub.f32 %v712, %v1162
  %v1164 = vand.u32 %v1163, 4294901760
  %1165 = vmatpush1.msra.mxu0 %v1164
  %1166 = vmatprep.subr.mxu0 0.0
  %v1167 = vand.u32 %v711, 4294901760
  %v1168 = vsub.f32 %v711, %v1167
  %v1169 = vand.u32 %v1168, 4294901760
  %1170 = vmatpush1.msra.mxu0 %v1169
  %1171 = vmatprep.subr.mxu0 0.0
  %v1172 = vand.u32 %v710, 4294901760
  %v1173 = vsub.f32 %v710, %v1172
  %v1174 = vand.u32 %v1173, 4294901760
  %1175 = vmatpush1.msra.mxu0 %v1174
  %1176 = vmatprep.subr.mxu0 0.0
  %v1177 = vand.u32 %v709, 4294901760
  %v1178 = vsub.f32 %v709, %v1177
  %v1179 = vand.u32 %v1178, 4294901760
  %1180 = vmatpush1.msra.mxu0 %v1179
  %1181 = vmatprep.subr.mxu0 0.0
  %v1182 = vand.u32 %v708, 4294901760
  %v1183 = vsub.f32 %v708, %v1182
  %v1184 = vand.u32 %v1183, 4294901760
  %1185 = vmatpush1.msra.mxu0 %v1184
  %1186 = vmatprep.subr.mxu0 0.0
  %v1187 = vand.u32 %v707, 4294901760
  %v1188 = vsub.f32 %v707, %v1187
  %v1189 = vand.u32 %v1188, 4294901760
  %1190 = vmatpush1.msra.mxu0 %v1189
  %1191 = vmatprep.subr.mxu0 0.0
  %v1192 = vand.u32 %v706, 4294901760
  %v1193 = vsub.f32 %v706, %v1192
  %v1194 = vand.u32 %v1193, 4294901760
  %1195 = vmatpush1.msra.mxu0 %v1194
  %1196 = vmatprep.subr.mxu0 0.0
  %v1197 = vand.u32 %v705, 4294901760
  %v1198 = vsub.f32 %v705, %v1197
  %v1199 = vand.u32 %v1198, 4294901760
  %1200 = vmatpush1.msra.mxu0 %v1199
  %1201 = vmatprep.subr.mxu0 0.0
  %v1202 = vand.u32 %v704, 4294901760
  %v1203 = vsub.f32 %v704, %v1202
  %v1204 = vand.u32 %v1203, 4294901760
  %1205 = vmatpush1.msra.mxu0 %v1204
  %1206 = vmatprep.subr.mxu0 0.0
  %v1207 = vand.u32 %v703, 4294901760
  %v1208 = vsub.f32 %v703, %v1207
  %v1209 = vand.u32 %v1208, 4294901760
  %1210 = vmatpush1.msra.mxu0 %v1209
  %1211 = vmatprep.subr.mxu0 0.0
  %v1212 = vand.u32 %v702, 4294901760
  %v1213 = vsub.f32 %v702, %v1212
  %v1214 = vand.u32 %v1213, 4294901760
  %1215 = vmatpush1.msra.mxu0 %v1214
  %1216 = vmatprep.subr.mxu0 0.0
  %v1217 = vand.u32 %v701, 4294901760
  %v1218 = vsub.f32 %v701, %v1217
  %v1219 = vand.u32 %v1218, 4294901760
  %1220 = vmatpush1.msra.mxu0 %v1219
  %1221 = vmatprep.subr.mxu0 0.0
  %v1222 = vand.u32 %v700, 4294901760
  %v1223 = vsub.f32 %v700, %v1222
  %v1224 = vand.u32 %v1223, 4294901760
  %1225 = vmatpush1.msra.mxu0 %v1224
  %1226 = vmatprep.subr.mxu0 0.0
  %v1227 = vand.u32 %v699, 4294901760
  %v1228 = vsub.f32 %v699, %v1227
  %v1229 = vand.u32 %v1228, 4294901760
  %1230 = vmatpush1.msra.mxu0 %v1229
  %1231 = vmatprep.subr.mxu0 0.0
  %v1232 = vand.u32 %v698, 4294901760
  %v1233 = vsub.f32 %v698, %v1232
  %v1234 = vand.u32 %v1233, 4294901760
  %1235 = vmatpush1.msra.mxu0 %v1234
  %1236 = vmatprep.subr.mxu0 0.0
  %1237 = vmatpush2.msra.mxu0 0.0
  %1238 = vmatprep.subr.mxu0 0.0
  %1239 = vmatpush2.msra.mxu0 0.0
  %1240 = vmatprep.subr.mxu0 0.0
  %1241 = vmatpush2.msra.mxu0 0.0
  %1242 = vmatprep.subr.mxu0 0.0
  %1243 = vmatpush2.msra.mxu0 0.0
  %1244 = vmatprep.subr.mxu0 0.0
  %1245 = vmatpush2.msra.mxu0 0.0
  %1246 = vmatprep.subr.mxu0 0.0
  %1247 = vmatpush2.msra.mxu0 0.0
  %1248 = vmatprep.subr.mxu0 0.0
  %1249 = vmatpush2.msra.mxu0 0.0
  %1250 = vmatprep.subr.mxu0 0.0
  %1251 = vmatpush2.msra.mxu0 0.0
  %1252 = vmatprep.subr.mxu0 0.0
  %1253 = vmatpush2.msra.mxu0 0.0
  %1254 = vmatprep.subr.mxu0 0.0
  %1255 = vmatpush2.msra.mxu0 0.0
  %1256 = vmatprep.subr.mxu0 0.0
  %1257 = vmatpush2.msra.mxu0 0.0
  %1258 = vmatprep.subr.mxu0 0.0
  %1259 = vmatpush2.msra.mxu0 0.0
  %1260 = vmatprep.subr.mxu0 0.0
  %1261 = vmatpush2.msra.mxu0 0.0
  %1262 = vmatprep.subr.mxu0 0.0
  %1263 = vmatpush2.msra.mxu0 0.0
  %1264 = vmatprep.subr.mxu0 0.0
  %1265 = vmatpush2.msra.mxu0 0.0
  %1266 = vmatprep.subr.mxu0 0.0
  %1267 = vmatpush2.msra.mxu0 0.0
  %1268 = vmatprep.mubr.f32.mxu0 0.0
  %v1269 = vand.u32 %v697, 4294901760
  %1270 = vmatmul.mubr.f32.gmra.mxu0 %v1269
  %v1271 = vpop.f32.mrf.mxu0
  %v1272 = vadd.f32 %v1153, %v1271
  %v1273 = vpop.f32.mrf.mxu0
  %1274 = vdwg.mxu0
  %1275 = vmatprep.subr.mxu0 0.0
  %v1276 = vand.u32 %v713, 4294901760
  %1277 = vmatpush1.msra.mxu0 %v1276
  %1278 = vmatprep.subr.mxu0 0.0
  %v1279 = vand.u32 %v712, 4294901760
  %1280 = vmatpush1.msra.mxu0 %v1279
  %1281 = vmatprep.subr.mxu0 0.0
  %v1282 = vand.u32 %v711, 4294901760
  %1283 = vmatpush1.msra.mxu0 %v1282
  %1284 = vmatprep.subr.mxu0 0.0
  %v1285 = vand.u32 %v710, 4294901760
  %1286 = vmatpush1.msra.mxu0 %v1285
  %1287 = vmatprep.subr.mxu0 0.0
  %v1288 = vand.u32 %v709, 4294901760
  %1289 = vmatpush1.msra.mxu0 %v1288
  %1290 = vmatprep.subr.mxu0 0.0
  %v1291 = vand.u32 %v708, 4294901760
  %1292 = vmatpush1.msra.mxu0 %v1291
  %1293 = vmatprep.subr.mxu0 0.0
  %v1294 = vand.u32 %v707, 4294901760
  %1295 = vmatpush1.msra.mxu0 %v1294
  %1296 = vmatprep.subr.mxu0 0.0
  %v1297 = vand.u32 %v706, 4294901760
  %1298 = vmatpush1.msra.mxu0 %v1297
  %1299 = vmatprep.subr.mxu0 0.0
  %v1300 = vand.u32 %v705, 4294901760
  %1301 = vmatpush1.msra.mxu0 %v1300
  %1302 = vmatprep.subr.mxu0 0.0
  %v1303 = vand.u32 %v704, 4294901760
  %1304 = vmatpush1.msra.mxu0 %v1303
  %1305 = vmatprep.subr.mxu0 0.0
  %v1306 = vand.u32 %v703, 4294901760
  %1307 = vmatpush1.msra.mxu0 %v1306
  %1308 = vmatprep.subr.mxu0 0.0
  %v1309 = vand.u32 %v702, 4294901760
  %1310 = vmatpush1.msra.mxu0 %v1309
  %1311 = vmatprep.subr.mxu0 0.0
  %v1312 = vand.u32 %v701, 4294901760
  %1313 = vmatpush1.msra.mxu0 %v1312
  %1314 = vmatprep.subr.mxu0 0.0
  %v1315 = vand.u32 %v700, 4294901760
  %1316 = vmatpush1.msra.mxu0 %v1315
  %1317 = vmatprep.subr.mxu0 0.0
  %v1318 = vand.u32 %v699, 4294901760
  %1319 = vmatpush1.msra.mxu0 %v1318
  %1320 = vmatprep.subr.mxu0 0.0
  %v1321 = vand.u32 %v698, 4294901760
  %1322 = vmatpush1.msra.mxu0 %v1321
  %1323 = vmatprep.subr.mxu0 0.0
  %1324 = vmatpush2.msra.mxu0 0.0
  %1325 = vmatprep.subr.mxu0 0.0
  %1326 = vmatpush2.msra.mxu0 0.0
  %1327 = vmatprep.subr.mxu0 0.0
  %1328 = vmatpush2.msra.mxu0 0.0
  %1329 = vmatprep.subr.mxu0 0.0
  %1330 = vmatpush2.msra.mxu0 0.0
  %1331 = vmatprep.subr.mxu0 0.0
  %1332 = vmatpush2.msra.mxu0 0.0
  %1333 = vmatprep.subr.mxu0 0.0
  %1334 = vmatpush2.msra.mxu0 0.0
  %1335 = vmatprep.subr.mxu0 0.0
  %1336 = vmatpush2.msra.mxu0 0.0
  %1337 = vmatprep.subr.mxu0 0.0
  %1338 = vmatpush2.msra.mxu0 0.0
  %1339 = vmatprep.subr.mxu0 0.0
  %1340 = vmatpush2.msra.mxu0 0.0
  %1341 = vmatprep.subr.mxu0 0.0
  %1342 = vmatpush2.msra.mxu0 0.0
  %1343 = vmatprep.subr.mxu0 0.0
  %1344 = vmatpush2.msra.mxu0 0.0
  %1345 = vmatprep.subr.mxu0 0.0
  %1346 = vmatpush2.msra.mxu0 0.0
  %1347 = vmatprep.subr.mxu0 0.0
  %1348 = vmatpush2.msra.mxu0 0.0
  %1349 = vmatprep.subr.mxu0 0.0
  %1350 = vmatpush2.msra.mxu0 0.0
  %1351 = vmatprep.subr.mxu0 0.0
  %1352 = vmatpush2.msra.mxu0 0.0
  %1353 = vmatprep.subr.mxu0 0.0
  %1354 = vmatpush2.msra.mxu0 0.0
  %1355 = vmatprep.mubr.f32.mxu0 0.0
  %v1356 = vand.u32 %v697, 4294901760
  %1357 = vmatmul.mubr.f32.gmra.mxu0 %v1356
  %v1358 = vpop.f32.mrf.mxu0
  %v1359 = vadd.f32 %v1272, %v1358
  %v1360 = vpop.f32.mrf.mxu0
  %1361 = vdwg.mxu0
  %v1362 = vmax.f32 %v1359, 0.0
  %v1363 = vld [vmem:[%s5] sm:$0xff]
  %v1364 = vld [vmem:[%s5 + $0x8] sm:$0xff]
  %v1365 = vld [vmem:[%s5 + $0x10] sm:$0xff]
  %v1366 = vld [vmem:[%s5 + $0x18] sm:$0xff]
  %v1367 = vld [vmem:[%s5 + $0x20] sm:$0xff]
  %v1368 = vld [vmem:[%s5 + $0x28] sm:$0xff]
  %v1369 = vld [vmem:[%s5 + $0x30] sm:$0xff]
  %v1370 = vld [vmem:[%s5 + $0x38] sm:$0xff]
  %v1371 = vld [vmem:[%s5 + $0x40] sm:$0xff]
  %v1372 = vld [vmem:[%s5 + $0x48] sm:$0xff]
  %v1373 = vld [vmem:[%s5 + $0x50] sm:$0xff]
  %v1374 = vld [vmem:[%s5 + $0x58] sm:$0xff]
  %v1375 = vld [vmem:[%s5 + $0x60] sm:$0xff]
  %v1376 = vld [vmem:[%s5 + $0x68] sm:$0xff]
  %v1377 = vld [vmem:[%s5 + $0x70] sm:$0xff]
  %v1378 = vld [vmem:[%s5 + $0x78] sm:$0xff]
  %v1379 = vld [vmem:[%s6] sm:$0x1]
  %v1381 = vlaneseq
  %v1382 = vshrl.u32 %v1381, 7
  %v1383 = vsub.s32 0, %v1382
  %v1384 = vrot.slane %v1379, %v1383
  %1386 = vmatprep.subr.mxu0 0.0
  %v1387 = vand.u32 %v1378, 4294901760
  %1388 = vmatpush1.msra.mxu0 %v1387
  %1389 = vmatprep.subr.mxu0 0.0
  %v1390 = vand.u32 %v1377, 4294901760
  %1391 = vmatpush1.msra.mxu0 %v1390
  %1392 = vmatprep.subr.mxu0 0.0
  %v1393 = vand.u32 %v1376, 4294901760
  %1394 = vmatpush1.msra.mxu0 %v1393
  %1395 = vmatprep.subr.mxu0 0.0
  %v1396 = vand.u32 %v1375, 4294901760
  %1397 = vmatpush1.msra.mxu0 %v1396
  %1398 = vmatprep.subr.mxu0 0.0
  %v1399 = vand.u32 %v1374, 4294901760
  %1400 = vmatpush1.msra.mxu0 %v1399
  %1401 = vmatprep.subr.mxu0 0.0
  %v1402 = vand.u32 %v1373, 4294901760
  %1403 = vmatpush1.msra.mxu0 %v1402
  %1404 = vmatprep.subr.mxu0 0.0
  %v1405 = vand.u32 %v1372, 4294901760
  %1406 = vmatpush1.msra.mxu0 %v1405
  %1407 = vmatprep.subr.mxu0 0.0
  %v1408 = vand.u32 %v1371, 4294901760
  %1409 = vmatpush1.msra.mxu0 %v1408
  %1410 = vmatprep.subr.mxu0 0.0
  %v1411 = vand.u32 %v1370, 4294901760
  %1412 = vmatpush1.msra.mxu0 %v1411
  %1413 = vmatprep.subr.mxu0 0.0
  %v1414 = vand.u32 %v1369, 4294901760
  %1415 = vmatpush1.msra.mxu0 %v1414
  %1416 = vmatprep.subr.mxu0 0.0
  %v1417 = vand.u32 %v1368, 4294901760
  %1418 = vmatpush1.msra.mxu0 %v1417
  %1419 = vmatprep.subr.mxu0 0.0
  %v1420 = vand.u32 %v1367, 4294901760
  %1421 = vmatpush1.msra.mxu0 %v1420
  %1422 = vmatprep.subr.mxu0 0.0
  %v1423 = vand.u32 %v1366, 4294901760
  %1424 = vmatpush1.msra.mxu0 %v1423
  %1425 = vmatprep.subr.mxu0 0.0
  %v1426 = vand.u32 %v1365, 4294901760
  %1427 = vmatpush1.msra.mxu0 %v1426
  %1428 = vmatprep.subr.mxu0 0.0
  %v1429 = vand.u32 %v1364, 4294901760
  %1430 = vmatpush1.msra.mxu0 %v1429
  %1431 = vmatprep.subr.mxu0 0.0
  %v1432 = vand.u32 %v1363, 4294901760
  %1433 = vmatpush1.msra.mxu0 %v1432
  %1434 = vmatprep.subr.mxu0 0.0
  %1435 = vmatpush2.msra.mxu0 0.0
  %1436 = vmatprep.subr.mxu0 0.0
  %1437 = vmatpush2.msra.mxu0 0.0
  %1438 = vmatprep.subr.mxu0 0.0
  %1439 = vmatpush2.msra.mxu0 0.0
  %1440 = vmatprep.subr.mxu0 0.0
  %1441 = vmatpush2.msra.mxu0 0.0
  %1442 = vmatprep.subr.mxu0 0.0
  %1443 = vmatpush2.msra.mxu0 0.0
  %1444 = vmatprep.subr.mxu0 0.0
  %1445 = vmatpush2.msra.mxu0 0.0
  %1446 = vmatprep.subr.mxu0 0.0
  %1447 = vmatpush2.msra.mxu0 0.0
  %1448 = vmatprep.subr.mxu0 0.0
  %1449 = vmatpush2.msra.mxu0 0.0
  %1450 = vmatprep.subr.mxu0 0.0
  %1451 = vmatpush2.msra.mxu0 0.0
  %1452 = vmatprep.subr.mxu0 0.0
  %1453 = vmatpush2.msra.mxu0 0.0
  %1454 = vmatprep.subr.mxu0 0.0
  %1455 = vmatpush2.msra.mxu0 0.0
  %1456 = vmatprep.subr.mxu0 0.0
  %1457 = vmatpush2.msra.mxu0 0.0
  %1458 = vmatprep.subr.mxu0 0.0
  %1459 = vmatpush2.msra.mxu0 0.0
  %1460 = vmatprep.subr.mxu0 0.0
  %1461 = vmatpush2.msra.mxu0 0.0
  %1462 = vmatprep.subr.mxu0 0.0
  %1463 = vmatpush2.msra.mxu0 0.0
  %1464 = vmatprep.subr.mxu0 0.0
  %1465 = vmatpush2.msra.mxu0 0.0
  %1466 = vmatprep.mubr.f32.mxu0 0.0
  %v1467 = vand.u32 %v1362, 4294901760
  %v1468 = vsub.f32 %v1362, %v1467
  %v1469 = vand.u32 %v1468, 4294901760
  %v1470 = vsub.f32 %v1468, %v1469
  %v1471 = vand.u32 %v1470, 4294901760
  %1472 = vmatmul.mubr.f32.gmra.mxu0 %v1471
  %v1473 = vpop.f32.mrf.mxu0
  %v1474 = vadd.f32 %v1384, %v1473
  %v1475 = vpop.f32.mrf.mxu0
  %1476 = vdwg.mxu0
  %1477 = vmatprep.subr.mxu0 0.0
  %v1478 = vand.u32 %v1378, 4294901760
  %v1479 = vsub.f32 %v1378, %v1478
  %v1480 = vand.u32 %v1479, 4294901760
  %v1481 = vsub.f32 %v1479, %v1480
  %v1482 = vand.u32 %v1481, 4294901760
  %1483 = vmatpush1.msra.mxu0 %v1482
  %1484 = vmatprep.subr.mxu0 0.0
  %v1485 = vand.u32 %v1377, 4294901760
  %v1486 = vsub.f32 %v1377, %v1485
  %v1487 = vand.u32 %v1486, 4294901760
  %v1488 = vsub.f32 %v1486, %v1487
  %v1489 = vand.u32 %v1488, 4294901760
  %1490 = vmatpush1.msra.mxu0 %v1489
  %1491 = vmatprep.subr.mxu0 0.0
  %v1492 = vand.u32 %v1376, 4294901760
  %v1493 = vsub.f32 %v1376, %v1492
  %v1494 = vand.u32 %v1493, 4294901760
  %v1495 = vsub.f32 %v1493, %v1494
  %v1496 = vand.u32 %v1495, 4294901760
  %1497 = vmatpush1.msra.mxu0 %v1496
  %1498 = vmatprep.subr.mxu0 0.0
  %v1499 = vand.u32 %v1375, 4294901760
  %v1500 = vsub.f32 %v1375, %v1499
  %v1501 = vand.u32 %v1500, 4294901760
  %v1502 = vsub.f32 %v1500, %v1501
  %v1503 = vand.u32 %v1502, 4294901760
  %1504 = vmatpush1.msra.mxu0 %v1503
  %1505 = vmatprep.subr.mxu0 0.0
  %v1506 = vand.u32 %v1374, 4294901760
  %v1507 = vsub.f32 %v1374, %v1506
  %v1508 = vand.u32 %v1507, 4294901760
  %v1509 = vsub.f32 %v1507, %v1508
  %v1510 = vand.u32 %v1509, 4294901760
  %1511 = vmatpush1.msra.mxu0 %v1510
  %1512 = vmatprep.subr.mxu0 0.0
  %v1513 = vand.u32 %v1373, 4294901760
  %v1514 = vsub.f32 %v1373, %v1513
  %v1515 = vand.u32 %v1514, 4294901760
  %v1516 = vsub.f32 %v1514, %v1515
  %v1517 = vand.u32 %v1516, 4294901760
  %1518 = vmatpush1.msra.mxu0 %v1517
  %1519 = vmatprep.subr.mxu0 0.0
  %v1520 = vand.u32 %v1372, 4294901760
  %v1521 = vsub.f32 %v1372, %v1520
  %v1522 = vand.u32 %v1521, 4294901760
  %v1523 = vsub.f32 %v1521, %v1522
  %v1524 = vand.u32 %v1523, 4294901760
  %1525 = vmatpush1.msra.mxu0 %v1524
  %1526 = vmatprep.subr.mxu0 0.0
  %v1527 = vand.u32 %v1371, 4294901760
  %v1528 = vsub.f32 %v1371, %v1527
  %v1529 = vand.u32 %v1528, 4294901760
  %v1530 = vsub.f32 %v1528, %v1529
  %v1531 = vand.u32 %v1530, 4294901760
  %1532 = vmatpush1.msra.mxu0 %v1531
  %1533 = vmatprep.subr.mxu0 0.0
  %v1534 = vand.u32 %v1370, 4294901760
  %v1535 = vsub.f32 %v1370, %v1534
  %v1536 = vand.u32 %v1535, 4294901760
  %v1537 = vsub.f32 %v1535, %v1536
  %v1538 = vand.u32 %v1537, 4294901760
  %1539 = vmatpush1.msra.mxu0 %v1538
  %1540 = vmatprep.subr.mxu0 0.0
  %v1541 = vand.u32 %v1369, 4294901760
  %v1542 = vsub.f32 %v1369, %v1541
  %v1543 = vand.u32 %v1542, 4294901760
  %v1544 = vsub.f32 %v1542, %v1543
  %v1545 = vand.u32 %v1544, 4294901760
  %1546 = vmatpush1.msra.mxu0 %v1545
  %1547 = vmatprep.subr.mxu0 0.0
  %v1548 = vand.u32 %v1368, 4294901760
  %v1549 = vsub.f32 %v1368, %v1548
  %v1550 = vand.u32 %v1549, 4294901760
  %v1551 = vsub.f32 %v1549, %v1550
  %v1552 = vand.u32 %v1551, 4294901760
  %1553 = vmatpush1.msra.mxu0 %v1552
  %1554 = vmatprep.subr.mxu0 0.0
  %v1555 = vand.u32 %v1367, 4294901760
  %v1556 = vsub.f32 %v1367, %v1555
  %v1557 = vand.u32 %v1556, 4294901760
  %v1558 = vsub.f32 %v1556, %v1557
  %v1559 = vand.u32 %v1558, 4294901760
  %1560 = vmatpush1.msra.mxu0 %v1559
  %1561 = vmatprep.subr.mxu0 0.0
  %v1562 = vand.u32 %v1366, 4294901760
  %v1563 = vsub.f32 %v1366, %v1562
  %v1564 = vand.u32 %v1563, 4294901760
  %v1565 = vsub.f32 %v1563, %v1564
  %v1566 = vand.u32 %v1565, 4294901760
  %1567 = vmatpush1.msra.mxu0 %v1566
  %1568 = vmatprep.subr.mxu0 0.0
  %v1569 = vand.u32 %v1365, 4294901760
  %v1570 = vsub.f32 %v1365, %v1569
  %v1571 = vand.u32 %v1570, 4294901760
  %v1572 = vsub.f32 %v1570, %v1571
  %v1573 = vand.u32 %v1572, 4294901760
  %1574 = vmatpush1.msra.mxu0 %v1573
  %1575 = vmatprep.subr.mxu0 0.0
  %v1576 = vand.u32 %v1364, 4294901760
  %v1577 = vsub.f32 %v1364, %v1576
  %v1578 = vand.u32 %v1577, 4294901760
  %v1579 = vsub.f32 %v1577, %v1578
  %v1580 = vand.u32 %v1579, 4294901760
  %1581 = vmatpush1.msra.mxu0 %v1580
  %1582 = vmatprep.subr.mxu0 0.0
  %v1583 = vand.u32 %v1363, 4294901760
  %v1584 = vsub.f32 %v1363, %v1583
  %v1585 = vand.u32 %v1584, 4294901760
  %v1586 = vsub.f32 %v1584, %v1585
  %v1587 = vand.u32 %v1586, 4294901760
  %1588 = vmatpush1.msra.mxu0 %v1587
  %1589 = vmatprep.subr.mxu0 0.0
  %1590 = vmatpush2.msra.mxu0 0.0
  %1591 = vmatprep.subr.mxu0 0.0
  %1592 = vmatpush2.msra.mxu0 0.0
  %1593 = vmatprep.subr.mxu0 0.0
  %1594 = vmatpush2.msra.mxu0 0.0
  %1595 = vmatprep.subr.mxu0 0.0
  %1596 = vmatpush2.msra.mxu0 0.0
  %1597 = vmatprep.subr.mxu0 0.0
  %1598 = vmatpush2.msra.mxu0 0.0
  %1599 = vmatprep.subr.mxu0 0.0
  %1600 = vmatpush2.msra.mxu0 0.0
  %1601 = vmatprep.subr.mxu0 0.0
  %1602 = vmatpush2.msra.mxu0 0.0
  %1603 = vmatprep.subr.mxu0 0.0
  %1604 = vmatpush2.msra.mxu0 0.0
  %1605 = vmatprep.subr.mxu0 0.0
  %1606 = vmatpush2.msra.mxu0 0.0
  %1607 = vmatprep.subr.mxu0 0.0
  %1608 = vmatpush2.msra.mxu0 0.0
  %1609 = vmatprep.subr.mxu0 0.0
  %1610 = vmatpush2.msra.mxu0 0.0
  %1611 = vmatprep.subr.mxu0 0.0
  %1612 = vmatpush2.msra.mxu0 0.0
  %1613 = vmatprep.subr.mxu0 0.0
  %1614 = vmatpush2.msra.mxu0 0.0
  %1615 = vmatprep.subr.mxu0 0.0
  %1616 = vmatpush2.msra.mxu0 0.0
  %1617 = vmatprep.subr.mxu0 0.0
  %1618 = vmatpush2.msra.mxu0 0.0
  %1619 = vmatprep.subr.mxu0 0.0
  %1620 = vmatpush2.msra.mxu0 0.0
  %1621 = vmatprep.mubr.f32.mxu0 0.0
  %v1622 = vand.u32 %v1362, 4294901760
  %1623 = vmatmul.mubr.f32.gmra.mxu0 %v1622
  %v1624 = vpop.f32.mrf.mxu0
  %v1625 = vadd.f32 %v1474, %v1624
  %v1626 = vpop.f32.mrf.mxu0
  %1627 = vdwg.mxu0
  %1628 = vmatprep.subr.mxu0 0.0
  %v1629 = vand.u32 %v1378, 4294901760
  %v1630 = vsub.f32 %v1378, %v1629
  %1631 = vmatpush1.msra.mxu0 %v1630
  %1632 = vmatprep.subr.mxu0 0.0
  %v1633 = vand.u32 %v1377, 4294901760
  %v1634 = vsub.f32 %v1377, %v1633
  %1635 = vmatpush1.msra.mxu0 %v1634
  %1636 = vmatprep.subr.mxu0 0.0
  %v1637 = vand.u32 %v1376, 4294901760
  %v1638 = vsub.f32 %v1376, %v1637
  %1639 = vmatpush1.msra.mxu0 %v1638
  %1640 = vmatprep.subr.mxu0 0.0
  %v1641 = vand.u32 %v1375, 4294901760
  %v1642 = vsub.f32 %v1375, %v1641
  %1643 = vmatpush1.msra.mxu0 %v1642
  %1644 = vmatprep.subr.mxu0 0.0
  %v1645 = vand.u32 %v1374, 4294901760
  %v1646 = vsub.f32 %v1374, %v1645
  %1647 = vmatpush1.msra.mxu0 %v1646
  %1648 = vmatprep.subr.mxu0 0.0
  %v1649 = vand.u32 %v1373, 4294901760
  %v1650 = vsub.f32 %v1373, %v1649
  %1651 = vmatpush1.msra.mxu0 %v1650
  %1652 = vmatprep.subr.mxu0 0.0
  %v1653 = vand.u32 %v1372, 4294901760
  %v1654 = vsub.f32 %v1372, %v1653
  %1655 = vmatpush1.msra.mxu0 %v1654
  %1656 = vmatprep.subr.mxu0 0.0
  %v1657 = vand.u32 %v1371, 4294901760
  %v1658 = vsub.f32 %v1371, %v1657
  %1659 = vmatpush1.msra.mxu0 %v1658
  %1660 = vmatprep.subr.mxu0 0.0
  %v1661 = vand.u32 %v1370, 4294901760
  %v1662 = vsub.f32 %v1370, %v1661
  %1663 = vmatpush1.msra.mxu0 %v1662
  %1664 = vmatprep.subr.mxu0 0.0
  %v1665 = vand.u32 %v1369, 4294901760
  %v1666 = vsub.f32 %v1369, %v1665
  %1667 = vmatpush1.msra.mxu0 %v1666
  %1668 = vmatprep.subr.mxu0 0.0
  %v1669 = vand.u32 %v1368, 4294901760
  %v1670 = vsub.f32 %v1368, %v1669
  %1671 = vmatpush1.msra.mxu0 %v1670
  %1672 = vmatprep.subr.mxu0 0.0
  %v1673 = vand.u32 %v1367, 4294901760
  %v1674 = vsub.f32 %v1367, %v1673
  %1675 = vmatpush1.msra.mxu0 %v1674
  %1676 = vmatprep.subr.mxu0 0.0
  %v1677 = vand.u32 %v1366, 4294901760
  %v1678 = vsub.f32 %v1366, %v1677
  %1679 = vmatpush1.msra.mxu0 %v1678
  %1680 = vmatprep.subr.mxu0 0.0
  %v1681 = vand.u32 %v1365, 4294901760
  %v1682 = vsub.f32 %v1365, %v1681
  %1683 = vmatpush1.msra.mxu0 %v1682
  %1684 = vmatprep.subr.mxu0 0.0
  %v1685 = vand.u32 %v1364, 4294901760
  %v1686 = vsub.f32 %v1364, %v1685
  %1687 = vmatpush1.msra.mxu0 %v1686
  %1688 = vmatprep.subr.mxu0 0.0
  %v1689 = vand.u32 %v1363, 4294901760
  %v1690 = vsub.f32 %v1363, %v1689
  %1691 = vmatpush1.msra.mxu0 %v1690
  %1692 = vmatprep.subr.mxu0 0.0
  %1693 = vmatpush2.msra.mxu0 0.0
  %1694 = vmatprep.subr.mxu0 0.0
  %1695 = vmatpush2.msra.mxu0 0.0
  %1696 = vmatprep.subr.mxu0 0.0
  %1697 = vmatpush2.msra.mxu0 0.0
  %1698 = vmatprep.subr.mxu0 0.0
  %1699 = vmatpush2.msra.mxu0 0.0
  %1700 = vmatprep.subr.mxu0 0.0
  %1701 = vmatpush2.msra.mxu0 0.0
  %1702 = vmatprep.subr.mxu0 0.0
  %1703 = vmatpush2.msra.mxu0 0.0
  %1704 = vmatprep.subr.mxu0 0.0
  %1705 = vmatpush2.msra.mxu0 0.0
  %1706 = vmatprep.subr.mxu0 0.0
  %1707 = vmatpush2.msra.mxu0 0.0
  %1708 = vmatprep.subr.mxu0 0.0
  %1709 = vmatpush2.msra.mxu0 0.0
  %1710 = vmatprep.subr.mxu0 0.0
  %1711 = vmatpush2.msra.mxu0 0.0
  %1712 = vmatprep.subr.mxu0 0.0
  %1713 = vmatpush2.msra.mxu0 0.0
  %1714 = vmatprep.subr.mxu0 0.0
  %1715 = vmatpush2.msra.mxu0 0.0
  %1716 = vmatprep.subr.mxu0 0.0
  %1717 = vmatpush2.msra.mxu0 0.0
  %1718 = vmatprep.subr.mxu0 0.0
  %1719 = vmatpush2.msra.mxu0 0.0
  %1720 = vmatprep.subr.mxu0 0.0
  %1721 = vmatpush2.msra.mxu0 0.0
  %1722 = vmatprep.subr.mxu0 0.0
  %1723 = vmatpush2.msra.mxu0 0.0
  %1724 = vmatprep.mubr.f32.mxu0 0.0
  %v1725 = vand.u32 %v1362, 4294901760
  %v1726 = vsub.f32 %v1362, %v1725
  %1727 = vmatmul.mubr.f32.gmra.mxu0 %v1726
  %v1728 = vpop.f32.mrf.mxu0
  %v1729 = vadd.f32 %v1625, %v1728
  %v1730 = vpop.f32.mrf.mxu0
  %1731 = vdwg.mxu0
  %1732 = vmatprep.subr.mxu0 0.0
  %v1733 = vand.u32 %v1378, 4294901760
  %1734 = vmatpush1.msra.mxu0 %v1733
  %1735 = vmatprep.subr.mxu0 0.0
  %v1736 = vand.u32 %v1377, 4294901760
  %1737 = vmatpush1.msra.mxu0 %v1736
  %1738 = vmatprep.subr.mxu0 0.0
  %v1739 = vand.u32 %v1376, 4294901760
  %1740 = vmatpush1.msra.mxu0 %v1739
  %1741 = vmatprep.subr.mxu0 0.0
  %v1742 = vand.u32 %v1375, 4294901760
  %1743 = vmatpush1.msra.mxu0 %v1742
  %1744 = vmatprep.subr.mxu0 0.0
  %v1745 = vand.u32 %v1374, 4294901760
  %1746 = vmatpush1.msra.mxu0 %v1745
  %1747 = vmatprep.subr.mxu0 0.0
  %v1748 = vand.u32 %v1373, 4294901760
  %1749 = vmatpush1.msra.mxu0 %v1748
  %1750 = vmatprep.subr.mxu0 0.0
  %v1751 = vand.u32 %v1372, 4294901760
  %1752 = vmatpush1.msra.mxu0 %v1751
  %1753 = vmatprep.subr.mxu0 0.0
  %v1754 = vand.u32 %v1371, 4294901760
  %1755 = vmatpush1.msra.mxu0 %v1754
  %1756 = vmatprep.subr.mxu0 0.0
  %v1757 = vand.u32 %v1370, 4294901760
  %1758 = vmatpush1.msra.mxu0 %v1757
  %1759 = vmatprep.subr.mxu0 0.0
  %v1760 = vand.u32 %v1369, 4294901760
  %1761 = vmatpush1.msra.mxu0 %v1760
  %1762 = vmatprep.subr.mxu0 0.0
  %v1763 = vand.u32 %v1368, 4294901760
  %1764 = vmatpush1.msra.mxu0 %v1763
  %1765 = vmatprep.subr.mxu0 0.0
  %v1766 = vand.u32 %v1367, 4294901760
  %1767 = vmatpush1.msra.mxu0 %v1766
  %1768 = vmatprep.subr.mxu0 0.0
  %v1769 = vand.u32 %v1366, 4294901760
  %1770 = vmatpush1.msra.mxu0 %v1769
  %1771 = vmatprep.subr.mxu0 0.0
  %v1772 = vand.u32 %v1365, 4294901760
  %1773 = vmatpush1.msra.mxu0 %v1772
  %1774 = vmatprep.subr.mxu0 0.0
  %v1775 = vand.u32 %v1364, 4294901760
  %1776 = vmatpush1.msra.mxu0 %v1775
  %1777 = vmatprep.subr.mxu0 0.0
  %v1778 = vand.u32 %v1363, 4294901760
  %1779 = vmatpush1.msra.mxu0 %v1778
  %1780 = vmatprep.subr.mxu0 0.0
  %1781 = vmatpush2.msra.mxu0 0.0
  %1782 = vmatprep.subr.mxu0 0.0
  %1783 = vmatpush2.msra.mxu0 0.0
  %1784 = vmatprep.subr.mxu0 0.0
  %1785 = vmatpush2.msra.mxu0 0.0
  %1786 = vmatprep.subr.mxu0 0.0
  %1787 = vmatpush2.msra.mxu0 0.0
  %1788 = vmatprep.subr.mxu0 0.0
  %1789 = vmatpush2.msra.mxu0 0.0
  %1790 = vmatprep.subr.mxu0 0.0
  %1791 = vmatpush2.msra.mxu0 0.0
  %1792 = vmatprep.subr.mxu0 0.0
  %1793 = vmatpush2.msra.mxu0 0.0
  %1794 = vmatprep.subr.mxu0 0.0
  %1795 = vmatpush2.msra.mxu0 0.0
  %1796 = vmatprep.subr.mxu0 0.0
  %1797 = vmatpush2.msra.mxu0 0.0
  %1798 = vmatprep.subr.mxu0 0.0
  %1799 = vmatpush2.msra.mxu0 0.0
  %1800 = vmatprep.subr.mxu0 0.0
  %1801 = vmatpush2.msra.mxu0 0.0
  %1802 = vmatprep.subr.mxu0 0.0
  %1803 = vmatpush2.msra.mxu0 0.0
  %1804 = vmatprep.subr.mxu0 0.0
  %1805 = vmatpush2.msra.mxu0 0.0
  %1806 = vmatprep.subr.mxu0 0.0
  %1807 = vmatpush2.msra.mxu0 0.0
  %1808 = vmatprep.subr.mxu0 0.0
  %1809 = vmatpush2.msra.mxu0 0.0
  %1810 = vmatprep.subr.mxu0 0.0
  %1811 = vmatpush2.msra.mxu0 0.0
  %1812 = vmatprep.mubr.f32.mxu0 0.0
  %v1813 = vand.u32 %v1362, 4294901760
  %v1814 = vsub.f32 %v1362, %v1813
  %v1815 = vand.u32 %v1814, 4294901760
  %1816 = vmatmul.mubr.f32.gmra.mxu0 %v1815
  %v1817 = vpop.f32.mrf.mxu0
  %v1818 = vadd.f32 %v1729, %v1817
  %v1819 = vpop.f32.mrf.mxu0
  %1820 = vdwg.mxu0
  %1821 = vmatprep.subr.mxu0 0.0
  %v1822 = vand.u32 %v1378, 4294901760
  %v1823 = vsub.f32 %v1378, %v1822
  %v1824 = vand.u32 %v1823, 4294901760
  %1825 = vmatpush1.msra.mxu0 %v1824
  %1826 = vmatprep.subr.mxu0 0.0
  %v1827 = vand.u32 %v1377, 4294901760
  %v1828 = vsub.f32 %v1377, %v1827
  %v1829 = vand.u32 %v1828, 4294901760
  %1830 = vmatpush1.msra.mxu0 %v1829
  %1831 = vmatprep.subr.mxu0 0.0
  %v1832 = vand.u32 %v1376, 4294901760
  %v1833 = vsub.f32 %v1376, %v1832
  %v1834 = vand.u32 %v1833, 4294901760
  %1835 = vmatpush1.msra.mxu0 %v1834
  %1836 = vmatprep.subr.mxu0 0.0
  %v1837 = vand.u32 %v1375, 4294901760
  %v1838 = vsub.f32 %v1375, %v1837
  %v1839 = vand.u32 %v1838, 4294901760
  %1840 = vmatpush1.msra.mxu0 %v1839
  %1841 = vmatprep.subr.mxu0 0.0
  %v1842 = vand.u32 %v1374, 4294901760
  %v1843 = vsub.f32 %v1374, %v1842
  %v1844 = vand.u32 %v1843, 4294901760
  %1845 = vmatpush1.msra.mxu0 %v1844
  %1846 = vmatprep.subr.mxu0 0.0
  %v1847 = vand.u32 %v1373, 4294901760
  %v1848 = vsub.f32 %v1373, %v1847
  %v1849 = vand.u32 %v1848, 4294901760
  %1850 = vmatpush1.msra.mxu0 %v1849
  %1851 = vmatprep.subr.mxu0 0.0
  %v1852 = vand.u32 %v1372, 4294901760
  %v1853 = vsub.f32 %v1372, %v1852
  %v1854 = vand.u32 %v1853, 4294901760
  %1855 = vmatpush1.msra.mxu0 %v1854
  %1856 = vmatprep.subr.mxu0 0.0
  %v1857 = vand.u32 %v1371, 4294901760
  %v1858 = vsub.f32 %v1371, %v1857
  %v1859 = vand.u32 %v1858, 4294901760
  %1860 = vmatpush1.msra.mxu0 %v1859
  %1861 = vmatprep.subr.mxu0 0.0
  %v1862 = vand.u32 %v1370, 4294901760
  %v1863 = vsub.f32 %v1370, %v1862
  %v1864 = vand.u32 %v1863, 4294901760
  %1865 = vmatpush1.msra.mxu0 %v1864
  %1866 = vmatprep.subr.mxu0 0.0
  %v1867 = vand.u32 %v1369, 4294901760
  %v1868 = vsub.f32 %v1369, %v1867
  %v1869 = vand.u32 %v1868, 4294901760
  %1870 = vmatpush1.msra.mxu0 %v1869
  %1871 = vmatprep.subr.mxu0 0.0
  %v1872 = vand.u32 %v1368, 4294901760
  %v1873 = vsub.f32 %v1368, %v1872
  %v1874 = vand.u32 %v1873, 4294901760
  %1875 = vmatpush1.msra.mxu0 %v1874
  %1876 = vmatprep.subr.mxu0 0.0
  %v1877 = vand.u32 %v1367, 4294901760
  %v1878 = vsub.f32 %v1367, %v1877
  %v1879 = vand.u32 %v1878, 4294901760
  %1880 = vmatpush1.msra.mxu0 %v1879
  %1881 = vmatprep.subr.mxu0 0.0
  %v1882 = vand.u32 %v1366, 4294901760
  %v1883 = vsub.f32 %v1366, %v1882
  %v1884 = vand.u32 %v1883, 4294901760
  %1885 = vmatpush1.msra.mxu0 %v1884
  %1886 = vmatprep.subr.mxu0 0.0
  %v1887 = vand.u32 %v1365, 4294901760
  %v1888 = vsub.f32 %v1365, %v1887
  %v1889 = vand.u32 %v1888, 4294901760
  %1890 = vmatpush1.msra.mxu0 %v1889
  %1891 = vmatprep.subr.mxu0 0.0
  %v1892 = vand.u32 %v1364, 4294901760
  %v1893 = vsub.f32 %v1364, %v1892
  %v1894 = vand.u32 %v1893, 4294901760
  %1895 = vmatpush1.msra.mxu0 %v1894
  %1896 = vmatprep.subr.mxu0 0.0
  %v1897 = vand.u32 %v1363, 4294901760
  %v1898 = vsub.f32 %v1363, %v1897
  %v1899 = vand.u32 %v1898, 4294901760
  %1900 = vmatpush1.msra.mxu0 %v1899
  %1901 = vmatprep.subr.mxu0 0.0
  %1902 = vmatpush2.msra.mxu0 0.0
  %1903 = vmatprep.subr.mxu0 0.0
  %1904 = vmatpush2.msra.mxu0 0.0
  %1905 = vmatprep.subr.mxu0 0.0
  %1906 = vmatpush2.msra.mxu0 0.0
  %1907 = vmatprep.subr.mxu0 0.0
  %1908 = vmatpush2.msra.mxu0 0.0
  %1909 = vmatprep.subr.mxu0 0.0
  %1910 = vmatpush2.msra.mxu0 0.0
  %1911 = vmatprep.subr.mxu0 0.0
  %1912 = vmatpush2.msra.mxu0 0.0
  %1913 = vmatprep.subr.mxu0 0.0
  %1914 = vmatpush2.msra.mxu0 0.0
  %1915 = vmatprep.subr.mxu0 0.0
  %1916 = vmatpush2.msra.mxu0 0.0
  %1917 = vmatprep.subr.mxu0 0.0
  %1918 = vmatpush2.msra.mxu0 0.0
  %1919 = vmatprep.subr.mxu0 0.0
  %1920 = vmatpush2.msra.mxu0 0.0
  %1921 = vmatprep.subr.mxu0 0.0
  %1922 = vmatpush2.msra.mxu0 0.0
  %1923 = vmatprep.subr.mxu0 0.0
  %1924 = vmatpush2.msra.mxu0 0.0
  %1925 = vmatprep.subr.mxu0 0.0
  %1926 = vmatpush2.msra.mxu0 0.0
  %1927 = vmatprep.subr.mxu0 0.0
  %1928 = vmatpush2.msra.mxu0 0.0
  %1929 = vmatprep.subr.mxu0 0.0
  %1930 = vmatpush2.msra.mxu0 0.0
  %1931 = vmatprep.subr.mxu0 0.0
  %1932 = vmatpush2.msra.mxu0 0.0
  %1933 = vmatprep.mubr.f32.mxu0 0.0
  %v1934 = vand.u32 %v1362, 4294901760
  %1935 = vmatmul.mubr.f32.gmra.mxu0 %v1934
  %v1936 = vpop.f32.mrf.mxu0
  %v1937 = vadd.f32 %v1818, %v1936
  %v1938 = vpop.f32.mrf.mxu0
  %1939 = vdwg.mxu0
  %1940 = vmatprep.subr.mxu0 0.0
  %v1941 = vand.u32 %v1378, 4294901760
  %1942 = vmatpush1.msra.mxu0 %v1941
  %1943 = vmatprep.subr.mxu0 0.0
  %v1944 = vand.u32 %v1377, 4294901760
  %1945 = vmatpush1.msra.mxu0 %v1944
  %1946 = vmatprep.subr.mxu0 0.0
  %v1947 = vand.u32 %v1376, 4294901760
  %1948 = vmatpush1.msra.mxu0 %v1947
  %1949 = vmatprep.subr.mxu0 0.0
  %v1950 = vand.u32 %v1375, 4294901760
  %1951 = vmatpush1.msra.mxu0 %v1950
  %1952 = vmatprep.subr.mxu0 0.0
  %v1953 = vand.u32 %v1374, 4294901760
  %1954 = vmatpush1.msra.mxu0 %v1953
  %1955 = vmatprep.subr.mxu0 0.0
  %v1956 = vand.u32 %v1373, 4294901760
  %1957 = vmatpush1.msra.mxu0 %v1956
  %1958 = vmatprep.subr.mxu0 0.0
  %v1959 = vand.u32 %v1372, 4294901760
  %1960 = vmatpush1.msra.mxu0 %v1959
  %1961 = vmatprep.subr.mxu0 0.0
  %v1962 = vand.u32 %v1371, 4294901760
  %1963 = vmatpush1.msra.mxu0 %v1962
  %1964 = vmatprep.subr.mxu0 0.0
  %v1965 = vand.u32 %v1370, 4294901760
  %1966 = vmatpush1.msra.mxu0 %v1965
  %1967 = vmatprep.subr.mxu0 0.0
  %v1968 = vand.u32 %v1369, 4294901760
  %1969 = vmatpush1.msra.mxu0 %v1968
  %1970 = vmatprep.subr.mxu0 0.0
  %v1971 = vand.u32 %v1368, 4294901760
  %1972 = vmatpush1.msra.mxu0 %v1971
  %1973 = vmatprep.subr.mxu0 0.0
  %v1974 = vand.u32 %v1367, 4294901760
  %1975 = vmatpush1.msra.mxu0 %v1974
  %1976 = vmatprep.subr.mxu0 0.0
  %v1977 = vand.u32 %v1366, 4294901760
  %1978 = vmatpush1.msra.mxu0 %v1977
  %1979 = vmatprep.subr.mxu0 0.0
  %v1980 = vand.u32 %v1365, 4294901760
  %1981 = vmatpush1.msra.mxu0 %v1980
  %1982 = vmatprep.subr.mxu0 0.0
  %v1983 = vand.u32 %v1364, 4294901760
  %1984 = vmatpush1.msra.mxu0 %v1983
  %1985 = vmatprep.subr.mxu0 0.0
  %v1986 = vand.u32 %v1363, 4294901760
  %1987 = vmatpush1.msra.mxu0 %v1986
  %1988 = vmatprep.subr.mxu0 0.0
  %1989 = vmatpush2.msra.mxu0 0.0
  %1990 = vmatprep.subr.mxu0 0.0
  %1991 = vmatpush2.msra.mxu0 0.0
  %1992 = vmatprep.subr.mxu0 0.0
  %1993 = vmatpush2.msra.mxu0 0.0
  %1994 = vmatprep.subr.mxu0 0.0
  %1995 = vmatpush2.msra.mxu0 0.0
  %1996 = vmatprep.subr.mxu0 0.0
  %1997 = vmatpush2.msra.mxu0 0.0
  %1998 = vmatprep.subr.mxu0 0.0
  %1999 = vmatpush2.msra.mxu0 0.0
  %2000 = vmatprep.subr.mxu0 0.0
  %2001 = vmatpush2.msra.mxu0 0.0
  %2002 = vmatprep.subr.mxu0 0.0
  %2003 = vmatpush2.msra.mxu0 0.0
  %2004 = vmatprep.subr.mxu0 0.0
  %2005 = vmatpush2.msra.mxu0 0.0
  %2006 = vmatprep.subr.mxu0 0.0
  %2007 = vmatpush2.msra.mxu0 0.0
  %2008 = vmatprep.subr.mxu0 0.0
  %2009 = vmatpush2.msra.mxu0 0.0
  %2010 = vmatprep.subr.mxu0 0.0
  %2011 = vmatpush2.msra.mxu0 0.0
  %2012 = vmatprep.subr.mxu0 0.0
  %2013 = vmatpush2.msra.mxu0 0.0
  %2014 = vmatprep.subr.mxu0 0.0
  %2015 = vmatpush2.msra.mxu0 0.0
  %2016 = vmatprep.subr.mxu0 0.0
  %2017 = vmatpush2.msra.mxu0 0.0
  %2018 = vmatprep.subr.mxu0 0.0
  %2019 = vmatpush2.msra.mxu0 0.0
  %2020 = vmatprep.mubr.f32.mxu0 0.0
  %v2021 = vand.u32 %v1362, 4294901760
  %2022 = vmatmul.mubr.f32.gmra.mxu0 %v2021
  %v2023 = vpop.f32.mrf.mxu0
  %v2024 = vadd.f32 %v1937, %v2023
  %v2025 = vpop.f32.mrf.mxu0
  %2026 = vdwg.mxu0
  %v2027 = vmax.f32 %v2024, 0.0
  %v2028 = vld [vmem:[%s7] sm:$0xff]
  %v2029 = vld [vmem:[%s7 + $0x8] sm:$0xff]
  %v2030 = vld [vmem:[%s7 + $0x10] sm:$0xff]
  %v2031 = vld [vmem:[%s7 + $0x18] sm:$0xff]
  %v2032 = vld [vmem:[%s7 + $0x20] sm:$0xff]
  %v2033 = vld [vmem:[%s7 + $0x28] sm:$0xff]
  %v2034 = vld [vmem:[%s7 + $0x30] sm:$0xff]
  %v2035 = vld [vmem:[%s7 + $0x38] sm:$0xff]
  %v2036 = vld [vmem:[%s7 + $0x40] sm:$0xff]
  %v2037 = vld [vmem:[%s7 + $0x48] sm:$0xff]
  %v2038 = vld [vmem:[%s7 + $0x50] sm:$0xff]
  %v2039 = vld [vmem:[%s7 + $0x58] sm:$0xff]
  %v2040 = vld [vmem:[%s7 + $0x60] sm:$0xff]
  %v2041 = vld [vmem:[%s7 + $0x68] sm:$0xff]
  %v2042 = vld [vmem:[%s7 + $0x70] sm:$0xff]
  %v2043 = vld [vmem:[%s7 + $0x78] sm:$0xff]
  %v2044 = vld [vmem:[%s8] sm:$0x1]
  %v2046 = vlaneseq
  %v2047 = vshrl.u32 %v2046, 7
  %v2048 = vsub.s32 0, %v2047
  %v2049 = vrot.slane %v2044, %v2048
  %2051 = vmatprep.subr.mxu0 0.0
  %v2052 = vand.u32 %v2043, 4294901760
  %2053 = vmatpush1.msra.mxu0 %v2052
  %2054 = vmatprep.subr.mxu0 0.0
  %v2055 = vand.u32 %v2042, 4294901760
  %2056 = vmatpush1.msra.mxu0 %v2055
  %2057 = vmatprep.subr.mxu0 0.0
  %v2058 = vand.u32 %v2041, 4294901760
  %2059 = vmatpush1.msra.mxu0 %v2058
  %2060 = vmatprep.subr.mxu0 0.0
  %v2061 = vand.u32 %v2040, 4294901760
  %2062 = vmatpush1.msra.mxu0 %v2061
  %2063 = vmatprep.subr.mxu0 0.0
  %v2064 = vand.u32 %v2039, 4294901760
  %2065 = vmatpush1.msra.mxu0 %v2064
  %2066 = vmatprep.subr.mxu0 0.0
  %v2067 = vand.u32 %v2038, 4294901760
  %2068 = vmatpush1.msra.mxu0 %v2067
  %2069 = vmatprep.subr.mxu0 0.0
  %v2070 = vand.u32 %v2037, 4294901760
  %2071 = vmatpush1.msra.mxu0 %v2070
  %2072 = vmatprep.subr.mxu0 0.0
  %v2073 = vand.u32 %v2036, 4294901760
  %2074 = vmatpush1.msra.mxu0 %v2073
  %2075 = vmatprep.subr.mxu0 0.0
  %v2076 = vand.u32 %v2035, 4294901760
  %2077 = vmatpush1.msra.mxu0 %v2076
  %2078 = vmatprep.subr.mxu0 0.0
  %v2079 = vand.u32 %v2034, 4294901760
  %2080 = vmatpush1.msra.mxu0 %v2079
  %2081 = vmatprep.subr.mxu0 0.0
  %v2082 = vand.u32 %v2033, 4294901760
  %2083 = vmatpush1.msra.mxu0 %v2082
  %2084 = vmatprep.subr.mxu0 0.0
  %v2085 = vand.u32 %v2032, 4294901760
  %2086 = vmatpush1.msra.mxu0 %v2085
  %2087 = vmatprep.subr.mxu0 0.0
  %v2088 = vand.u32 %v2031, 4294901760
  %2089 = vmatpush1.msra.mxu0 %v2088
  %2090 = vmatprep.subr.mxu0 0.0
  %v2091 = vand.u32 %v2030, 4294901760
  %2092 = vmatpush1.msra.mxu0 %v2091
  %2093 = vmatprep.subr.mxu0 0.0
  %v2094 = vand.u32 %v2029, 4294901760
  %2095 = vmatpush1.msra.mxu0 %v2094
  %2096 = vmatprep.subr.mxu0 0.0
  %v2097 = vand.u32 %v2028, 4294901760
  %2098 = vmatpush1.msra.mxu0 %v2097
  %2099 = vmatprep.subr.mxu0 0.0
  %2100 = vmatpush2.msra.mxu0 0.0
  %2101 = vmatprep.subr.mxu0 0.0
  %2102 = vmatpush2.msra.mxu0 0.0
  %2103 = vmatprep.subr.mxu0 0.0
  %2104 = vmatpush2.msra.mxu0 0.0
  %2105 = vmatprep.subr.mxu0 0.0
  %2106 = vmatpush2.msra.mxu0 0.0
  %2107 = vmatprep.subr.mxu0 0.0
  %2108 = vmatpush2.msra.mxu0 0.0
  %2109 = vmatprep.subr.mxu0 0.0
  %2110 = vmatpush2.msra.mxu0 0.0
  %2111 = vmatprep.subr.mxu0 0.0
  %2112 = vmatpush2.msra.mxu0 0.0
  %2113 = vmatprep.subr.mxu0 0.0
  %2114 = vmatpush2.msra.mxu0 0.0
  %2115 = vmatprep.subr.mxu0 0.0
  %2116 = vmatpush2.msra.mxu0 0.0
  %2117 = vmatprep.subr.mxu0 0.0
  %2118 = vmatpush2.msra.mxu0 0.0
  %2119 = vmatprep.subr.mxu0 0.0
  %2120 = vmatpush2.msra.mxu0 0.0
  %2121 = vmatprep.subr.mxu0 0.0
  %2122 = vmatpush2.msra.mxu0 0.0
  %2123 = vmatprep.subr.mxu0 0.0
  %2124 = vmatpush2.msra.mxu0 0.0
  %2125 = vmatprep.subr.mxu0 0.0
  %2126 = vmatpush2.msra.mxu0 0.0
  %2127 = vmatprep.subr.mxu0 0.0
  %2128 = vmatpush2.msra.mxu0 0.0
  %2129 = vmatprep.subr.mxu0 0.0
  %2130 = vmatpush2.msra.mxu0 0.0
  %2131 = vmatprep.mubr.f32.mxu0 0.0
  %v2132 = vand.u32 %v2027, 4294901760
  %v2133 = vsub.f32 %v2027, %v2132
  %v2134 = vand.u32 %v2133, 4294901760
  %v2135 = vsub.f32 %v2133, %v2134
  %v2136 = vand.u32 %v2135, 4294901760
  %2137 = vmatmul.mubr.f32.gmra.mxu0 %v2136
  %v2138 = vpop.f32.mrf.mxu0
  %v2139 = vadd.f32 %v2049, %v2138
  %v2140 = vpop.f32.mrf.mxu0
  %2141 = vdwg.mxu0
  %2142 = vmatprep.subr.mxu0 0.0
  %v2143 = vand.u32 %v2043, 4294901760
  %v2144 = vsub.f32 %v2043, %v2143
  %v2145 = vand.u32 %v2144, 4294901760
  %v2146 = vsub.f32 %v2144, %v2145
  %v2147 = vand.u32 %v2146, 4294901760
  %2148 = vmatpush1.msra.mxu0 %v2147
  %2149 = vmatprep.subr.mxu0 0.0
  %v2150 = vand.u32 %v2042, 4294901760
  %v2151 = vsub.f32 %v2042, %v2150
  %v2152 = vand.u32 %v2151, 4294901760
  %v2153 = vsub.f32 %v2151, %v2152
  %v2154 = vand.u32 %v2153, 4294901760
  %2155 = vmatpush1.msra.mxu0 %v2154
  %2156 = vmatprep.subr.mxu0 0.0
  %v2157 = vand.u32 %v2041, 4294901760
  %v2158 = vsub.f32 %v2041, %v2157
  %v2159 = vand.u32 %v2158, 4294901760
  %v2160 = vsub.f32 %v2158, %v2159
  %v2161 = vand.u32 %v2160, 4294901760
  %2162 = vmatpush1.msra.mxu0 %v2161
  %2163 = vmatprep.subr.mxu0 0.0
  %v2164 = vand.u32 %v2040, 4294901760
  %v2165 = vsub.f32 %v2040, %v2164
  %v2166 = vand.u32 %v2165, 4294901760
  %v2167 = vsub.f32 %v2165, %v2166
  %v2168 = vand.u32 %v2167, 4294901760
  %2169 = vmatpush1.msra.mxu0 %v2168
  %2170 = vmatprep.subr.mxu0 0.0
  %v2171 = vand.u32 %v2039, 4294901760
  %v2172 = vsub.f32 %v2039, %v2171
  %v2173 = vand.u32 %v2172, 4294901760
  %v2174 = vsub.f32 %v2172, %v2173
  %v2175 = vand.u32 %v2174, 4294901760
  %2176 = vmatpush1.msra.mxu0 %v2175
  %2177 = vmatprep.subr.mxu0 0.0
  %v2178 = vand.u32 %v2038, 4294901760
  %v2179 = vsub.f32 %v2038, %v2178
  %v2180 = vand.u32 %v2179, 4294901760
  %v2181 = vsub.f32 %v2179, %v2180
  %v2182 = vand.u32 %v2181, 4294901760
  %2183 = vmatpush1.msra.mxu0 %v2182
  %2184 = vmatprep.subr.mxu0 0.0
  %v2185 = vand.u32 %v2037, 4294901760
  %v2186 = vsub.f32 %v2037, %v2185
  %v2187 = vand.u32 %v2186, 4294901760
  %v2188 = vsub.f32 %v2186, %v2187
  %v2189 = vand.u32 %v2188, 4294901760
  %2190 = vmatpush1.msra.mxu0 %v2189
  %2191 = vmatprep.subr.mxu0 0.0
  %v2192 = vand.u32 %v2036, 4294901760
  %v2193 = vsub.f32 %v2036, %v2192
  %v2194 = vand.u32 %v2193, 4294901760
  %v2195 = vsub.f32 %v2193, %v2194
  %v2196 = vand.u32 %v2195, 4294901760
  %2197 = vmatpush1.msra.mxu0 %v2196
  %2198 = vmatprep.subr.mxu0 0.0
  %v2199 = vand.u32 %v2035, 4294901760
  %v2200 = vsub.f32 %v2035, %v2199
  %v2201 = vand.u32 %v2200, 4294901760
  %v2202 = vsub.f32 %v2200, %v2201
  %v2203 = vand.u32 %v2202, 4294901760
  %2204 = vmatpush1.msra.mxu0 %v2203
  %2205 = vmatprep.subr.mxu0 0.0
  %v2206 = vand.u32 %v2034, 4294901760
  %v2207 = vsub.f32 %v2034, %v2206
  %v2208 = vand.u32 %v2207, 4294901760
  %v2209 = vsub.f32 %v2207, %v2208
  %v2210 = vand.u32 %v2209, 4294901760
  %2211 = vmatpush1.msra.mxu0 %v2210
  %2212 = vmatprep.subr.mxu0 0.0
  %v2213 = vand.u32 %v2033, 4294901760
  %v2214 = vsub.f32 %v2033, %v2213
  %v2215 = vand.u32 %v2214, 4294901760
  %v2216 = vsub.f32 %v2214, %v2215
  %v2217 = vand.u32 %v2216, 4294901760
  %2218 = vmatpush1.msra.mxu0 %v2217
  %2219 = vmatprep.subr.mxu0 0.0
  %v2220 = vand.u32 %v2032, 4294901760
  %v2221 = vsub.f32 %v2032, %v2220
  %v2222 = vand.u32 %v2221, 4294901760
  %v2223 = vsub.f32 %v2221, %v2222
  %v2224 = vand.u32 %v2223, 4294901760
  %2225 = vmatpush1.msra.mxu0 %v2224
  %2226 = vmatprep.subr.mxu0 0.0
  %v2227 = vand.u32 %v2031, 4294901760
  %v2228 = vsub.f32 %v2031, %v2227
  %v2229 = vand.u32 %v2228, 4294901760
  %v2230 = vsub.f32 %v2228, %v2229
  %v2231 = vand.u32 %v2230, 4294901760
  %2232 = vmatpush1.msra.mxu0 %v2231
  %2233 = vmatprep.subr.mxu0 0.0
  %v2234 = vand.u32 %v2030, 4294901760
  %v2235 = vsub.f32 %v2030, %v2234
  %v2236 = vand.u32 %v2235, 4294901760
  %v2237 = vsub.f32 %v2235, %v2236
  %v2238 = vand.u32 %v2237, 4294901760
  %2239 = vmatpush1.msra.mxu0 %v2238
  %2240 = vmatprep.subr.mxu0 0.0
  %v2241 = vand.u32 %v2029, 4294901760
  %v2242 = vsub.f32 %v2029, %v2241
  %v2243 = vand.u32 %v2242, 4294901760
  %v2244 = vsub.f32 %v2242, %v2243
  %v2245 = vand.u32 %v2244, 4294901760
  %2246 = vmatpush1.msra.mxu0 %v2245
  %2247 = vmatprep.subr.mxu0 0.0
  %v2248 = vand.u32 %v2028, 4294901760
  %v2249 = vsub.f32 %v2028, %v2248
  %v2250 = vand.u32 %v2249, 4294901760
  %v2251 = vsub.f32 %v2249, %v2250
  %v2252 = vand.u32 %v2251, 4294901760
  %2253 = vmatpush1.msra.mxu0 %v2252
  %2254 = vmatprep.subr.mxu0 0.0
  %2255 = vmatpush2.msra.mxu0 0.0
  %2256 = vmatprep.subr.mxu0 0.0
  %2257 = vmatpush2.msra.mxu0 0.0
  %2258 = vmatprep.subr.mxu0 0.0
  %2259 = vmatpush2.msra.mxu0 0.0
  %2260 = vmatprep.subr.mxu0 0.0
  %2261 = vmatpush2.msra.mxu0 0.0
  %2262 = vmatprep.subr.mxu0 0.0
  %2263 = vmatpush2.msra.mxu0 0.0
  %2264 = vmatprep.subr.mxu0 0.0
  %2265 = vmatpush2.msra.mxu0 0.0
  %2266 = vmatprep.subr.mxu0 0.0
  %2267 = vmatpush2.msra.mxu0 0.0
  %2268 = vmatprep.subr.mxu0 0.0
  %2269 = vmatpush2.msra.mxu0 0.0
  %2270 = vmatprep.subr.mxu0 0.0
  %2271 = vmatpush2.msra.mxu0 0.0
  %2272 = vmatprep.subr.mxu0 0.0
  %2273 = vmatpush2.msra.mxu0 0.0
  %2274 = vmatprep.subr.mxu0 0.0
  %2275 = vmatpush2.msra.mxu0 0.0
  %2276 = vmatprep.subr.mxu0 0.0
  %2277 = vmatpush2.msra.mxu0 0.0
  %2278 = vmatprep.subr.mxu0 0.0
  %2279 = vmatpush2.msra.mxu0 0.0
  %2280 = vmatprep.subr.mxu0 0.0
  %2281 = vmatpush2.msra.mxu0 0.0
  %2282 = vmatprep.subr.mxu0 0.0
  %2283 = vmatpush2.msra.mxu0 0.0
  %2284 = vmatprep.subr.mxu0 0.0
  %2285 = vmatpush2.msra.mxu0 0.0
  %2286 = vmatprep.mubr.f32.mxu0 0.0
  %v2287 = vand.u32 %v2027, 4294901760
  %2288 = vmatmul.mubr.f32.gmra.mxu0 %v2287
  %v2289 = vpop.f32.mrf.mxu0
  %v2290 = vadd.f32 %v2139, %v2289
  %v2291 = vpop.f32.mrf.mxu0
  %2292 = vdwg.mxu0
  %2293 = vmatprep.subr.mxu0 0.0
  %v2294 = vand.u32 %v2043, 4294901760
  %v2295 = vsub.f32 %v2043, %v2294
  %2296 = vmatpush1.msra.mxu0 %v2295
  %2297 = vmatprep.subr.mxu0 0.0
  %v2298 = vand.u32 %v2042, 4294901760
  %v2299 = vsub.f32 %v2042, %v2298
  %2300 = vmatpush1.msra.mxu0 %v2299
  %2301 = vmatprep.subr.mxu0 0.0
  %v2302 = vand.u32 %v2041, 4294901760
  %v2303 = vsub.f32 %v2041, %v2302
  %2304 = vmatpush1.msra.mxu0 %v2303
  %2305 = vmatprep.subr.mxu0 0.0
  %v2306 = vand.u32 %v2040, 4294901760
  %v2307 = vsub.f32 %v2040, %v2306
  %2308 = vmatpush1.msra.mxu0 %v2307
  %2309 = vmatprep.subr.mxu0 0.0
  %v2310 = vand.u32 %v2039, 4294901760
  %v2311 = vsub.f32 %v2039, %v2310
  %2312 = vmatpush1.msra.mxu0 %v2311
  %2313 = vmatprep.subr.mxu0 0.0
  %v2314 = vand.u32 %v2038, 4294901760
  %v2315 = vsub.f32 %v2038, %v2314
  %2316 = vmatpush1.msra.mxu0 %v2315
  %2317 = vmatprep.subr.mxu0 0.0
  %v2318 = vand.u32 %v2037, 4294901760
  %v2319 = vsub.f32 %v2037, %v2318
  %2320 = vmatpush1.msra.mxu0 %v2319
  %2321 = vmatprep.subr.mxu0 0.0
  %v2322 = vand.u32 %v2036, 4294901760
  %v2323 = vsub.f32 %v2036, %v2322
  %2324 = vmatpush1.msra.mxu0 %v2323
  %2325 = vmatprep.subr.mxu0 0.0
  %v2326 = vand.u32 %v2035, 4294901760
  %v2327 = vsub.f32 %v2035, %v2326
  %2328 = vmatpush1.msra.mxu0 %v2327
  %2329 = vmatprep.subr.mxu0 0.0
  %v2330 = vand.u32 %v2034, 4294901760
  %v2331 = vsub.f32 %v2034, %v2330
  %2332 = vmatpush1.msra.mxu0 %v2331
  %2333 = vmatprep.subr.mxu0 0.0
  %v2334 = vand.u32 %v2033, 4294901760
  %v2335 = vsub.f32 %v2033, %v2334
  %2336 = vmatpush1.msra.mxu0 %v2335
  %2337 = vmatprep.subr.mxu0 0.0
  %v2338 = vand.u32 %v2032, 4294901760
  %v2339 = vsub.f32 %v2032, %v2338
  %2340 = vmatpush1.msra.mxu0 %v2339
  %2341 = vmatprep.subr.mxu0 0.0
  %v2342 = vand.u32 %v2031, 4294901760
  %v2343 = vsub.f32 %v2031, %v2342
  %2344 = vmatpush1.msra.mxu0 %v2343
  %2345 = vmatprep.subr.mxu0 0.0
  %v2346 = vand.u32 %v2030, 4294901760
  %v2347 = vsub.f32 %v2030, %v2346
  %2348 = vmatpush1.msra.mxu0 %v2347
  %2349 = vmatprep.subr.mxu0 0.0
  %v2350 = vand.u32 %v2029, 4294901760
  %v2351 = vsub.f32 %v2029, %v2350
  %2352 = vmatpush1.msra.mxu0 %v2351
  %2353 = vmatprep.subr.mxu0 0.0
  %v2354 = vand.u32 %v2028, 4294901760
  %v2355 = vsub.f32 %v2028, %v2354
  %2356 = vmatpush1.msra.mxu0 %v2355
  %2357 = vmatprep.subr.mxu0 0.0
  %2358 = vmatpush2.msra.mxu0 0.0
  %2359 = vmatprep.subr.mxu0 0.0
  %2360 = vmatpush2.msra.mxu0 0.0
  %2361 = vmatprep.subr.mxu0 0.0
  %2362 = vmatpush2.msra.mxu0 0.0
  %2363 = vmatprep.subr.mxu0 0.0
  %2364 = vmatpush2.msra.mxu0 0.0
  %2365 = vmatprep.subr.mxu0 0.0
  %2366 = vmatpush2.msra.mxu0 0.0
  %2367 = vmatprep.subr.mxu0 0.0
  %2368 = vmatpush2.msra.mxu0 0.0
  %2369 = vmatprep.subr.mxu0 0.0
  %2370 = vmatpush2.msra.mxu0 0.0
  %2371 = vmatprep.subr.mxu0 0.0
  %2372 = vmatpush2.msra.mxu0 0.0
  %2373 = vmatprep.subr.mxu0 0.0
  %2374 = vmatpush2.msra.mxu0 0.0
  %2375 = vmatprep.subr.mxu0 0.0
  %2376 = vmatpush2.msra.mxu0 0.0
  %2377 = vmatprep.subr.mxu0 0.0
  %2378 = vmatpush2.msra.mxu0 0.0
  %2379 = vmatprep.subr.mxu0 0.0
  %2380 = vmatpush2.msra.mxu0 0.0
  %2381 = vmatprep.subr.mxu0 0.0
  %2382 = vmatpush2.msra.mxu0 0.0
  %2383 = vmatprep.subr.mxu0 0.0
  %2384 = vmatpush2.msra.mxu0 0.0
  %2385 = vmatprep.subr.mxu0 0.0
  %2386 = vmatpush2.msra.mxu0 0.0
  %2387 = vmatprep.subr.mxu0 0.0
  %2388 = vmatpush2.msra.mxu0 0.0
  %2389 = vmatprep.mubr.f32.mxu0 0.0
  %v2390 = vand.u32 %v2027, 4294901760
  %v2391 = vsub.f32 %v2027, %v2390
  %2392 = vmatmul.mubr.f32.gmra.mxu0 %v2391
  %v2393 = vpop.f32.mrf.mxu0
  %v2394 = vadd.f32 %v2290, %v2393
  %v2395 = vpop.f32.mrf.mxu0
  %2396 = vdwg.mxu0
  %2397 = vmatprep.subr.mxu0 0.0
  %v2398 = vand.u32 %v2043, 4294901760
  %2399 = vmatpush1.msra.mxu0 %v2398
  %2400 = vmatprep.subr.mxu0 0.0
  %v2401 = vand.u32 %v2042, 4294901760
  %2402 = vmatpush1.msra.mxu0 %v2401
  %2403 = vmatprep.subr.mxu0 0.0
  %v2404 = vand.u32 %v2041, 4294901760
  %2405 = vmatpush1.msra.mxu0 %v2404
  %2406 = vmatprep.subr.mxu0 0.0
  %v2407 = vand.u32 %v2040, 4294901760
  %2408 = vmatpush1.msra.mxu0 %v2407
  %2409 = vmatprep.subr.mxu0 0.0
  %v2410 = vand.u32 %v2039, 4294901760
  %2411 = vmatpush1.msra.mxu0 %v2410
  %2412 = vmatprep.subr.mxu0 0.0
  %v2413 = vand.u32 %v2038, 4294901760
  %2414 = vmatpush1.msra.mxu0 %v2413
  %2415 = vmatprep.subr.mxu0 0.0
  %v2416 = vand.u32 %v2037, 4294901760
  %2417 = vmatpush1.msra.mxu0 %v2416
  %2418 = vmatprep.subr.mxu0 0.0
  %v2419 = vand.u32 %v2036, 4294901760
  %2420 = vmatpush1.msra.mxu0 %v2419
  %2421 = vmatprep.subr.mxu0 0.0
  %v2422 = vand.u32 %v2035, 4294901760
  %2423 = vmatpush1.msra.mxu0 %v2422
  %2424 = vmatprep.subr.mxu0 0.0
  %v2425 = vand.u32 %v2034, 4294901760
  %2426 = vmatpush1.msra.mxu0 %v2425
  %2427 = vmatprep.subr.mxu0 0.0
  %v2428 = vand.u32 %v2033, 4294901760
  %2429 = vmatpush1.msra.mxu0 %v2428
  %2430 = vmatprep.subr.mxu0 0.0
  %v2431 = vand.u32 %v2032, 4294901760
  %2432 = vmatpush1.msra.mxu0 %v2431
  %2433 = vmatprep.subr.mxu0 0.0
  %v2434 = vand.u32 %v2031, 4294901760
  %2435 = vmatpush1.msra.mxu0 %v2434
  %2436 = vmatprep.subr.mxu0 0.0
  %v2437 = vand.u32 %v2030, 4294901760
  %2438 = vmatpush1.msra.mxu0 %v2437
  %2439 = vmatprep.subr.mxu0 0.0
  %v2440 = vand.u32 %v2029, 4294901760
  %2441 = vmatpush1.msra.mxu0 %v2440
  %2442 = vmatprep.subr.mxu0 0.0
  %v2443 = vand.u32 %v2028, 4294901760
  %2444 = vmatpush1.msra.mxu0 %v2443
  %2445 = vmatprep.subr.mxu0 0.0
  %2446 = vmatpush2.msra.mxu0 0.0
  %2447 = vmatprep.subr.mxu0 0.0
  %2448 = vmatpush2.msra.mxu0 0.0
  %2449 = vmatprep.subr.mxu0 0.0
  %2450 = vmatpush2.msra.mxu0 0.0
  %2451 = vmatprep.subr.mxu0 0.0
  %2452 = vmatpush2.msra.mxu0 0.0
  %2453 = vmatprep.subr.mxu0 0.0
  %2454 = vmatpush2.msra.mxu0 0.0
  %2455 = vmatprep.subr.mxu0 0.0
  %2456 = vmatpush2.msra.mxu0 0.0
  %2457 = vmatprep.subr.mxu0 0.0
  %2458 = vmatpush2.msra.mxu0 0.0
  %2459 = vmatprep.subr.mxu0 0.0
  %2460 = vmatpush2.msra.mxu0 0.0
  %2461 = vmatprep.subr.mxu0 0.0
  %2462 = vmatpush2.msra.mxu0 0.0
  %2463 = vmatprep.subr.mxu0 0.0
  %2464 = vmatpush2.msra.mxu0 0.0
  %2465 = vmatprep.subr.mxu0 0.0
  %2466 = vmatpush2.msra.mxu0 0.0
  %2467 = vmatprep.subr.mxu0 0.0
  %2468 = vmatpush2.msra.mxu0 0.0
  %2469 = vmatprep.subr.mxu0 0.0
  %2470 = vmatpush2.msra.mxu0 0.0
  %2471 = vmatprep.subr.mxu0 0.0
  %2472 = vmatpush2.msra.mxu0 0.0
  %2473 = vmatprep.subr.mxu0 0.0
  %2474 = vmatpush2.msra.mxu0 0.0
  %2475 = vmatprep.subr.mxu0 0.0
  %2476 = vmatpush2.msra.mxu0 0.0
  %2477 = vmatprep.mubr.f32.mxu0 0.0
  %v2478 = vand.u32 %v2027, 4294901760
  %v2479 = vsub.f32 %v2027, %v2478
  %v2480 = vand.u32 %v2479, 4294901760
  %2481 = vmatmul.mubr.f32.gmra.mxu0 %v2480
  %v2482 = vpop.f32.mrf.mxu0
  %v2483 = vadd.f32 %v2394, %v2482
  %v2484 = vpop.f32.mrf.mxu0
  %2485 = vdwg.mxu0
  %2486 = vmatprep.subr.mxu0 0.0
  %v2487 = vand.u32 %v2043, 4294901760
  %v2488 = vsub.f32 %v2043, %v2487
  %v2489 = vand.u32 %v2488, 4294901760
  %2490 = vmatpush1.msra.mxu0 %v2489
  %2491 = vmatprep.subr.mxu0 0.0
  %v2492 = vand.u32 %v2042, 4294901760
  %v2493 = vsub.f32 %v2042, %v2492
  %v2494 = vand.u32 %v2493, 4294901760
  %2495 = vmatpush1.msra.mxu0 %v2494
  %2496 = vmatprep.subr.mxu0 0.0
  %v2497 = vand.u32 %v2041, 4294901760
  %v2498 = vsub.f32 %v2041, %v2497
  %v2499 = vand.u32 %v2498, 4294901760
  %2500 = vmatpush1.msra.mxu0 %v2499
  %2501 = vmatprep.subr.mxu0 0.0
  %v2502 = vand.u32 %v2040, 4294901760
  %v2503 = vsub.f32 %v2040, %v2502
  %v2504 = vand.u32 %v2503, 4294901760
  %2505 = vmatpush1.msra.mxu0 %v2504
  %2506 = vmatprep.subr.mxu0 0.0
  %v2507 = vand.u32 %v2039, 4294901760
  %v2508 = vsub.f32 %v2039, %v2507
  %v2509 = vand.u32 %v2508, 4294901760
  %2510 = vmatpush1.msra.mxu0 %v2509
  %2511 = vmatprep.subr.mxu0 0.0
  %v2512 = vand.u32 %v2038, 4294901760
  %v2513 = vsub.f32 %v2038, %v2512
  %v2514 = vand.u32 %v2513, 4294901760
  %2515 = vmatpush1.msra.mxu0 %v2514
  %2516 = vmatprep.subr.mxu0 0.0
  %v2517 = vand.u32 %v2037, 4294901760
  %v2518 = vsub.f32 %v2037, %v2517
  %v2519 = vand.u32 %v2518, 4294901760
  %2520 = vmatpush1.msra.mxu0 %v2519
  %2521 = vmatprep.subr.mxu0 0.0
  %v2522 = vand.u32 %v2036, 4294901760
  %v2523 = vsub.f32 %v2036, %v2522
  %v2524 = vand.u32 %v2523, 4294901760
  %2525 = vmatpush1.msra.mxu0 %v2524
  %2526 = vmatprep.subr.mxu0 0.0
  %v2527 = vand.u32 %v2035, 4294901760
  %v2528 = vsub.f32 %v2035, %v2527
  %v2529 = vand.u32 %v2528, 4294901760
  %2530 = vmatpush1.msra.mxu0 %v2529
  %2531 = vmatprep.subr.mxu0 0.0
  %v2532 = vand.u32 %v2034, 4294901760
  %v2533 = vsub.f32 %v2034, %v2532
  %v2534 = vand.u32 %v2533, 4294901760
  %2535 = vmatpush1.msra.mxu0 %v2534
  %2536 = vmatprep.subr.mxu0 0.0
  %v2537 = vand.u32 %v2033, 4294901760
  %v2538 = vsub.f32 %v2033, %v2537
  %v2539 = vand.u32 %v2538, 4294901760
  %2540 = vmatpush1.msra.mxu0 %v2539
  %2541 = vmatprep.subr.mxu0 0.0
  %v2542 = vand.u32 %v2032, 4294901760
  %v2543 = vsub.f32 %v2032, %v2542
  %v2544 = vand.u32 %v2543, 4294901760
  %2545 = vmatpush1.msra.mxu0 %v2544
  %2546 = vmatprep.subr.mxu0 0.0
  %v2547 = vand.u32 %v2031, 4294901760
  %v2548 = vsub.f32 %v2031, %v2547
  %v2549 = vand.u32 %v2548, 4294901760
  %2550 = vmatpush1.msra.mxu0 %v2549
  %2551 = vmatprep.subr.mxu0 0.0
  %v2552 = vand.u32 %v2030, 4294901760
  %v2553 = vsub.f32 %v2030, %v2552
  %v2554 = vand.u32 %v2553, 4294901760
  %2555 = vmatpush1.msra.mxu0 %v2554
  %2556 = vmatprep.subr.mxu0 0.0
  %v2557 = vand.u32 %v2029, 4294901760
  %v2558 = vsub.f32 %v2029, %v2557
  %v2559 = vand.u32 %v2558, 4294901760
  %2560 = vmatpush1.msra.mxu0 %v2559
  %2561 = vmatprep.subr.mxu0 0.0
  %v2562 = vand.u32 %v2028, 4294901760
  %v2563 = vsub.f32 %v2028, %v2562
  %v2564 = vand.u32 %v2563, 4294901760
  %2565 = vmatpush1.msra.mxu0 %v2564
  %2566 = vmatprep.subr.mxu0 0.0
  %2567 = vmatpush2.msra.mxu0 0.0
  %2568 = vmatprep.subr.mxu0 0.0
  %2569 = vmatpush2.msra.mxu0 0.0
  %2570 = vmatprep.subr.mxu0 0.0
  %2571 = vmatpush2.msra.mxu0 0.0
  %2572 = vmatprep.subr.mxu0 0.0
  %2573 = vmatpush2.msra.mxu0 0.0
  %2574 = vmatprep.subr.mxu0 0.0
  %2575 = vmatpush2.msra.mxu0 0.0
  %2576 = vmatprep.subr.mxu0 0.0
  %2577 = vmatpush2.msra.mxu0 0.0
  %2578 = vmatprep.subr.mxu0 0.0
  %2579 = vmatpush2.msra.mxu0 0.0
  %2580 = vmatprep.subr.mxu0 0.0
  %2581 = vmatpush2.msra.mxu0 0.0
  %2582 = vmatprep.subr.mxu0 0.0
  %2583 = vmatpush2.msra.mxu0 0.0
  %2584 = vmatprep.subr.mxu0 0.0
  %2585 = vmatpush2.msra.mxu0 0.0
  %2586 = vmatprep.subr.mxu0 0.0
  %2587 = vmatpush2.msra.mxu0 0.0
  %2588 = vmatprep.subr.mxu0 0.0
  %2589 = vmatpush2.msra.mxu0 0.0
  %2590 = vmatprep.subr.mxu0 0.0
  %2591 = vmatpush2.msra.mxu0 0.0
  %2592 = vmatprep.subr.mxu0 0.0
  %2593 = vmatpush2.msra.mxu0 0.0
  %2594 = vmatprep.subr.mxu0 0.0
  %2595 = vmatpush2.msra.mxu0 0.0
  %2596 = vmatprep.subr.mxu0 0.0
  %2597 = vmatpush2.msra.mxu0 0.0
  %2598 = vmatprep.mubr.f32.mxu0 0.0
  %v2599 = vand.u32 %v2027, 4294901760
  %2600 = vmatmul.mubr.f32.gmra.mxu0 %v2599
  %v2601 = vpop.f32.mrf.mxu0
  %v2602 = vadd.f32 %v2483, %v2601
  %v2603 = vpop.f32.mrf.mxu0
  %2604 = vdwg.mxu0
  %2605 = vmatprep.subr.mxu0 0.0
  %v2606 = vand.u32 %v2043, 4294901760
  %2607 = vmatpush1.msra.mxu0 %v2606
  %2608 = vmatprep.subr.mxu0 0.0
  %v2609 = vand.u32 %v2042, 4294901760
  %2610 = vmatpush1.msra.mxu0 %v2609
  %2611 = vmatprep.subr.mxu0 0.0
  %v2612 = vand.u32 %v2041, 4294901760
  %2613 = vmatpush1.msra.mxu0 %v2612
  %2614 = vmatprep.subr.mxu0 0.0
  %v2615 = vand.u32 %v2040, 4294901760
  %2616 = vmatpush1.msra.mxu0 %v2615
  %2617 = vmatprep.subr.mxu0 0.0
  %v2618 = vand.u32 %v2039, 4294901760
  %2619 = vmatpush1.msra.mxu0 %v2618
  %2620 = vmatprep.subr.mxu0 0.0
  %v2621 = vand.u32 %v2038, 4294901760
  %2622 = vmatpush1.msra.mxu0 %v2621
  %2623 = vmatprep.subr.mxu0 0.0
  %v2624 = vand.u32 %v2037, 4294901760
  %2625 = vmatpush1.msra.mxu0 %v2624
  %2626 = vmatprep.subr.mxu0 0.0
  %v2627 = vand.u32 %v2036, 4294901760
  %2628 = vmatpush1.msra.mxu0 %v2627
  %2629 = vmatprep.subr.mxu0 0.0
  %v2630 = vand.u32 %v2035, 4294901760
  %2631 = vmatpush1.msra.mxu0 %v2630
  %2632 = vmatprep.subr.mxu0 0.0
  %v2633 = vand.u32 %v2034, 4294901760
  %2634 = vmatpush1.msra.mxu0 %v2633
  %2635 = vmatprep.subr.mxu0 0.0
  %v2636 = vand.u32 %v2033, 4294901760
  %2637 = vmatpush1.msra.mxu0 %v2636
  %2638 = vmatprep.subr.mxu0 0.0
  %v2639 = vand.u32 %v2032, 4294901760
  %2640 = vmatpush1.msra.mxu0 %v2639
  %2641 = vmatprep.subr.mxu0 0.0
  %v2642 = vand.u32 %v2031, 4294901760
  %2643 = vmatpush1.msra.mxu0 %v2642
  %2644 = vmatprep.subr.mxu0 0.0
  %v2645 = vand.u32 %v2030, 4294901760
  %2646 = vmatpush1.msra.mxu0 %v2645
  %2647 = vmatprep.subr.mxu0 0.0
  %v2648 = vand.u32 %v2029, 4294901760
  %2649 = vmatpush1.msra.mxu0 %v2648
  %2650 = vmatprep.subr.mxu0 0.0
  %v2651 = vand.u32 %v2028, 4294901760
  %2652 = vmatpush1.msra.mxu0 %v2651
  %2653 = vmatprep.subr.mxu0 0.0
  %2654 = vmatpush2.msra.mxu0 0.0
  %2655 = vmatprep.subr.mxu0 0.0
  %2656 = vmatpush2.msra.mxu0 0.0
  %2657 = vmatprep.subr.mxu0 0.0
  %2658 = vmatpush2.msra.mxu0 0.0
  %2659 = vmatprep.subr.mxu0 0.0
  %2660 = vmatpush2.msra.mxu0 0.0
  %2661 = vmatprep.subr.mxu0 0.0
  %2662 = vmatpush2.msra.mxu0 0.0
  %2663 = vmatprep.subr.mxu0 0.0
  %2664 = vmatpush2.msra.mxu0 0.0
  %2665 = vmatprep.subr.mxu0 0.0
  %2666 = vmatpush2.msra.mxu0 0.0
  %2667 = vmatprep.subr.mxu0 0.0
  %2668 = vmatpush2.msra.mxu0 0.0
  %2669 = vmatprep.subr.mxu0 0.0
  %2670 = vmatpush2.msra.mxu0 0.0
  %2671 = vmatprep.subr.mxu0 0.0
  %2672 = vmatpush2.msra.mxu0 0.0
  %2673 = vmatprep.subr.mxu0 0.0
  %2674 = vmatpush2.msra.mxu0 0.0
  %2675 = vmatprep.subr.mxu0 0.0
  %2676 = vmatpush2.msra.mxu0 0.0
  %2677 = vmatprep.subr.mxu0 0.0
  %2678 = vmatpush2.msra.mxu0 0.0
  %2679 = vmatprep.subr.mxu0 0.0
  %2680 = vmatpush2.msra.mxu0 0.0
  %2681 = vmatprep.subr.mxu0 0.0
  %2682 = vmatpush2.msra.mxu0 0.0
  %2683 = vmatprep.subr.mxu0 0.0
  %2684 = vmatpush2.msra.mxu0 0.0
  %2685 = vmatprep.mubr.f32.mxu0 0.0
  %v2686 = vand.u32 %v2027, 4294901760
  %2687 = vmatmul.mubr.f32.gmra.mxu0 %v2686
  %v2688 = vpop.f32.mrf.mxu0
  %v2689 = vadd.f32 %v2602, %v2688
  %v2690 = vpop.f32.mrf.mxu0
  %2691 = vdwg.mxu0
  %2692 = vst [vmem:[%s9] sm:$0xff] %v2689
  // Predicated region
  $region38: #{mlp_forward.1} parent=0 // pred_check
    _
  $region39: #{mlp_forward.1} parent=0 // pred_check_branch
    %2694 = sbr.rel (0) target = $region41
  $region40: #{mlp_forward.1} parent=0 // pred_region
    _
  $region41: #{mlp_forward.1} parent=0 // pred_fallthru
    _
  // Predicated region
  $region42: #{mlp_forward.1} parent=0 // pred_check
    _
  $region43: #{mlp_forward.1} parent=0 // pred_check_branch
    %2696 = sbr.rel (0) target = $region45
  $region44: #{mlp_forward.1} parent=0 // pred_region
    _
  $region45: #{mlp_forward.1} parent=0 // pred_fallthru
    _

</llo_original>
